<compile_context>
chip_gen: v7x
topology: tpu7x:2x2x1
jax: 0.10.0
libtpu: 0.0.40
codegen_flags: <defaults>
</compile_context>

<pallas_src>
import math
import functools

import jax
import jax.numpy as jnp
from jax.experimental import pallas as pl
from jax.experimental.pallas import tpu as pltpu


def encoder_block_kernel(
    x_ref,
    wq_ref, bq_ref, wk_ref, bk_ref, wv_ref, bv_ref,
    wo_ref, bo_ref,
    w1_ref, b1_ref, w2_ref, b2_ref,
    gamma_ref, beta_ref,
    o_ref,
    k_cache, v_cache,
    *, num_heads, d_k, d_v, q_tile, kv_tile,
):
    f32 = jnp.float32
    bf16 = jnp.bfloat16
    H = num_heads
    S, D = x_ref.shape
    n_kv = S // kv_tile
    n_ff = w1_ref.shape[0]
    t = pl.program_id(1)

    # ---- K / V projections: once per batch element, cached head-major -------
    @pl.when(t == 0)
    def _():
        x_all = x_ref[...].astype(bf16)                       # (S, D)
        for h in range(H):                                    # static loop
            kh = jnp.dot(x_all, wk_ref[h], preferred_element_type=f32) + bk_ref[h]
            vh = jnp.dot(x_all, wv_ref[h], preferred_element_type=f32) + bv_ref[h]
            k_cache[h] = kh.astype(bf16)                      # (S, d_k)
            v_cache[h] = vh.astype(bf16)                      # (S, d_v)

    # ---- Query tile sliced from the resident full-sequence block ------------
    q_start = pl.multiple_of(t * q_tile, q_tile)
    xq_f32 = x_ref[pl.ds(q_start, q_tile), :].astype(f32)     # residual, f32
    xq_bf = xq_f32.astype(bf16)

    gamma = gamma_ref[...]                                    # (1, D) f32
    beta = beta_ref[...]                                      # (1, D) f32

    def layer_norm(y):                                        # y: (Tq, D) f32
        mean = jnp.mean(y, axis=-1, keepdims=True)
        var = jnp.mean(jnp.square(y - mean), axis=-1, keepdims=True)
        # TODO(synk): eps=1e-6 matches our reference; PyTorch nn.LayerNorm default is 1e-5.
        return (y - mean) * jax.lax.rsqrt(var + 1e-6) * gamma + beta

    # ---- Q projection (1/sqrt(d_k) folded into wq/bq host-side) -------------
    # Head-major weights -> per-head matmuls + major-axis stack (no lane slices).
    qh = jnp.stack(
        [(jnp.dot(xq_bf, wq_ref[h], preferred_element_type=f32)
          + bq_ref[h]).astype(bf16) for h in range(H)],
        axis=0)                                               # (H, Tq, d_k) bf16

    # ---- Flash-style attention: online softmax over KV chunks ---------------
    def kv_step(c, carry):
        m, l, acc = carry
        lo = pl.multiple_of(c * kv_tile, kv_tile)
        kc = k_cache[:, pl.ds(lo, kv_tile), :]                # (H, tk, d_k) bf16
        vc = v_cache[:, pl.ds(lo, kv_tile), :]                # (H, tk, d_v) bf16
        s = jnp.einsum("hqd,hkd->hqk", qh, kc,
                       preferred_element_type=f32)            # (H, Tq, tk) f32
        m_new = jnp.maximum(m, jnp.max(s, axis=-1, keepdims=True))
        alpha = jnp.exp(m - m_new)
        p = jnp.exp(s - m_new)
        l_new = alpha * l + jnp.sum(p, axis=-1, keepdims=True)
        acc_new = alpha * acc + jnp.einsum(
            "hqk,hkd->hqd", p.astype(bf16), vc, preferred_element_type=f32)
        return m_new, l_new, acc_new

    m0 = jnp.full((H, q_tile, 1), -jnp.inf, f32)
    l0 = jnp.zeros((H, q_tile, 1), f32)
    a0 = jnp.zeros((H, q_tile, d_v), f32)
    _, l_fin, acc_fin = jax.lax.fori_loop(0, n_kv, kv_step, (m0, l0, a0))
    ctx = (acc_fin * pl.reciprocal(l_fin, approx=True)).astype(bf16)  # (H, Tq, d_v)
    # TODO(synk): attention mask unsupported (module forward is used with mask=None).

    # ---- Output projection: per-head accumulation (no (H, Tq, D) intermediate)
    attn = jnp.zeros((q_tile, D), f32)
    for h in range(H):                                        # static, short
        attn = attn + jnp.dot(ctx[h], wo_ref[h], preferred_element_type=f32)
    attn = attn + bo_ref[...]
    # TODO(synk): attention / FF dropout omitted (identity in deterministic forward).

    y1 = layer_norm(attn + xq_f32)                            # (Tq, D) f32
    y1_bf = y1.astype(bf16)

    # ---- Point-wise FFN, hidden dim chunked (chunk-stacked weights) ---------
    def ff_step(c, acc_):
        h1 = jnp.dot(y1_bf, w1_ref[c], preferred_element_type=f32) + b1_ref[c]
        h1 = jnp.maximum(h1, 0.0).astype(bf16)
        return acc_ + jnp.dot(h1, w2_ref[c], preferred_element_type=f32)

    ff = jax.lax.fori_loop(0, n_ff, ff_step,
                           jnp.zeros((q_tile, D), f32), unroll=True)
    ff = ff + b2_ref[...]
    # TODO(synk): on v7x, w1/w2 could additionally be streamed from HBM with
    # manual double-buffered DMA (pl.ANY + make_async_copy) for extra headroom.

    y2 = layer_norm(ff + y1)
    o_ref[...] = y2.astype(o_ref.dtype)


def _tpu_vmem_capacity_bytes(default=128 * 1024 * 1024):
    try:
        info = pltpu.get_tpu_info()
        return int(getattr(info, "vmem_capacity_bytes", default))
    except Exception:
        return default


def _fit_tile(tile, total):
    tile = min(tile, total)
    return tile if total % tile == 0 else total


def encoder_block(x, params, *, num_heads, d_k, d_v,
                  q_tile=None, kv_tile=None, ff_chunk=None):
    B, S, D = x.shape
    (wq, bq, wk, bk, wv, bv, wo, bo, w1, b1, w2, b2, gamma, beta) = params
    P = w1.shape[1]

    # Generation-specific defaults: v7x has 64 MiB VMEM / TensorCore, v5e/v6e 128 MiB.
    vmem_cap = _tpu_vmem_capacity_bytes()
    small_vmem = vmem_cap <= 64 * 1024 * 1024
    if q_tile is None:
        q_tile = 256 if small_vmem else 512
    if kv_tile is None:
        kv_tile = 256
    if ff_chunk is None:
        ff_chunk = 512
    vmem_limit = (48 if small_vmem else 100) * 1024 * 1024

    tq = _fit_tile(q_tile, S)
    tk = _fit_tile(kv_tile, S)
    fc = _fit_tile(ff_chunk, P)
    n_ff = P // fc

    bf = jnp.bfloat16
    f32 = jnp.float32
    scale = 1.0 / math.sqrt(d_k)

    # Host-side parameter prep:
    #  * bf16 weights (halve DMA + VMEM), f32 biases.
    #  * 1/sqrt(d_k) folded into wq/bq.
    #  * wq/wk/wv/wo head-major so the kernel never slices the lane axis.
    #  * w1/b1/w2 stacked per FFN chunk -> only major-axis dynamic indexing.
    kparams = [
        (wq * scale).reshape(D, num_heads, d_k).transpose(1, 0, 2).astype(bf),
        (bq * scale).reshape(num_heads, 1, d_k).astype(f32),
        wk.reshape(D, num_heads, d_k).transpose(1, 0, 2).astype(bf),
        bk.reshape(num_heads, 1, d_k).astype(f32),
        wv.reshape(D, num_heads, d_v).transpose(1, 0, 2).astype(bf),
        bv.reshape(num_heads, 1, d_v).astype(f32),
        wo.reshape(num_heads, d_v, D).astype(bf),
        bo.astype(f32),
        w1.reshape(D, n_ff, fc).transpose(1, 0, 2).astype(bf),
        b1.reshape(n_ff, 1, fc).astype(f32),
        w2.reshape(n_ff, fc, D).astype(bf),
        b2.astype(f32),
        gamma.astype(f32),
        beta.astype(f32),
    ]

    kernel = functools.partial(
        encoder_block_kernel, num_heads=num_heads, d_k=d_k, d_v=d_v,
        q_tile=tq, kv_tile=tk)

    def build(single_buffer_weights):
        def param_spec(p):
            idx = lambda b, t, _n=p.ndim: (0,) * _n
            if single_buffer_weights:
                # Grid-invariant blocks: single-buffer to halve weight VMEM.
                return pl.BlockSpec(p.shape, idx, pipeline_mode=pl.Buffered(1))
            return pl.BlockSpec(p.shape, idx)

        in_specs = [pl.BlockSpec((pl.Squeezed(), S, D), lambda b, t: (b, 0, 0))]
        in_specs += [param_spec(p) for p in kparams]
        out_spec = pl.BlockSpec((pl.Squeezed(), tq, D), lambda b, t: (b, t, 0))

        return pl.pallas_call(
            kernel,
            out_shape=jax.ShapeDtypeStruct((B, S, D), x.dtype),
            grid_spec=pltpu.PrefetchScalarGridSpec(
                num_scalar_prefetch=0,
                grid=(B, S // tq),
                in_specs=in_specs,
                out_specs=out_spec,
                scratch_shapes=[
                    pltpu.VMEM((num_heads, S, d_k), jnp.bfloat16),  # K cache
                    pltpu.VMEM((num_heads, S, d_v), jnp.bfloat16),  # V cache
                ],
            ),
            compiler_params=pltpu.CompilerParams(
                # K/V caching across q-tiles requires the seq-tile axis to be
                # sequential; batch stays parallel for megacore sharding.
                dimension_semantics=("parallel", "arbitrary"),
                vmem_limit_bytes=vmem_limit,
            ),
        )

    try:
        return jax.block_until_ready(build(True)(x, *kparams))
    except Exception:
        # TODO(synk): pipeline_mode=pl.Buffered(1) unsupported on this JAX
        # version; fall back to default double-buffered weight blocks.
        return jax.block_until_ready(build(False)(x, *kparams))


def encoder_block_ref(x, params, *, num_heads, d_k, d_v):
    """Pure-JAX f32 reference with identical math, for correctness checking."""
    (wq, bq, wk, bk, wv, bv, wo, bo, w1, b1, w2, b2, gamma, beta) = params

    def layer_norm(y):
        mean = jnp.mean(y, axis=-1, keepdims=True)
        var = jnp.mean((y - mean) ** 2, axis=-1, keepdims=True)
        return (y - mean) * jax.lax.rsqrt(var + 1e-6) * gamma + beta

    B, S, D = x.shape
    q = (x @ wq + bq).reshape(B, S, num_heads, d_k).transpose(0, 2, 1, 3)
    k = (x @ wk + bk).reshape(B, S, num_heads, d_k).transpose(0, 2, 1, 3)
    v = (x @ wv + bv).reshape(B, S, num_heads, d_v).transpose(0, 2, 1, 3)
    s = jnp.einsum("bhqd,bhkd->bhqk", q, k) / math.sqrt(d_k)
    p = jax.nn.softmax(s, axis=-1)
    ctx = jnp.einsum("bhqk,bhkd->bhqd", p, v).transpose(0, 2, 1, 3).reshape(B, S, -1)
    attn = ctx @ wo + bo
    y1 = layer_norm(attn + x)
    ff = jnp.maximum(y1 @ w1 + b1, 0.0) @ w2 + b2
    return layer_norm(ff + y1)


def init_params(key, d_model, d_k, d_v, num_heads, pointwise):
    ks = jax.random.split(key, 12)
    s = 0.05

    def w(k, shape):
        return jax.random.normal(k, shape, jnp.float32) * s

    return [
        w(ks[0], (d_model, num_heads * d_k)),   # wq
        w(ks[1], (1, num_heads * d_k)),         # bq
        w(ks[2], (d_model, num_heads * d_k)),   # wk
        w(ks[3], (1, num_heads * d_k)),         # bk
        w(ks[4], (d_model, num_heads * d_v)),   # wv
        w(ks[5], (1, num_heads * d_v)),         # bv
        w(ks[6], (num_heads * d_v, d_model)),   # wo
        w(ks[7], (1, d_model)),                 # bo
        w(ks[8], (d_model, pointwise)),         # w1
        w(ks[9], (1, pointwise)),               # b1
        w(ks[10], (pointwise, d_model)),        # w2
        w(ks[11], (1, d_model)),                # b2
        jnp.ones((1, d_model), jnp.float32),    # layer norm gamma (shared)
        jnp.zeros((1, d_model), jnp.float32),   # layer norm beta (shared)
    ]


if __name__ == "__main__":
    # Small shapes consistent with the module's forward semantics.
    B, S = 2, 8
    d_model, num_heads, d_k, d_v, pointwise = 32, 4, 8, 8, 64

    key = jax.random.PRNGKey(0)
    kx, kp = jax.random.split(key)
    x = jax.random.normal(kx, (B, S, d_model), jnp.float32)
    params = init_params(kp, d_model, d_k, d_v, num_heads, pointwise)

    out = encoder_block(x, params, num_heads=num_heads, d_k=d_k, d_v=d_v)
    out = jax.block_until_ready(out)

    ref = encoder_block_ref(x, params, num_heads=num_heads, d_k=d_k, d_v=d_v)
    assert out.shape == (B, S, d_model)
    # bf16 MXU inputs (f32 accumulation) vs f32 reference -> relaxed tolerance.
    assert jnp.allclose(out, ref, atol=3e-2, rtol=3e-2), "mismatch vs reference"

    print("KERNEL_OK")
</pallas_src>

<mosaic_0001>
module attributes {stable_mosaic.version = 11 : i64} {
  func.func @encoder_block_kernel(%arg0: i32, %arg1: i32, %arg2: memref<1x8x32xf32, #tpu.memory_space<vmem>>, %arg3: memref<4x32x8xbf16, #tpu.memory_space<vmem>>, %arg4: memref<4x1x8xf32, #tpu.memory_space<vmem>>, %arg5: memref<4x32x8xbf16, #tpu.memory_space<vmem>>, %arg6: memref<4x1x8xf32, #tpu.memory_space<vmem>>, %arg7: memref<4x32x8xbf16, #tpu.memory_space<vmem>>, %arg8: memref<4x1x8xf32, #tpu.memory_space<vmem>>, %arg9: memref<4x8x32xbf16, #tpu.memory_space<vmem>>, %arg10: memref<1x32xf32, #tpu.memory_space<vmem>>, %arg11: memref<1x32x64xbf16, #tpu.memory_space<vmem>>, %arg12: memref<1x1x64xf32, #tpu.memory_space<vmem>>, %arg13: memref<1x64x32xbf16, #tpu.memory_space<vmem>>, %arg14: memref<1x32xf32, #tpu.memory_space<vmem>>, %arg15: memref<1x32xf32, #tpu.memory_space<vmem>>, %arg16: memref<1x32xf32, #tpu.memory_space<vmem>>, %arg17: memref<1x8x32xf32, #tpu.memory_space<vmem>>, %arg18: memref<4x8x8xbf16, #tpu.memory_space<vmem>>, %arg19: memref<4x8x8xbf16, #tpu.memory_space<vmem>>) attributes {dimension_semantics = [#tpu.dimension_semantics<parallel>, #tpu.dimension_semantics<arbitrary>], iteration_bounds = array<i64: 2, 1>, scalar_prefetch = 0 : i64, scratch_operands = 2 : i64, tpu.core_type = #tpu.core_type<tc>, window_params = [{transform_indices = @transform_0, window_bounds = array<i64: 1, 8, 32>}, {pipeline_mode = #tpu.pipeline_mode<synchronous>, transform_indices = @transform_1, window_bounds = array<i64: 4, 32, 8>}, {pipeline_mode = #tpu.pipeline_mode<synchronous>, transform_indices = @transform_2, window_bounds = array<i64: 4, 1, 8>}, {pipeline_mode = #tpu.pipeline_mode<synchronous>, transform_indices = @transform_3, window_bounds = array<i64: 4, 32, 8>}, {pipeline_mode = #tpu.pipeline_mode<synchronous>, transform_indices = @transform_4, window_bounds = array<i64: 4, 1, 8>}, {pipeline_mode = #tpu.pipeline_mode<synchronous>, transform_indices = @transform_5, window_bounds = array<i64: 4, 32, 8>}, {pipeline_mode = #tpu.pipeline_mode<synchronous>, transform_indices = @transform_6, window_bounds = array<i64: 4, 1, 8>}, {pipeline_mode = #tpu.pipeline_mode<synchronous>, transform_indices = @transform_7, window_bounds = array<i64: 4, 8, 32>}, {pipeline_mode = #tpu.pipeline_mode<synchronous>, transform_indices = @transform_8, window_bounds = array<i64: 1, 32>}, {pipeline_mode = #tpu.pipeline_mode<synchronous>, transform_indices = @transform_9, window_bounds = array<i64: 1, 32, 64>}, {pipeline_mode = #tpu.pipeline_mode<synchronous>, transform_indices = @transform_10, window_bounds = array<i64: 1, 1, 64>}, {pipeline_mode = #tpu.pipeline_mode<synchronous>, transform_indices = @transform_11, window_bounds = array<i64: 1, 64, 32>}, {pipeline_mode = #tpu.pipeline_mode<synchronous>, transform_indices = @transform_12, window_bounds = array<i64: 1, 32>}, {pipeline_mode = #tpu.pipeline_mode<synchronous>, transform_indices = @transform_13, window_bounds = array<i64: 1, 32>}, {pipeline_mode = #tpu.pipeline_mode<synchronous>, transform_indices = @transform_14, window_bounds = array<i64: 1, 32>}, {transform_indices = @transform_15, window_bounds = array<i64: 1, 8, 32>}]} {
    %c0_i32 = arith.constant 0 : i32
    %0 = arith.cmpi eq, %arg1, %c0_i32 : i32
    %1 = arith.extui %0 : i1 to i32
    %c0_i32_0 = arith.constant 0 : i32
    %2 = arith.cmpi ne, %1, %c0_i32_0 : i32
    scf.if %2 {
      %c0_89 = arith.constant 0 : index
      %c0_90 = arith.constant 0 : index
      %c0_91 = arith.constant 0 : index
      %178 = vector.load %arg2[%c0_89, %c0_90, %c0_91] : memref<1x8x32xf32, #tpu.memory_space<vmem>>, vector<1x8x32xf32>
      %179 = vector.shape_cast %178 : vector<1x8x32xf32> to vector<8x32xf32>
      %180 = arith.truncf %179 : vector<8x32xf32> to vector<8x32xbf16>
      %c0_92 = arith.constant 0 : index
      %c0_93 = arith.constant 0 : index
      %c0_94 = arith.constant 0 : index
      %181 = vector.load %arg5[%c0_92, %c0_93, %c0_94] : memref<4x32x8xbf16, #tpu.memory_space<vmem>>, vector<1x32x8xbf16>
      %182 = vector.shape_cast %181 : vector<1x32x8xbf16> to vector<32x8xbf16>
      %cst_95 = arith.constant dense<0.000000e+00> : vector<8x8xf32>
      %183 = tpu.matmul %180, %182, %cst_95 {dimension_numbers = #tpu.dot_dimension_numbers<[1], [0], [0], [1], [0, 0, 1, 1], [], []>} : vector<8x32xbf16>, vector<32x8xbf16>, vector<8x8xf32> -> vector<8x8xf32>
      %c0_96 = arith.constant 0 : index
      %c0_97 = arith.constant 0 : index
      %c0_98 = arith.constant 0 : index
      %184 = vector.load %arg6[%c0_96, %c0_97, %c0_98] : memref<4x1x8xf32, #tpu.memory_space<vmem>>, vector<1x1x8xf32>
      %185 = vector.shape_cast %184 : vector<1x1x8xf32> to vector<1x8xf32>
      %186 = vector.broadcast %185 : vector<1x8xf32> to vector<8x8xf32>
      %187 = arith.addf %183, %186 : vector<8x8xf32>
      %c0_99 = arith.constant 0 : index
      %c0_100 = arith.constant 0 : index
      %c0_101 = arith.constant 0 : index
      %188 = vector.load %arg7[%c0_99, %c0_100, %c0_101] : memref<4x32x8xbf16, #tpu.memory_space<vmem>>, vector<1x32x8xbf16>
      %189 = vector.shape_cast %188 : vector<1x32x8xbf16> to vector<32x8xbf16>
      %cst_102 = arith.constant dense<0.000000e+00> : vector<8x8xf32>
      %190 = tpu.matmul %180, %189, %cst_102 {dimension_numbers = #tpu.dot_dimension_numbers<[1], [0], [0], [1], [0, 0, 1, 1], [], []>} : vector<8x32xbf16>, vector<32x8xbf16>, vector<8x8xf32> -> vector<8x8xf32>
      %c0_103 = arith.constant 0 : index
      %c0_104 = arith.constant 0 : index
      %c0_105 = arith.constant 0 : index
      %191 = vector.load %arg8[%c0_103, %c0_104, %c0_105] : memref<4x1x8xf32, #tpu.memory_space<vmem>>, vector<1x1x8xf32>
      %192 = vector.shape_cast %191 : vector<1x1x8xf32> to vector<1x8xf32>
      %193 = vector.broadcast %192 : vector<1x8xf32> to vector<8x8xf32>
      %194 = arith.addf %190, %193 : vector<8x8xf32>
      %195 = arith.truncf %187 : vector<8x8xf32> to vector<8x8xbf16>
      %c0_106 = arith.constant 0 : index
      %c0_107 = arith.constant 0 : index
      %c0_108 = arith.constant 0 : index
      %196 = vector.load %arg18[%c0_106, %c0_107, %c0_108] : memref<4x8x8xbf16, #tpu.memory_space<vmem>>, vector<1x8x8xbf16>
      %197 = vector.shape_cast %196 : vector<1x8x8xbf16> to vector<8x8xbf16>
      %198 = vector.shape_cast %195 : vector<8x8xbf16> to vector<1x8x8xbf16>
      tpu.vector_store %arg18[%c0_106, %c0_107, %c0_108], %198 {strides = array<i32>} : memref<4x8x8xbf16, #tpu.memory_space<vmem>>, vector<1x8x8xbf16>,
      %199 = arith.truncf %194 : vector<8x8xf32> to vector<8x8xbf16>
      %c0_109 = arith.constant 0 : index
      %c0_110 = arith.constant 0 : index
      %c0_111 = arith.constant 0 : index
      %200 = vector.load %arg19[%c0_109, %c0_110, %c0_111] : memref<4x8x8xbf16, #tpu.memory_space<vmem>>, vector<1x8x8xbf16>
      %201 = vector.shape_cast %200 : vector<1x8x8xbf16> to vector<8x8xbf16>
      %202 = vector.shape_cast %199 : vector<8x8xbf16> to vector<1x8x8xbf16>
      tpu.vector_store %arg19[%c0_109, %c0_110, %c0_111], %202 {strides = array<i32>} : memref<4x8x8xbf16, #tpu.memory_space<vmem>>, vector<1x8x8xbf16>,
      %c1_112 = arith.constant 1 : index
      %c0_113 = arith.constant 0 : index
      %c0_114 = arith.constant 0 : index
      %203 = vector.load %arg5[%c1_112, %c0_113, %c0_114] : memref<4x32x8xbf16, #tpu.memory_space<vmem>>, vector<1x32x8xbf16>
      %204 = vector.shape_cast %203 : vector<1x32x8xbf16> to vector<32x8xbf16>
      %cst_115 = arith.constant dense<0.000000e+00> : vector<8x8xf32>
      %205 = tpu.matmul %180, %204, %cst_115 {dimension_numbers = #tpu.dot_dimension_numbers<[1], [0], [0], [1], [0, 0, 1, 1], [], []>} : vector<8x32xbf16>, vector<32x8xbf16>, vector<8x8xf32> -> vector<8x8xf32>
      %c1_116 = arith.constant 1 : index
      %c0_117 = arith.constant 0 : index
      %c0_118 = arith.constant 0 : index
      %206 = vector.load %arg6[%c1_116, %c0_117, %c0_118] : memref<4x1x8xf32, #tpu.memory_space<vmem>>, vector<1x1x8xf32>
      %207 = vector.shape_cast %206 : vector<1x1x8xf32> to vector<1x8xf32>
      %208 = vector.broadcast %207 : vector<1x8xf32> to vector<8x8xf32>
      %209 = arith.addf %205, %208 : vector<8x8xf32>
      %c1_119 = arith.constant 1 : index
      %c0_120 = arith.constant 0 : index
      %c0_121 = arith.constant 0 : index
      %210 = vector.load %arg7[%c1_119, %c0_120, %c0_121] : memref<4x32x8xbf16, #tpu.memory_space<vmem>>, vector<1x32x8xbf16>
      %211 = vector.shape_cast %210 : vector<1x32x8xbf16> to vector<32x8xbf16>
      %cst_122 = arith.constant dense<0.000000e+00> : vector<8x8xf32>
      %212 = tpu.matmul %180, %211, %cst_122 {dimension_numbers = #tpu.dot_dimension_numbers<[1], [0], [0], [1], [0, 0, 1, 1], [], []>} : vector<8x32xbf16>, vector<32x8xbf16>, vector<8x8xf32> -> vector<8x8xf32>
      %c1_123 = arith.constant 1 : index
      %c0_124 = arith.constant 0 : index
      %c0_125 = arith.constant 0 : index
      %213 = vector.load %arg8[%c1_123, %c0_124, %c0_125] : memref<4x1x8xf32, #tpu.memory_space<vmem>>, vector<1x1x8xf32>
      %214 = vector.shape_cast %213 : vector<1x1x8xf32> to vector<1x8xf32>
      %215 = vector.broadcast %214 : vector<1x8xf32> to vector<8x8xf32>
      %216 = arith.addf %212, %215 : vector<8x8xf32>
      %217 = arith.truncf %209 : vector<8x8xf32> to vector<8x8xbf16>
      %c1_126 = arith.constant 1 : index
      %c0_127 = arith.constant 0 : index
      %c0_128 = arith.constant 0 : index
      %218 = vector.load %arg18[%c1_126, %c0_127, %c0_128] : memref<4x8x8xbf16, #tpu.memory_space<vmem>>, vector<1x8x8xbf16>
      %219 = vector.shape_cast %218 : vector<1x8x8xbf16> to vector<8x8xbf16>
      %220 = vector.shape_cast %217 : vector<8x8xbf16> to vector<1x8x8xbf16>
      tpu.vector_store %arg18[%c1_126, %c0_127, %c0_128], %220 {strides = array<i32>} : memref<4x8x8xbf16, #tpu.memory_space<vmem>>, vector<1x8x8xbf16>,
      %221 = arith.truncf %216 : vector<8x8xf32> to vector<8x8xbf16>
      %c1_129 = arith.constant 1 : index
      %c0_130 = arith.constant 0 : index
      %c0_131 = arith.constant 0 : index
      %222 = vector.load %arg19[%c1_129, %c0_130, %c0_131] : memref<4x8x8xbf16, #tpu.memory_space<vmem>>, vector<1x8x8xbf16>
      %223 = vector.shape_cast %222 : vector<1x8x8xbf16> to vector<8x8xbf16>
      %224 = vector.shape_cast %221 : vector<8x8xbf16> to vector<1x8x8xbf16>
      tpu.vector_store %arg19[%c1_129, %c0_130, %c0_131], %224 {strides = array<i32>} : memref<4x8x8xbf16, #tpu.memory_space<vmem>>, vector<1x8x8xbf16>,
      %c2_132 = arith.constant 2 : index
      %c0_133 = arith.constant 0 : index
      %c0_134 = arith.constant 0 : index
      %225 = vector.load %arg5[%c2_132, %c0_133, %c0_134] : memref<4x32x8xbf16, #tpu.memory_space<vmem>>, vector<1x32x8xbf16>
      %226 = vector.shape_cast %225 : vector<1x32x8xbf16> to vector<32x8xbf16>
      %cst_135 = arith.constant dense<0.000000e+00> : vector<8x8xf32>
      %227 = tpu.matmul %180, %226, %cst_135 {dimension_numbers = #tpu.dot_dimension_numbers<[1], [0], [0], [1], [0, 0, 1, 1], [], []>} : vector<8x32xbf16>, vector<32x8xbf16>, vector<8x8xf32> -> vector<8x8xf32>
      %c2_136 = arith.constant 2 : index
      %c0_137 = arith.constant 0 : index
      %c0_138 = arith.constant 0 : index
      %228 = vector.load %arg6[%c2_136, %c0_137, %c0_138] : memref<4x1x8xf32, #tpu.memory_space<vmem>>, vector<1x1x8xf32>
      %229 = vector.shape_cast %228 : vector<1x1x8xf32> to vector<1x8xf32>
      %230 = vector.broadcast %229 : vector<1x8xf32> to vector<8x8xf32>
      %231 = arith.addf %227, %230 : vector<8x8xf32>
      %c2_139 = arith.constant 2 : index
      %c0_140 = arith.constant 0 : index
      %c0_141 = arith.constant 0 : index
      %232 = vector.load %arg7[%c2_139, %c0_140, %c0_141] : memref<4x32x8xbf16, #tpu.memory_space<vmem>>, vector<1x32x8xbf16>
      %233 = vector.shape_cast %232 : vector<1x32x8xbf16> to vector<32x8xbf16>
      %cst_142 = arith.constant dense<0.000000e+00> : vector<8x8xf32>
      %234 = tpu.matmul %180, %233, %cst_142 {dimension_numbers = #tpu.dot_dimension_numbers<[1], [0], [0], [1], [0, 0, 1, 1], [], []>} : vector<8x32xbf16>, vector<32x8xbf16>, vector<8x8xf32> -> vector<8x8xf32>
      %c2_143 = arith.constant 2 : index
      %c0_144 = arith.constant 0 : index
      %c0_145 = arith.constant 0 : index
      %235 = vector.load %arg8[%c2_143, %c0_144, %c0_145] : memref<4x1x8xf32, #tpu.memory_space<vmem>>, vector<1x1x8xf32>
      %236 = vector.shape_cast %235 : vector<1x1x8xf32> to vector<1x8xf32>
      %237 = vector.broadcast %236 : vector<1x8xf32> to vector<8x8xf32>
      %238 = arith.addf %234, %237 : vector<8x8xf32>
      %239 = arith.truncf %231 : vector<8x8xf32> to vector<8x8xbf16>
      %c2_146 = arith.constant 2 : index
      %c0_147 = arith.constant 0 : index
      %c0_148 = arith.constant 0 : index
      %240 = vector.load %arg18[%c2_146, %c0_147, %c0_148] : memref<4x8x8xbf16, #tpu.memory_space<vmem>>, vector<1x8x8xbf16>
      %241 = vector.shape_cast %240 : vector<1x8x8xbf16> to vector<8x8xbf16>
      %242 = vector.shape_cast %239 : vector<8x8xbf16> to vector<1x8x8xbf16>
      tpu.vector_store %arg18[%c2_146, %c0_147, %c0_148], %242 {strides = array<i32>} : memref<4x8x8xbf16, #tpu.memory_space<vmem>>, vector<1x8x8xbf16>,
      %243 = arith.truncf %238 : vector<8x8xf32> to vector<8x8xbf16>
      %c2_149 = arith.constant 2 : index
      %c0_150 = arith.constant 0 : index
      %c0_151 = arith.constant 0 : index
      %244 = vector.load %arg19[%c2_149, %c0_150, %c0_151] : memref<4x8x8xbf16, #tpu.memory_space<vmem>>, vector<1x8x8xbf16>
      %245 = vector.shape_cast %244 : vector<1x8x8xbf16> to vector<8x8xbf16>
      %246 = vector.shape_cast %243 : vector<8x8xbf16> to vector<1x8x8xbf16>
      tpu.vector_store %arg19[%c2_149, %c0_150, %c0_151], %246 {strides = array<i32>} : memref<4x8x8xbf16, #tpu.memory_space<vmem>>, vector<1x8x8xbf16>,
      %c3_152 = arith.constant 3 : index
      %c0_153 = arith.constant 0 : index
      %c0_154 = arith.constant 0 : index
      %247 = vector.load %arg5[%c3_152, %c0_153, %c0_154] : memref<4x32x8xbf16, #tpu.memory_space<vmem>>, vector<1x32x8xbf16>
      %248 = vector.shape_cast %247 : vector<1x32x8xbf16> to vector<32x8xbf16>
      %cst_155 = arith.constant dense<0.000000e+00> : vector<8x8xf32>
      %249 = tpu.matmul %180, %248, %cst_155 {dimension_numbers = #tpu.dot_dimension_numbers<[1], [0], [0], [1], [0, 0, 1, 1], [], []>} : vector<8x32xbf16>, vector<32x8xbf16>, vector<8x8xf32> -> vector<8x8xf32>
      %c3_156 = arith.constant 3 : index
      %c0_157 = arith.constant 0 : index
      %c0_158 = arith.constant 0 : index
      %250 = vector.load %arg6[%c3_156, %c0_157, %c0_158] : memref<4x1x8xf32, #tpu.memory_space<vmem>>, vector<1x1x8xf32>
      %251 = vector.shape_cast %250 : vector<1x1x8xf32> to vector<1x8xf32>
      %252 = vector.broadcast %251 : vector<1x8xf32> to vector<8x8xf32>
      %253 = arith.addf %249, %252 : vector<8x8xf32>
      %c3_159 = arith.constant 3 : index
      %c0_160 = arith.constant 0 : index
      %c0_161 = arith.constant 0 : index
      %254 = vector.load %arg7[%c3_159, %c0_160, %c0_161] : memref<4x32x8xbf16, #tpu.memory_space<vmem>>, vector<1x32x8xbf16>
      %255 = vector.shape_cast %254 : vector<1x32x8xbf16> to vector<32x8xbf16>
      %cst_162 = arith.constant dense<0.000000e+00> : vector<8x8xf32>
      %256 = tpu.matmul %180, %255, %cst_162 {dimension_numbers = #tpu.dot_dimension_numbers<[1], [0], [0], [1], [0, 0, 1, 1], [], []>} : vector<8x32xbf16>, vector<32x8xbf16>, vector<8x8xf32> -> vector<8x8xf32>
      %c3_163 = arith.constant 3 : index
      %c0_164 = arith.constant 0 : index
      %c0_165 = arith.constant 0 : index
      %257 = vector.load %arg8[%c3_163, %c0_164, %c0_165] : memref<4x1x8xf32, #tpu.memory_space<vmem>>, vector<1x1x8xf32>
      %258 = vector.shape_cast %257 : vector<1x1x8xf32> to vector<1x8xf32>
      %259 = vector.broadcast %258 : vector<1x8xf32> to vector<8x8xf32>
      %260 = arith.addf %256, %259 : vector<8x8xf32>
      %261 = arith.truncf %253 : vector<8x8xf32> to vector<8x8xbf16>
      %c3_166 = arith.constant 3 : index
      %c0_167 = arith.constant 0 : index
      %c0_168 = arith.constant 0 : index
      %262 = vector.load %arg18[%c3_166, %c0_167, %c0_168] : memref<4x8x8xbf16, #tpu.memory_space<vmem>>, vector<1x8x8xbf16>
      %263 = vector.shape_cast %262 : vector<1x8x8xbf16> to vector<8x8xbf16>
      %264 = vector.shape_cast %261 : vector<8x8xbf16> to vector<1x8x8xbf16>
      tpu.vector_store %arg18[%c3_166, %c0_167, %c0_168], %264 {strides = array<i32>} : memref<4x8x8xbf16, #tpu.memory_space<vmem>>, vector<1x8x8xbf16>,
      %265 = arith.truncf %260 : vector<8x8xf32> to vector<8x8xbf16>
      %c3_169 = arith.constant 3 : index
      %c0_170 = arith.constant 0 : index
      %c0_171 = arith.constant 0 : index
      %266 = vector.load %arg19[%c3_169, %c0_170, %c0_171] : memref<4x8x8xbf16, #tpu.memory_space<vmem>>, vector<1x8x8xbf16>
      %267 = vector.shape_cast %266 : vector<1x8x8xbf16> to vector<8x8xbf16>
      %268 = vector.shape_cast %265 : vector<8x8xbf16> to vector<1x8x8xbf16>
      tpu.vector_store %arg19[%c3_169, %c0_170, %c0_171], %268 {strides = array<i32>} : memref<4x8x8xbf16, #tpu.memory_space<vmem>>, vector<1x8x8xbf16>,
    } else {
    }
    %c8_i32 = arith.constant 8 : i32
    %3 = arith.muli %arg1, %c8_i32 : i32
    %4 = tpu.assume_multiple %3, 8 : i32
    %c0 = arith.constant 0 : index
    %5 = arith.index_cast %4 : i32 to index
    %c0_1 = arith.constant 0 : index
    %6 = vector.load %arg2[%c0, %5, %c0_1] : memref<1x8x32xf32, #tpu.memory_space<vmem>>, vector<1x8x32xf32>
    %7 = vector.shape_cast %6 : vector<1x8x32xf32> to vector<8x32xf32>
    %8 = arith.truncf %7 : vector<8x32xf32> to vector<8x32xbf16>
    %c0_2 = arith.constant 0 : index
    %c0_3 = arith.constant 0 : index
    %9 = vector.load %arg15[%c0_2, %c0_3] : memref<1x32xf32, #tpu.memory_space<vmem>>, vector<1x32xf32>
    %c0_4 = arith.constant 0 : index
    %c0_5 = arith.constant 0 : index
    %10 = vector.load %arg16[%c0_4, %c0_5] : memref<1x32xf32, #tpu.memory_space<vmem>>, vector<1x32xf32>
    %c0_6 = arith.constant 0 : index
    %c0_7 = arith.constant 0 : index
    %c0_8 = arith.constant 0 : index
    %11 = vector.load %arg3[%c0_6, %c0_7, %c0_8] : memref<4x32x8xbf16, #tpu.memory_space<vmem>>, vector<1x32x8xbf16>
    %12 = vector.shape_cast %11 : vector<1x32x8xbf16> to vector<32x8xbf16>
    %cst = arith.constant dense<0.000000e+00> : vector<8x8xf32>
    %13 = tpu.matmul %8, %12, %cst {dimension_numbers = #tpu.dot_dimension_numbers<[1], [0], [0], [1], [0, 0, 1, 1], [], []>} : vector<8x32xbf16>, vector<32x8xbf16>, vector<8x8xf32> -> vector<8x8xf32>
    %c0_9 = arith.constant 0 : index
    %c0_10 = arith.constant 0 : index
    %c0_11 = arith.constant 0 : index
    %14 = vector.load %arg4[%c0_9, %c0_10, %c0_11] : memref<4x1x8xf32, #tpu.memory_space<vmem>>, vector<1x1x8xf32>
    %15 = vector.shape_cast %14 : vector<1x1x8xf32> to vector<1x8xf32>
    %16 = vector.broadcast %15 : vector<1x8xf32> to vector<8x8xf32>
    %17 = arith.addf %13, %16 : vector<8x8xf32>
    %18 = arith.truncf %17 : vector<8x8xf32> to vector<8x8xbf16>
    %c1 = arith.constant 1 : index
    %c0_12 = arith.constant 0 : index
    %c0_13 = arith.constant 0 : index
    %19 = vector.load %arg3[%c1, %c0_12, %c0_13] : memref<4x32x8xbf16, #tpu.memory_space<vmem>>, vector<1x32x8xbf16>
    %20 = vector.shape_cast %19 : vector<1x32x8xbf16> to vector<32x8xbf16>
    %cst_14 = arith.constant dense<0.000000e+00> : vector<8x8xf32>
    %21 = tpu.matmul %8, %20, %cst_14 {dimension_numbers = #tpu.dot_dimension_numbers<[1], [0], [0], [1], [0, 0, 1, 1], [], []>} : vector<8x32xbf16>, vector<32x8xbf16>, vector<8x8xf32> -> vector<8x8xf32>
    %c1_15 = arith.constant 1 : index
    %c0_16 = arith.constant 0 : index
    %c0_17 = arith.constant 0 : index
    %22 = vector.load %arg4[%c1_15, %c0_16, %c0_17] : memref<4x1x8xf32, #tpu.memory_space<vmem>>, vector<1x1x8xf32>
    %23 = vector.shape_cast %22 : vector<1x1x8xf32> to vector<1x8xf32>
    %24 = vector.broadcast %23 : vector<1x8xf32> to vector<8x8xf32>
    %25 = arith.addf %21, %24 : vector<8x8xf32>
    %26 = arith.truncf %25 : vector<8x8xf32> to vector<8x8xbf16>
    %c2 = arith.constant 2 : index
    %c0_18 = arith.constant 0 : index
    %c0_19 = arith.constant 0 : index
    %27 = vector.load %arg3[%c2, %c0_18, %c0_19] : memref<4x32x8xbf16, #tpu.memory_space<vmem>>, vector<1x32x8xbf16>
    %28 = vector.shape_cast %27 : vector<1x32x8xbf16> to vector<32x8xbf16>
    %cst_20 = arith.constant dense<0.000000e+00> : vector<8x8xf32>
    %29 = tpu.matmul %8, %28, %cst_20 {dimension_numbers = #tpu.dot_dimension_numbers<[1], [0], [0], [1], [0, 0, 1, 1], [], []>} : vector<8x32xbf16>, vector<32x8xbf16>, vector<8x8xf32> -> vector<8x8xf32>
    %c2_21 = arith.constant 2 : index
    %c0_22 = arith.constant 0 : index
    %c0_23 = arith.constant 0 : index
    %30 = vector.load %arg4[%c2_21, %c0_22, %c0_23] : memref<4x1x8xf32, #tpu.memory_space<vmem>>, vector<1x1x8xf32>
    %31 = vector.shape_cast %30 : vector<1x1x8xf32> to vector<1x8xf32>
    %32 = vector.broadcast %31 : vector<1x8xf32> to vector<8x8xf32>
    %33 = arith.addf %29, %32 : vector<8x8xf32>
    %34 = arith.truncf %33 : vector<8x8xf32> to vector<8x8xbf16>
    %c3 = arith.constant 3 : index
    %c0_24 = arith.constant 0 : index
    %c0_25 = arith.constant 0 : index
    %35 = vector.load %arg3[%c3, %c0_24, %c0_25] : memref<4x32x8xbf16, #tpu.memory_space<vmem>>, vector<1x32x8xbf16>
    %36 = vector.shape_cast %35 : vector<1x32x8xbf16> to vector<32x8xbf16>
    %cst_26 = arith.constant dense<0.000000e+00> : vector<8x8xf32>
    %37 = tpu.matmul %8, %36, %cst_26 {dimension_numbers = #tpu.dot_dimension_numbers<[1], [0], [0], [1], [0, 0, 1, 1], [], []>} : vector<8x32xbf16>, vector<32x8xbf16>, vector<8x8xf32> -> vector<8x8xf32>
    %c3_27 = arith.constant 3 : index
    %c0_28 = arith.constant 0 : index
    %c0_29 = arith.constant 0 : index
    %38 = vector.load %arg4[%c3_27, %c0_28, %c0_29] : memref<4x1x8xf32, #tpu.memory_space<vmem>>, vector<1x1x8xf32>
    %39 = vector.shape_cast %38 : vector<1x1x8xf32> to vector<1x8xf32>
    %40 = vector.broadcast %39 : vector<1x8xf32> to vector<8x8xf32>
    %41 = arith.addf %37, %40 : vector<8x8xf32>
    %42 = arith.truncf %41 : vector<8x8xf32> to vector<8x8xbf16>
    %43 = vector.shape_cast %18 : vector<8x8xbf16> to vector<1x8x8xbf16>
    %44 = vector.shape_cast %26 : vector<8x8xbf16> to vector<1x8x8xbf16>
    %45 = vector.shape_cast %34 : vector<8x8xbf16> to vector<1x8x8xbf16>
    %46 = vector.shape_cast %42 : vector<8x8xbf16> to vector<1x8x8xbf16>
    %47 = tpu.concatenate %43, %44, %45, %46 in 0 : vector<1x8x8xbf16>, vector<1x8x8xbf16>, vector<1x8x8xbf16>, vector<1x8x8xbf16> -> vector<4x8x8xbf16>
    %cst_30 = arith.constant 0xFF800000 : f32
    %48 = vector.broadcast %cst_30 : f32 to vector<4x8x1xf32>
    %cst_31 = arith.constant 0.000000e+00 : f32
    %49 = vector.broadcast %cst_31 : f32 to vector<4x8x1xf32>
    %cst_32 = arith.constant 0.000000e+00 : f32
    %50 = vector.broadcast %cst_32 : f32 to vector<4x8x8xf32>
    %c0_i32_33 = arith.constant 0 : i32
    %c8_i32_34 = arith.constant 8 : i32
    %51 = arith.muli %c0_i32_33, %c8_i32_34 : i32
    %52 = tpu.assume_multiple %51, 8 : i32
    %c0_35 = arith.constant 0 : index
    %53 = arith.index_cast %52 : i32 to index
    %c0_36 = arith.constant 0 : index
    %54 = vector.load %arg18[%c0_35, %53, %c0_36] : memref<4x8x8xbf16, #tpu.memory_space<vmem>>, vector<4x8x8xbf16>
    %c0_37 = arith.constant 0 : index
    %55 = arith.index_cast %52 : i32 to index
    %c0_38 = arith.constant 0 : index
    %56 = vector.load %arg19[%c0_37, %55, %c0_38] : memref<4x8x8xbf16, #tpu.memory_space<vmem>>, vector<4x8x8xbf16>
    "tpu.trace_start"() <{level = 10 : i32, message = "hqd,hkd->hqk"}> : () -> ()
    %cst_39 = arith.constant dense<0.000000e+00> : vector<4x8x8xf32>
    %57 = tpu.matmul %47, %54, %cst_39 {dimension_numbers = #tpu.dot_dimension_numbers<[2], [2], [1], [1], [0, 0, 0, 1, 1, 1], [0], [0]>} : vector<4x8x8xbf16>, vector<4x8x8xbf16>, vector<4x8x8xf32> -> vector<4x8x8xf32>
    "tpu.trace_stop"() : () -> ()
    %cst_40 = arith.constant dense<0xFF800000> : vector<4x8xf32>
    %58 = vector.multi_reduction <maximumf>, %57, %cst_40 [2] : vector<4x8x8xf32> to vector<4x8xf32>
    %59 = vector.shape_cast %58 : vector<4x8xf32> to vector<4x8x1xf32>
    %60 = arith.maximumf %48, %59 : vector<4x8x1xf32>
    %61 = arith.subf %48, %60 : vector<4x8x1xf32>
    %62 = math.exp %61 : vector<4x8x1xf32>
    %63 = vector.broadcast %60 : vector<4x8x1xf32> to vector<4x8x8xf32>
    %64 = arith.subf %57, %63 : vector<4x8x8xf32>
    %65 = math.exp %64 : vector<4x8x8xf32>
    %66 = arith.mulf %62, %49 : vector<4x8x1xf32>
    %cst_41 = arith.constant dense<0.000000e+00> : vector<4x8xf32>
    %67 = vector.multi_reduction <add>, %65, %cst_41 [2] : vector<4x8x8xf32> to vector<4x8xf32>
    %68 = vector.shape_cast %67 : vector<4x8xf32> to vector<4x8x1xf32>
    %69 = arith.addf %66, %68 : vector<4x8x1xf32>
    %70 = vector.broadcast %62 : vector<4x8x1xf32> to vector<4x8x8xf32>
    %71 = arith.mulf %70, %50 : vector<4x8x8xf32>
    %72 = arith.truncf %65 : vector<4x8x8xf32> to vector<4x8x8xbf16>
    "tpu.trace_start"() <{level = 10 : i32, message = "hqk,hkd->hqd"}> : () -> ()
    %cst_42 = arith.constant dense<0.000000e+00> : vector<4x8x8xf32>
    %73 = tpu.matmul %72, %56, %cst_42 {dimension_numbers = #tpu.dot_dimension_numbers<[2], [1], [1], [2], [0, 0, 0, 1, 1, 2], [0], [0]>} : vector<4x8x8xbf16>, vector<4x8x8xbf16>, vector<4x8x8xf32> -> vector<4x8x8xf32>
    "tpu.trace_stop"() : () -> ()
    %74 = arith.addf %71, %73 : vector<4x8x8xf32>
    %c1_i32 = arith.constant 1 : i32
    %75 = tpu.reciprocal %69 {approx = true} : vector<4x8x1xf32> -> vector<4x8x1xf32>
    %76 = vector.broadcast %75 : vector<4x8x1xf32> to vector<4x8x8xf32>
    %77 = arith.mulf %74, %76 : vector<4x8x8xf32>
    %78 = arith.truncf %77 : vector<4x8x8xf32> to vector<4x8x8xbf16>
    %cst_43 = arith.constant 0.000000e+00 : f32
    %79 = vector.broadcast %cst_43 : f32 to vector<8x32xf32>
    %80 = vector.extract_strided_slice %78 {offsets = [0, 0, 0], sizes = [1, 8, 8], strides = [1, 1, 1]} : vector<4x8x8xbf16> to vector<1x8x8xbf16>
    %81 = vector.shape_cast %80 : vector<1x8x8xbf16> to vector<8x8xbf16>
    %c0_44 = arith.constant 0 : index
    %c0_45 = arith.constant 0 : index
    %c0_46 = arith.constant 0 : index
    %82 = vector.load %arg9[%c0_44, %c0_45, %c0_46] : memref<4x8x32xbf16, #tpu.memory_space<vmem>>, vector<1x8x32xbf16>
    %83 = vector.shape_cast %82 : vector<1x8x32xbf16> to vector<8x32xbf16>
    %cst_47 = arith.constant dense<0.000000e+00> : vector<8x32xf32>
    %84 = tpu.matmul %81, %83, %cst_47 {dimension_numbers = #tpu.dot_dimension_numbers<[1], [0], [0], [1], [0, 0, 1, 1], [], []>} : vector<8x8xbf16>, vector<8x32xbf16>, vector<8x32xf32> -> vector<8x32xf32>
    %85 = arith.addf %79, %84 : vector<8x32xf32>
    %86 = vector.extract_strided_slice %78 {offsets = [1, 0, 0], sizes = [1, 8, 8], strides = [1, 1, 1]} : vector<4x8x8xbf16> to vector<1x8x8xbf16>
    %87 = vector.shape_cast %86 : vector<1x8x8xbf16> to vector<8x8xbf16>
    %c1_48 = arith.constant 1 : index
    %c0_49 = arith.constant 0 : index
    %c0_50 = arith.constant 0 : index
    %88 = vector.load %arg9[%c1_48, %c0_49, %c0_50] : memref<4x8x32xbf16, #tpu.memory_space<vmem>>, vector<1x8x32xbf16>
    %89 = vector.shape_cast %88 : vector<1x8x32xbf16> to vector<8x32xbf16>
    %cst_51 = arith.constant dense<0.000000e+00> : vector<8x32xf32>
    %90 = tpu.matmul %87, %89, %cst_51 {dimension_numbers = #tpu.dot_dimension_numbers<[1], [0], [0], [1], [0, 0, 1, 1], [], []>} : vector<8x8xbf16>, vector<8x32xbf16>, vector<8x32xf32> -> vector<8x32xf32>
    %91 = arith.addf %85, %90 : vector<8x32xf32>
    %92 = vector.extract_strided_slice %78 {offsets = [2, 0, 0], sizes = [1, 8, 8], strides = [1, 1, 1]} : vector<4x8x8xbf16> to vector<1x8x8xbf16>
    %93 = vector.shape_cast %92 : vector<1x8x8xbf16> to vector<8x8xbf16>
    %c2_52 = arith.constant 2 : index
    %c0_53 = arith.constant 0 : index
    %c0_54 = arith.constant 0 : index
    %94 = vector.load %arg9[%c2_52, %c0_53, %c0_54] : memref<4x8x32xbf16, #tpu.memory_space<vmem>>, vector<1x8x32xbf16>
    %95 = vector.shape_cast %94 : vector<1x8x32xbf16> to vector<8x32xbf16>
    %cst_55 = arith.constant dense<0.000000e+00> : vector<8x32xf32>
    %96 = tpu.matmul %93, %95, %cst_55 {dimension_numbers = #tpu.dot_dimension_numbers<[1], [0], [0], [1], [0, 0, 1, 1], [], []>} : vector<8x8xbf16>, vector<8x32xbf16>, vector<8x32xf32> -> vector<8x32xf32>
    %97 = arith.addf %91, %96 : vector<8x32xf32>
    %98 = vector.extract_strided_slice %78 {offsets = [3, 0, 0], sizes = [1, 8, 8], strides = [1, 1, 1]} : vector<4x8x8xbf16> to vector<1x8x8xbf16>
    %99 = vector.shape_cast %98 : vector<1x8x8xbf16> to vector<8x8xbf16>
    %c3_56 = arith.constant 3 : index
    %c0_57 = arith.constant 0 : index
    %c0_58 = arith.constant 0 : index
    %100 = vector.load %arg9[%c3_56, %c0_57, %c0_58] : memref<4x8x32xbf16, #tpu.memory_space<vmem>>, vector<1x8x32xbf16>
    %101 = vector.shape_cast %100 : vector<1x8x32xbf16> to vector<8x32xbf16>
    %cst_59 = arith.constant dense<0.000000e+00> : vector<8x32xf32>
    %102 = tpu.matmul %99, %101, %cst_59 {dimension_numbers = #tpu.dot_dimension_numbers<[1], [0], [0], [1], [0, 0, 1, 1], [], []>} : vector<8x8xbf16>, vector<8x32xbf16>, vector<8x32xf32> -> vector<8x32xf32>
    %103 = arith.addf %97, %102 : vector<8x32xf32>
    %c0_60 = arith.constant 0 : index
    %c0_61 = arith.constant 0 : index
    %104 = vector.load %arg10[%c0_60, %c0_61] : memref<1x32xf32, #tpu.memory_space<vmem>>, vector<1x32xf32>
    %105 = vector.broadcast %104 : vector<1x32xf32> to vector<8x32xf32>
    %106 = arith.addf %103, %105 : vector<8x32xf32>
    %107 = arith.addf %106, %7 : vector<8x32xf32>
    %cst_62 = arith.constant dense<0.000000e+00> : vector<8xf32>
    %108 = vector.multi_reduction <add>, %107, %cst_62 [1] : vector<8x32xf32> to vector<8xf32>
    %109 = vector.shape_cast %108 : vector<8xf32> to vector<8x1xf32>
    %cst_63 = arith.constant 3.200000e+01 : f32
    %110 = vector.broadcast %cst_63 : f32 to vector<8x1xf32>
    %111 = arith.divf %109, %110 : vector<8x1xf32>
    %112 = vector.broadcast %111 : vector<8x1xf32> to vector<8x32xf32>
    %113 = arith.subf %107, %112 : vector<8x32xf32>
    %114 = arith.mulf %113, %113 : vector<8x32xf32>
    %cst_64 = arith.constant dense<0.000000e+00> : vector<8xf32>
    %115 = vector.multi_reduction <add>, %114, %cst_64 [1] : vector<8x32xf32> to vector<8xf32>
    %116 = vector.shape_cast %115 : vector<8xf32> to vector<8x1xf32>
    %cst_65 = arith.constant 3.200000e+01 : f32
    %117 = vector.broadcast %cst_65 : f32 to vector<8x1xf32>
    %118 = arith.divf %116, %117 : vector<8x1xf32>
    %119 = vector.broadcast %111 : vector<8x1xf32> to vector<8x32xf32>
    %120 = arith.subf %107, %119 : vector<8x32xf32>
    %cst_66 = arith.constant 9.99999997E-7 : f32
    %121 = vector.broadcast %cst_66 : f32 to vector<8x1xf32>
    %122 = arith.addf %118, %121 : vector<8x1xf32>
    %123 = math.rsqrt %122 : vector<8x1xf32>
    %124 = vector.broadcast %123 : vector<8x1xf32> to vector<8x32xf32>
    %125 = arith.mulf %120, %124 : vector<8x32xf32>
    %126 = vector.broadcast %9 : vector<1x32xf32> to vector<8x32xf32>
    %127 = arith.mulf %125, %126 : vector<8x32xf32>
    %128 = vector.broadcast %10 : vector<1x32xf32> to vector<8x32xf32>
    %129 = arith.addf %127, %128 : vector<8x32xf32>
    %130 = arith.truncf %129 : vector<8x32xf32> to vector<8x32xbf16>
    %cst_67 = arith.constant 0.000000e+00 : f32
    %131 = vector.broadcast %cst_67 : f32 to vector<8x32xf32>
    %c0_i32_68 = arith.constant 0 : i32
    %132 = arith.index_cast %c0_i32_68 : i32 to index
    %c0_69 = arith.constant 0 : index
    %c0_70 = arith.constant 0 : index
    %133 = vector.load %arg11[%132, %c0_69, %c0_70] : memref<1x32x64xbf16, #tpu.memory_space<vmem>>, vector<1x32x64xbf16>
    %134 = vector.shape_cast %133 : vector<1x32x64xbf16> to vector<32x64xbf16>
    %cst_71 = arith.constant dense<0.000000e+00> : vector<8x64xf32>
    %135 = tpu.matmul %130, %134, %cst_71 {dimension_numbers = #tpu.dot_dimension_numbers<[1], [0], [0], [1], [0, 0, 1, 1], [], []>} : vector<8x32xbf16>, vector<32x64xbf16>, vector<8x64xf32> -> vector<8x64xf32>
    %136 = arith.index_cast %c0_i32_68 : i32 to index
    %c0_72 = arith.constant 0 : index
    %c0_73 = arith.constant 0 : index
    %137 = vector.load %arg12[%136, %c0_72, %c0_73] : memref<1x1x64xf32, #tpu.memory_space<vmem>>, vector<1x1x64xf32>
    %138 = vector.shape_cast %137 : vector<1x1x64xf32> to vector<1x64xf32>
    %139 = vector.broadcast %138 : vector<1x64xf32> to vector<8x64xf32>
    %140 = arith.addf %135, %139 : vector<8x64xf32>
    %cst_74 = arith.constant 0.000000e+00 : f32
    %141 = vector.broadcast %cst_74 : f32 to vector<8x64xf32>
    %142 = arith.maximumf %140, %141 : vector<8x64xf32>
    %143 = arith.truncf %142 : vector<8x64xf32> to vector<8x64xbf16>
    %144 = arith.index_cast %c0_i32_68 : i32 to index
    %c0_75 = arith.constant 0 : index
    %c0_76 = arith.constant 0 : index
    %145 = vector.load %arg13[%144, %c0_75, %c0_76] : memref<1x64x32xbf16, #tpu.memory_space<vmem>>, vector<1x64x32xbf16>
    %146 = vector.shape_cast %145 : vector<1x64x32xbf16> to vector<64x32xbf16>
    %cst_77 = arith.constant dense<0.000000e+00> : vector<8x32xf32>
    %147 = tpu.matmul %143, %146, %cst_77 {dimension_numbers = #tpu.dot_dimension_numbers<[1], [0], [0], [1], [0, 0, 1, 1], [], []>} : vector<8x64xbf16>, vector<64x32xbf16>, vector<8x32xf32> -> vector<8x32xf32>
    %148 = arith.addf %131, %147 : vector<8x32xf32>
    %c1_i32_78 = arith.constant 1 : i32
    %c0_79 = arith.constant 0 : index
    %c0_80 = arith.constant 0 : index
    %149 = vector.load %arg14[%c0_79, %c0_80] : memref<1x32xf32, #tpu.memory_space<vmem>>, vector<1x32xf32>
    %150 = vector.broadcast %149 : vector<1x32xf32> to vector<8x32xf32>
    %151 = arith.addf %148, %150 : vector<8x32xf32>
    %152 = arith.addf %151, %129 : vector<8x32xf32>
    %cst_81 = arith.constant dense<0.000000e+00> : vector<8xf32>
    %153 = vector.multi_reduction <add>, %152, %cst_81 [1] : vector<8x32xf32> to vector<8xf32>
    %154 = vector.shape_cast %153 : vector<8xf32> to vector<8x1xf32>
    %cst_82 = arith.constant 3.200000e+01 : f32
    %155 = vector.broadcast %cst_82 : f32 to vector<8x1xf32>
    %156 = arith.divf %154, %155 : vector<8x1xf32>
    %157 = vector.broadcast %156 : vector<8x1xf32> to vector<8x32xf32>
    %158 = arith.subf %152, %157 : vector<8x32xf32>
    %159 = arith.mulf %158, %158 : vector<8x32xf32>
    %cst_83 = arith.constant dense<0.000000e+00> : vector<8xf32>
    %160 = vector.multi_reduction <add>, %159, %cst_83 [1] : vector<8x32xf32> to vector<8xf32>
    %161 = vector.shape_cast %160 : vector<8xf32> to vector<8x1xf32>
    %cst_84 = arith.constant 3.200000e+01 : f32
    %162 = vector.broadcast %cst_84 : f32 to vector<8x1xf32>
    %163 = arith.divf %161, %162 : vector<8x1xf32>
    %164 = vector.broadcast %156 : vector<8x1xf32> to vector<8x32xf32>
    %165 = arith.subf %152, %164 : vector<8x32xf32>
    %cst_85 = arith.constant 9.99999997E-7 : f32
    %166 = vector.broadcast %cst_85 : f32 to vector<8x1xf32>
    %167 = arith.addf %163, %166 : vector<8x1xf32>
    %168 = math.rsqrt %167 : vector<8x1xf32>
    %169 = vector.broadcast %168 : vector<8x1xf32> to vector<8x32xf32>
    %170 = arith.mulf %165, %169 : vector<8x32xf32>
    %171 = vector.broadcast %9 : vector<1x32xf32> to vector<8x32xf32>
    %172 = arith.mulf %170, %171 : vector<8x32xf32>
    %173 = vector.broadcast %10 : vector<1x32xf32> to vector<8x32xf32>
    %174 = arith.addf %172, %173 : vector<8x32xf32>
    %c0_86 = arith.constant 0 : index
    %c0_87 = arith.constant 0 : index
    %c0_88 = arith.constant 0 : index
    %175 = vector.load %arg17[%c0_86, %c0_87, %c0_88] : memref<1x8x32xf32, #tpu.memory_space<vmem>>, vector<1x8x32xf32>
    %176 = vector.shape_cast %175 : vector<1x8x32xf32> to vector<8x32xf32>
    %177 = vector.shape_cast %174 : vector<8x32xf32> to vector<1x8x32xf32>
    tpu.vector_store %arg17[%c0_86, %c0_87, %c0_88], %177 {strides = array<i32>} : memref<1x8x32xf32, #tpu.memory_space<vmem>>, vector<1x8x32xf32>,
    return
  }
  func.func @transform_0(%arg0: i32, %arg1: i32) -> (i32, i32, i32) {
    %c0_i32 = arith.constant 0 : i32
    %c0_i32_0 = arith.constant 0 : i32
    %c0_i32_1 = arith.constant 0 : i32
    return %arg0, %c0_i32, %c0_i32_0 : i32, i32, i32
  }
  func.func @transform_1(%arg0: i32, %arg1: i32) -> (i32, i32, i32) {
    %c0_i32 = arith.constant 0 : i32
    %c0_i32_0 = arith.constant 0 : i32
    %c0_i32_1 = arith.constant 0 : i32
    %c0_i32_2 = arith.constant 0 : i32
    return %c0_i32, %c0_i32_0, %c0_i32_1 : i32, i32, i32
  }
  func.func @transform_2(%arg0: i32, %arg1: i32) -> (i32, i32, i32) {
    %c0_i32 = arith.constant 0 : i32
    %c0_i32_0 = arith.constant 0 : i32
    %c0_i32_1 = arith.constant 0 : i32
    %c0_i32_2 = arith.constant 0 : i32
    return %c0_i32, %c0_i32_0, %c0_i32_1 : i32, i32, i32
  }
  func.func @transform_3(%arg0: i32, %arg1: i32) -> (i32, i32, i32) {
    %c0_i32 = arith.constant 0 : i32
    %c0_i32_0 = arith.constant 0 : i32
    %c0_i32_1 = arith.constant 0 : i32
    %c0_i32_2 = arith.constant 0 : i32
    return %c0_i32, %c0_i32_0, %c0_i32_1 : i32, i32, i32
  }
  func.func @transform_4(%arg0: i32, %arg1: i32) -> (i32, i32, i32) {
    %c0_i32 = arith.constant 0 : i32
    %c0_i32_0 = arith.constant 0 : i32
    %c0_i32_1 = arith.constant 0 : i32
    %c0_i32_2 = arith.constant 0 : i32
    return %c0_i32, %c0_i32_0, %c0_i32_1 : i32, i32, i32
  }
  func.func @transform_5(%arg0: i32, %arg1: i32) -> (i32, i32, i32) {
    %c0_i32 = arith.constant 0 : i32
    %c0_i32_0 = arith.constant 0 : i32
    %c0_i32_1 = arith.constant 0 : i32
    %c0_i32_2 = arith.constant 0 : i32
    return %c0_i32, %c0_i32_0, %c0_i32_1 : i32, i32, i32
  }
  func.func @transform_6(%arg0: i32, %arg1: i32) -> (i32, i32, i32) {
    %c0_i32 = arith.constant 0 : i32
    %c0_i32_0 = arith.constant 0 : i32
    %c0_i32_1 = arith.constant 0 : i32
    %c0_i32_2 = arith.constant 0 : i32
    return %c0_i32, %c0_i32_0, %c0_i32_1 : i32, i32, i32
  }
  func.func @transform_7(%arg0: i32, %arg1: i32) -> (i32, i32, i32) {
    %c0_i32 = arith.constant 0 : i32
    %c0_i32_0 = arith.constant 0 : i32
    %c0_i32_1 = arith.constant 0 : i32
    %c0_i32_2 = arith.constant 0 : i32
    return %c0_i32, %c0_i32_0, %c0_i32_1 : i32, i32, i32
  }
  func.func @transform_8(%arg0: i32, %arg1: i32) -> (i32, i32) {
    %c0_i32 = arith.constant 0 : i32
    %c0_i32_0 = arith.constant 0 : i32
    %c0_i32_1 = arith.constant 0 : i32
    return %c0_i32, %c0_i32_0 : i32, i32
  }
  func.func @transform_9(%arg0: i32, %arg1: i32) -> (i32, i32, i32) {
    %c0_i32 = arith.constant 0 : i32
    %c0_i32_0 = arith.constant 0 : i32
    %c0_i32_1 = arith.constant 0 : i32
    %c0_i32_2 = arith.constant 0 : i32
    return %c0_i32, %c0_i32_0, %c0_i32_1 : i32, i32, i32
  }
  func.func @transform_10(%arg0: i32, %arg1: i32) -> (i32, i32, i32) {
    %c0_i32 = arith.constant 0 : i32
    %c0_i32_0 = arith.constant 0 : i32
    %c0_i32_1 = arith.constant 0 : i32
    %c0_i32_2 = arith.constant 0 : i32
    return %c0_i32, %c0_i32_0, %c0_i32_1 : i32, i32, i32
  }
  func.func @transform_11(%arg0: i32, %arg1: i32) -> (i32, i32, i32) {
    %c0_i32 = arith.constant 0 : i32
    %c0_i32_0 = arith.constant 0 : i32
    %c0_i32_1 = arith.constant 0 : i32
    %c0_i32_2 = arith.constant 0 : i32
    return %c0_i32, %c0_i32_0, %c0_i32_1 : i32, i32, i32
  }
  func.func @transform_12(%arg0: i32, %arg1: i32) -> (i32, i32) {
    %c0_i32 = arith.constant 0 : i32
    %c0_i32_0 = arith.constant 0 : i32
    %c0_i32_1 = arith.constant 0 : i32
    return %c0_i32, %c0_i32_0 : i32, i32
  }
  func.func @transform_13(%arg0: i32, %arg1: i32) -> (i32, i32) {
    %c0_i32 = arith.constant 0 : i32
    %c0_i32_0 = arith.constant 0 : i32
    %c0_i32_1 = arith.constant 0 : i32
    return %c0_i32, %c0_i32_0 : i32, i32
  }
  func.func @transform_14(%arg0: i32, %arg1: i32) -> (i32, i32) {
    %c0_i32 = arith.constant 0 : i32
    %c0_i32_0 = arith.constant 0 : i32
    %c0_i32_1 = arith.constant 0 : i32
    return %c0_i32, %c0_i32_0 : i32, i32
  }
  func.func @transform_15(%arg0: i32, %arg1: i32) -> (i32, i32, i32) {
    %c0_i32 = arith.constant 0 : i32
    %c0_i32_0 = arith.constant 0 : i32
    return %arg0, %arg1, %c0_i32 : i32, i32, i32
  }
}

module attributes {stable_mosaic.version = 11 : i64} {
  func.func @encoder_block_kernel(%arg0: i32, %arg1: i32, %arg2: memref<1x8x32xf32, #tpu.memory_space<vmem>>, %arg3: memref<4x32x8xbf16, #tpu.memory_space<vmem>>, %arg4: memref<4x1x8xf32, #tpu.memory_space<vmem>>, %arg5: memref<4x32x8xbf16, #tpu.memory_space<vmem>>, %arg6: memref<4x1x8xf32, #tpu.memory_space<vmem>>, %arg7: memref<4x32x8xbf16, #tpu.memory_space<vmem>>, %arg8: memref<4x1x8xf32, #tpu.memory_space<vmem>>, %arg9: memref<4x8x32xbf16, #tpu.memory_space<vmem>>, %arg10: memref<1x32xf32, #tpu.memory_space<vmem>>, %arg11: memref<1x32x64xbf16, #tpu.memory_space<vmem>>, %arg12: memref<1x1x64xf32, #tpu.memory_space<vmem>>, %arg13: memref<1x64x32xbf16, #tpu.memory_space<vmem>>, %arg14: memref<1x32xf32, #tpu.memory_space<vmem>>, %arg15: memref<1x32xf32, #tpu.memory_space<vmem>>, %arg16: memref<1x32xf32, #tpu.memory_space<vmem>>, %arg17: memref<1x8x32xf32, #tpu.memory_space<vmem>>, %arg18: memref<4x8x8xbf16, #tpu.memory_space<vmem>>, %arg19: memref<4x8x8xbf16, #tpu.memory_space<vmem>>) attributes {dimension_semantics = [#tpu.dimension_semantics<parallel>, #tpu.dimension_semantics<arbitrary>], iteration_bounds = array<i64: 2, 1>, scalar_prefetch = 0 : i64, scratch_operands = 2 : i64, tpu.core_type = #tpu.core_type<tc>, window_params = [{transform_indices = @transform_0, window_bounds = array<i64: 1, 8, 32>}, {pipeline_mode = #tpu.pipeline_mode<synchronous>, transform_indices = @transform_1, window_bounds = array<i64: 4, 32, 8>}, {pipeline_mode = #tpu.pipeline_mode<synchronous>, transform_indices = @transform_2, window_bounds = array<i64: 4, 1, 8>}, {pipeline_mode = #tpu.pipeline_mode<synchronous>, transform_indices = @transform_3, window_bounds = array<i64: 4, 32, 8>}, {pipeline_mode = #tpu.pipeline_mode<synchronous>, transform_indices = @transform_4, window_bounds = array<i64: 4, 1, 8>}, {pipeline_mode = #tpu.pipeline_mode<synchronous>, transform_indices = @transform_5, window_bounds = array<i64: 4, 32, 8>}, {pipeline_mode = #tpu.pipeline_mode<synchronous>, transform_indices = @transform_6, window_bounds = array<i64: 4, 1, 8>}, {pipeline_mode = #tpu.pipeline_mode<synchronous>, transform_indices = @transform_7, window_bounds = array<i64: 4, 8, 32>}, {pipeline_mode = #tpu.pipeline_mode<synchronous>, transform_indices = @transform_8, window_bounds = array<i64: 1, 32>}, {pipeline_mode = #tpu.pipeline_mode<synchronous>, transform_indices = @transform_9, window_bounds = array<i64: 1, 32, 64>}, {pipeline_mode = #tpu.pipeline_mode<synchronous>, transform_indices = @transform_10, window_bounds = array<i64: 1, 1, 64>}, {pipeline_mode = #tpu.pipeline_mode<synchronous>, transform_indices = @transform_11, window_bounds = array<i64: 1, 64, 32>}, {pipeline_mode = #tpu.pipeline_mode<synchronous>, transform_indices = @transform_12, window_bounds = array<i64: 1, 32>}, {pipeline_mode = #tpu.pipeline_mode<synchronous>, transform_indices = @transform_13, window_bounds = array<i64: 1, 32>}, {pipeline_mode = #tpu.pipeline_mode<synchronous>, transform_indices = @transform_14, window_bounds = array<i64: 1, 32>}, {transform_indices = @transform_15, window_bounds = array<i64: 1, 8, 32>}]} {
    %c0_i32 = arith.constant 0 : i32
    %0 = arith.cmpi eq, %arg1, %c0_i32 : i32
    %1 = arith.extui %0 : i1 to i32
    %c0_i32_0 = arith.constant 0 : i32
    %2 = arith.cmpi ne, %1, %c0_i32_0 : i32
    scf.if %2 {
      %c0_89 = arith.constant 0 : index
      %c0_90 = arith.constant 0 : index
      %c0_91 = arith.constant 0 : index
      %178 = vector.load %arg2[%c0_89, %c0_90, %c0_91] : memref<1x8x32xf32, #tpu.memory_space<vmem>>, vector<1x8x32xf32>
      %179 = vector.shape_cast %178 : vector<1x8x32xf32> to vector<8x32xf32>
      %180 = arith.truncf %179 : vector<8x32xf32> to vector<8x32xbf16>
      %c0_92 = arith.constant 0 : index
      %c0_93 = arith.constant 0 : index
      %c0_94 = arith.constant 0 : index
      %181 = vector.load %arg5[%c0_92, %c0_93, %c0_94] : memref<4x32x8xbf16, #tpu.memory_space<vmem>>, vector<1x32x8xbf16>
      %182 = vector.shape_cast %181 : vector<1x32x8xbf16> to vector<32x8xbf16>
      %cst_95 = arith.constant dense<0.000000e+00> : vector<8x8xf32>
      %183 = tpu.matmul %180, %182, %cst_95 {dimension_numbers = #tpu.dot_dimension_numbers<[1], [0], [0], [1], [0, 0, 1, 1], [], []>} : vector<8x32xbf16>, vector<32x8xbf16>, vector<8x8xf32> -> vector<8x8xf32>
      %c0_96 = arith.constant 0 : index
      %c0_97 = arith.constant 0 : index
      %c0_98 = arith.constant 0 : index
      %184 = vector.load %arg6[%c0_96, %c0_97, %c0_98] : memref<4x1x8xf32, #tpu.memory_space<vmem>>, vector<1x1x8xf32>
      %185 = vector.shape_cast %184 : vector<1x1x8xf32> to vector<1x8xf32>
      %186 = vector.broadcast %185 : vector<1x8xf32> to vector<8x8xf32>
      %187 = arith.addf %183, %186 : vector<8x8xf32>
      %c0_99 = arith.constant 0 : index
      %c0_100 = arith.constant 0 : index
      %c0_101 = arith.constant 0 : index
      %188 = vector.load %arg7[%c0_99, %c0_100, %c0_101] : memref<4x32x8xbf16, #tpu.memory_space<vmem>>, vector<1x32x8xbf16>
      %189 = vector.shape_cast %188 : vector<1x32x8xbf16> to vector<32x8xbf16>
      %cst_102 = arith.constant dense<0.000000e+00> : vector<8x8xf32>
      %190 = tpu.matmul %180, %189, %cst_102 {dimension_numbers = #tpu.dot_dimension_numbers<[1], [0], [0], [1], [0, 0, 1, 1], [], []>} : vector<8x32xbf16>, vector<32x8xbf16>, vector<8x8xf32> -> vector<8x8xf32>
      %c0_103 = arith.constant 0 : index
      %c0_104 = arith.constant 0 : index
      %c0_105 = arith.constant 0 : index
      %191 = vector.load %arg8[%c0_103, %c0_104, %c0_105] : memref<4x1x8xf32, #tpu.memory_space<vmem>>, vector<1x1x8xf32>
      %192 = vector.shape_cast %191 : vector<1x1x8xf32> to vector<1x8xf32>
      %193 = vector.broadcast %192 : vector<1x8xf32> to vector<8x8xf32>
      %194 = arith.addf %190, %193 : vector<8x8xf32>
      %195 = arith.truncf %187 : vector<8x8xf32> to vector<8x8xbf16>
      %c0_106 = arith.constant 0 : index
      %c0_107 = arith.constant 0 : index
      %c0_108 = arith.constant 0 : index
      %196 = vector.load %arg18[%c0_106, %c0_107, %c0_108] : memref<4x8x8xbf16, #tpu.memory_space<vmem>>, vector<1x8x8xbf16>
      %197 = vector.shape_cast %196 : vector<1x8x8xbf16> to vector<8x8xbf16>
      %198 = vector.shape_cast %195 : vector<8x8xbf16> to vector<1x8x8xbf16>
      tpu.vector_store %arg18[%c0_106, %c0_107, %c0_108], %198 {strides = array<i32>} : memref<4x8x8xbf16, #tpu.memory_space<vmem>>, vector<1x8x8xbf16>,
      %199 = arith.truncf %194 : vector<8x8xf32> to vector<8x8xbf16>
      %c0_109 = arith.constant 0 : index
      %c0_110 = arith.constant 0 : index
      %c0_111 = arith.constant 0 : index
      %200 = vector.load %arg19[%c0_109, %c0_110, %c0_111] : memref<4x8x8xbf16, #tpu.memory_space<vmem>>, vector<1x8x8xbf16>
      %201 = vector.shape_cast %200 : vector<1x8x8xbf16> to vector<8x8xbf16>
      %202 = vector.shape_cast %199 : vector<8x8xbf16> to vector<1x8x8xbf16>
      tpu.vector_store %arg19[%c0_109, %c0_110, %c0_111], %202 {strides = array<i32>} : memref<4x8x8xbf16, #tpu.memory_space<vmem>>, vector<1x8x8xbf16>,
      %c1_112 = arith.constant 1 : index
      %c0_113 = arith.constant 0 : index
      %c0_114 = arith.constant 0 : index
      %203 = vector.load %arg5[%c1_112, %c0_113, %c0_114] : memref<4x32x8xbf16, #tpu.memory_space<vmem>>, vector<1x32x8xbf16>
      %204 = vector.shape_cast %203 : vector<1x32x8xbf16> to vector<32x8xbf16>
      %cst_115 = arith.constant dense<0.000000e+00> : vector<8x8xf32>
      %205 = tpu.matmul %180, %204, %cst_115 {dimension_numbers = #tpu.dot_dimension_numbers<[1], [0], [0], [1], [0, 0, 1, 1], [], []>} : vector<8x32xbf16>, vector<32x8xbf16>, vector<8x8xf32> -> vector<8x8xf32>
      %c1_116 = arith.constant 1 : index
      %c0_117 = arith.constant 0 : index
      %c0_118 = arith.constant 0 : index
      %206 = vector.load %arg6[%c1_116, %c0_117, %c0_118] : memref<4x1x8xf32, #tpu.memory_space<vmem>>, vector<1x1x8xf32>
      %207 = vector.shape_cast %206 : vector<1x1x8xf32> to vector<1x8xf32>
      %208 = vector.broadcast %207 : vector<1x8xf32> to vector<8x8xf32>
      %209 = arith.addf %205, %208 : vector<8x8xf32>
      %c1_119 = arith.constant 1 : index
      %c0_120 = arith.constant 0 : index
      %c0_121 = arith.constant 0 : index
      %210 = vector.load %arg7[%c1_119, %c0_120, %c0_121] : memref<4x32x8xbf16, #tpu.memory_space<vmem>>, vector<1x32x8xbf16>
      %211 = vector.shape_cast %210 : vector<1x32x8xbf16> to vector<32x8xbf16>
      %cst_122 = arith.constant dense<0.000000e+00> : vector<8x8xf32>
      %212 = tpu.matmul %180, %211, %cst_122 {dimension_numbers = #tpu.dot_dimension_numbers<[1], [0], [0], [1], [0, 0, 1, 1], [], []>} : vector<8x32xbf16>, vector<32x8xbf16>, vector<8x8xf32> -> vector<8x8xf32>
      %c1_123 = arith.constant 1 : index
      %c0_124 = arith.constant 0 : index
      %c0_125 = arith.constant 0 : index
      %213 = vector.load %arg8[%c1_123, %c0_124, %c0_125] : memref<4x1x8xf32, #tpu.memory_space<vmem>>, vector<1x1x8xf32>
      %214 = vector.shape_cast %213 : vector<1x1x8xf32> to vector<1x8xf32>
      %215 = vector.broadcast %214 : vector<1x8xf32> to vector<8x8xf32>
      %216 = arith.addf %212, %215 : vector<8x8xf32>
      %217 = arith.truncf %209 : vector<8x8xf32> to vector<8x8xbf16>
      %c1_126 = arith.constant 1 : index
      %c0_127 = arith.constant 0 : index
      %c0_128 = arith.constant 0 : index
      %218 = vector.load %arg18[%c1_126, %c0_127, %c0_128] : memref<4x8x8xbf16, #tpu.memory_space<vmem>>, vector<1x8x8xbf16>
      %219 = vector.shape_cast %218 : vector<1x8x8xbf16> to vector<8x8xbf16>
      %220 = vector.shape_cast %217 : vector<8x8xbf16> to vector<1x8x8xbf16>
      tpu.vector_store %arg18[%c1_126, %c0_127, %c0_128], %220 {strides = array<i32>} : memref<4x8x8xbf16, #tpu.memory_space<vmem>>, vector<1x8x8xbf16>,
      %221 = arith.truncf %216 : vector<8x8xf32> to vector<8x8xbf16>
      %c1_129 = arith.constant 1 : index
      %c0_130 = arith.constant 0 : index
      %c0_131 = arith.constant 0 : index
      %222 = vector.load %arg19[%c1_129, %c0_130, %c0_131] : memref<4x8x8xbf16, #tpu.memory_space<vmem>>, vector<1x8x8xbf16>
      %223 = vector.shape_cast %222 : vector<1x8x8xbf16> to vector<8x8xbf16>
      %224 = vector.shape_cast %221 : vector<8x8xbf16> to vector<1x8x8xbf16>
      tpu.vector_store %arg19[%c1_129, %c0_130, %c0_131], %224 {strides = array<i32>} : memref<4x8x8xbf16, #tpu.memory_space<vmem>>, vector<1x8x8xbf16>,
      %c2_132 = arith.constant 2 : index
      %c0_133 = arith.constant 0 : index
      %c0_134 = arith.constant 0 : index
      %225 = vector.load %arg5[%c2_132, %c0_133, %c0_134] : memref<4x32x8xbf16, #tpu.memory_space<vmem>>, vector<1x32x8xbf16>
      %226 = vector.shape_cast %225 : vector<1x32x8xbf16> to vector<32x8xbf16>
      %cst_135 = arith.constant dense<0.000000e+00> : vector<8x8xf32>
      %227 = tpu.matmul %180, %226, %cst_135 {dimension_numbers = #tpu.dot_dimension_numbers<[1], [0], [0], [1], [0, 0, 1, 1], [], []>} : vector<8x32xbf16>, vector<32x8xbf16>, vector<8x8xf32> -> vector<8x8xf32>
      %c2_136 = arith.constant 2 : index
      %c0_137 = arith.constant 0 : index
      %c0_138 = arith.constant 0 : index
      %228 = vector.load %arg6[%c2_136, %c0_137, %c0_138] : memref<4x1x8xf32, #tpu.memory_space<vmem>>, vector<1x1x8xf32>
      %229 = vector.shape_cast %228 : vector<1x1x8xf32> to vector<1x8xf32>
      %230 = vector.broadcast %229 : vector<1x8xf32> to vector<8x8xf32>
      %231 = arith.addf %227, %230 : vector<8x8xf32>
      %c2_139 = arith.constant 2 : index
      %c0_140 = arith.constant 0 : index
      %c0_141 = arith.constant 0 : index
      %232 = vector.load %arg7[%c2_139, %c0_140, %c0_141] : memref<4x32x8xbf16, #tpu.memory_space<vmem>>, vector<1x32x8xbf16>
      %233 = vector.shape_cast %232 : vector<1x32x8xbf16> to vector<32x8xbf16>
      %cst_142 = arith.constant dense<0.000000e+00> : vector<8x8xf32>
      %234 = tpu.matmul %180, %233, %cst_142 {dimension_numbers = #tpu.dot_dimension_numbers<[1], [0], [0], [1], [0, 0, 1, 1], [], []>} : vector<8x32xbf16>, vector<32x8xbf16>, vector<8x8xf32> -> vector<8x8xf32>
      %c2_143 = arith.constant 2 : index
      %c0_144 = arith.constant 0 : index
      %c0_145 = arith.constant 0 : index
      %235 = vector.load %arg8[%c2_143, %c0_144, %c0_145] : memref<4x1x8xf32, #tpu.memory_space<vmem>>, vector<1x1x8xf32>
      %236 = vector.shape_cast %235 : vector<1x1x8xf32> to vector<1x8xf32>
      %237 = vector.broadcast %236 : vector<1x8xf32> to vector<8x8xf32>
      %238 = arith.addf %234, %237 : vector<8x8xf32>
      %239 = arith.truncf %231 : vector<8x8xf32> to vector<8x8xbf16>
      %c2_146 = arith.constant 2 : index
      %c0_147 = arith.constant 0 : index
      %c0_148 = arith.constant 0 : index
      %240 = vector.load %arg18[%c2_146, %c0_147, %c0_148] : memref<4x8x8xbf16, #tpu.memory_space<vmem>>, vector<1x8x8xbf16>
      %241 = vector.shape_cast %240 : vector<1x8x8xbf16> to vector<8x8xbf16>
      %242 = vector.shape_cast %239 : vector<8x8xbf16> to vector<1x8x8xbf16>
      tpu.vector_store %arg18[%c2_146, %c0_147, %c0_148], %242 {strides = array<i32>} : memref<4x8x8xbf16, #tpu.memory_space<vmem>>, vector<1x8x8xbf16>,
      %243 = arith.truncf %238 : vector<8x8xf32> to vector<8x8xbf16>
      %c2_149 = arith.constant 2 : index
      %c0_150 = arith.constant 0 : index
      %c0_151 = arith.constant 0 : index
      %244 = vector.load %arg19[%c2_149, %c0_150, %c0_151] : memref<4x8x8xbf16, #tpu.memory_space<vmem>>, vector<1x8x8xbf16>
      %245 = vector.shape_cast %244 : vector<1x8x8xbf16> to vector<8x8xbf16>
      %246 = vector.shape_cast %243 : vector<8x8xbf16> to vector<1x8x8xbf16>
      tpu.vector_store %arg19[%c2_149, %c0_150, %c0_151], %246 {strides = array<i32>} : memref<4x8x8xbf16, #tpu.memory_space<vmem>>, vector<1x8x8xbf16>,
      %c3_152 = arith.constant 3 : index
      %c0_153 = arith.constant 0 : index
      %c0_154 = arith.constant 0 : index
      %247 = vector.load %arg5[%c3_152, %c0_153, %c0_154] : memref<4x32x8xbf16, #tpu.memory_space<vmem>>, vector<1x32x8xbf16>
      %248 = vector.shape_cast %247 : vector<1x32x8xbf16> to vector<32x8xbf16>
      %cst_155 = arith.constant dense<0.000000e+00> : vector<8x8xf32>
      %249 = tpu.matmul %180, %248, %cst_155 {dimension_numbers = #tpu.dot_dimension_numbers<[1], [0], [0], [1], [0, 0, 1, 1], [], []>} : vector<8x32xbf16>, vector<32x8xbf16>, vector<8x8xf32> -> vector<8x8xf32>
      %c3_156 = arith.constant 3 : index
      %c0_157 = arith.constant 0 : index
      %c0_158 = arith.constant 0 : index
      %250 = vector.load %arg6[%c3_156, %c0_157, %c0_158] : memref<4x1x8xf32, #tpu.memory_space<vmem>>, vector<1x1x8xf32>
      %251 = vector.shape_cast %250 : vector<1x1x8xf32> to vector<1x8xf32>
      %252 = vector.broadcast %251 : vector<1x8xf32> to vector<8x8xf32>
      %253 = arith.addf %249, %252 : vector<8x8xf32>
      %c3_159 = arith.constant 3 : index
      %c0_160 = arith.constant 0 : index
      %c0_161 = arith.constant 0 : index
      %254 = vector.load %arg7[%c3_159, %c0_160, %c0_161] : memref<4x32x8xbf16, #tpu.memory_space<vmem>>, vector<1x32x8xbf16>
      %255 = vector.shape_cast %254 : vector<1x32x8xbf16> to vector<32x8xbf16>
      %cst_162 = arith.constant dense<0.000000e+00> : vector<8x8xf32>
      %256 = tpu.matmul %180, %255, %cst_162 {dimension_numbers = #tpu.dot_dimension_numbers<[1], [0], [0], [1], [0, 0, 1, 1], [], []>} : vector<8x32xbf16>, vector<32x8xbf16>, vector<8x8xf32> -> vector<8x8xf32>
      %c3_163 = arith.constant 3 : index
      %c0_164 = arith.constant 0 : index
      %c0_165 = arith.constant 0 : index
      %257 = vector.load %arg8[%c3_163, %c0_164, %c0_165] : memref<4x1x8xf32, #tpu.memory_space<vmem>>, vector<1x1x8xf32>
      %258 = vector.shape_cast %257 : vector<1x1x8xf32> to vector<1x8xf32>
      %259 = vector.broadcast %258 : vector<1x8xf32> to vector<8x8xf32>
      %260 = arith.addf %256, %259 : vector<8x8xf32>
      %261 = arith.truncf %253 : vector<8x8xf32> to vector<8x8xbf16>
      %c3_166 = arith.constant 3 : index
      %c0_167 = arith.constant 0 : index
      %c0_168 = arith.constant 0 : index
      %262 = vector.load %arg18[%c3_166, %c0_167, %c0_168] : memref<4x8x8xbf16, #tpu.memory_space<vmem>>, vector<1x8x8xbf16>
      %263 = vector.shape_cast %262 : vector<1x8x8xbf16> to vector<8x8xbf16>
      %264 = vector.shape_cast %261 : vector<8x8xbf16> to vector<1x8x8xbf16>
      tpu.vector_store %arg18[%c3_166, %c0_167, %c0_168], %264 {strides = array<i32>} : memref<4x8x8xbf16, #tpu.memory_space<vmem>>, vector<1x8x8xbf16>,
      %265 = arith.truncf %260 : vector<8x8xf32> to vector<8x8xbf16>
      %c3_169 = arith.constant 3 : index
      %c0_170 = arith.constant 0 : index
      %c0_171 = arith.constant 0 : index
      %266 = vector.load %arg19[%c3_169, %c0_170, %c0_171] : memref<4x8x8xbf16, #tpu.memory_space<vmem>>, vector<1x8x8xbf16>
      %267 = vector.shape_cast %266 : vector<1x8x8xbf16> to vector<8x8xbf16>
      %268 = vector.shape_cast %265 : vector<8x8xbf16> to vector<1x8x8xbf16>
      tpu.vector_store %arg19[%c3_169, %c0_170, %c0_171], %268 {strides = array<i32>} : memref<4x8x8xbf16, #tpu.memory_space<vmem>>, vector<1x8x8xbf16>,
    } else {
    }
    %c8_i32 = arith.constant 8 : i32
    %3 = arith.muli %arg1, %c8_i32 : i32
    %4 = tpu.assume_multiple %3, 8 : i32
    %c0 = arith.constant 0 : index
    %5 = arith.index_cast %4 : i32 to index
    %c0_1 = arith.constant 0 : index
    %6 = vector.load %arg2[%c0, %5, %c0_1] : memref<1x8x32xf32, #tpu.memory_space<vmem>>, vector<1x8x32xf32>
    %7 = vector.shape_cast %6 : vector<1x8x32xf32> to vector<8x32xf32>
    %8 = arith.truncf %7 : vector<8x32xf32> to vector<8x32xbf16>
    %c0_2 = arith.constant 0 : index
    %c0_3 = arith.constant 0 : index
    %9 = vector.load %arg15[%c0_2, %c0_3] : memref<1x32xf32, #tpu.memory_space<vmem>>, vector<1x32xf32>
    %c0_4 = arith.constant 0 : index
    %c0_5 = arith.constant 0 : index
    %10 = vector.load %arg16[%c0_4, %c0_5] : memref<1x32xf32, #tpu.memory_space<vmem>>, vector<1x32xf32>
    %c0_6 = arith.constant 0 : index
    %c0_7 = arith.constant 0 : index
    %c0_8 = arith.constant 0 : index
    %11 = vector.load %arg3[%c0_6, %c0_7, %c0_8] : memref<4x32x8xbf16, #tpu.memory_space<vmem>>, vector<1x32x8xbf16>
    %12 = vector.shape_cast %11 : vector<1x32x8xbf16> to vector<32x8xbf16>
    %cst = arith.constant dense<0.000000e+00> : vector<8x8xf32>
    %13 = tpu.matmul %8, %12, %cst {dimension_numbers = #tpu.dot_dimension_numbers<[1], [0], [0], [1], [0, 0, 1, 1], [], []>} : vector<8x32xbf16>, vector<32x8xbf16>, vector<8x8xf32> -> vector<8x8xf32>
    %c0_9 = arith.constant 0 : index
    %c0_10 = arith.constant 0 : index
    %c0_11 = arith.constant 0 : index
    %14 = vector.load %arg4[%c0_9, %c0_10, %c0_11] : memref<4x1x8xf32, #tpu.memory_space<vmem>>, vector<1x1x8xf32>
    %15 = vector.shape_cast %14 : vector<1x1x8xf32> to vector<1x8xf32>
    %16 = vector.broadcast %15 : vector<1x8xf32> to vector<8x8xf32>
    %17 = arith.addf %13, %16 : vector<8x8xf32>
    %18 = arith.truncf %17 : vector<8x8xf32> to vector<8x8xbf16>
    %c1 = arith.constant 1 : index
    %c0_12 = arith.constant 0 : index
    %c0_13 = arith.constant 0 : index
    %19 = vector.load %arg3[%c1, %c0_12, %c0_13] : memref<4x32x8xbf16, #tpu.memory_space<vmem>>, vector<1x32x8xbf16>
    %20 = vector.shape_cast %19 : vector<1x32x8xbf16> to vector<32x8xbf16>
    %cst_14 = arith.constant dense<0.000000e+00> : vector<8x8xf32>
    %21 = tpu.matmul %8, %20, %cst_14 {dimension_numbers = #tpu.dot_dimension_numbers<[1], [0], [0], [1], [0, 0, 1, 1], [], []>} : vector<8x32xbf16>, vector<32x8xbf16>, vector<8x8xf32> -> vector<8x8xf32>
    %c1_15 = arith.constant 1 : index
    %c0_16 = arith.constant 0 : index
    %c0_17 = arith.constant 0 : index
    %22 = vector.load %arg4[%c1_15, %c0_16, %c0_17] : memref<4x1x8xf32, #tpu.memory_space<vmem>>, vector<1x1x8xf32>
    %23 = vector.shape_cast %22 : vector<1x1x8xf32> to vector<1x8xf32>
    %24 = vector.broadcast %23 : vector<1x8xf32> to vector<8x8xf32>
    %25 = arith.addf %21, %24 : vector<8x8xf32>
    %26 = arith.truncf %25 : vector<8x8xf32> to vector<8x8xbf16>
    %c2 = arith.constant 2 : index
    %c0_18 = arith.constant 0 : index
    %c0_19 = arith.constant 0 : index
    %27 = vector.load %arg3[%c2, %c0_18, %c0_19] : memref<4x32x8xbf16, #tpu.memory_space<vmem>>, vector<1x32x8xbf16>
    %28 = vector.shape_cast %27 : vector<1x32x8xbf16> to vector<32x8xbf16>
    %cst_20 = arith.constant dense<0.000000e+00> : vector<8x8xf32>
    %29 = tpu.matmul %8, %28, %cst_20 {dimension_numbers = #tpu.dot_dimension_numbers<[1], [0], [0], [1], [0, 0, 1, 1], [], []>} : vector<8x32xbf16>, vector<32x8xbf16>, vector<8x8xf32> -> vector<8x8xf32>
    %c2_21 = arith.constant 2 : index
    %c0_22 = arith.constant 0 : index
    %c0_23 = arith.constant 0 : index
    %30 = vector.load %arg4[%c2_21, %c0_22, %c0_23] : memref<4x1x8xf32, #tpu.memory_space<vmem>>, vector<1x1x8xf32>
    %31 = vector.shape_cast %30 : vector<1x1x8xf32> to vector<1x8xf32>
    %32 = vector.broadcast %31 : vector<1x8xf32> to vector<8x8xf32>
    %33 = arith.addf %29, %32 : vector<8x8xf32>
    %34 = arith.truncf %33 : vector<8x8xf32> to vector<8x8xbf16>
    %c3 = arith.constant 3 : index
    %c0_24 = arith.constant 0 : index
    %c0_25 = arith.constant 0 : index
    %35 = vector.load %arg3[%c3, %c0_24, %c0_25] : memref<4x32x8xbf16, #tpu.memory_space<vmem>>, vector<1x32x8xbf16>
    %36 = vector.shape_cast %35 : vector<1x32x8xbf16> to vector<32x8xbf16>
    %cst_26 = arith.constant dense<0.000000e+00> : vector<8x8xf32>
    %37 = tpu.matmul %8, %36, %cst_26 {dimension_numbers = #tpu.dot_dimension_numbers<[1], [0], [0], [1], [0, 0, 1, 1], [], []>} : vector<8x32xbf16>, vector<32x8xbf16>, vector<8x8xf32> -> vector<8x8xf32>
    %c3_27 = arith.constant 3 : index
    %c0_28 = arith.constant 0 : index
    %c0_29 = arith.constant 0 : index
    %38 = vector.load %arg4[%c3_27, %c0_28, %c0_29] : memref<4x1x8xf32, #tpu.memory_space<vmem>>, vector<1x1x8xf32>
    %39 = vector.shape_cast %38 : vector<1x1x8xf32> to vector<1x8xf32>
    %40 = vector.broadcast %39 : vector<1x8xf32> to vector<8x8xf32>
    %41 = arith.addf %37, %40 : vector<8x8xf32>
    %42 = arith.truncf %41 : vector<8x8xf32> to vector<8x8xbf16>
    %43 = vector.shape_cast %18 : vector<8x8xbf16> to vector<1x8x8xbf16>
    %44 = vector.shape_cast %26 : vector<8x8xbf16> to vector<1x8x8xbf16>
    %45 = vector.shape_cast %34 : vector<8x8xbf16> to vector<1x8x8xbf16>
    %46 = vector.shape_cast %42 : vector<8x8xbf16> to vector<1x8x8xbf16>
    %47 = tpu.concatenate %43, %44, %45, %46 in 0 : vector<1x8x8xbf16>, vector<1x8x8xbf16>, vector<1x8x8xbf16>, vector<1x8x8xbf16> -> vector<4x8x8xbf16>
    %cst_30 = arith.constant 0xFF800000 : f32
    %48 = vector.broadcast %cst_30 : f32 to vector<4x8x1xf32>
    %cst_31 = arith.constant 0.000000e+00 : f32
    %49 = vector.broadcast %cst_31 : f32 to vector<4x8x1xf32>
    %cst_32 = arith.constant 0.000000e+00 : f32
    %50 = vector.broadcast %cst_32 : f32 to vector<4x8x8xf32>
    %c0_i32_33 = arith.constant 0 : i32
    %c8_i32_34 = arith.constant 8 : i32
    %51 = arith.muli %c0_i32_33, %c8_i32_34 : i32
    %52 = tpu.assume_multiple %51, 8 : i32
    %c0_35 = arith.constant 0 : index
    %53 = arith.index_cast %52 : i32 to index
    %c0_36 = arith.constant 0 : index
    %54 = vector.load %arg18[%c0_35, %53, %c0_36] : memref<4x8x8xbf16, #tpu.memory_space<vmem>>, vector<4x8x8xbf16>
    %c0_37 = arith.constant 0 : index
    %55 = arith.index_cast %52 : i32 to index
    %c0_38 = arith.constant 0 : index
    %56 = vector.load %arg19[%c0_37, %55, %c0_38] : memref<4x8x8xbf16, #tpu.memory_space<vmem>>, vector<4x8x8xbf16>
    "tpu.trace_start"() <{level = 10 : i32, message = "hqd,hkd->hqk"}> : () -> ()
    %cst_39 = arith.constant dense<0.000000e+00> : vector<4x8x8xf32>
    %57 = tpu.matmul %47, %54, %cst_39 {dimension_numbers = #tpu.dot_dimension_numbers<[2], [2], [1], [1], [0, 0, 0, 1, 1, 1], [0], [0]>} : vector<4x8x8xbf16>, vector<4x8x8xbf16>, vector<4x8x8xf32> -> vector<4x8x8xf32>
    "tpu.trace_stop"() : () -> ()
    %cst_40 = arith.constant dense<0xFF800000> : vector<4x8xf32>
    %58 = vector.multi_reduction <maximumf>, %57, %cst_40 [2] : vector<4x8x8xf32> to vector<4x8xf32>
    %59 = vector.shape_cast %58 : vector<4x8xf32> to vector<4x8x1xf32>
    %60 = arith.maximumf %48, %59 : vector<4x8x1xf32>
    %61 = arith.subf %48, %60 : vector<4x8x1xf32>
    %62 = math.exp %61 : vector<4x8x1xf32>
    %63 = vector.broadcast %60 : vector<4x8x1xf32> to vector<4x8x8xf32>
    %64 = arith.subf %57, %63 : vector<4x8x8xf32>
    %65 = math.exp %64 : vector<4x8x8xf32>
    %66 = arith.mulf %62, %49 : vector<4x8x1xf32>
    %cst_41 = arith.constant dense<0.000000e+00> : vector<4x8xf32>
    %67 = vector.multi_reduction <add>, %65, %cst_41 [2] : vector<4x8x8xf32> to vector<4x8xf32>
    %68 = vector.shape_cast %67 : vector<4x8xf32> to vector<4x8x1xf32>
    %69 = arith.addf %66, %68 : vector<4x8x1xf32>
    %70 = vector.broadcast %62 : vector<4x8x1xf32> to vector<4x8x8xf32>
    %71 = arith.mulf %70, %50 : vector<4x8x8xf32>
    %72 = arith.truncf %65 : vector<4x8x8xf32> to vector<4x8x8xbf16>
    "tpu.trace_start"() <{level = 10 : i32, message = "hqk,hkd->hqd"}> : () -> ()
    %cst_42 = arith.constant dense<0.000000e+00> : vector<4x8x8xf32>
    %73 = tpu.matmul %72, %56, %cst_42 {dimension_numbers = #tpu.dot_dimension_numbers<[2], [1], [1], [2], [0, 0, 0, 1, 1, 2], [0], [0]>} : vector<4x8x8xbf16>, vector<4x8x8xbf16>, vector<4x8x8xf32> -> vector<4x8x8xf32>
    "tpu.trace_stop"() : () -> ()
    %74 = arith.addf %71, %73 : vector<4x8x8xf32>
    %c1_i32 = arith.constant 1 : i32
    %75 = tpu.reciprocal %69 {approx = true} : vector<4x8x1xf32> -> vector<4x8x1xf32>
    %76 = vector.broadcast %75 : vector<4x8x1xf32> to vector<4x8x8xf32>
    %77 = arith.mulf %74, %76 : vector<4x8x8xf32>
    %78 = arith.truncf %77 : vector<4x8x8xf32> to vector<4x8x8xbf16>
    %cst_43 = arith.constant 0.000000e+00 : f32
    %79 = vector.broadcast %cst_43 : f32 to vector<8x32xf32>
    %80 = vector.extract_strided_slice %78 {offsets = [0, 0, 0], sizes = [1, 8, 8], strides = [1, 1, 1]} : vector<4x8x8xbf16> to vector<1x8x8xbf16>
    %81 = vector.shape_cast %80 : vector<1x8x8xbf16> to vector<8x8xbf16>
    %c0_44 = arith.constant 0 : index
    %c0_45 = arith.constant 0 : index
    %c0_46 = arith.constant 0 : index
    %82 = vector.load %arg9[%c0_44, %c0_45, %c0_46] : memref<4x8x32xbf16, #tpu.memory_space<vmem>>, vector<1x8x32xbf16>
    %83 = vector.shape_cast %82 : vector<1x8x32xbf16> to vector<8x32xbf16>
    %cst_47 = arith.constant dense<0.000000e+00> : vector<8x32xf32>
    %84 = tpu.matmul %81, %83, %cst_47 {dimension_numbers = #tpu.dot_dimension_numbers<[1], [0], [0], [1], [0, 0, 1, 1], [], []>} : vector<8x8xbf16>, vector<8x32xbf16>, vector<8x32xf32> -> vector<8x32xf32>
    %85 = arith.addf %79, %84 : vector<8x32xf32>
    %86 = vector.extract_strided_slice %78 {offsets = [1, 0, 0], sizes = [1, 8, 8], strides = [1, 1, 1]} : vector<4x8x8xbf16> to vector<1x8x8xbf16>
    %87 = vector.shape_cast %86 : vector<1x8x8xbf16> to vector<8x8xbf16>
    %c1_48 = arith.constant 1 : index
    %c0_49 = arith.constant 0 : index
    %c0_50 = arith.constant 0 : index
    %88 = vector.load %arg9[%c1_48, %c0_49, %c0_50] : memref<4x8x32xbf16, #tpu.memory_space<vmem>>, vector<1x8x32xbf16>
    %89 = vector.shape_cast %88 : vector<1x8x32xbf16> to vector<8x32xbf16>
    %cst_51 = arith.constant dense<0.000000e+00> : vector<8x32xf32>
    %90 = tpu.matmul %87, %89, %cst_51 {dimension_numbers = #tpu.dot_dimension_numbers<[1], [0], [0], [1], [0, 0, 1, 1], [], []>} : vector<8x8xbf16>, vector<8x32xbf16>, vector<8x32xf32> -> vector<8x32xf32>
    %91 = arith.addf %85, %90 : vector<8x32xf32>
    %92 = vector.extract_strided_slice %78 {offsets = [2, 0, 0], sizes = [1, 8, 8], strides = [1, 1, 1]} : vector<4x8x8xbf16> to vector<1x8x8xbf16>
    %93 = vector.shape_cast %92 : vector<1x8x8xbf16> to vector<8x8xbf16>
    %c2_52 = arith.constant 2 : index
    %c0_53 = arith.constant 0 : index
    %c0_54 = arith.constant 0 : index
    %94 = vector.load %arg9[%c2_52, %c0_53, %c0_54] : memref<4x8x32xbf16, #tpu.memory_space<vmem>>, vector<1x8x32xbf16>
    %95 = vector.shape_cast %94 : vector<1x8x32xbf16> to vector<8x32xbf16>
    %cst_55 = arith.constant dense<0.000000e+00> : vector<8x32xf32>
    %96 = tpu.matmul %93, %95, %cst_55 {dimension_numbers = #tpu.dot_dimension_numbers<[1], [0], [0], [1], [0, 0, 1, 1], [], []>} : vector<8x8xbf16>, vector<8x32xbf16>, vector<8x32xf32> -> vector<8x32xf32>
    %97 = arith.addf %91, %96 : vector<8x32xf32>
    %98 = vector.extract_strided_slice %78 {offsets = [3, 0, 0], sizes = [1, 8, 8], strides = [1, 1, 1]} : vector<4x8x8xbf16> to vector<1x8x8xbf16>
    %99 = vector.shape_cast %98 : vector<1x8x8xbf16> to vector<8x8xbf16>
    %c3_56 = arith.constant 3 : index
    %c0_57 = arith.constant 0 : index
    %c0_58 = arith.constant 0 : index
    %100 = vector.load %arg9[%c3_56, %c0_57, %c0_58] : memref<4x8x32xbf16, #tpu.memory_space<vmem>>, vector<1x8x32xbf16>
    %101 = vector.shape_cast %100 : vector<1x8x32xbf16> to vector<8x32xbf16>
    %cst_59 = arith.constant dense<0.000000e+00> : vector<8x32xf32>
    %102 = tpu.matmul %99, %101, %cst_59 {dimension_numbers = #tpu.dot_dimension_numbers<[1], [0], [0], [1], [0, 0, 1, 1], [], []>} : vector<8x8xbf16>, vector<8x32xbf16>, vector<8x32xf32> -> vector<8x32xf32>
    %103 = arith.addf %97, %102 : vector<8x32xf32>
    %c0_60 = arith.constant 0 : index
    %c0_61 = arith.constant 0 : index
    %104 = vector.load %arg10[%c0_60, %c0_61] : memref<1x32xf32, #tpu.memory_space<vmem>>, vector<1x32xf32>
    %105 = vector.broadcast %104 : vector<1x32xf32> to vector<8x32xf32>
    %106 = arith.addf %103, %105 : vector<8x32xf32>
    %107 = arith.addf %106, %7 : vector<8x32xf32>
    %cst_62 = arith.constant dense<0.000000e+00> : vector<8xf32>
    %108 = vector.multi_reduction <add>, %107, %cst_62 [1] : vector<8x32xf32> to vector<8xf32>
    %109 = vector.shape_cast %108 : vector<8xf32> to vector<8x1xf32>
    %cst_63 = arith.constant 3.200000e+01 : f32
    %110 = vector.broadcast %cst_63 : f32 to vector<8x1xf32>
    %111 = arith.divf %109, %110 : vector<8x1xf32>
    %112 = vector.broadcast %111 : vector<8x1xf32> to vector<8x32xf32>
    %113 = arith.subf %107, %112 : vector<8x32xf32>
    %114 = arith.mulf %113, %113 : vector<8x32xf32>
    %cst_64 = arith.constant dense<0.000000e+00> : vector<8xf32>
    %115 = vector.multi_reduction <add>, %114, %cst_64 [1] : vector<8x32xf32> to vector<8xf32>
    %116 = vector.shape_cast %115 : vector<8xf32> to vector<8x1xf32>
    %cst_65 = arith.constant 3.200000e+01 : f32
    %117 = vector.broadcast %cst_65 : f32 to vector<8x1xf32>
    %118 = arith.divf %116, %117 : vector<8x1xf32>
    %119 = vector.broadcast %111 : vector<8x1xf32> to vector<8x32xf32>
    %120 = arith.subf %107, %119 : vector<8x32xf32>
    %cst_66 = arith.constant 9.99999997E-7 : f32
    %121 = vector.broadcast %cst_66 : f32 to vector<8x1xf32>
    %122 = arith.addf %118, %121 : vector<8x1xf32>
    %123 = math.rsqrt %122 : vector<8x1xf32>
    %124 = vector.broadcast %123 : vector<8x1xf32> to vector<8x32xf32>
    %125 = arith.mulf %120, %124 : vector<8x32xf32>
    %126 = vector.broadcast %9 : vector<1x32xf32> to vector<8x32xf32>
    %127 = arith.mulf %125, %126 : vector<8x32xf32>
    %128 = vector.broadcast %10 : vector<1x32xf32> to vector<8x32xf32>
    %129 = arith.addf %127, %128 : vector<8x32xf32>
    %130 = arith.truncf %129 : vector<8x32xf32> to vector<8x32xbf16>
    %cst_67 = arith.constant 0.000000e+00 : f32
    %131 = vector.broadcast %cst_67 : f32 to vector<8x32xf32>
    %c0_i32_68 = arith.constant 0 : i32
    %132 = arith.index_cast %c0_i32_68 : i32 to index
    %c0_69 = arith.constant 0 : index
    %c0_70 = arith.constant 0 : index
    %133 = vector.load %arg11[%132, %c0_69, %c0_70] : memref<1x32x64xbf16, #tpu.memory_space<vmem>>, vector<1x32x64xbf16>
    %134 = vector.shape_cast %133 : vector<1x32x64xbf16> to vector<32x64xbf16>
    %cst_71 = arith.constant dense<0.000000e+00> : vector<8x64xf32>
    %135 = tpu.matmul %130, %134, %cst_71 {dimension_numbers = #tpu.dot_dimension_numbers<[1], [0], [0], [1], [0, 0, 1, 1], [], []>} : vector<8x32xbf16>, vector<32x64xbf16>, vector<8x64xf32> -> vector<8x64xf32>
    %136 = arith.index_cast %c0_i32_68 : i32 to index
    %c0_72 = arith.constant 0 : index
    %c0_73 = arith.constant 0 : index
    %137 = vector.load %arg12[%136, %c0_72, %c0_73] : memref<1x1x64xf32, #tpu.memory_space<vmem>>, vector<1x1x64xf32>
    %138 = vector.shape_cast %137 : vector<1x1x64xf32> to vector<1x64xf32>
    %139 = vector.broadcast %138 : vector<1x64xf32> to vector<8x64xf32>
    %140 = arith.addf %135, %139 : vector<8x64xf32>
    %cst_74 = arith.constant 0.000000e+00 : f32
    %141 = vector.broadcast %cst_74 : f32 to vector<8x64xf32>
    %142 = arith.maximumf %140, %141 : vector<8x64xf32>
    %143 = arith.truncf %142 : vector<8x64xf32> to vector<8x64xbf16>
    %144 = arith.index_cast %c0_i32_68 : i32 to index
    %c0_75 = arith.constant 0 : index
    %c0_76 = arith.constant 0 : index
    %145 = vector.load %arg13[%144, %c0_75, %c0_76] : memref<1x64x32xbf16, #tpu.memory_space<vmem>>, vector<1x64x32xbf16>
    %146 = vector.shape_cast %145 : vector<1x64x32xbf16> to vector<64x32xbf16>
    %cst_77 = arith.constant dense<0.000000e+00> : vector<8x32xf32>
    %147 = tpu.matmul %143, %146, %cst_77 {dimension_numbers = #tpu.dot_dimension_numbers<[1], [0], [0], [1], [0, 0, 1, 1], [], []>} : vector<8x64xbf16>, vector<64x32xbf16>, vector<8x32xf32> -> vector<8x32xf32>
    %148 = arith.addf %131, %147 : vector<8x32xf32>
    %c1_i32_78 = arith.constant 1 : i32
    %c0_79 = arith.constant 0 : index
    %c0_80 = arith.constant 0 : index
    %149 = vector.load %arg14[%c0_79, %c0_80] : memref<1x32xf32, #tpu.memory_space<vmem>>, vector<1x32xf32>
    %150 = vector.broadcast %149 : vector<1x32xf32> to vector<8x32xf32>
    %151 = arith.addf %148, %150 : vector<8x32xf32>
    %152 = arith.addf %151, %129 : vector<8x32xf32>
    %cst_81 = arith.constant dense<0.000000e+00> : vector<8xf32>
    %153 = vector.multi_reduction <add>, %152, %cst_81 [1] : vector<8x32xf32> to vector<8xf32>
    %154 = vector.shape_cast %153 : vector<8xf32> to vector<8x1xf32>
    %cst_82 = arith.constant 3.200000e+01 : f32
    %155 = vector.broadcast %cst_82 : f32 to vector<8x1xf32>
    %156 = arith.divf %154, %155 : vector<8x1xf32>
    %157 = vector.broadcast %156 : vector<8x1xf32> to vector<8x32xf32>
    %158 = arith.subf %152, %157 : vector<8x32xf32>
    %159 = arith.mulf %158, %158 : vector<8x32xf32>
    %cst_83 = arith.constant dense<0.000000e+00> : vector<8xf32>
    %160 = vector.multi_reduction <add>, %159, %cst_83 [1] : vector<8x32xf32> to vector<8xf32>
    %161 = vector.shape_cast %160 : vector<8xf32> to vector<8x1xf32>
    %cst_84 = arith.constant 3.200000e+01 : f32
    %162 = vector.broadcast %cst_84 : f32 to vector<8x1xf32>
    %163 = arith.divf %161, %162 : vector<8x1xf32>
    %164 = vector.broadcast %156 : vector<8x1xf32> to vector<8x32xf32>
    %165 = arith.subf %152, %164 : vector<8x32xf32>
    %cst_85 = arith.constant 9.99999997E-7 : f32
    %166 = vector.broadcast %cst_85 : f32 to vector<8x1xf32>
    %167 = arith.addf %163, %166 : vector<8x1xf32>
    %168 = math.rsqrt %167 : vector<8x1xf32>
    %169 = vector.broadcast %168 : vector<8x1xf32> to vector<8x32xf32>
    %170 = arith.mulf %165, %169 : vector<8x32xf32>
    %171 = vector.broadcast %9 : vector<1x32xf32> to vector<8x32xf32>
    %172 = arith.mulf %170, %171 : vector<8x32xf32>
    %173 = vector.broadcast %10 : vector<1x32xf32> to vector<8x32xf32>
    %174 = arith.addf %172, %173 : vector<8x32xf32>
    %c0_86 = arith.constant 0 : index
    %c0_87 = arith.constant 0 : index
    %c0_88 = arith.constant 0 : index
    %175 = vector.load %arg17[%c0_86, %c0_87, %c0_88] : memref<1x8x32xf32, #tpu.memory_space<vmem>>, vector<1x8x32xf32>
    %176 = vector.shape_cast %175 : vector<1x8x32xf32> to vector<8x32xf32>
    %177 = vector.shape_cast %174 : vector<8x32xf32> to vector<1x8x32xf32>
    tpu.vector_store %arg17[%c0_86, %c0_87, %c0_88], %177 {strides = array<i32>} : memref<1x8x32xf32, #tpu.memory_space<vmem>>, vector<1x8x32xf32>,
    return
  }
  func.func @transform_0(%arg0: i32, %arg1: i32) -> (i32, i32, i32) {
    %c0_i32 = arith.constant 0 : i32
    %c0_i32_0 = arith.constant 0 : i32
    %c0_i32_1 = arith.constant 0 : i32
    return %arg0, %c0_i32, %c0_i32_0 : i32, i32, i32
  }
  func.func @transform_1(%arg0: i32, %arg1: i32) -> (i32, i32, i32) {
    %c0_i32 = arith.constant 0 : i32
    %c0_i32_0 = arith.constant 0 : i32
    %c0_i32_1 = arith.constant 0 : i32
    %c0_i32_2 = arith.constant 0 : i32
    return %c0_i32, %c0_i32_0, %c0_i32_1 : i32, i32, i32
  }
  func.func @transform_2(%arg0: i32, %arg1: i32) -> (i32, i32, i32) {
    %c0_i32 = arith.constant 0 : i32
    %c0_i32_0 = arith.constant 0 : i32
    %c0_i32_1 = arith.constant 0 : i32
    %c0_i32_2 = arith.constant 0 : i32
    return %c0_i32, %c0_i32_0, %c0_i32_1 : i32, i32, i32
  }
  func.func @transform_3(%arg0: i32, %arg1: i32) -> (i32, i32, i32) {
    %c0_i32 = arith.constant 0 : i32
    %c0_i32_0 = arith.constant 0 : i32
    %c0_i32_1 = arith.constant 0 : i32
    %c0_i32_2 = arith.constant 0 : i32
    return %c0_i32, %c0_i32_0, %c0_i32_1 : i32, i32, i32
  }
  func.func @transform_4(%arg0: i32, %arg1: i32) -> (i32, i32, i32) {
    %c0_i32 = arith.constant 0 : i32
    %c0_i32_0 = arith.constant 0 : i32
    %c0_i32_1 = arith.constant 0 : i32
    %c0_i32_2 = arith.constant 0 : i32
    return %c0_i32, %c0_i32_0, %c0_i32_1 : i32, i32, i32
  }
  func.func @transform_5(%arg0: i32, %arg1: i32) -> (i32, i32, i32) {
    %c0_i32 = arith.constant 0 : i32
    %c0_i32_0 = arith.constant 0 : i32
    %c0_i32_1 = arith.constant 0 : i32
    %c0_i32_2 = arith.constant 0 : i32
    return %c0_i32, %c0_i32_0, %c0_i32_1 : i32, i32, i32
  }
  func.func @transform_6(%arg0: i32, %arg1: i32) -> (i32, i32, i32) {
    %c0_i32 = arith.constant 0 : i32
    %c0_i32_0 = arith.constant 0 : i32
    %c0_i32_1 = arith.constant 0 : i32
    %c0_i32_2 = arith.constant 0 : i32
    return %c0_i32, %c0_i32_0, %c0_i32_1 : i32, i32, i32
  }
  func.func @transform_7(%arg0: i32, %arg1: i32) -> (i32, i32, i32) {
    %c0_i32 = arith.constant 0 : i32
    %c0_i32_0 = arith.constant 0 : i32
    %c0_i32_1 = arith.constant 0 : i32
    %c0_i32_2 = arith.constant 0 : i32
    return %c0_i32, %c0_i32_0, %c0_i32_1 : i32, i32, i32
  }
  func.func @transform_8(%arg0: i32, %arg1: i32) -> (i32, i32) {
    %c0_i32 = arith.constant 0 : i32
    %c0_i32_0 = arith.constant 0 : i32
    %c0_i32_1 = arith.constant 0 : i32
    return %c0_i32, %c0_i32_0 : i32, i32
  }
  func.func @transform_9(%arg0: i32, %arg1: i32) -> (i32, i32, i32) {
    %c0_i32 = arith.constant 0 : i32
    %c0_i32_0 = arith.constant 0 : i32
    %c0_i32_1 = arith.constant 0 : i32
    %c0_i32_2 = arith.constant 0 : i32
    return %c0_i32, %c0_i32_0, %c0_i32_1 : i32, i32, i32
  }
  func.func @transform_10(%arg0: i32, %arg1: i32) -> (i32, i32, i32) {
    %c0_i32 = arith.constant 0 : i32
    %c0_i32_0 = arith.constant 0 : i32
    %c0_i32_1 = arith.constant 0 : i32
    %c0_i32_2 = arith.constant 0 : i32
    return %c0_i32, %c0_i32_0, %c0_i32_1 : i32, i32, i32
  }
  func.func @transform_11(%arg0: i32, %arg1: i32) -> (i32, i32, i32) {
    %c0_i32 = arith.constant 0 : i32
    %c0_i32_0 = arith.constant 0 : i32
    %c0_i32_1 = arith.constant 0 : i32
    %c0_i32_2 = arith.constant 0 : i32
    return %c0_i32, %c0_i32_0, %c0_i32_1 : i32, i32, i32
  }
  func.func @transform_12(%arg0: i32, %arg1: i32) -> (i32, i32) {
    %c0_i32 = arith.constant 0 : i32
    %c0_i32_0 = arith.constant 0 : i32
    %c0_i32_1 = arith.constant 0 : i32
    return %c0_i32, %c0_i32_0 : i32, i32
  }
  func.func @transform_13(%arg0: i32, %arg1: i32) -> (i32, i32) {
    %c0_i32 = arith.constant 0 : i32
    %c0_i32_0 = arith.constant 0 : i32
    %c0_i32_1 = arith.constant 0 : i32
    return %c0_i32, %c0_i32_0 : i32, i32
  }
  func.func @transform_14(%arg0: i32, %arg1: i32) -> (i32, i32) {
    %c0_i32 = arith.constant 0 : i32
    %c0_i32_0 = arith.constant 0 : i32
    %c0_i32_1 = arith.constant 0 : i32
    return %c0_i32, %c0_i32_0 : i32, i32
  }
  func.func @transform_15(%arg0: i32, %arg1: i32) -> (i32, i32, i32) {
    %c0_i32 = arith.constant 0 : i32
    %c0_i32_0 = arith.constant 0 : i32
    return %arg0, %arg1, %c0_i32 : i32, i32, i32
  }
}

</mosaic_0001>

<llo_original>
// kernel: tpu_custom_call.1
$region0: #{tpu_custom_call.1}
  #allocation0 [shape = 'u32[]', space=smem, size = 0x4, offset = 0x4, fixed_abs, tag = 'smem constant byte address 0x4 - core index']
  #allocation1 [shape = 'u32[144,128]{1,0:T(1,128)}', space=vmem, size = 0x12000, scoped, tag = 'internal scratch']
  #allocation2 [shape = 'bf16[4,8,8]{2,1,0:T(8,128)(2,1)}', space=vmem, size = 0x2000, scoped, tag = 'scratch operand']
  #allocation3 [shape = 'bf16[4,8,8]{2,1,0:T(8,128)(2,1)}', space=vmem, size = 0x2000, scoped, tag = 'scratch operand']
  %s0 = inlined_call_operand.hbm [shape: f32[2,8,32], index: 0, kind: input, shape index: {}]
  %s1 = inlined_call_operand.hbm [shape: bf16[4,32,8], index: 1, kind: input, shape index: {}]
  %s2 = inlined_call_operand.hbm [shape: f32[4,1,8], index: 2, kind: input, shape index: {}]
  %s3 = inlined_call_operand.hbm [shape: bf16[4,32,8], index: 3, kind: input, shape index: {}]
  %s4 = inlined_call_operand.hbm [shape: f32[4,1,8], index: 4, kind: input, shape index: {}]
  %s5 = inlined_call_operand.hbm [shape: bf16[4,32,8], index: 5, kind: input, shape index: {}]
  %s6 = inlined_call_operand.hbm [shape: f32[4,1,8], index: 6, kind: input, shape index: {}]
  %s7 = inlined_call_operand.hbm [shape: bf16[4,8,32], index: 7, kind: input, shape index: {}]
  %s8 = inlined_call_operand.hbm [shape: f32[1,32], index: 8, kind: input, shape index: {}]
  %s9 = inlined_call_operand.hbm [shape: bf16[1,32,64], index: 9, kind: input, shape index: {}]
  %s10 = inlined_call_operand.hbm [shape: f32[1,1,64], index: 10, kind: input, shape index: {}]
  %s11 = inlined_call_operand.hbm [shape: bf16[1,64,32], index: 11, kind: input, shape index: {}]
  %s12 = inlined_call_operand.hbm [shape: f32[1,32], index: 12, kind: input, shape index: {}]
  %s13 = inlined_call_operand.hbm [shape: f32[1,32], index: 13, kind: input, shape index: {}]
  %s14 = inlined_call_operand.hbm [shape: f32[1,32], index: 14, kind: input, shape index: {}]
  %s15 = inlined_call_operand.hbm [shape: f32[2,8,32], index: 15, kind: output, shape index: {}]
  %s16 = sld [smem:[#allocation0]]
  $region157: #{tpu_custom_call.1} parent=0
    _
  %s18 = ssub.s32 1, %s16
  %s19 = scalar_select 0, %s18, %s16
  $region1: #{tpu_custom_call.1} parent=0
    #allocation4 [shape = 'u8[8192]{0}', space=vmem, size = 0x2000, scoped, tag = 'input window, operand 0']
    #allocation5 [shape = 's32[2]{0}', space=sflag, size = 0x8, scoped, tag = 'scoped memory for tpu_custom_call.1']
    #allocation6 [shape = 's32[2]{0}', space=sflag, size = 0x8, scoped, tag = 'scoped memory for tpu_custom_call.1']
    #allocation7 [shape = 'u8[32768]{0}', space=vmem, size = 0x8000, scoped, tag = 'input window, operand 1, single buffered']
    #allocation8 [shape = 's32[1]{0}', space=sflag, size = 0x4, scoped, tag = 'scoped memory for tpu_custom_call.1']
    #allocation9 [shape = 'u8[2048]{0}', space=vmem, size = 0x800, scoped, tag = 'input window, operand 2, single buffered']
    #allocation10 [shape = 'u8[32768]{0}', space=vmem, size = 0x8000, scoped, tag = 'input window, operand 3, single buffered']
    #allocation11 [shape = 's32[1]{0}', space=sflag, size = 0x4, scoped, tag = 'scoped memory for tpu_custom_call.1']
    #allocation12 [shape = 'u8[2048]{0}', space=vmem, size = 0x800, scoped, tag = 'input window, operand 4, single buffered']
    #allocation13 [shape = 'u8[32768]{0}', space=vmem, size = 0x8000, scoped, tag = 'input window, operand 5, single buffered']
    #allocation14 [shape = 's32[1]{0}', space=sflag, size = 0x4, scoped, tag = 'scoped memory for tpu_custom_call.1']
    #allocation15 [shape = 'u8[2048]{0}', space=vmem, size = 0x800, scoped, tag = 'input window, operand 6, single buffered']
    #allocation16 [shape = 'u8[8192]{0}', space=vmem, size = 0x2000, scoped, tag = 'input window, operand 7, single buffered']
    #allocation17 [shape = 's32[1]{0}', space=sflag, size = 0x4, scoped, tag = 'scoped memory for tpu_custom_call.1']
    #allocation18 [shape = 'u8[512]{0}', space=vmem, size = 0x400, scoped, tag = 'input window, operand 8, single buffered']
    #allocation19 [shape = 'u8[8192]{0}', space=vmem, size = 0x2000, scoped, tag = 'input window, operand 9, single buffered']
    #allocation20 [shape = 's32[1]{0}', space=sflag, size = 0x4, scoped, tag = 'scoped memory for tpu_custom_call.1']
    #allocation21 [shape = 'u8[512]{0}', space=vmem, size = 0x400, scoped, tag = 'input window, operand 10, single buffered']
    #allocation22 [shape = 'u8[16384]{0}', space=vmem, size = 0x4000, scoped, tag = 'input window, operand 11, single buffered']
    #allocation23 [shape = 's32[1]{0}', space=sflag, size = 0x4, scoped, tag = 'scoped memory for tpu_custom_call.1']
    #allocation24 [shape = 'u8[512]{0}', space=vmem, size = 0x400, scoped, tag = 'input window, operand 12, single buffered']
    #allocation25 [shape = 'u8[512]{0}', space=vmem, size = 0x400, scoped, tag = 'input window, operand 13, single buffered']
    #allocation26 [shape = 's32[1]{0}', space=sflag, size = 0x4, scoped, tag = 'scoped memory for tpu_custom_call.1']
    #allocation27 [shape = 'u8[512]{0}', space=vmem, size = 0x400, scoped, tag = 'input window, operand 14, single buffered']
    #allocation28 [shape = 'u8[8192]{0}', space=vmem, size = 0x2000, scoped, tag = 'output window, operand 0']
    %20 = vsyncpa [#allocation5], 0
    %s21 = scalar_lea.sflag [#allocation5], 1
    %22 = vsyncpa %s21, 0
    %23 = vsyncpa [#allocation8], 0
    %24 = vsyncpa [#allocation11], 0
    %25 = vsyncpa [#allocation14], 0
    %26 = vsyncpa [#allocation17], 0
    %27 = vsyncpa [#allocation20], 0
    %28 = vsyncpa [#allocation23], 0
    %29 = vsyncpa [#allocation26], 0
    %30 = vsyncpa [#allocation6], 0
    %s31 = scalar_lea.sflag [#allocation6], 1
    %32 = vsyncpa %s31, 0
    loop: start=0, step=1, limit=4
    $region2: #{tpu_custom_call.1} parent=1 // loop_pre_header
      _
    $region3: #{tpu_custom_call.1} parent=1 // loop_header
      %s34 = sphi 0, %s38
      %p35 = scmp.ge.s32.totalorder %s34, 4
      %s41 = sphi 0, %s53
      %s42 = sphi 0, %s49
      %s43 = sphi 0, %s41
      %s44 = sphi 0, %s42
      %s45 = sphi 0, %s43
      %s46 = sphi 0, %s44
      %s56 = sphi 0, %s58
      %s59 = sphi 0, %s56
      %s60 = sphi 0, %s59
      %s76 = sphi 0, %s60
      %s80 = sphi 0, %s80
      %s82 = sphi 0, %s80
      %s83 = sphi 0, %s82
      %s97 = sphi 0, %s83
      %s101 = sphi 0, %s101
      %s103 = sphi 0, %s101
      %s104 = sphi 0, %s103
      %s118 = sphi 0, %s104
      %s122 = sphi 0, %s122
      %s124 = sphi 0, %s122
      %s125 = sphi 0, %s124
      %s139 = sphi 0, %s125
      %s143 = sphi 0, %s143
      %s145 = sphi 0, %s143
      %s146 = sphi 0, %s145
      %s160 = sphi 0, %s146
      %s164 = sphi 0, %s164
      %s166 = sphi 0, %s164
      %s167 = sphi 0, %s166
      %s181 = sphi 0, %s167
      %s185 = sphi 0, %s185
      %s187 = sphi 0, %s185
      %s188 = sphi 0, %s187
      %s202 = sphi 0, %s188
      %s206 = sphi 0, %s206
      %s208 = sphi 0, %s206
      %s209 = sphi 0, %s208
      %s223 = sphi 0, %s209
      %s227 = sphi 0, %s227
      %s229 = sphi 0, %s227
      %s230 = sphi 0, %s229
      %s244 = sphi 0, %s230
      %s248 = sphi 0, %s248
      %s250 = sphi 0, %s248
      %s251 = sphi 0, %s250
      %s265 = sphi 0, %s251
      %s269 = sphi 0, %s269
      %s271 = sphi 0, %s269
      %s272 = sphi 0, %s271
      %s286 = sphi 0, %s272
      %s290 = sphi 0, %s290
      %s292 = sphi 0, %s290
      %s293 = sphi 0, %s292
      %s307 = sphi 0, %s293
      %s311 = sphi 0, %s311
      %s313 = sphi 0, %s311
      %s314 = sphi 0, %s313
      %s328 = sphi 0, %s314
      %s332 = sphi 0, %s332
      %s334 = sphi 0, %s332
      %s335 = sphi 0, %s334
      %s349 = sphi 0, %s335
      %s353 = sphi 0, %s353
      %s355 = sphi 0, %s353
      %s356 = sphi 0, %s355
      %s370 = sphi 0, %s356
      %s378 = sphi 0, %s380
      %s381 = sphi 0, %s378
      %s382 = sphi 0, %s381
      %s398 = sphi 0, %s382
    $region4: #{tpu_custom_call.1} parent=1 // loop_header_branch
      %37 = sbr.rel (%p35) target = $region8
    $region5: #{tpu_custom_call.1} parent=1 // loop_body
      %s39 = ssub.s32 %s34, 1
      %s40 = ssub.s32 %s34, 2
      %s47 = sadd.s32 1, %s42
      %p48 = scmp.ge.s32.totalorder %s47, 1
      %s49 = scalar_select %p48, 0, %s47
      %s50 = sadd.s32 1, %s41
      %s51 = scalar_select %p48, %s50, %s41
      %p52 = scmp.ge.s32.totalorder %s51, 2
      %s53 = scalar_select %p52, 0, %s51
      %s54 = ssub.s32 %s41, %s53
      %p55 = scmp.eq.s32.totalorder %s54, 0
      %s57 = sadd.s32 %s56, 1
      %s58 = scalar_select %p55, %s56, %s57
      %p61 = pneg %p55
      %p62 = scmp.eq.s32.totalorder %s34, 1
      %p63 = por %p61, %p62
      %p64 = scmp.ne.s32.totalorder %s56, %s59
      %p65 = scmp.eq.s32.totalorder %s34, 0
      %p66 = por %p64, %p65
      %p67 = scmp.ne.s32.totalorder %s56, %s59
      %p68 = scmp.eq.s32.totalorder %s39, 1
      %p69 = por %p67, %p68
      %p70 = scmp.ne.s32.totalorder %s59, %s60
      %p71 = scmp.eq.s32.totalorder %s39, 0
      %p72 = por %p70, %p71
      %p73 = scmp.ne.s32.totalorder %s59, %s60
      %p74 = scmp.eq.s32.totalorder %s40, 1
      %p75 = por %p73, %p74
      %p77 = scmp.ne.s32.totalorder %s60, %s76
      %p78 = scmp.eq.s32.totalorder %s40, 0
      %p79 = por %p77, %p78
      %s81 = sadd.s32 %s80, 1
      %p84 = scmp.eq.s32.totalorder %s34, 1
      %p85 = scmp.ne.s32.totalorder %s80, %s82
      %p86 = scmp.eq.s32.totalorder %s34, 0
      %p87 = por %p85, %p86
      %p88 = scmp.ne.s32.totalorder %s80, %s82
      %p89 = scmp.eq.s32.totalorder %s39, 1
      %p90 = por %p88, %p89
      %p91 = scmp.ne.s32.totalorder %s82, %s83
      %p92 = scmp.eq.s32.totalorder %s39, 0
      %p93 = por %p91, %p92
      %p94 = scmp.ne.s32.totalorder %s82, %s83
      %p95 = scmp.eq.s32.totalorder %s40, 1
      %p96 = por %p94, %p95
      %p98 = scmp.ne.s32.totalorder %s83, %s97
      %p99 = scmp.eq.s32.totalorder %s40, 0
      %p100 = por %p98, %p99
      %s102 = sadd.s32 %s101, 1
      %p105 = scmp.eq.s32.totalorder %s34, 1
      %p106 = scmp.ne.s32.totalorder %s101, %s103
      %p107 = scmp.eq.s32.totalorder %s34, 0
      %p108 = por %p106, %p107
      %p109 = scmp.ne.s32.totalorder %s101, %s103
      %p110 = scmp.eq.s32.totalorder %s39, 1
      %p111 = por %p109, %p110
      %p112 = scmp.ne.s32.totalorder %s103, %s104
      %p113 = scmp.eq.s32.totalorder %s39, 0
      %p114 = por %p112, %p113
      %p115 = scmp.ne.s32.totalorder %s103, %s104
      %p116 = scmp.eq.s32.totalorder %s40, 1
      %p117 = por %p115, %p116
      %p119 = scmp.ne.s32.totalorder %s104, %s118
      %p120 = scmp.eq.s32.totalorder %s40, 0
      %p121 = por %p119, %p120
      %s123 = sadd.s32 %s122, 1
      %p126 = scmp.eq.s32.totalorder %s34, 1
      %p127 = scmp.ne.s32.totalorder %s122, %s124
      %p128 = scmp.eq.s32.totalorder %s34, 0
      %p129 = por %p127, %p128
      %p130 = scmp.ne.s32.totalorder %s122, %s124
      %p131 = scmp.eq.s32.totalorder %s39, 1
      %p132 = por %p130, %p131
      %p133 = scmp.ne.s32.totalorder %s124, %s125
      %p134 = scmp.eq.s32.totalorder %s39, 0
      %p135 = por %p133, %p134
      %p136 = scmp.ne.s32.totalorder %s124, %s125
      %p137 = scmp.eq.s32.totalorder %s40, 1
      %p138 = por %p136, %p137
      %p140 = scmp.ne.s32.totalorder %s125, %s139
      %p141 = scmp.eq.s32.totalorder %s40, 0
      %p142 = por %p140, %p141
      %s144 = sadd.s32 %s143, 1
      %p147 = scmp.eq.s32.totalorder %s34, 1
      %p148 = scmp.ne.s32.totalorder %s143, %s145
      %p149 = scmp.eq.s32.totalorder %s34, 0
      %p150 = por %p148, %p149
      %p151 = scmp.ne.s32.totalorder %s143, %s145
      %p152 = scmp.eq.s32.totalorder %s39, 1
      %p153 = por %p151, %p152
      %p154 = scmp.ne.s32.totalorder %s145, %s146
      %p155 = scmp.eq.s32.totalorder %s39, 0
      %p156 = por %p154, %p155
      %p157 = scmp.ne.s32.totalorder %s145, %s146
      %p158 = scmp.eq.s32.totalorder %s40, 1
      %p159 = por %p157, %p158
      %p161 = scmp.ne.s32.totalorder %s146, %s160
      %p162 = scmp.eq.s32.totalorder %s40, 0
      %p163 = por %p161, %p162
      %s165 = sadd.s32 %s164, 1
      %p168 = scmp.eq.s32.totalorder %s34, 1
      %p169 = scmp.ne.s32.totalorder %s164, %s166
      %p170 = scmp.eq.s32.totalorder %s34, 0
      %p171 = por %p169, %p170
      %p172 = scmp.ne.s32.totalorder %s164, %s166
      %p173 = scmp.eq.s32.totalorder %s39, 1
      %p174 = por %p172, %p173
      %p175 = scmp.ne.s32.totalorder %s166, %s167
      %p176 = scmp.eq.s32.totalorder %s39, 0
      %p177 = por %p175, %p176
      %p178 = scmp.ne.s32.totalorder %s166, %s167
      %p179 = scmp.eq.s32.totalorder %s40, 1
      %p180 = por %p178, %p179
      %p182 = scmp.ne.s32.totalorder %s167, %s181
      %p183 = scmp.eq.s32.totalorder %s40, 0
      %p184 = por %p182, %p183
      %s186 = sadd.s32 %s185, 1
      %p189 = scmp.eq.s32.totalorder %s34, 1
      %p190 = scmp.ne.s32.totalorder %s185, %s187
      %p191 = scmp.eq.s32.totalorder %s34, 0
      %p192 = por %p190, %p191
      %p193 = scmp.ne.s32.totalorder %s185, %s187
      %p194 = scmp.eq.s32.totalorder %s39, 1
      %p195 = por %p193, %p194
      %p196 = scmp.ne.s32.totalorder %s187, %s188
      %p197 = scmp.eq.s32.totalorder %s39, 0
      %p198 = por %p196, %p197
      %p199 = scmp.ne.s32.totalorder %s187, %s188
      %p200 = scmp.eq.s32.totalorder %s40, 1
      %p201 = por %p199, %p200
      %p203 = scmp.ne.s32.totalorder %s188, %s202
      %p204 = scmp.eq.s32.totalorder %s40, 0
      %p205 = por %p203, %p204
      %s207 = sadd.s32 %s206, 1
      %p210 = scmp.eq.s32.totalorder %s34, 1
      %p211 = scmp.ne.s32.totalorder %s206, %s208
      %p212 = scmp.eq.s32.totalorder %s34, 0
      %p213 = por %p211, %p212
      %p214 = scmp.ne.s32.totalorder %s206, %s208
      %p215 = scmp.eq.s32.totalorder %s39, 1
      %p216 = por %p214, %p215
      %p217 = scmp.ne.s32.totalorder %s208, %s209
      %p218 = scmp.eq.s32.totalorder %s39, 0
      %p219 = por %p217, %p218
      %p220 = scmp.ne.s32.totalorder %s208, %s209
      %p221 = scmp.eq.s32.totalorder %s40, 1
      %p222 = por %p220, %p221
      %p224 = scmp.ne.s32.totalorder %s209, %s223
      %p225 = scmp.eq.s32.totalorder %s40, 0
      %p226 = por %p224, %p225
      %s228 = sadd.s32 %s227, 1
      %p231 = scmp.eq.s32.totalorder %s34, 1
      %p232 = scmp.ne.s32.totalorder %s227, %s229
      %p233 = scmp.eq.s32.totalorder %s34, 0
      %p234 = por %p232, %p233
      %p235 = scmp.ne.s32.totalorder %s227, %s229
      %p236 = scmp.eq.s32.totalorder %s39, 1
      %p237 = por %p235, %p236
      %p238 = scmp.ne.s32.totalorder %s229, %s230
      %p239 = scmp.eq.s32.totalorder %s39, 0
      %p240 = por %p238, %p239
      %p241 = scmp.ne.s32.totalorder %s229, %s230
      %p242 = scmp.eq.s32.totalorder %s40, 1
      %p243 = por %p241, %p242
      %p245 = scmp.ne.s32.totalorder %s230, %s244
      %p246 = scmp.eq.s32.totalorder %s40, 0
      %p247 = por %p245, %p246
      %s249 = sadd.s32 %s248, 1
      %p252 = scmp.eq.s32.totalorder %s34, 1
      %p253 = scmp.ne.s32.totalorder %s248, %s250
      %p254 = scmp.eq.s32.totalorder %s34, 0
      %p255 = por %p253, %p254
      %p256 = scmp.ne.s32.totalorder %s248, %s250
      %p257 = scmp.eq.s32.totalorder %s39, 1
      %p258 = por %p256, %p257
      %p259 = scmp.ne.s32.totalorder %s250, %s251
      %p260 = scmp.eq.s32.totalorder %s39, 0
      %p261 = por %p259, %p260
      %p262 = scmp.ne.s32.totalorder %s250, %s251
      %p263 = scmp.eq.s32.totalorder %s40, 1
      %p264 = por %p262, %p263
      %p266 = scmp.ne.s32.totalorder %s251, %s265
      %p267 = scmp.eq.s32.totalorder %s40, 0
      %p268 = por %p266, %p267
      %s270 = sadd.s32 %s269, 1
      %p273 = scmp.eq.s32.totalorder %s34, 1
      %p274 = scmp.ne.s32.totalorder %s269, %s271
      %p275 = scmp.eq.s32.totalorder %s34, 0
      %p276 = por %p274, %p275
      %p277 = scmp.ne.s32.totalorder %s269, %s271
      %p278 = scmp.eq.s32.totalorder %s39, 1
      %p279 = por %p277, %p278
      %p280 = scmp.ne.s32.totalorder %s271, %s272
      %p281 = scmp.eq.s32.totalorder %s39, 0
      %p282 = por %p280, %p281
      %p283 = scmp.ne.s32.totalorder %s271, %s272
      %p284 = scmp.eq.s32.totalorder %s40, 1
      %p285 = por %p283, %p284
      %p287 = scmp.ne.s32.totalorder %s272, %s286
      %p288 = scmp.eq.s32.totalorder %s40, 0
      %p289 = por %p287, %p288
      %s291 = sadd.s32 %s290, 1
      %p294 = scmp.eq.s32.totalorder %s34, 1
      %p295 = scmp.ne.s32.totalorder %s290, %s292
      %p296 = scmp.eq.s32.totalorder %s34, 0
      %p297 = por %p295, %p296
      %p298 = scmp.ne.s32.totalorder %s290, %s292
      %p299 = scmp.eq.s32.totalorder %s39, 1
      %p300 = por %p298, %p299
      %p301 = scmp.ne.s32.totalorder %s292, %s293
      %p302 = scmp.eq.s32.totalorder %s39, 0
      %p303 = por %p301, %p302
      %p304 = scmp.ne.s32.totalorder %s292, %s293
      %p305 = scmp.eq.s32.totalorder %s40, 1
      %p306 = por %p304, %p305
      %p308 = scmp.ne.s32.totalorder %s293, %s307
      %p309 = scmp.eq.s32.totalorder %s40, 0
      %p310 = por %p308, %p309
      %s312 = sadd.s32 %s311, 1
      %p315 = scmp.eq.s32.totalorder %s34, 1
      %p316 = scmp.ne.s32.totalorder %s311, %s313
      %p317 = scmp.eq.s32.totalorder %s34, 0
      %p318 = por %p316, %p317
      %p319 = scmp.ne.s32.totalorder %s311, %s313
      %p320 = scmp.eq.s32.totalorder %s39, 1
      %p321 = por %p319, %p320
      %p322 = scmp.ne.s32.totalorder %s313, %s314
      %p323 = scmp.eq.s32.totalorder %s39, 0
      %p324 = por %p322, %p323
      %p325 = scmp.ne.s32.totalorder %s313, %s314
      %p326 = scmp.eq.s32.totalorder %s40, 1
      %p327 = por %p325, %p326
      %p329 = scmp.ne.s32.totalorder %s314, %s328
      %p330 = scmp.eq.s32.totalorder %s40, 0
      %p331 = por %p329, %p330
      %s333 = sadd.s32 %s332, 1
      %p336 = scmp.eq.s32.totalorder %s34, 1
      %p337 = scmp.ne.s32.totalorder %s332, %s334
      %p338 = scmp.eq.s32.totalorder %s34, 0
      %p339 = por %p337, %p338
      %p340 = scmp.ne.s32.totalorder %s332, %s334
      %p341 = scmp.eq.s32.totalorder %s39, 1
      %p342 = por %p340, %p341
      %p343 = scmp.ne.s32.totalorder %s334, %s335
      %p344 = scmp.eq.s32.totalorder %s39, 0
      %p345 = por %p343, %p344
      %p346 = scmp.ne.s32.totalorder %s334, %s335
      %p347 = scmp.eq.s32.totalorder %s40, 1
      %p348 = por %p346, %p347
      %p350 = scmp.ne.s32.totalorder %s335, %s349
      %p351 = scmp.eq.s32.totalorder %s40, 0
      %p352 = por %p350, %p351
      %s354 = sadd.s32 %s353, 1
      %p357 = scmp.eq.s32.totalorder %s34, 1
      %p358 = scmp.ne.s32.totalorder %s353, %s355
      %p359 = scmp.eq.s32.totalorder %s34, 0
      %p360 = por %p358, %p359
      %p361 = scmp.ne.s32.totalorder %s353, %s355
      %p362 = scmp.eq.s32.totalorder %s39, 1
      %p363 = por %p361, %p362
      %p364 = scmp.ne.s32.totalorder %s355, %s356
      %p365 = scmp.eq.s32.totalorder %s39, 0
      %p366 = por %p364, %p365
      %p367 = scmp.ne.s32.totalorder %s355, %s356
      %p368 = scmp.eq.s32.totalorder %s40, 1
      %p369 = por %p367, %p368
      %p371 = scmp.ne.s32.totalorder %s356, %s370
      %p372 = scmp.eq.s32.totalorder %s40, 0
      %p373 = por %p371, %p372
      %s374 = ssub.s32 %s41, %s53
      %s375 = ssub.s32 %s42, %s49
      %s376 = sor.u32 %s374, %s375
      %p377 = scmp.eq.s32.totalorder %s376, 0
      %s379 = sadd.s32 %s378, 1
      %s380 = scalar_select %p377, %s378, %s379
      %p383 = pneg %p377
      %p384 = scmp.eq.s32.totalorder %s34, 1
      %p385 = por %p383, %p384
      %p386 = scmp.ne.s32.totalorder %s378, %s381
      %p387 = scmp.eq.s32.totalorder %s34, 0
      %p388 = por %p386, %p387
      %p389 = scmp.ne.s32.totalorder %s378, %s381
      %p390 = scmp.eq.s32.totalorder %s39, 1
      %p391 = por %p389, %p390
      %p392 = scmp.ne.s32.totalorder %s381, %s382
      %p393 = scmp.eq.s32.totalorder %s39, 0
      %p394 = por %p392, %p393
      %p395 = scmp.ne.s32.totalorder %s381, %s382
      %p396 = scmp.eq.s32.totalorder %s40, 1
      %p397 = por %p395, %p396
      %p399 = scmp.ne.s32.totalorder %s382, %s398
      %p400 = scmp.eq.s32.totalorder %s40, 0
      %p401 = por %p399, %p400
      %p402 = scmp.le.s32.totalorder 1, %s34
      %p403 = scmp.lt.s32.totalorder %s34, 3
      %p404 = pnand %p402, %p403
      %p405 = pneg %p404
      // Predicated region
      $region9: #{tpu_custom_call.1} parent=5 // pred_check
        _
      $region10: #{tpu_custom_call.1} parent=5 // pred_check_branch
        %407 = sbr.rel (%p404) target = $region12
      $region11: #{tpu_custom_call.1} parent=5 // pred_region
        %s408 = ssub.s32 %s34, 1
        // Predicated region
        $region13: #{tpu_custom_call.1} parent=11 // pred_check
          %p409 = pneg %p93
        $region14: #{tpu_custom_call.1} parent=11 // pred_check_branch
          %411 = sbr.rel (%p409) target = $region16
        $region15: #{tpu_custom_call.1} parent=11 // pred_region
          %s413 = ssub.s32 1024, 1024
          %414 = vsyncadd [#allocation8], %s413
          %s415 = sshll.u32 [#allocation7], 4
          %s416 = int_to_ptr.vmem [resolvable:$true] %s415
          %421 = dma.hbm_to_vmem [thread:$0]  %s1, 1024, %s416, [#allocation8], 64, 64, 4
        $region16: #{tpu_custom_call.1} parent=11 // pred_fallthru
          _
        // Predicated region
        $region17: #{tpu_custom_call.1} parent=11 // pred_check
          %p422 = pneg %p114
        $region18: #{tpu_custom_call.1} parent=11 // pred_check_branch
          %424 = sbr.rel (%p422) target = $region20
        $region19: #{tpu_custom_call.1} parent=11 // pred_region
          %s426 = ssub.s32 64, 64
          %427 = vsyncadd [#allocation8], %s426
          %s428 = sshll.u32 [#allocation9], 4
          %s429 = int_to_ptr.vmem [resolvable:$true] %s428
          %434 = dma.hbm_to_vmem [thread:$0]  %s2, 64, %s429, [#allocation8], 16, 16, 1
        $region20: #{tpu_custom_call.1} parent=11 // pred_fallthru
          _
        // Predicated region
        $region21: #{tpu_custom_call.1} parent=11 // pred_check
          %p435 = pneg %p135
        $region22: #{tpu_custom_call.1} parent=11 // pred_check_branch
          %437 = sbr.rel (%p435) target = $region24
        $region23: #{tpu_custom_call.1} parent=11 // pred_region
          %s439 = ssub.s32 1024, 1024
          %440 = vsyncadd [#allocation11], %s439
          %s441 = sshll.u32 [#allocation10], 4
          %s442 = int_to_ptr.vmem [resolvable:$true] %s441
          %447 = dma.hbm_to_vmem [thread:$0]  %s3, 1024, %s442, [#allocation11], 64, 64, 4
        $region24: #{tpu_custom_call.1} parent=11 // pred_fallthru
          _
        // Predicated region
        $region25: #{tpu_custom_call.1} parent=11 // pred_check
          %p448 = pneg %p156
        $region26: #{tpu_custom_call.1} parent=11 // pred_check_branch
          %450 = sbr.rel (%p448) target = $region28
        $region27: #{tpu_custom_call.1} parent=11 // pred_region
          %s452 = ssub.s32 64, 64
          %453 = vsyncadd [#allocation11], %s452
          %s454 = sshll.u32 [#allocation12], 4
          %s455 = int_to_ptr.vmem [resolvable:$true] %s454
          %460 = dma.hbm_to_vmem [thread:$0]  %s4, 64, %s455, [#allocation11], 16, 16, 1
        $region28: #{tpu_custom_call.1} parent=11 // pred_fallthru
          _
        // Predicated region
        $region29: #{tpu_custom_call.1} parent=11 // pred_check
          %p461 = pneg %p177
        $region30: #{tpu_custom_call.1} parent=11 // pred_check_branch
          %463 = sbr.rel (%p461) target = $region32
        $region31: #{tpu_custom_call.1} parent=11 // pred_region
          %s465 = ssub.s32 1024, 1024
          %466 = vsyncadd [#allocation14], %s465
          %s467 = sshll.u32 [#allocation13], 4
          %s468 = int_to_ptr.vmem [resolvable:$true] %s467
          %473 = dma.hbm_to_vmem [thread:$0]  %s5, 1024, %s468, [#allocation14], 64, 64, 4
        $region32: #{tpu_custom_call.1} parent=11 // pred_fallthru
          _
        // Predicated region
        $region33: #{tpu_custom_call.1} parent=11 // pred_check
          %p474 = pneg %p198
        $region34: #{tpu_custom_call.1} parent=11 // pred_check_branch
          %476 = sbr.rel (%p474) target = $region36
        $region35: #{tpu_custom_call.1} parent=11 // pred_region
          %s478 = ssub.s32 64, 64
          %479 = vsyncadd [#allocation14], %s478
          %s480 = sshll.u32 [#allocation15], 4
          %s481 = int_to_ptr.vmem [resolvable:$true] %s480
          %486 = dma.hbm_to_vmem [thread:$0]  %s6, 64, %s481, [#allocation14], 16, 16, 1
        $region36: #{tpu_custom_call.1} parent=11 // pred_fallthru
          _
        // Predicated region
        $region37: #{tpu_custom_call.1} parent=11 // pred_check
          %p487 = pneg %p219
        $region38: #{tpu_custom_call.1} parent=11 // pred_check_branch
          %489 = sbr.rel (%p487) target = $region40
        $region39: #{tpu_custom_call.1} parent=11 // pred_region
          %s491 = ssub.s32 256, 256
          %492 = vsyncadd [#allocation17], %s491
          %s493 = sshll.u32 [#allocation16], 4
          %s494 = int_to_ptr.vmem [resolvable:$true] %s493
          %499 = dma.hbm_to_vmem [thread:$0]  %s7, 256, %s494, [#allocation17], 64, 64, 4
        $region40: #{tpu_custom_call.1} parent=11 // pred_fallthru
          _
        // Predicated region
        $region41: #{tpu_custom_call.1} parent=11 // pred_check
          %p500 = pneg %p240
        $region42: #{tpu_custom_call.1} parent=11 // pred_check_branch
          %502 = sbr.rel (%p500) target = $region44
        $region43: #{tpu_custom_call.1} parent=11 // pred_region
          %s504 = ssub.s32 16, 16
          %505 = vsyncadd [#allocation17], %s504
          %s507 = sshll.u32 [#allocation18], 4
          %s508 = int_to_ptr.vmem [resolvable:$true] %s507
          %510 = dma.hbm_to_vmem [thread:$0]  %s8, 16, %s508, [#allocation17]
        $region44: #{tpu_custom_call.1} parent=11 // pred_fallthru
          _
        // Predicated region
        $region45: #{tpu_custom_call.1} parent=11 // pred_check
          %p511 = pneg %p261
        $region46: #{tpu_custom_call.1} parent=11 // pred_check_branch
          %513 = sbr.rel (%p511) target = $region48
        $region47: #{tpu_custom_call.1} parent=11 // pred_region
          %s515 = ssub.s32 256, 256
          %516 = vsyncadd [#allocation20], %s515
          %s517 = sshll.u32 [#allocation19], 4
          %s518 = int_to_ptr.vmem [resolvable:$true] %s517
          %523 = dma.hbm_to_vmem [thread:$0]  %s9, 256, %s518, [#allocation20], 64, 64, 4
        $region48: #{tpu_custom_call.1} parent=11 // pred_fallthru
          _
        // Predicated region
        $region49: #{tpu_custom_call.1} parent=11 // pred_check
          %p524 = pneg %p282
        $region50: #{tpu_custom_call.1} parent=11 // pred_check_branch
          %526 = sbr.rel (%p524) target = $region52
        $region51: #{tpu_custom_call.1} parent=11 // pred_region
          %s528 = ssub.s32 16, 16
          %529 = vsyncadd [#allocation20], %s528
          %s531 = sshll.u32 [#allocation21], 4
          %s532 = int_to_ptr.vmem [resolvable:$true] %s531
          %534 = dma.hbm_to_vmem [thread:$0]  %s10, 16, %s532, [#allocation20]
        $region52: #{tpu_custom_call.1} parent=11 // pred_fallthru
          _
        // Predicated region
        $region53: #{tpu_custom_call.1} parent=11 // pred_check
          %p535 = pneg %p303
        $region54: #{tpu_custom_call.1} parent=11 // pred_check_branch
          %537 = sbr.rel (%p535) target = $region56
        $region55: #{tpu_custom_call.1} parent=11 // pred_region
          %s539 = ssub.s32 512, 512
          %540 = vsyncadd [#allocation23], %s539
          %s541 = sshll.u32 [#allocation22], 4
          %s542 = int_to_ptr.vmem [resolvable:$true] %s541
          %547 = dma.hbm_to_vmem [thread:$0]  %s11, 512, %s542, [#allocation23], 64, 64, 4
        $region56: #{tpu_custom_call.1} parent=11 // pred_fallthru
          _
        // Predicated region
        $region57: #{tpu_custom_call.1} parent=11 // pred_check
          %p548 = pneg %p324
        $region58: #{tpu_custom_call.1} parent=11 // pred_check_branch
          %550 = sbr.rel (%p548) target = $region60
        $region59: #{tpu_custom_call.1} parent=11 // pred_region
          %s552 = ssub.s32 16, 16
          %553 = vsyncadd [#allocation23], %s552
          %s555 = sshll.u32 [#allocation24], 4
          %s556 = int_to_ptr.vmem [resolvable:$true] %s555
          %558 = dma.hbm_to_vmem [thread:$0]  %s12, 16, %s556, [#allocation23]
        $region60: #{tpu_custom_call.1} parent=11 // pred_fallthru
          _
        // Predicated region
        $region61: #{tpu_custom_call.1} parent=11 // pred_check
          %p559 = pneg %p345
        $region62: #{tpu_custom_call.1} parent=11 // pred_check_branch
          %561 = sbr.rel (%p559) target = $region64
        $region63: #{tpu_custom_call.1} parent=11 // pred_region
          %s563 = ssub.s32 16, 16
          %564 = vsyncadd [#allocation26], %s563
          %s566 = sshll.u32 [#allocation25], 4
          %s567 = int_to_ptr.vmem [resolvable:$true] %s566
          %569 = dma.hbm_to_vmem [thread:$0]  %s13, 16, %s567, [#allocation26]
        $region64: #{tpu_custom_call.1} parent=11 // pred_fallthru
          _
        // Predicated region
        $region65: #{tpu_custom_call.1} parent=11 // pred_check
          %p570 = pneg %p366
        $region66: #{tpu_custom_call.1} parent=11 // pred_check_branch
          %572 = sbr.rel (%p570) target = $region68
        $region67: #{tpu_custom_call.1} parent=11 // pred_region
          %s574 = ssub.s32 16, 16
          %575 = vsyncadd [#allocation26], %s574
          %s577 = sshll.u32 [#allocation27], 4
          %s578 = int_to_ptr.vmem [resolvable:$true] %s577
          %580 = dma.hbm_to_vmem [thread:$0]  %s14, 16, %s578, [#allocation26]
        $region68: #{tpu_custom_call.1} parent=11 // pred_fallthru
          _
      $region12: #{tpu_custom_call.1} parent=5 // pred_fallthru
        _
      %p581 = scmp.lt.s32.totalorder %s34, 2
      // Predicated region
      $region69: #{tpu_custom_call.1} parent=5 // pred_check
        %p582 = pneg %p581
      $region70: #{tpu_custom_call.1} parent=5 // pred_check_branch
        %584 = sbr.rel (%p582) target = $region72
      $region71: #{tpu_custom_call.1} parent=5 // pred_region
        // Predicated region
        $region73: #{tpu_custom_call.1} parent=71 // pred_check
          %p585 = pneg %p66
        $region74: #{tpu_custom_call.1} parent=71 // pred_check_branch
          %587 = sbr.rel (%p585) target = $region76
        $region75: #{tpu_custom_call.1} parent=71 // pred_region
          %s588 = sand.u32 %s56, 1
          %s589 = scalar_lea.sflag [#allocation5], %s588
          %s590 = sand.u32 %s56, 1
          %s591 = smul.addr %s590, 8
          %s592 = scalar_lea.vmem [#allocation4], %s591
          %s594 = ssub.s32 128, 128
          %595 = vsyncadd %s589, %s594
          %s596 = smul.addr %s41, 128
          %s597 = scalar_lea.hbm %s0, %s596
          %s599 = sshll.u32 %s592, 4
          %s600 = int_to_ptr.vmem [resolvable:$true] %s599
          %602 = dma.hbm_to_vmem [thread:$0]  %s597, 128, %s600, %s589
        $region76: #{tpu_custom_call.1} parent=71 // pred_fallthru
          _
      $region72: #{tpu_custom_call.1} parent=5 // pred_fallthru
        _
      %p603 = scmp.le.s32.totalorder 1, %s34
      %p604 = scmp.lt.s32.totalorder %s34, 3
      %p605 = pnand %p603, %p604
      %p606 = pneg %p605
      // Predicated region
      $region77: #{tpu_custom_call.1} parent=5 // pred_check
        _
      $region78: #{tpu_custom_call.1} parent=5 // pred_check_branch
        %608 = sbr.rel (%p605) target = $region80
      $region79: #{tpu_custom_call.1} parent=5 // pred_region
        %s609 = ssub.s32 %s34, 1
        %s610 = sand.u32 %s59, 1
        %s611 = scalar_lea.sflag [#allocation5], %s610
        %s612 = sand.u32 %s59, 1
        %s613 = smul.addr %s612, 8
        %s614 = scalar_lea.vmem [#allocation4], %s613
        // Predicated region
        $region81: #{tpu_custom_call.1} parent=79 // pred_check
          %p615 = pneg %p72
        $region82: #{tpu_custom_call.1} parent=79 // pred_check_branch
          %617 = sbr.rel (%p615) target = $region84
        $region83: #{tpu_custom_call.1} parent=79 // pred_region
          %618 = dma.done %s611, 128
        $region84: #{tpu_custom_call.1} parent=79 // pred_fallthru
          _
        // Predicated region
        $region85: #{tpu_custom_call.1} parent=79 // pred_check
          %p619 = pneg %p93
        $region86: #{tpu_custom_call.1} parent=79 // pred_check_branch
          %621 = sbr.rel (%p619) target = $region88
        $region87: #{tpu_custom_call.1} parent=79 // pred_region
          %622 = dma.done [#allocation8], 1024
        $region88: #{tpu_custom_call.1} parent=79 // pred_fallthru
          _
        // Predicated region
        $region89: #{tpu_custom_call.1} parent=79 // pred_check
          %p623 = pneg %p114
        $region90: #{tpu_custom_call.1} parent=79 // pred_check_branch
          %625 = sbr.rel (%p623) target = $region92
        $region91: #{tpu_custom_call.1} parent=79 // pred_region
          %626 = dma.done [#allocation8], 64
        $region92: #{tpu_custom_call.1} parent=79 // pred_fallthru
          _
        // Predicated region
        $region93: #{tpu_custom_call.1} parent=79 // pred_check
          %p627 = pneg %p135
        $region94: #{tpu_custom_call.1} parent=79 // pred_check_branch
          %629 = sbr.rel (%p627) target = $region96
        $region95: #{tpu_custom_call.1} parent=79 // pred_region
          %630 = dma.done [#allocation11], 1024
        $region96: #{tpu_custom_call.1} parent=79 // pred_fallthru
          _
        // Predicated region
        $region97: #{tpu_custom_call.1} parent=79 // pred_check
          %p631 = pneg %p156
        $region98: #{tpu_custom_call.1} parent=79 // pred_check_branch
          %633 = sbr.rel (%p631) target = $region100
        $region99: #{tpu_custom_call.1} parent=79 // pred_region
          %634 = dma.done [#allocation11], 64
        $region100: #{tpu_custom_call.1} parent=79 // pred_fallthru
          _
        // Predicated region
        $region101: #{tpu_custom_call.1} parent=79 // pred_check
          %p635 = pneg %p177
        $region102: #{tpu_custom_call.1} parent=79 // pred_check_branch
          %637 = sbr.rel (%p635) target = $region104
        $region103: #{tpu_custom_call.1} parent=79 // pred_region
          %638 = dma.done [#allocation14], 1024
        $region104: #{tpu_custom_call.1} parent=79 // pred_fallthru
          _
        // Predicated region
        $region105: #{tpu_custom_call.1} parent=79 // pred_check
          %p639 = pneg %p198
        $region106: #{tpu_custom_call.1} parent=79 // pred_check_branch
          %641 = sbr.rel (%p639) target = $region108
        $region107: #{tpu_custom_call.1} parent=79 // pred_region
          %642 = dma.done [#allocation14], 64
        $region108: #{tpu_custom_call.1} parent=79 // pred_fallthru
          _
        // Predicated region
        $region109: #{tpu_custom_call.1} parent=79 // pred_check
          %p643 = pneg %p219
        $region110: #{tpu_custom_call.1} parent=79 // pred_check_branch
          %645 = sbr.rel (%p643) target = $region112
        $region111: #{tpu_custom_call.1} parent=79 // pred_region
          %646 = dma.done [#allocation17], 256
        $region112: #{tpu_custom_call.1} parent=79 // pred_fallthru
          _
        // Predicated region
        $region113: #{tpu_custom_call.1} parent=79 // pred_check
          %p647 = pneg %p240
        $region114: #{tpu_custom_call.1} parent=79 // pred_check_branch
          %649 = sbr.rel (%p647) target = $region116
        $region115: #{tpu_custom_call.1} parent=79 // pred_region
          %650 = dma.done [#allocation17], 16
        $region116: #{tpu_custom_call.1} parent=79 // pred_fallthru
          _
        // Predicated region
        $region117: #{tpu_custom_call.1} parent=79 // pred_check
          %p651 = pneg %p261
        $region118: #{tpu_custom_call.1} parent=79 // pred_check_branch
          %653 = sbr.rel (%p651) target = $region120
        $region119: #{tpu_custom_call.1} parent=79 // pred_region
          %654 = dma.done [#allocation20], 256
        $region120: #{tpu_custom_call.1} parent=79 // pred_fallthru
          _
        // Predicated region
        $region121: #{tpu_custom_call.1} parent=79 // pred_check
          %p655 = pneg %p282
        $region122: #{tpu_custom_call.1} parent=79 // pred_check_branch
          %657 = sbr.rel (%p655) target = $region124
        $region123: #{tpu_custom_call.1} parent=79 // pred_region
          %658 = dma.done [#allocation20], 16
        $region124: #{tpu_custom_call.1} parent=79 // pred_fallthru
          _
        // Predicated region
        $region125: #{tpu_custom_call.1} parent=79 // pred_check
          %p659 = pneg %p303
        $region126: #{tpu_custom_call.1} parent=79 // pred_check_branch
          %661 = sbr.rel (%p659) target = $region128
        $region127: #{tpu_custom_call.1} parent=79 // pred_region
          %662 = dma.done [#allocation23], 512
        $region128: #{tpu_custom_call.1} parent=79 // pred_fallthru
          _
        // Predicated region
        $region129: #{tpu_custom_call.1} parent=79 // pred_check
          %p663 = pneg %p324
        $region130: #{tpu_custom_call.1} parent=79 // pred_check_branch
          %665 = sbr.rel (%p663) target = $region132
        $region131: #{tpu_custom_call.1} parent=79 // pred_region
          %666 = dma.done [#allocation23], 16
        $region132: #{tpu_custom_call.1} parent=79 // pred_fallthru
          _
        // Predicated region
        $region133: #{tpu_custom_call.1} parent=79 // pred_check
          %p667 = pneg %p345
        $region134: #{tpu_custom_call.1} parent=79 // pred_check_branch
          %669 = sbr.rel (%p667) target = $region136
        $region135: #{tpu_custom_call.1} parent=79 // pred_region
          %670 = dma.done [#allocation26], 16
        $region136: #{tpu_custom_call.1} parent=79 // pred_fallthru
          _
        // Predicated region
        $region137: #{tpu_custom_call.1} parent=79 // pred_check
          %p671 = pneg %p366
        $region138: #{tpu_custom_call.1} parent=79 // pred_check_branch
          %673 = sbr.rel (%p671) target = $region140
        $region139: #{tpu_custom_call.1} parent=79 // pred_region
          %674 = dma.done [#allocation26], 16
        $region140: #{tpu_custom_call.1} parent=79 // pred_fallthru
          _
        %s675 = sand.u32 %s59, 1
        %s676 = scalar_lea.sflag [#allocation5], %s675
        %s677 = sand.u32 %s59, 1
        %s678 = smul.addr %s677, 8
        %s679 = scalar_lea.vmem [#allocation4], %s678
        %p680 = pneg %p72
        %p681 = pneg %p69
        %p682 = pneg %p93
        %p683 = pneg %p90
        %p684 = pneg %p114
        %p685 = pneg %p111
        %p686 = pneg %p135
        %p687 = pneg %p132
        %p688 = pneg %p156
        %p689 = pneg %p153
        %p690 = pneg %p177
        %p691 = pneg %p174
        %p692 = pneg %p198
        %p693 = pneg %p195
        %p694 = pneg %p219
        %p695 = pneg %p216
        %p696 = pneg %p240
        %p697 = pneg %p237
        %p698 = pneg %p261
        %p699 = pneg %p258
        %p700 = pneg %p282
        %p701 = pneg %p279
        %p702 = pneg %p303
        %p703 = pneg %p300
        %p704 = pneg %p324
        %p705 = pneg %p321
        %p706 = pneg %p345
        %p707 = pneg %p342
        %p708 = pneg %p366
        %p709 = pneg %p363
        %p710 = pneg %p394
        %p711 = pneg %p391
        %s712 = sand.u32 %s381, 1
        %s713 = scalar_lea.sflag [#allocation6], %s712
        %s714 = sand.u32 %s381, 1
        %s715 = smul.addr %s714, 8
        %s716 = scalar_lea.vmem [#allocation28], %s715
        %p718 = scmp.eq.s32.totalorder %s44, 0
        // Predicated region
        $region141: #{tpu_custom_call.1} parent=79 // pred_check
          %p719 = pneg %p718
        $region142: #{tpu_custom_call.1} parent=79 // pred_check_branch
          %721 = sbr.rel (%p719) target = $region144
        $region143: #{tpu_custom_call.1} parent=79 // pred_region
          %v722 = vld [vmem:[%s614] sm:$0xff]
          %v723 = vpack.c.bf16 %v722, %v722
          %v724 = vld [vmem:[#allocation10] sm:$0xf]
          %v725 = vld [vmem:[#allocation10 + $0x4] sm:$0xf]
          %v726 = vld [vmem:[#allocation10 + $0x8] sm:$0xf]
          %v727 = vld [vmem:[#allocation10 + $0xc] sm:$0xf]
          %v728 = vld [vmem:[#allocation12] sm:$0x1]
          %v730 = vlaneseq
          %v731 = vshrl.u32 %v730, 7
          %v732 = vsub.s32 0, %v731
          %v733 = vrot.slane %v728, %v732
          %v739 = vunpack.c.l.b16 %v724
          %v740 = vunpack.c.l.b16 %v725
          %v741 = vunpack.c.l.b16 %v726
          %v742 = vunpack.c.l.b16 %v727
          %v743 = vpack.c.b16 %v740, %v739
          %v744 = vpack.c.b16 %v742, %v741
          %vm747 = vcmask 261120
          %v749 = vsel %vm747, %v723, 0
          %751 = vmatprep.subr.bf16.mxu0 0
          %752 = vmatpush1.bf16.msra.mxu0 %v743
          %753 = vmatprep.subr.bf16.mxu0 0
          %754 = vmatpush1.bf16.msra.mxu0 %v744
          %755 = vmatprep.subr.bf16.mxu0 0
          %756 = vmatpush1.bf16.msra.mxu0 0
          %757 = vmatprep.subr.bf16.mxu0 0
          %758 = vmatpush1.bf16.msra.mxu0 0
          %759 = vmatprep.subr.bf16.mxu0 0
          %760 = vmatpush1.bf16.msra.mxu0 0
          %761 = vmatprep.subr.bf16.mxu0 0
          %762 = vmatpush1.bf16.msra.mxu0 0
          %763 = vmatprep.subr.bf16.mxu0 0
          %764 = vmatpush1.bf16.msra.mxu0 0
          %765 = vmatprep.subr.bf16.mxu0 0
          %766 = vmatpush1.bf16.msra.mxu0 0
          %767 = vmatprep.subr.bf16.mxu0 0
          %768 = vmatpush1.bf16.msra.mxu0 0
          %769 = vmatprep.subr.bf16.mxu0 0
          %770 = vmatpush1.bf16.msra.mxu0 0
          %771 = vmatprep.subr.bf16.mxu0 0
          %772 = vmatpush1.bf16.msra.mxu0 0
          %773 = vmatprep.subr.bf16.mxu0 0
          %774 = vmatpush1.bf16.msra.mxu0 0
          %775 = vmatprep.subr.bf16.mxu0 0
          %776 = vmatpush1.bf16.msra.mxu0 0
          %777 = vmatprep.subr.bf16.mxu0 0
          %778 = vmatpush1.bf16.msra.mxu0 0
          %779 = vmatprep.subr.bf16.mxu0 0
          %780 = vmatpush1.bf16.msra.mxu0 0
          %781 = vmatprep.subr.bf16.mxu0 0
          %782 = vmatpush1.bf16.msra.mxu0 0
          %783 = vmatprep.mubr.bf16.mxu0 0
          %784 = vmatmul.mubr.bf16.gmra.mrb[0].mxu0 %v749
          %v785 = vpop.f32.mrb[0].mxu0
          %v786 = vadd.f32 %v733, %v785
          %v787 = vpop.f32.mrb[0].mxu0
          %v788 = vpop.f32.mrb[0].mxu0
          %v789 = vpop.f32.mrb[0].mxu0
          %790 = vdwg.mxu0
          %v791 = vld [vmem:[#allocation13] sm:$0xf]
          %v792 = vld [vmem:[#allocation13 + $0x4] sm:$0xf]
          %v793 = vld [vmem:[#allocation13 + $0x8] sm:$0xf]
          %v794 = vld [vmem:[#allocation13 + $0xc] sm:$0xf]
          %v795 = vld [vmem:[#allocation15] sm:$0x1]
          %v797 = vlaneseq
          %v798 = vshrl.u32 %v797, 7
          %v799 = vsub.s32 0, %v798
          %v800 = vrot.slane %v795, %v799
          %v806 = vunpack.c.l.b16 %v791
          %v807 = vunpack.c.l.b16 %v792
          %v808 = vunpack.c.l.b16 %v793
          %v809 = vunpack.c.l.b16 %v794
          %v810 = vpack.c.b16 %v807, %v806
          %v811 = vpack.c.b16 %v809, %v808
          %814 = vmatprep.subr.bf16.mxu0 0
          %815 = vmatpush1.bf16.msra.mxu0 %v810
          %816 = vmatprep.subr.bf16.mxu0 0
          %817 = vmatpush1.bf16.msra.mxu0 %v811
          %818 = vmatprep.subr.bf16.mxu0 0
          %819 = vmatpush1.bf16.msra.mxu0 0
          %820 = vmatprep.subr.bf16.mxu0 0
          %821 = vmatpush1.bf16.msra.mxu0 0
          %822 = vmatprep.subr.bf16.mxu0 0
          %823 = vmatpush1.bf16.msra.mxu0 0
          %824 = vmatprep.subr.bf16.mxu0 0
          %825 = vmatpush1.bf16.msra.mxu0 0
          %826 = vmatprep.subr.bf16.mxu0 0
          %827 = vmatpush1.bf16.msra.mxu0 0
          %828 = vmatprep.subr.bf16.mxu0 0
          %829 = vmatpush1.bf16.msra.mxu0 0
          %830 = vmatprep.subr.bf16.mxu0 0
          %831 = vmatpush1.bf16.msra.mxu0 0
          %832 = vmatprep.subr.bf16.mxu0 0
          %833 = vmatpush1.bf16.msra.mxu0 0
          %834 = vmatprep.subr.bf16.mxu0 0
          %835 = vmatpush1.bf16.msra.mxu0 0
          %836 = vmatprep.subr.bf16.mxu0 0
          %837 = vmatpush1.bf16.msra.mxu0 0
          %838 = vmatprep.subr.bf16.mxu0 0
          %839 = vmatpush1.bf16.msra.mxu0 0
          %840 = vmatprep.subr.bf16.mxu0 0
          %841 = vmatpush1.bf16.msra.mxu0 0
          %842 = vmatprep.subr.bf16.mxu0 0
          %843 = vmatpush1.bf16.msra.mxu0 0
          %844 = vmatprep.subr.bf16.mxu0 0
          %845 = vmatpush1.bf16.msra.mxu0 0
          %846 = vmatprep.mubr.bf16.mxu0 0
          %847 = vmatmul.mubr.bf16.gmra.mrb[0].mxu0 %v749
          %v848 = vpop.f32.mrb[0].mxu0
          %v849 = vadd.f32 %v800, %v848
          %v850 = vpop.f32.mrb[0].mxu0
          %v851 = vpop.f32.mrb[0].mxu0
          %v852 = vpop.f32.mrb[0].mxu0
          %853 = vdwg.mxu0
          %v854 = vpack.c.bf16 %v786, %v786
          %vm855 = vcmask 60416
          %856 = vst.msk [vmem:[#allocation2] sm:$0xf] %vm855, %v854
          %v857 = vpack.c.bf16 %v849, %v849
          %858 = vst.msk [vmem:[#allocation3] sm:$0xf] %vm855, %v857
          %s859 = scalar_lea.vmem [#allocation10], 16
          %v860 = vld [vmem:[%s859] sm:$0xf]
          %v861 = vld [vmem:[%s859 + $0x4] sm:$0xf]
          %v862 = vld [vmem:[%s859 + $0x8] sm:$0xf]
          %v863 = vld [vmem:[%s859 + $0xc] sm:$0xf]
          %s864 = scalar_lea.vmem [#allocation12], 1
          %v865 = vld [vmem:[%s864] sm:$0x1]
          %v867 = vlaneseq
          %v868 = vshrl.u32 %v867, 7
          %v869 = vsub.s32 0, %v868
          %v870 = vrot.slane %v865, %v869
          %v876 = vunpack.c.l.b16 %v860
          %v877 = vunpack.c.l.b16 %v861
          %v878 = vunpack.c.l.b16 %v862
          %v879 = vunpack.c.l.b16 %v863
          %v880 = vpack.c.b16 %v877, %v876
          %v881 = vpack.c.b16 %v879, %v878
          %884 = vmatprep.subr.bf16.mxu0 0
          %885 = vmatpush1.bf16.msra.mxu0 %v880
          %886 = vmatprep.subr.bf16.mxu0 0
          %887 = vmatpush1.bf16.msra.mxu0 %v881
          %888 = vmatprep.subr.bf16.mxu0 0
          %889 = vmatpush1.bf16.msra.mxu0 0
          %890 = vmatprep.subr.bf16.mxu0 0
          %891 = vmatpush1.bf16.msra.mxu0 0
          %892 = vmatprep.subr.bf16.mxu0 0
          %893 = vmatpush1.bf16.msra.mxu0 0
          %894 = vmatprep.subr.bf16.mxu0 0
          %895 = vmatpush1.bf16.msra.mxu0 0
          %896 = vmatprep.subr.bf16.mxu0 0
          %897 = vmatpush1.bf16.msra.mxu0 0
          %898 = vmatprep.subr.bf16.mxu0 0
          %899 = vmatpush1.bf16.msra.mxu0 0
          %900 = vmatprep.subr.bf16.mxu0 0
          %901 = vmatpush1.bf16.msra.mxu0 0
          %902 = vmatprep.subr.bf16.mxu0 0
          %903 = vmatpush1.bf16.msra.mxu0 0
          %904 = vmatprep.subr.bf16.mxu0 0
          %905 = vmatpush1.bf16.msra.mxu0 0
          %906 = vmatprep.subr.bf16.mxu0 0
          %907 = vmatpush1.bf16.msra.mxu0 0
          %908 = vmatprep.subr.bf16.mxu0 0
          %909 = vmatpush1.bf16.msra.mxu0 0
          %910 = vmatprep.subr.bf16.mxu0 0
          %911 = vmatpush1.bf16.msra.mxu0 0
          %912 = vmatprep.subr.bf16.mxu0 0
          %913 = vmatpush1.bf16.msra.mxu0 0
          %914 = vmatprep.subr.bf16.mxu0 0
          %915 = vmatpush1.bf16.msra.mxu0 0
          %916 = vmatprep.mubr.bf16.mxu0 0
          %917 = vmatmul.mubr.bf16.gmra.mrb[0].mxu0 %v749
          %v918 = vpop.f32.mrb[0].mxu0
          %v919 = vadd.f32 %v870, %v918
          %v920 = vpop.f32.mrb[0].mxu0
          %v921 = vpop.f32.mrb[0].mxu0
          %v922 = vpop.f32.mrb[0].mxu0
          %923 = vdwg.mxu0
          %s924 = scalar_lea.vmem [#allocation13], 16
          %v925 = vld [vmem:[%s924] sm:$0xf]
          %v926 = vld [vmem:[%s924 + $0x4] sm:$0xf]
          %v927 = vld [vmem:[%s924 + $0x8] sm:$0xf]
          %v928 = vld [vmem:[%s924 + $0xc] sm:$0xf]
          %s929 = scalar_lea.vmem [#allocation15], 1
          %v930 = vld [vmem:[%s929] sm:$0x1]
          %v932 = vlaneseq
          %v933 = vshrl.u32 %v932, 7
          %v934 = vsub.s32 0, %v933
          %v935 = vrot.slane %v930, %v934
          %v941 = vunpack.c.l.b16 %v925
          %v942 = vunpack.c.l.b16 %v926
          %v943 = vunpack.c.l.b16 %v927
          %v944 = vunpack.c.l.b16 %v928
          %v945 = vpack.c.b16 %v942, %v941
          %v946 = vpack.c.b16 %v944, %v943
          %949 = vmatprep.subr.bf16.mxu0 0
          %950 = vmatpush1.bf16.msra.mxu0 %v945
          %951 = vmatprep.subr.bf16.mxu0 0
          %952 = vmatpush1.bf16.msra.mxu0 %v946
          %953 = vmatprep.subr.bf16.mxu0 0
          %954 = vmatpush1.bf16.msra.mxu0 0
          %955 = vmatprep.subr.bf16.mxu0 0
          %956 = vmatpush1.bf16.msra.mxu0 0
          %957 = vmatprep.subr.bf16.mxu0 0
          %958 = vmatpush1.bf16.msra.mxu0 0
          %959 = vmatprep.subr.bf16.mxu0 0
          %960 = vmatpush1.bf16.msra.mxu0 0
          %961 = vmatprep.subr.bf16.mxu0 0
          %962 = vmatpush1.bf16.msra.mxu0 0
          %963 = vmatprep.subr.bf16.mxu0 0
          %964 = vmatpush1.bf16.msra.mxu0 0
          %965 = vmatprep.subr.bf16.mxu0 0
          %966 = vmatpush1.bf16.msra.mxu0 0
          %967 = vmatprep.subr.bf16.mxu0 0
          %968 = vmatpush1.bf16.msra.mxu0 0
          %969 = vmatprep.subr.bf16.mxu0 0
          %970 = vmatpush1.bf16.msra.mxu0 0
          %971 = vmatprep.subr.bf16.mxu0 0
          %972 = vmatpush1.bf16.msra.mxu0 0
          %973 = vmatprep.subr.bf16.mxu0 0
          %974 = vmatpush1.bf16.msra.mxu0 0
          %975 = vmatprep.subr.bf16.mxu0 0
          %976 = vmatpush1.bf16.msra.mxu0 0
          %977 = vmatprep.subr.bf16.mxu0 0
          %978 = vmatpush1.bf16.msra.mxu0 0
          %979 = vmatprep.subr.bf16.mxu0 0
          %980 = vmatpush1.bf16.msra.mxu0 0
          %981 = vmatprep.mubr.bf16.mxu0 0
          %982 = vmatmul.mubr.bf16.gmra.mrb[0].mxu0 %v749
          %v983 = vpop.f32.mrb[0].mxu0
          %v984 = vadd.f32 %v935, %v983
          %v985 = vpop.f32.mrb[0].mxu0
          %v986 = vpop.f32.mrb[0].mxu0
          %v987 = vpop.f32.mrb[0].mxu0
          %988 = vdwg.mxu0
          %v989 = vpack.c.bf16 %v919, %v919
          %s990 = scalar_lea.vmem [#allocation2], 4
          %991 = vst.msk [vmem:[%s990] sm:$0xf] %vm855, %v989
          %v992 = vpack.c.bf16 %v984, %v984
          %s993 = scalar_lea.vmem [#allocation3], 4
          %994 = vst.msk [vmem:[%s993] sm:$0xf] %vm855, %v992
          %s995 = scalar_lea.vmem [#allocation10], 32
          %v996 = vld [vmem:[%s995] sm:$0xf]
          %v997 = vld [vmem:[%s995 + $0x4] sm:$0xf]
          %v998 = vld [vmem:[%s995 + $0x8] sm:$0xf]
          %v999 = vld [vmem:[%s995 + $0xc] sm:$0xf]
          %s1000 = scalar_lea.vmem [#allocation12], 2
          %v1001 = vld [vmem:[%s1000] sm:$0x1]
          %v1003 = vlaneseq
          %v1004 = vshrl.u32 %v1003, 7
          %v1005 = vsub.s32 0, %v1004
          %v1006 = vrot.slane %v1001, %v1005
          %v1012 = vunpack.c.l.b16 %v996
          %v1013 = vunpack.c.l.b16 %v997
          %v1014 = vunpack.c.l.b16 %v998
          %v1015 = vunpack.c.l.b16 %v999
          %v1016 = vpack.c.b16 %v1013, %v1012
          %v1017 = vpack.c.b16 %v1015, %v1014
          %1020 = vmatprep.subr.bf16.mxu0 0
          %1021 = vmatpush1.bf16.msra.mxu0 %v1016
          %1022 = vmatprep.subr.bf16.mxu0 0
          %1023 = vmatpush1.bf16.msra.mxu0 %v1017
          %1024 = vmatprep.subr.bf16.mxu0 0
          %1025 = vmatpush1.bf16.msra.mxu0 0
          %1026 = vmatprep.subr.bf16.mxu0 0
          %1027 = vmatpush1.bf16.msra.mxu0 0
          %1028 = vmatprep.subr.bf16.mxu0 0
          %1029 = vmatpush1.bf16.msra.mxu0 0
          %1030 = vmatprep.subr.bf16.mxu0 0
          %1031 = vmatpush1.bf16.msra.mxu0 0
          %1032 = vmatprep.subr.bf16.mxu0 0
          %1033 = vmatpush1.bf16.msra.mxu0 0
          %1034 = vmatprep.subr.bf16.mxu0 0
          %1035 = vmatpush1.bf16.msra.mxu0 0
          %1036 = vmatprep.subr.bf16.mxu0 0
          %1037 = vmatpush1.bf16.msra.mxu0 0
          %1038 = vmatprep.subr.bf16.mxu0 0
          %1039 = vmatpush1.bf16.msra.mxu0 0
          %1040 = vmatprep.subr.bf16.mxu0 0
          %1041 = vmatpush1.bf16.msra.mxu0 0
          %1042 = vmatprep.subr.bf16.mxu0 0
          %1043 = vmatpush1.bf16.msra.mxu0 0
          %1044 = vmatprep.subr.bf16.mxu0 0
          %1045 = vmatpush1.bf16.msra.mxu0 0
          %1046 = vmatprep.subr.bf16.mxu0 0
          %1047 = vmatpush1.bf16.msra.mxu0 0
          %1048 = vmatprep.subr.bf16.mxu0 0
          %1049 = vmatpush1.bf16.msra.mxu0 0
          %1050 = vmatprep.subr.bf16.mxu0 0
          %1051 = vmatpush1.bf16.msra.mxu0 0
          %1052 = vmatprep.mubr.bf16.mxu0 0
          %1053 = vmatmul.mubr.bf16.gmra.mrb[0].mxu0 %v749
          %v1054 = vpop.f32.mrb[0].mxu0
          %v1055 = vadd.f32 %v1006, %v1054
          %v1056 = vpop.f32.mrb[0].mxu0
          %v1057 = vpop.f32.mrb[0].mxu0
          %v1058 = vpop.f32.mrb[0].mxu0
          %1059 = vdwg.mxu0
          %s1060 = scalar_lea.vmem [#allocation13], 32
          %v1061 = vld [vmem:[%s1060] sm:$0xf]
          %v1062 = vld [vmem:[%s1060 + $0x4] sm:$0xf]
          %v1063 = vld [vmem:[%s1060 + $0x8] sm:$0xf]
          %v1064 = vld [vmem:[%s1060 + $0xc] sm:$0xf]
          %s1065 = scalar_lea.vmem [#allocation15], 2
          %v1066 = vld [vmem:[%s1065] sm:$0x1]
          %v1068 = vlaneseq
          %v1069 = vshrl.u32 %v1068, 7
          %v1070 = vsub.s32 0, %v1069
          %v1071 = vrot.slane %v1066, %v1070
          %v1077 = vunpack.c.l.b16 %v1061
          %v1078 = vunpack.c.l.b16 %v1062
          %v1079 = vunpack.c.l.b16 %v1063
          %v1080 = vunpack.c.l.b16 %v1064
          %v1081 = vpack.c.b16 %v1078, %v1077
          %v1082 = vpack.c.b16 %v1080, %v1079
          %1085 = vmatprep.subr.bf16.mxu0 0
          %1086 = vmatpush1.bf16.msra.mxu0 %v1081
          %1087 = vmatprep.subr.bf16.mxu0 0
          %1088 = vmatpush1.bf16.msra.mxu0 %v1082
          %1089 = vmatprep.subr.bf16.mxu0 0
          %1090 = vmatpush1.bf16.msra.mxu0 0
          %1091 = vmatprep.subr.bf16.mxu0 0
          %1092 = vmatpush1.bf16.msra.mxu0 0
          %1093 = vmatprep.subr.bf16.mxu0 0
          %1094 = vmatpush1.bf16.msra.mxu0 0
          %1095 = vmatprep.subr.bf16.mxu0 0
          %1096 = vmatpush1.bf16.msra.mxu0 0
          %1097 = vmatprep.subr.bf16.mxu0 0
          %1098 = vmatpush1.bf16.msra.mxu0 0
          %1099 = vmatprep.subr.bf16.mxu0 0
          %1100 = vmatpush1.bf16.msra.mxu0 0
          %1101 = vmatprep.subr.bf16.mxu0 0
          %1102 = vmatpush1.bf16.msra.mxu0 0
          %1103 = vmatprep.subr.bf16.mxu0 0
          %1104 = vmatpush1.bf16.msra.mxu0 0
          %1105 = vmatprep.subr.bf16.mxu0 0
          %1106 = vmatpush1.bf16.msra.mxu0 0
          %1107 = vmatprep.subr.bf16.mxu0 0
          %1108 = vmatpush1.bf16.msra.mxu0 0
          %1109 = vmatprep.subr.bf16.mxu0 0
          %1110 = vmatpush1.bf16.msra.mxu0 0
          %1111 = vmatprep.subr.bf16.mxu0 0
          %1112 = vmatpush1.bf16.msra.mxu0 0
          %1113 = vmatprep.subr.bf16.mxu0 0
          %1114 = vmatpush1.bf16.msra.mxu0 0
          %1115 = vmatprep.subr.bf16.mxu0 0
          %1116 = vmatpush1.bf16.msra.mxu0 0
          %1117 = vmatprep.mubr.bf16.mxu0 0
          %1118 = vmatmul.mubr.bf16.gmra.mrb[0].mxu0 %v749
          %v1119 = vpop.f32.mrb[0].mxu0
          %v1120 = vadd.f32 %v1071, %v1119
          %v1121 = vpop.f32.mrb[0].mxu0
          %v1122 = vpop.f32.mrb[0].mxu0
          %v1123 = vpop.f32.mrb[0].mxu0
          %1124 = vdwg.mxu0
          %v1125 = vpack.c.bf16 %v1055, %v1055
          %s1126 = scalar_lea.vmem [#allocation2], 8
          %1127 = vst.msk [vmem:[%s1126] sm:$0xf] %vm855, %v1125
          %v1128 = vpack.c.bf16 %v1120, %v1120
          %s1129 = scalar_lea.vmem [#allocation3], 8
          %1130 = vst.msk [vmem:[%s1129] sm:$0xf] %vm855, %v1128
          %s1131 = scalar_lea.vmem [#allocation10], 48
          %v1132 = vld [vmem:[%s1131] sm:$0xf]
          %v1133 = vld [vmem:[%s1131 + $0x4] sm:$0xf]
          %v1134 = vld [vmem:[%s1131 + $0x8] sm:$0xf]
          %v1135 = vld [vmem:[%s1131 + $0xc] sm:$0xf]
          %s1136 = scalar_lea.vmem [#allocation12], 3
          %v1137 = vld [vmem:[%s1136] sm:$0x1]
          %v1139 = vlaneseq
          %v1140 = vshrl.u32 %v1139, 7
          %v1141 = vsub.s32 0, %v1140
          %v1142 = vrot.slane %v1137, %v1141
          %v1148 = vunpack.c.l.b16 %v1132
          %v1149 = vunpack.c.l.b16 %v1133
          %v1150 = vunpack.c.l.b16 %v1134
          %v1151 = vunpack.c.l.b16 %v1135
          %v1152 = vpack.c.b16 %v1149, %v1148
          %v1153 = vpack.c.b16 %v1151, %v1150
          %1156 = vmatprep.subr.bf16.mxu0 0
          %1157 = vmatpush1.bf16.msra.mxu0 %v1152
          %1158 = vmatprep.subr.bf16.mxu0 0
          %1159 = vmatpush1.bf16.msra.mxu0 %v1153
          %1160 = vmatprep.subr.bf16.mxu0 0
          %1161 = vmatpush1.bf16.msra.mxu0 0
          %1162 = vmatprep.subr.bf16.mxu0 0
          %1163 = vmatpush1.bf16.msra.mxu0 0
          %1164 = vmatprep.subr.bf16.mxu0 0
          %1165 = vmatpush1.bf16.msra.mxu0 0
          %1166 = vmatprep.subr.bf16.mxu0 0
          %1167 = vmatpush1.bf16.msra.mxu0 0
          %1168 = vmatprep.subr.bf16.mxu0 0
          %1169 = vmatpush1.bf16.msra.mxu0 0
          %1170 = vmatprep.subr.bf16.mxu0 0
          %1171 = vmatpush1.bf16.msra.mxu0 0
          %1172 = vmatprep.subr.bf16.mxu0 0
          %1173 = vmatpush1.bf16.msra.mxu0 0
          %1174 = vmatprep.subr.bf16.mxu0 0
          %1175 = vmatpush1.bf16.msra.mxu0 0
          %1176 = vmatprep.subr.bf16.mxu0 0
          %1177 = vmatpush1.bf16.msra.mxu0 0
          %1178 = vmatprep.subr.bf16.mxu0 0
          %1179 = vmatpush1.bf16.msra.mxu0 0
          %1180 = vmatprep.subr.bf16.mxu0 0
          %1181 = vmatpush1.bf16.msra.mxu0 0
          %1182 = vmatprep.subr.bf16.mxu0 0
          %1183 = vmatpush1.bf16.msra.mxu0 0
          %1184 = vmatprep.subr.bf16.mxu0 0
          %1185 = vmatpush1.bf16.msra.mxu0 0
          %1186 = vmatprep.subr.bf16.mxu0 0
          %1187 = vmatpush1.bf16.msra.mxu0 0
          %1188 = vmatprep.mubr.bf16.mxu0 0
          %1189 = vmatmul.mubr.bf16.gmra.mrb[0].mxu0 %v749
          %v1190 = vpop.f32.mrb[0].mxu0
          %v1191 = vadd.f32 %v1142, %v1190
          %v1192 = vpop.f32.mrb[0].mxu0
          %v1193 = vpop.f32.mrb[0].mxu0
          %v1194 = vpop.f32.mrb[0].mxu0
          %1195 = vdwg.mxu0
          %s1196 = scalar_lea.vmem [#allocation13], 48
          %v1197 = vld [vmem:[%s1196] sm:$0xf]
          %v1198 = vld [vmem:[%s1196 + $0x4] sm:$0xf]
          %v1199 = vld [vmem:[%s1196 + $0x8] sm:$0xf]
          %v1200 = vld [vmem:[%s1196 + $0xc] sm:$0xf]
          %s1201 = scalar_lea.vmem [#allocation15], 3
          %v1202 = vld [vmem:[%s1201] sm:$0x1]
          %v1204 = vlaneseq
          %v1205 = vshrl.u32 %v1204, 7
          %v1206 = vsub.s32 0, %v1205
          %v1207 = vrot.slane %v1202, %v1206
          %v1213 = vunpack.c.l.b16 %v1197
          %v1214 = vunpack.c.l.b16 %v1198
          %v1215 = vunpack.c.l.b16 %v1199
          %v1216 = vunpack.c.l.b16 %v1200
          %v1217 = vpack.c.b16 %v1214, %v1213
          %v1218 = vpack.c.b16 %v1216, %v1215
          %1221 = vmatprep.subr.bf16.mxu0 0
          %1222 = vmatpush1.bf16.msra.mxu0 %v1217
          %1223 = vmatprep.subr.bf16.mxu0 0
          %1224 = vmatpush1.bf16.msra.mxu0 %v1218
          %1225 = vmatprep.subr.bf16.mxu0 0
          %1226 = vmatpush1.bf16.msra.mxu0 0
          %1227 = vmatprep.subr.bf16.mxu0 0
          %1228 = vmatpush1.bf16.msra.mxu0 0
          %1229 = vmatprep.subr.bf16.mxu0 0
          %1230 = vmatpush1.bf16.msra.mxu0 0
          %1231 = vmatprep.subr.bf16.mxu0 0
          %1232 = vmatpush1.bf16.msra.mxu0 0
          %1233 = vmatprep.subr.bf16.mxu0 0
          %1234 = vmatpush1.bf16.msra.mxu0 0
          %1235 = vmatprep.subr.bf16.mxu0 0
          %1236 = vmatpush1.bf16.msra.mxu0 0
          %1237 = vmatprep.subr.bf16.mxu0 0
          %1238 = vmatpush1.bf16.msra.mxu0 0
          %1239 = vmatprep.subr.bf16.mxu0 0
          %1240 = vmatpush1.bf16.msra.mxu0 0
          %1241 = vmatprep.subr.bf16.mxu0 0
          %1242 = vmatpush1.bf16.msra.mxu0 0
          %1243 = vmatprep.subr.bf16.mxu0 0
          %1244 = vmatpush1.bf16.msra.mxu0 0
          %1245 = vmatprep.subr.bf16.mxu0 0
          %1246 = vmatpush1.bf16.msra.mxu0 0
          %1247 = vmatprep.subr.bf16.mxu0 0
          %1248 = vmatpush1.bf16.msra.mxu0 0
          %1249 = vmatprep.subr.bf16.mxu0 0
          %1250 = vmatpush1.bf16.msra.mxu0 0
          %1251 = vmatprep.subr.bf16.mxu0 0
          %1252 = vmatpush1.bf16.msra.mxu0 0
          %1253 = vmatprep.mubr.bf16.mxu0 0
          %1254 = vmatmul.mubr.bf16.gmra.mrb[0].mxu0 %v749
          %v1255 = vpop.f32.mrb[0].mxu0
          %v1256 = vadd.f32 %v1207, %v1255
          %v1257 = vpop.f32.mrb[0].mxu0
          %v1258 = vpop.f32.mrb[0].mxu0
          %v1259 = vpop.f32.mrb[0].mxu0
          %1260 = vdwg.mxu0
          %v1261 = vpack.c.bf16 %v1191, %v1191
          %s1262 = scalar_lea.vmem [#allocation2], 12
          %1263 = vst.msk [vmem:[%s1262] sm:$0xf] %vm855, %v1261
          %v1264 = vpack.c.bf16 %v1256, %v1256
          %s1265 = scalar_lea.vmem [#allocation3], 12
          %1266 = vst.msk [vmem:[%s1265] sm:$0xf] %vm855, %v1264
        $region144: #{tpu_custom_call.1} parent=79 // pred_fallthru
          _
        %s1267 = smul.u32 %s44, 8
        %s1268 = scalar_lea.vmem %s614, %s1267 [#allocation4]
        %v1269 = vld [vmem:[%s1268] sm:$0xff]
        %v1270 = vpack.c.bf16 %v1269, %v1269
        %v1271 = vld [vmem:[#allocation25] sm:$0x1]
        %v1272 = vld [vmem:[#allocation27] sm:$0x1]
        %v1273 = vld [vmem:[#allocation7] sm:$0xf]
        %v1274 = vld [vmem:[#allocation7 + $0x4] sm:$0xf]
        %v1275 = vld [vmem:[#allocation7 + $0x8] sm:$0xf]
        %v1276 = vld [vmem:[#allocation7 + $0xc] sm:$0xf]
        %v1277 = vld [vmem:[#allocation9] sm:$0x1]
        %v1279 = vlaneseq
        %v1280 = vshrl.u32 %v1279, 7
        %v1281 = vsub.s32 0, %v1280
        %v1282 = vrot.slane %v1277, %v1281
        %v1288 = vunpack.c.l.b16 %v1273
        %v1289 = vunpack.c.l.b16 %v1274
        %v1290 = vunpack.c.l.b16 %v1275
        %v1291 = vunpack.c.l.b16 %v1276
        %v1292 = vpack.c.b16 %v1289, %v1288
        %v1293 = vpack.c.b16 %v1291, %v1290
        %vm1296 = vcmask 261120
        %v1298 = vsel %vm1296, %v1270, 0
        %1300 = vmatprep.subr.bf16.mxu0 0
        %1301 = vmatpush1.bf16.msra.mxu0 %v1292
        %1302 = vmatprep.subr.bf16.mxu0 0
        %1303 = vmatpush1.bf16.msra.mxu0 %v1293
        %1304 = vmatprep.subr.bf16.mxu0 0
        %1305 = vmatpush1.bf16.msra.mxu0 0
        %1306 = vmatprep.subr.bf16.mxu0 0
        %1307 = vmatpush1.bf16.msra.mxu0 0
        %1308 = vmatprep.subr.bf16.mxu0 0
        %1309 = vmatpush1.bf16.msra.mxu0 0
        %1310 = vmatprep.subr.bf16.mxu0 0
        %1311 = vmatpush1.bf16.msra.mxu0 0
        %1312 = vmatprep.subr.bf16.mxu0 0
        %1313 = vmatpush1.bf16.msra.mxu0 0
        %1314 = vmatprep.subr.bf16.mxu0 0
        %1315 = vmatpush1.bf16.msra.mxu0 0
        %1316 = vmatprep.subr.bf16.mxu0 0
        %1317 = vmatpush1.bf16.msra.mxu0 0
        %1318 = vmatprep.subr.bf16.mxu0 0
        %1319 = vmatpush1.bf16.msra.mxu0 0
        %1320 = vmatprep.subr.bf16.mxu0 0
        %1321 = vmatpush1.bf16.msra.mxu0 0
        %1322 = vmatprep.subr.bf16.mxu0 0
        %1323 = vmatpush1.bf16.msra.mxu0 0
        %1324 = vmatprep.subr.bf16.mxu0 0
        %1325 = vmatpush1.bf16.msra.mxu0 0
        %1326 = vmatprep.subr.bf16.mxu0 0
        %1327 = vmatpush1.bf16.msra.mxu0 0
        %1328 = vmatprep.subr.bf16.mxu0 0
        %1329 = vmatpush1.bf16.msra.mxu0 0
        %1330 = vmatprep.subr.bf16.mxu0 0
        %1331 = vmatpush1.bf16.msra.mxu0 0
        %1332 = vmatprep.mubr.bf16.mxu0 0
        %1333 = vmatmul.mubr.bf16.gmra.mrb[0].mxu0 %v1298
        %v1334 = vpop.f32.mrb[0].mxu0
        %v1335 = vadd.f32 %v1282, %v1334
        %v1336 = vpop.f32.mrb[0].mxu0
        %v1337 = vpop.f32.mrb[0].mxu0
        %v1338 = vpop.f32.mrb[0].mxu0
        %1339 = vdwg.mxu0
        %v1340 = vpack.c.bf16 %v1335, %v1335
        %s1341 = scalar_lea.vmem [#allocation7], 16
        %v1342 = vld [vmem:[%s1341] sm:$0xf]
        %v1343 = vld [vmem:[%s1341 + $0x4] sm:$0xf]
        %v1344 = vld [vmem:[%s1341 + $0x8] sm:$0xf]
        %v1345 = vld [vmem:[%s1341 + $0xc] sm:$0xf]
        %s1346 = scalar_lea.vmem [#allocation9], 1
        %v1347 = vld [vmem:[%s1346] sm:$0x1]
        %v1349 = vlaneseq
        %v1350 = vshrl.u32 %v1349, 7
        %v1351 = vsub.s32 0, %v1350
        %v1352 = vrot.slane %v1347, %v1351
        %v1358 = vunpack.c.l.b16 %v1342
        %v1359 = vunpack.c.l.b16 %v1343
        %v1360 = vunpack.c.l.b16 %v1344
        %v1361 = vunpack.c.l.b16 %v1345
        %v1362 = vpack.c.b16 %v1359, %v1358
        %v1363 = vpack.c.b16 %v1361, %v1360
        %1366 = vmatprep.subr.bf16.mxu0 0
        %1367 = vmatpush1.bf16.msra.mxu0 %v1362
        %1368 = vmatprep.subr.bf16.mxu0 0
        %1369 = vmatpush1.bf16.msra.mxu0 %v1363
        %1370 = vmatprep.subr.bf16.mxu0 0
        %1371 = vmatpush1.bf16.msra.mxu0 0
        %1372 = vmatprep.subr.bf16.mxu0 0
        %1373 = vmatpush1.bf16.msra.mxu0 0
        %1374 = vmatprep.subr.bf16.mxu0 0
        %1375 = vmatpush1.bf16.msra.mxu0 0
        %1376 = vmatprep.subr.bf16.mxu0 0
        %1377 = vmatpush1.bf16.msra.mxu0 0
        %1378 = vmatprep.subr.bf16.mxu0 0
        %1379 = vmatpush1.bf16.msra.mxu0 0
        %1380 = vmatprep.subr.bf16.mxu0 0
        %1381 = vmatpush1.bf16.msra.mxu0 0
        %1382 = vmatprep.subr.bf16.mxu0 0
        %1383 = vmatpush1.bf16.msra.mxu0 0
        %1384 = vmatprep.subr.bf16.mxu0 0
        %1385 = vmatpush1.bf16.msra.mxu0 0
        %1386 = vmatprep.subr.bf16.mxu0 0
        %1387 = vmatpush1.bf16.msra.mxu0 0
        %1388 = vmatprep.subr.bf16.mxu0 0
        %1389 = vmatpush1.bf16.msra.mxu0 0
        %1390 = vmatprep.subr.bf16.mxu0 0
        %1391 = vmatpush1.bf16.msra.mxu0 0
        %1392 = vmatprep.subr.bf16.mxu0 0
        %1393 = vmatpush1.bf16.msra.mxu0 0
        %1394 = vmatprep.subr.bf16.mxu0 0
        %1395 = vmatpush1.bf16.msra.mxu0 0
        %1396 = vmatprep.subr.bf16.mxu0 0
        %1397 = vmatpush1.bf16.msra.mxu0 0
        %1398 = vmatprep.mubr.bf16.mxu0 0
        %1399 = vmatmul.mubr.bf16.gmra.mrb[0].mxu0 %v1298
        %v1400 = vpop.f32.mrb[0].mxu0
        %v1401 = vadd.f32 %v1352, %v1400
        %v1402 = vpop.f32.mrb[0].mxu0
        %v1403 = vpop.f32.mrb[0].mxu0
        %v1404 = vpop.f32.mrb[0].mxu0
        %1405 = vdwg.mxu0
        %v1406 = vpack.c.bf16 %v1401, %v1401
        %s1407 = scalar_lea.vmem [#allocation7], 32
        %v1408 = vld [vmem:[%s1407] sm:$0xf]
        %v1409 = vld [vmem:[%s1407 + $0x4] sm:$0xf]
        %v1410 = vld [vmem:[%s1407 + $0x8] sm:$0xf]
        %v1411 = vld [vmem:[%s1407 + $0xc] sm:$0xf]
        %s1412 = scalar_lea.vmem [#allocation9], 2
        %v1413 = vld [vmem:[%s1412] sm:$0x1]
        %v1415 = vlaneseq
        %v1416 = vshrl.u32 %v1415, 7
        %v1417 = vsub.s32 0, %v1416
        %v1418 = vrot.slane %v1413, %v1417
        %v1424 = vunpack.c.l.b16 %v1408
        %v1425 = vunpack.c.l.b16 %v1409
        %v1426 = vunpack.c.l.b16 %v1410
        %v1427 = vunpack.c.l.b16 %v1411
        %v1428 = vpack.c.b16 %v1425, %v1424
        %v1429 = vpack.c.b16 %v1427, %v1426
        %1432 = vmatprep.subr.bf16.mxu0 0
        %1433 = vmatpush1.bf16.msra.mxu0 %v1428
        %1434 = vmatprep.subr.bf16.mxu0 0
        %1435 = vmatpush1.bf16.msra.mxu0 %v1429
        %1436 = vmatprep.subr.bf16.mxu0 0
        %1437 = vmatpush1.bf16.msra.mxu0 0
        %1438 = vmatprep.subr.bf16.mxu0 0
        %1439 = vmatpush1.bf16.msra.mxu0 0
        %1440 = vmatprep.subr.bf16.mxu0 0
        %1441 = vmatpush1.bf16.msra.mxu0 0
        %1442 = vmatprep.subr.bf16.mxu0 0
        %1443 = vmatpush1.bf16.msra.mxu0 0
        %1444 = vmatprep.subr.bf16.mxu0 0
        %1445 = vmatpush1.bf16.msra.mxu0 0
        %1446 = vmatprep.subr.bf16.mxu0 0
        %1447 = vmatpush1.bf16.msra.mxu0 0
        %1448 = vmatprep.subr.bf16.mxu0 0
        %1449 = vmatpush1.bf16.msra.mxu0 0
        %1450 = vmatprep.subr.bf16.mxu0 0
        %1451 = vmatpush1.bf16.msra.mxu0 0
        %1452 = vmatprep.subr.bf16.mxu0 0
        %1453 = vmatpush1.bf16.msra.mxu0 0
        %1454 = vmatprep.subr.bf16.mxu0 0
        %1455 = vmatpush1.bf16.msra.mxu0 0
        %1456 = vmatprep.subr.bf16.mxu0 0
        %1457 = vmatpush1.bf16.msra.mxu0 0
        %1458 = vmatprep.subr.bf16.mxu0 0
        %1459 = vmatpush1.bf16.msra.mxu0 0
        %1460 = vmatprep.subr.bf16.mxu0 0
        %1461 = vmatpush1.bf16.msra.mxu0 0
        %1462 = vmatprep.subr.bf16.mxu0 0
        %1463 = vmatpush1.bf16.msra.mxu0 0
        %1464 = vmatprep.mubr.bf16.mxu0 0
        %1465 = vmatmul.mubr.bf16.gmra.mrb[0].mxu0 %v1298
        %v1466 = vpop.f32.mrb[0].mxu0
        %v1467 = vadd.f32 %v1418, %v1466
        %v1468 = vpop.f32.mrb[0].mxu0
        %v1469 = vpop.f32.mrb[0].mxu0
        %v1470 = vpop.f32.mrb[0].mxu0
        %1471 = vdwg.mxu0
        %v1472 = vpack.c.bf16 %v1467, %v1467
        %s1473 = scalar_lea.vmem [#allocation7], 48
        %v1474 = vld [vmem:[%s1473] sm:$0xf]
        %v1475 = vld [vmem:[%s1473 + $0x4] sm:$0xf]
        %v1476 = vld [vmem:[%s1473 + $0x8] sm:$0xf]
        %v1477 = vld [vmem:[%s1473 + $0xc] sm:$0xf]
        %s1478 = scalar_lea.vmem [#allocation9], 3
        %v1479 = vld [vmem:[%s1478] sm:$0x1]
        %v1481 = vlaneseq
        %v1482 = vshrl.u32 %v1481, 7
        %v1483 = vsub.s32 0, %v1482
        %v1484 = vrot.slane %v1479, %v1483
        %v1490 = vunpack.c.l.b16 %v1474
        %v1491 = vunpack.c.l.b16 %v1475
        %v1492 = vunpack.c.l.b16 %v1476
        %v1493 = vunpack.c.l.b16 %v1477
        %v1494 = vpack.c.b16 %v1491, %v1490
        %v1495 = vpack.c.b16 %v1493, %v1492
        %1498 = vmatprep.subr.bf16.mxu0 0
        %1499 = vmatpush1.bf16.msra.mxu0 %v1494
        %1500 = vmatprep.subr.bf16.mxu0 0
        %1501 = vmatpush1.bf16.msra.mxu0 %v1495
        %1502 = vmatprep.subr.bf16.mxu0 0
        %1503 = vmatpush1.bf16.msra.mxu0 0
        %1504 = vmatprep.subr.bf16.mxu0 0
        %1505 = vmatpush1.bf16.msra.mxu0 0
        %1506 = vmatprep.subr.bf16.mxu0 0
        %1507 = vmatpush1.bf16.msra.mxu0 0
        %1508 = vmatprep.subr.bf16.mxu0 0
        %1509 = vmatpush1.bf16.msra.mxu0 0
        %1510 = vmatprep.subr.bf16.mxu0 0
        %1511 = vmatpush1.bf16.msra.mxu0 0
        %1512 = vmatprep.subr.bf16.mxu0 0
        %1513 = vmatpush1.bf16.msra.mxu0 0
        %1514 = vmatprep.subr.bf16.mxu0 0
        %1515 = vmatpush1.bf16.msra.mxu0 0
        %1516 = vmatprep.subr.bf16.mxu0 0
        %1517 = vmatpush1.bf16.msra.mxu0 0
        %1518 = vmatprep.subr.bf16.mxu0 0
        %1519 = vmatpush1.bf16.msra.mxu0 0
        %1520 = vmatprep.subr.bf16.mxu0 0
        %1521 = vmatpush1.bf16.msra.mxu0 0
        %1522 = vmatprep.subr.bf16.mxu0 0
        %1523 = vmatpush1.bf16.msra.mxu0 0
        %1524 = vmatprep.subr.bf16.mxu0 0
        %1525 = vmatpush1.bf16.msra.mxu0 0
        %1526 = vmatprep.subr.bf16.mxu0 0
        %1527 = vmatpush1.bf16.msra.mxu0 0
        %1528 = vmatprep.subr.bf16.mxu0 0
        %1529 = vmatpush1.bf16.msra.mxu0 0
        %1530 = vmatprep.mubr.bf16.mxu0 0
        %1531 = vmatmul.mubr.bf16.gmra.mrb[0].mxu0 %v1298
        %v1532 = vpop.f32.mrb[0].mxu0
        %v1533 = vadd.f32 %v1484, %v1532
        %v1534 = vpop.f32.mrb[0].mxu0
        %v1535 = vpop.f32.mrb[0].mxu0
        %v1536 = vpop.f32.mrb[0].mxu0
        %1537 = vdwg.mxu0
        %v1538 = vpack.c.bf16 %v1533, %v1533
        %v1539 = vld [vmem:[#allocation2] sm:$0xf]
        %v1540 = vld [vmem:[#allocation2 + $0x4] sm:$0xf]
        %v1541 = vld [vmem:[#allocation2 + $0x8] sm:$0xf]
        %v1542 = vld [vmem:[#allocation2 + $0xc] sm:$0xf]
        %v1543 = vld [vmem:[#allocation3] sm:$0xf]
        %v1544 = vld [vmem:[#allocation3 + $0x4] sm:$0xf]
        %v1545 = vld [vmem:[#allocation3 + $0x8] sm:$0xf]
        %v1546 = vld [vmem:[#allocation3 + $0xc] sm:$0xf]
        %vm1547 = vcmask 64512
        %v1549 = vsel %vm1547, %v1340, 0
        %v1552 = vsel %vm1547, %v1539, 0
        %1554 = vmatprep.subr.bf16.mxu0 0
        %1555 = vmatpush1.bf16.xpose.msra.mxu0 %v1552
        %1556 = vmatprep.subr.bf16.mxu0 0
        %1557 = vmatpush1.bf16.xpose.msra.mxu0 0
        %1558 = vmatprep.subr.bf16.mxu0 0
        %1559 = vmatpush1.bf16.xpose.msra.mxu0 0
        %1560 = vmatprep.subr.bf16.mxu0 0
        %1561 = vmatpush1.bf16.xpose.msra.mxu0 0
        %1562 = vmatprep.subr.bf16.mxu0 0
        %1563 = vmatpush1.bf16.xpose.msra.mxu0 0
        %1564 = vmatprep.subr.bf16.mxu0 0
        %1565 = vmatpush1.bf16.xpose.msra.mxu0 0
        %1566 = vmatprep.subr.bf16.mxu0 0
        %1567 = vmatpush1.bf16.xpose.msra.mxu0 0
        %1568 = vmatprep.subr.bf16.mxu0 0
        %1569 = vmatpush1.bf16.xpose.msra.mxu0 0
        %1570 = vmatprep.subr.bf16.mxu0 0
        %1571 = vmatpush1.bf16.xpose.msra.mxu0 0
        %1572 = vmatprep.subr.bf16.mxu0 0
        %1573 = vmatpush1.bf16.xpose.msra.mxu0 0
        %1574 = vmatprep.subr.bf16.mxu0 0
        %1575 = vmatpush1.bf16.xpose.msra.mxu0 0
        %1576 = vmatprep.subr.bf16.mxu0 0
        %1577 = vmatpush1.bf16.xpose.msra.mxu0 0
        %1578 = vmatprep.subr.bf16.mxu0 0
        %1579 = vmatpush1.bf16.xpose.msra.mxu0 0
        %1580 = vmatprep.subr.bf16.mxu0 0
        %1581 = vmatpush1.bf16.xpose.msra.mxu0 0
        %1582 = vmatprep.subr.bf16.mxu0 0
        %1583 = vmatpush1.bf16.xpose.msra.mxu0 0
        %1584 = vmatprep.subr.bf16.mxu0 0
        %1585 = vmatpush1.bf16.xpose.msra.mxu0 0
        %1586 = vmatprep.mubr.bf16.mxu0 0
        %1587 = vmatmul.mubr.bf16.gmra.mrb[0].mxu0 %v1549
        %v1588 = vpop.f32.mrb[0].mxu0
        %v1589 = vadd.f32 0.0, %v1588
        %v1590 = vpop.f32.mrb[0].mxu0
        %v1591 = vpop.f32.mrb[0].mxu0
        %v1592 = vpop.f32.mrb[0].mxu0
        %1593 = vdwg.mxu0
        %v1595 = vsel %vm1547, %v1406, 0
        %v1598 = vsel %vm1547, %v1540, 0
        %1600 = vmatprep.subr.bf16.mxu0 0
        %1601 = vmatpush1.bf16.xpose.msra.mxu0 %v1598
        %1602 = vmatprep.subr.bf16.mxu0 0
        %1603 = vmatpush1.bf16.xpose.msra.mxu0 0
        %1604 = vmatprep.subr.bf16.mxu0 0
        %1605 = vmatpush1.bf16.xpose.msra.mxu0 0
        %1606 = vmatprep.subr.bf16.mxu0 0
        %1607 = vmatpush1.bf16.xpose.msra.mxu0 0
        %1608 = vmatprep.subr.bf16.mxu0 0
        %1609 = vmatpush1.bf16.xpose.msra.mxu0 0
        %1610 = vmatprep.subr.bf16.mxu0 0
        %1611 = vmatpush1.bf16.xpose.msra.mxu0 0
        %1612 = vmatprep.subr.bf16.mxu0 0
        %1613 = vmatpush1.bf16.xpose.msra.mxu0 0
        %1614 = vmatprep.subr.bf16.mxu0 0
        %1615 = vmatpush1.bf16.xpose.msra.mxu0 0
        %1616 = vmatprep.subr.bf16.mxu0 0
        %1617 = vmatpush1.bf16.xpose.msra.mxu0 0
        %1618 = vmatprep.subr.bf16.mxu0 0
        %1619 = vmatpush1.bf16.xpose.msra.mxu0 0
        %1620 = vmatprep.subr.bf16.mxu0 0
        %1621 = vmatpush1.bf16.xpose.msra.mxu0 0
        %1622 = vmatprep.subr.bf16.mxu0 0
        %1623 = vmatpush1.bf16.xpose.msra.mxu0 0
        %1624 = vmatprep.subr.bf16.mxu0 0
        %1625 = vmatpush1.bf16.xpose.msra.mxu0 0
        %1626 = vmatprep.subr.bf16.mxu0 0
        %1627 = vmatpush1.bf16.xpose.msra.mxu0 0
        %1628 = vmatprep.subr.bf16.mxu0 0
        %1629 = vmatpush1.bf16.xpose.msra.mxu0 0
        %1630 = vmatprep.subr.bf16.mxu0 0
        %1631 = vmatpush1.bf16.xpose.msra.mxu0 0
        %1632 = vmatprep.mubr.bf16.mxu0 0
        %1633 = vmatmul.mubr.bf16.gmra.mrb[0].mxu0 %v1595
        %v1634 = vpop.f32.mrb[0].mxu0
        %v1635 = vadd.f32 0.0, %v1634
        %v1636 = vpop.f32.mrb[0].mxu0
        %v1637 = vpop.f32.mrb[0].mxu0
        %v1638 = vpop.f32.mrb[0].mxu0
        %1639 = vdwg.mxu0
        %v1641 = vsel %vm1547, %v1472, 0
        %v1644 = vsel %vm1547, %v1541, 0
        %1646 = vmatprep.subr.bf16.mxu0 0
        %1647 = vmatpush1.bf16.xpose.msra.mxu0 %v1644
        %1648 = vmatprep.subr.bf16.mxu0 0
        %1649 = vmatpush1.bf16.xpose.msra.mxu0 0
        %1650 = vmatprep.subr.bf16.mxu0 0
        %1651 = vmatpush1.bf16.xpose.msra.mxu0 0
        %1652 = vmatprep.subr.bf16.mxu0 0
        %1653 = vmatpush1.bf16.xpose.msra.mxu0 0
        %1654 = vmatprep.subr.bf16.mxu0 0
        %1655 = vmatpush1.bf16.xpose.msra.mxu0 0
        %1656 = vmatprep.subr.bf16.mxu0 0
        %1657 = vmatpush1.bf16.xpose.msra.mxu0 0
        %1658 = vmatprep.subr.bf16.mxu0 0
        %1659 = vmatpush1.bf16.xpose.msra.mxu0 0
        %1660 = vmatprep.subr.bf16.mxu0 0
        %1661 = vmatpush1.bf16.xpose.msra.mxu0 0
        %1662 = vmatprep.subr.bf16.mxu0 0
        %1663 = vmatpush1.bf16.xpose.msra.mxu0 0
        %1664 = vmatprep.subr.bf16.mxu0 0
        %1665 = vmatpush1.bf16.xpose.msra.mxu0 0
        %1666 = vmatprep.subr.bf16.mxu0 0
        %1667 = vmatpush1.bf16.xpose.msra.mxu0 0
        %1668 = vmatprep.subr.bf16.mxu0 0
        %1669 = vmatpush1.bf16.xpose.msra.mxu0 0
        %1670 = vmatprep.subr.bf16.mxu0 0
        %1671 = vmatpush1.bf16.xpose.msra.mxu0 0
        %1672 = vmatprep.subr.bf16.mxu0 0
        %1673 = vmatpush1.bf16.xpose.msra.mxu0 0
        %1674 = vmatprep.subr.bf16.mxu0 0
        %1675 = vmatpush1.bf16.xpose.msra.mxu0 0
        %1676 = vmatprep.subr.bf16.mxu0 0
        %1677 = vmatpush1.bf16.xpose.msra.mxu0 0
        %1678 = vmatprep.mubr.bf16.mxu0 0
        %1679 = vmatmul.mubr.bf16.gmra.mrb[0].mxu0 %v1641
        %v1680 = vpop.f32.mrb[0].mxu0
        %v1681 = vadd.f32 0.0, %v1680
        %v1682 = vpop.f32.mrb[0].mxu0
        %v1683 = vpop.f32.mrb[0].mxu0
        %v1684 = vpop.f32.mrb[0].mxu0
        %1685 = vdwg.mxu0
        %v1687 = vsel %vm1547, %v1538, 0
        %v1690 = vsel %vm1547, %v1542, 0
        %1692 = vmatprep.subr.bf16.mxu0 0
        %1693 = vmatpush1.bf16.xpose.msra.mxu0 %v1690
        %1694 = vmatprep.subr.bf16.mxu0 0
        %1695 = vmatpush1.bf16.xpose.msra.mxu0 0
        %1696 = vmatprep.subr.bf16.mxu0 0
        %1697 = vmatpush1.bf16.xpose.msra.mxu0 0
        %1698 = vmatprep.subr.bf16.mxu0 0
        %1699 = vmatpush1.bf16.xpose.msra.mxu0 0
        %1700 = vmatprep.subr.bf16.mxu0 0
        %1701 = vmatpush1.bf16.xpose.msra.mxu0 0
        %1702 = vmatprep.subr.bf16.mxu0 0
        %1703 = vmatpush1.bf16.xpose.msra.mxu0 0
        %1704 = vmatprep.subr.bf16.mxu0 0
        %1705 = vmatpush1.bf16.xpose.msra.mxu0 0
        %1706 = vmatprep.subr.bf16.mxu0 0
        %1707 = vmatpush1.bf16.xpose.msra.mxu0 0
        %1708 = vmatprep.subr.bf16.mxu0 0
        %1709 = vmatpush1.bf16.xpose.msra.mxu0 0
        %1710 = vmatprep.subr.bf16.mxu0 0
        %1711 = vmatpush1.bf16.xpose.msra.mxu0 0
        %1712 = vmatprep.subr.bf16.mxu0 0
        %1713 = vmatpush1.bf16.xpose.msra.mxu0 0
        %1714 = vmatprep.subr.bf16.mxu0 0
        %1715 = vmatpush1.bf16.xpose.msra.mxu0 0
        %1716 = vmatprep.subr.bf16.mxu0 0
        %1717 = vmatpush1.bf16.xpose.msra.mxu0 0
        %1718 = vmatprep.subr.bf16.mxu0 0
        %1719 = vmatpush1.bf16.xpose.msra.mxu0 0
        %1720 = vmatprep.subr.bf16.mxu0 0
        %1721 = vmatpush1.bf16.xpose.msra.mxu0 0
        %1722 = vmatprep.subr.bf16.mxu0 0
        %1723 = vmatpush1.bf16.xpose.msra.mxu0 0
        %1724 = vmatprep.mubr.bf16.mxu0 0
        %1725 = vmatmul.mubr.bf16.gmra.mrb[0].mxu0 %v1687
        %v1726 = vpop.f32.mrb[0].mxu0
        %v1727 = vadd.f32 0.0, %v1726
        %v1728 = vpop.f32.mrb[0].mxu0
        %v1729 = vpop.f32.mrb[0].mxu0
        %v1730 = vpop.f32.mrb[0].mxu0
        %1731 = vdwg.mxu0
        %v1732 = vsel %vm1547, %v1589, -inf
        %1733 = vmax.xlane.f32.xlu0 %v1732
        %v1734 = vpop.xlane.xlu0 %1733
        %v1735 = vsel %vm1547, %v1635, -inf
        %1736 = vmax.xlane.f32.xlu0 %v1735
        %v1737 = vpop.xlane.xlu0 %1736
        %v1738 = vsel %vm1547, %v1681, -inf
        %1739 = vmax.xlane.f32.xlu0 %v1738
        %v1740 = vpop.xlane.xlu0 %1739
        %v1741 = vsel %vm1547, %v1727, -inf
        %1742 = vmax.xlane.f32.xlu0 %v1741
        %v1743 = vpop.xlane.xlu0 %1742
        %v1744 = vsub.f32 -inf, %v1734
        %v1745 = vsub.f32 -inf, %v1737
        %v1746 = vsub.f32 -inf, %v1740
        %v1747 = vsub.f32 -inf, %v1743
        %v1748 = vmul.f32 %v1744, 1.442695
        %v1749 = vpow.pop %v1748
        %v1750 = vmul.f32 %v1745, 1.442695
        %v1751 = vpow.pop %v1750
        %v1752 = vmul.f32 %v1746, 1.442695
        %v1753 = vpow.pop %v1752
        %v1754 = vmul.f32 %v1747, 1.442695
        %v1755 = vpow.pop %v1754
        %v1756 = vsub.f32 %v1589, %v1734
        %v1757 = vsub.f32 %v1635, %v1737
        %v1758 = vsub.f32 %v1681, %v1740
        %v1759 = vsub.f32 %v1727, %v1743
        %v1760 = vmul.f32 %v1756, 1.442695
        %v1761 = vpow.pop %v1760
        %v1762 = vmul.f32 %v1757, 1.442695
        %v1763 = vpow.pop %v1762
        %v1764 = vmul.f32 %v1758, 1.442695
        %v1765 = vpow.pop %v1764
        %v1766 = vmul.f32 %v1759, 1.442695
        %v1767 = vpow.pop %v1766
        %v1768 = vmul.f32 %v1749, 0.0
        %v1769 = vmul.f32 %v1751, 0.0
        %v1770 = vmul.f32 %v1753, 0.0
        %v1771 = vmul.f32 %v1755, 0.0
        %v1772 = vsel %vm1547, %v1761, 0.0
        %1773 = vadd.xlane.f32.xlu0 %v1772
        %v1774 = vpop.xlane.xlu0 %1773
        %v1775 = vsel %vm1547, %v1763, 0.0
        %1776 = vadd.xlane.f32.xlu0 %v1775
        %v1777 = vpop.xlane.xlu0 %1776
        %v1778 = vsel %vm1547, %v1765, 0.0
        %1779 = vadd.xlane.f32.xlu0 %v1778
        %v1780 = vpop.xlane.xlu0 %1779
        %v1781 = vsel %vm1547, %v1767, 0.0
        %1782 = vadd.xlane.f32.xlu0 %v1781
        %v1783 = vpop.xlane.xlu0 %1782
        %v1784 = vadd.f32 %v1768, %v1774
        %v1785 = vadd.f32 %v1769, %v1777
        %v1786 = vadd.f32 %v1770, %v1780
        %v1787 = vadd.f32 %v1771, %v1783
        %v1788 = vpack.c.bf16 %v1761, %v1761
        %v1789 = vpack.c.bf16 %v1763, %v1763
        %v1790 = vpack.c.bf16 %v1765, %v1765
        %v1791 = vpack.c.bf16 %v1767, %v1767
        %v1793 = vsel %vm1547, %v1788, 0
        %vm1795 = vcmask 1043456
        %v1797 = vsel %vm1795, %v1543, 0
        %1799 = vmatprep.subr.bf16.mxu0 0
        %1800 = vmatpush1.bf16.msra.mxu0 %v1797
        %1801 = vmatprep.subr.bf16.mxu0 0
        %1802 = vmatpush1.bf16.msra.mxu0 0
        %1803 = vmatprep.subr.bf16.mxu0 0
        %1804 = vmatpush1.bf16.msra.mxu0 0
        %1805 = vmatprep.subr.bf16.mxu0 0
        %1806 = vmatpush1.bf16.msra.mxu0 0
        %1807 = vmatprep.subr.bf16.mxu0 0
        %1808 = vmatpush1.bf16.msra.mxu0 0
        %1809 = vmatprep.subr.bf16.mxu0 0
        %1810 = vmatpush1.bf16.msra.mxu0 0
        %1811 = vmatprep.subr.bf16.mxu0 0
        %1812 = vmatpush1.bf16.msra.mxu0 0
        %1813 = vmatprep.subr.bf16.mxu0 0
        %1814 = vmatpush1.bf16.msra.mxu0 0
        %1815 = vmatprep.subr.bf16.mxu0 0
        %1816 = vmatpush1.bf16.msra.mxu0 0
        %1817 = vmatprep.subr.bf16.mxu0 0
        %1818 = vmatpush1.bf16.msra.mxu0 0
        %1819 = vmatprep.subr.bf16.mxu0 0
        %1820 = vmatpush1.bf16.msra.mxu0 0
        %1821 = vmatprep.subr.bf16.mxu0 0
        %1822 = vmatpush1.bf16.msra.mxu0 0
        %1823 = vmatprep.subr.bf16.mxu0 0
        %1824 = vmatpush1.bf16.msra.mxu0 0
        %1825 = vmatprep.subr.bf16.mxu0 0
        %1826 = vmatpush1.bf16.msra.mxu0 0
        %1827 = vmatprep.subr.bf16.mxu0 0
        %1828 = vmatpush1.bf16.msra.mxu0 0
        %1829 = vmatprep.subr.bf16.mxu0 0
        %1830 = vmatpush1.bf16.msra.mxu0 0
        %1831 = vmatprep.mubr.bf16.mxu0 0
        %1832 = vmatmul.mubr.bf16.gmra.mrb[0].mxu0 %v1793
        %v1833 = vpop.f32.mrb[0].mxu0
        %v1834 = vadd.f32 0.0, %v1833
        %v1835 = vpop.f32.mrb[0].mxu0
        %v1836 = vpop.f32.mrb[0].mxu0
        %v1837 = vpop.f32.mrb[0].mxu0
        %1838 = vdwg.mxu0
        %v1840 = vsel %vm1547, %v1789, 0
        %v1843 = vsel %vm1795, %v1544, 0
        %1845 = vmatprep.subr.bf16.mxu0 0
        %1846 = vmatpush1.bf16.msra.mxu0 %v1843
        %1847 = vmatprep.subr.bf16.mxu0 0
        %1848 = vmatpush1.bf16.msra.mxu0 0
        %1849 = vmatprep.subr.bf16.mxu0 0
        %1850 = vmatpush1.bf16.msra.mxu0 0
        %1851 = vmatprep.subr.bf16.mxu0 0
        %1852 = vmatpush1.bf16.msra.mxu0 0
        %1853 = vmatprep.subr.bf16.mxu0 0
        %1854 = vmatpush1.bf16.msra.mxu0 0
        %1855 = vmatprep.subr.bf16.mxu0 0
        %1856 = vmatpush1.bf16.msra.mxu0 0
        %1857 = vmatprep.subr.bf16.mxu0 0
        %1858 = vmatpush1.bf16.msra.mxu0 0
        %1859 = vmatprep.subr.bf16.mxu0 0
        %1860 = vmatpush1.bf16.msra.mxu0 0
        %1861 = vmatprep.subr.bf16.mxu0 0
        %1862 = vmatpush1.bf16.msra.mxu0 0
        %1863 = vmatprep.subr.bf16.mxu0 0
        %1864 = vmatpush1.bf16.msra.mxu0 0
        %1865 = vmatprep.subr.bf16.mxu0 0
        %1866 = vmatpush1.bf16.msra.mxu0 0
        %1867 = vmatprep.subr.bf16.mxu0 0
        %1868 = vmatpush1.bf16.msra.mxu0 0
        %1869 = vmatprep.subr.bf16.mxu0 0
        %1870 = vmatpush1.bf16.msra.mxu0 0
        %1871 = vmatprep.subr.bf16.mxu0 0
        %1872 = vmatpush1.bf16.msra.mxu0 0
        %1873 = vmatprep.subr.bf16.mxu0 0
        %1874 = vmatpush1.bf16.msra.mxu0 0
        %1875 = vmatprep.subr.bf16.mxu0 0
        %1876 = vmatpush1.bf16.msra.mxu0 0
        %1877 = vmatprep.mubr.bf16.mxu0 0
        %1878 = vmatmul.mubr.bf16.gmra.mrb[0].mxu0 %v1840
        %v1879 = vpop.f32.mrb[0].mxu0
        %v1880 = vadd.f32 0.0, %v1879
        %v1881 = vpop.f32.mrb[0].mxu0
        %v1882 = vpop.f32.mrb[0].mxu0
        %v1883 = vpop.f32.mrb[0].mxu0
        %1884 = vdwg.mxu0
        %v1886 = vsel %vm1547, %v1790, 0
        %v1889 = vsel %vm1795, %v1545, 0
        %1891 = vmatprep.subr.bf16.mxu0 0
        %1892 = vmatpush1.bf16.msra.mxu0 %v1889
        %1893 = vmatprep.subr.bf16.mxu0 0
        %1894 = vmatpush1.bf16.msra.mxu0 0
        %1895 = vmatprep.subr.bf16.mxu0 0
        %1896 = vmatpush1.bf16.msra.mxu0 0
        %1897 = vmatprep.subr.bf16.mxu0 0
        %1898 = vmatpush1.bf16.msra.mxu0 0
        %1899 = vmatprep.subr.bf16.mxu0 0
        %1900 = vmatpush1.bf16.msra.mxu0 0
        %1901 = vmatprep.subr.bf16.mxu0 0
        %1902 = vmatpush1.bf16.msra.mxu0 0
        %1903 = vmatprep.subr.bf16.mxu0 0
        %1904 = vmatpush1.bf16.msra.mxu0 0
        %1905 = vmatprep.subr.bf16.mxu0 0
        %1906 = vmatpush1.bf16.msra.mxu0 0
        %1907 = vmatprep.subr.bf16.mxu0 0
        %1908 = vmatpush1.bf16.msra.mxu0 0
        %1909 = vmatprep.subr.bf16.mxu0 0
        %1910 = vmatpush1.bf16.msra.mxu0 0
        %1911 = vmatprep.subr.bf16.mxu0 0
        %1912 = vmatpush1.bf16.msra.mxu0 0
        %1913 = vmatprep.subr.bf16.mxu0 0
        %1914 = vmatpush1.bf16.msra.mxu0 0
        %1915 = vmatprep.subr.bf16.mxu0 0
        %1916 = vmatpush1.bf16.msra.mxu0 0
        %1917 = vmatprep.subr.bf16.mxu0 0
        %1918 = vmatpush1.bf16.msra.mxu0 0
        %1919 = vmatprep.subr.bf16.mxu0 0
        %1920 = vmatpush1.bf16.msra.mxu0 0
        %1921 = vmatprep.subr.bf16.mxu0 0
        %1922 = vmatpush1.bf16.msra.mxu0 0
        %1923 = vmatprep.mubr.bf16.mxu0 0
        %1924 = vmatmul.mubr.bf16.gmra.mrb[0].mxu0 %v1886
        %v1925 = vpop.f32.mrb[0].mxu0
        %v1926 = vadd.f32 0.0, %v1925
        %v1927 = vpop.f32.mrb[0].mxu0
        %v1928 = vpop.f32.mrb[0].mxu0
        %v1929 = vpop.f32.mrb[0].mxu0
        %1930 = vdwg.mxu0
        %v1932 = vsel %vm1547, %v1791, 0
        %v1935 = vsel %vm1795, %v1546, 0
        %1937 = vmatprep.subr.bf16.mxu0 0
        %1938 = vmatpush1.bf16.msra.mxu0 %v1935
        %1939 = vmatprep.subr.bf16.mxu0 0
        %1940 = vmatpush1.bf16.msra.mxu0 0
        %1941 = vmatprep.subr.bf16.mxu0 0
        %1942 = vmatpush1.bf16.msra.mxu0 0
        %1943 = vmatprep.subr.bf16.mxu0 0
        %1944 = vmatpush1.bf16.msra.mxu0 0
        %1945 = vmatprep.subr.bf16.mxu0 0
        %1946 = vmatpush1.bf16.msra.mxu0 0
        %1947 = vmatprep.subr.bf16.mxu0 0
        %1948 = vmatpush1.bf16.msra.mxu0 0
        %1949 = vmatprep.subr.bf16.mxu0 0
        %1950 = vmatpush1.bf16.msra.mxu0 0
        %1951 = vmatprep.subr.bf16.mxu0 0
        %1952 = vmatpush1.bf16.msra.mxu0 0
        %1953 = vmatprep.subr.bf16.mxu0 0
        %1954 = vmatpush1.bf16.msra.mxu0 0
        %1955 = vmatprep.subr.bf16.mxu0 0
        %1956 = vmatpush1.bf16.msra.mxu0 0
        %1957 = vmatprep.subr.bf16.mxu0 0
        %1958 = vmatpush1.bf16.msra.mxu0 0
        %1959 = vmatprep.subr.bf16.mxu0 0
        %1960 = vmatpush1.bf16.msra.mxu0 0
        %1961 = vmatprep.subr.bf16.mxu0 0
        %1962 = vmatpush1.bf16.msra.mxu0 0
        %1963 = vmatprep.subr.bf16.mxu0 0
        %1964 = vmatpush1.bf16.msra.mxu0 0
        %1965 = vmatprep.subr.bf16.mxu0 0
        %1966 = vmatpush1.bf16.msra.mxu0 0
        %1967 = vmatprep.subr.bf16.mxu0 0
        %1968 = vmatpush1.bf16.msra.mxu0 0
        %1969 = vmatprep.mubr.bf16.mxu0 0
        %1970 = vmatmul.mubr.bf16.gmra.mrb[0].mxu0 %v1932
        %v1971 = vpop.f32.mrb[0].mxu0
        %v1972 = vadd.f32 0.0, %v1971
        %v1973 = vpop.f32.mrb[0].mxu0
        %v1974 = vpop.f32.mrb[0].mxu0
        %v1975 = vpop.f32.mrb[0].mxu0
        %1976 = vdwg.mxu0
        %v1977 = vadd.f32 %v1768, %v1834
        %v1978 = vadd.f32 %v1769, %v1880
        %v1979 = vadd.f32 %v1770, %v1926
        %v1980 = vadd.f32 %v1771, %v1972
        %v1981 = vrcp.pop %v1784
        %v1982 = vrcp.pop %v1785
        %v1983 = vrcp.pop %v1786
        %v1984 = vrcp.pop %v1787
        %v1985 = vmul.f32 %v1977, %v1981
        %v1986 = vmul.f32 %v1978, %v1982
        %v1987 = vmul.f32 %v1979, %v1983
        %v1988 = vmul.f32 %v1980, %v1984
        %v1989 = vpack.c.bf16 %v1985, %v1985
        %v1990 = vpack.c.bf16 %v1986, %v1986
        %v1991 = vpack.c.bf16 %v1987, %v1987
        %v1992 = vpack.c.bf16 %v1988, %v1988
        %v1993 = vld [vmem:[#allocation16] sm:$0xf]
        %s1994 = scalar_lea.vmem [#allocation16], 4
        %v1995 = vld [vmem:[%s1994] sm:$0xf]
        %v1997 = vsel %vm1547, %v1990, 0
        %v2000 = vsel %vm1795, %v1995, 0
        %2002 = vmatprep.subr.bf16.mxu0 0
        %2003 = vmatpush1.bf16.msra.mxu0 %v2000
        %2004 = vmatprep.subr.bf16.mxu0 0
        %2005 = vmatpush1.bf16.msra.mxu0 0
        %2006 = vmatprep.subr.bf16.mxu0 0
        %2007 = vmatpush1.bf16.msra.mxu0 0
        %2008 = vmatprep.subr.bf16.mxu0 0
        %2009 = vmatpush1.bf16.msra.mxu0 0
        %2010 = vmatprep.subr.bf16.mxu0 0
        %2011 = vmatpush1.bf16.msra.mxu0 0
        %2012 = vmatprep.subr.bf16.mxu0 0
        %2013 = vmatpush1.bf16.msra.mxu0 0
        %2014 = vmatprep.subr.bf16.mxu0 0
        %2015 = vmatpush1.bf16.msra.mxu0 0
        %2016 = vmatprep.subr.bf16.mxu0 0
        %2017 = vmatpush1.bf16.msra.mxu0 0
        %2018 = vmatprep.subr.bf16.mxu0 0
        %2019 = vmatpush1.bf16.msra.mxu0 0
        %2020 = vmatprep.subr.bf16.mxu0 0
        %2021 = vmatpush1.bf16.msra.mxu0 0
        %2022 = vmatprep.subr.bf16.mxu0 0
        %2023 = vmatpush1.bf16.msra.mxu0 0
        %2024 = vmatprep.subr.bf16.mxu0 0
        %2025 = vmatpush1.bf16.msra.mxu0 0
        %2026 = vmatprep.subr.bf16.mxu0 0
        %2027 = vmatpush1.bf16.msra.mxu0 0
        %2028 = vmatprep.subr.bf16.mxu0 0
        %2029 = vmatpush1.bf16.msra.mxu0 0
        %2030 = vmatprep.subr.bf16.mxu0 0
        %2031 = vmatpush1.bf16.msra.mxu0 0
        %2032 = vmatprep.subr.bf16.mxu0 0
        %2033 = vmatpush1.bf16.msra.mxu0 0
        %2034 = vmatprep.mubr.bf16.mxu0 0
        %2035 = vmatmul.mubr.bf16.gmra.mrb[0].mxu0 %v1997
        %v2036 = vpop.f32.mrb[0].mxu0
        %v2037 = vadd.f32 0.0, %v2036
        %v2038 = vpop.f32.mrb[0].mxu0
        %v2039 = vpop.f32.mrb[0].mxu0
        %v2040 = vpop.f32.mrb[0].mxu0
        %2041 = vdwg.mxu0
        %v2043 = vsel %vm1547, %v1989, 0
        %v2046 = vsel %vm1795, %v1993, 0
        %2048 = vmatprep.subr.bf16.mxu0 0
        %2049 = vmatpush1.bf16.msra.mxu0 %v2046
        %2050 = vmatprep.subr.bf16.mxu0 0
        %2051 = vmatpush1.bf16.msra.mxu0 0
        %2052 = vmatprep.subr.bf16.mxu0 0
        %2053 = vmatpush1.bf16.msra.mxu0 0
        %2054 = vmatprep.subr.bf16.mxu0 0
        %2055 = vmatpush1.bf16.msra.mxu0 0
        %2056 = vmatprep.subr.bf16.mxu0 0
        %2057 = vmatpush1.bf16.msra.mxu0 0
        %2058 = vmatprep.subr.bf16.mxu0 0
        %2059 = vmatpush1.bf16.msra.mxu0 0
        %2060 = vmatprep.subr.bf16.mxu0 0
        %2061 = vmatpush1.bf16.msra.mxu0 0
        %2062 = vmatprep.subr.bf16.mxu0 0
        %2063 = vmatpush1.bf16.msra.mxu0 0
        %2064 = vmatprep.subr.bf16.mxu0 0
        %2065 = vmatpush1.bf16.msra.mxu0 0
        %2066 = vmatprep.subr.bf16.mxu0 0
        %2067 = vmatpush1.bf16.msra.mxu0 0
        %2068 = vmatprep.subr.bf16.mxu0 0
        %2069 = vmatpush1.bf16.msra.mxu0 0
        %2070 = vmatprep.subr.bf16.mxu0 0
        %2071 = vmatpush1.bf16.msra.mxu0 0
        %2072 = vmatprep.subr.bf16.mxu0 0
        %2073 = vmatpush1.bf16.msra.mxu0 0
        %2074 = vmatprep.subr.bf16.mxu0 0
        %2075 = vmatpush1.bf16.msra.mxu0 0
        %2076 = vmatprep.subr.bf16.mxu0 0
        %2077 = vmatpush1.bf16.msra.mxu0 0
        %2078 = vmatprep.subr.bf16.mxu0 0
        %2079 = vmatpush1.bf16.msra.mxu0 0
        %2080 = vmatprep.mubr.bf16.mxu0 0
        %2081 = vmatmul.mubr.bf16.gmra.mrb[0].mxu0 %v2043
        %v2082 = vpop.f32.mrb[0].mxu0
        %v2083 = vadd.f32 %v2037, %v2082
        %v2084 = vpop.f32.mrb[0].mxu0
        %v2085 = vpop.f32.mrb[0].mxu0
        %v2086 = vpop.f32.mrb[0].mxu0
        %2087 = vdwg.mxu0
        %s2088 = scalar_lea.vmem [#allocation16], 8
        %v2089 = vld [vmem:[%s2088] sm:$0xf]
        %v2091 = vsel %vm1547, %v1991, 0
        %v2094 = vsel %vm1795, %v2089, 0
        %2096 = vmatprep.subr.bf16.mxu0 0
        %2097 = vmatpush1.bf16.msra.mxu0 %v2094
        %2098 = vmatprep.subr.bf16.mxu0 0
        %2099 = vmatpush1.bf16.msra.mxu0 0
        %2100 = vmatprep.subr.bf16.mxu0 0
        %2101 = vmatpush1.bf16.msra.mxu0 0
        %2102 = vmatprep.subr.bf16.mxu0 0
        %2103 = vmatpush1.bf16.msra.mxu0 0
        %2104 = vmatprep.subr.bf16.mxu0 0
        %2105 = vmatpush1.bf16.msra.mxu0 0
        %2106 = vmatprep.subr.bf16.mxu0 0
        %2107 = vmatpush1.bf16.msra.mxu0 0
        %2108 = vmatprep.subr.bf16.mxu0 0
        %2109 = vmatpush1.bf16.msra.mxu0 0
        %2110 = vmatprep.subr.bf16.mxu0 0
        %2111 = vmatpush1.bf16.msra.mxu0 0
        %2112 = vmatprep.subr.bf16.mxu0 0
        %2113 = vmatpush1.bf16.msra.mxu0 0
        %2114 = vmatprep.subr.bf16.mxu0 0
        %2115 = vmatpush1.bf16.msra.mxu0 0
        %2116 = vmatprep.subr.bf16.mxu0 0
        %2117 = vmatpush1.bf16.msra.mxu0 0
        %2118 = vmatprep.subr.bf16.mxu0 0
        %2119 = vmatpush1.bf16.msra.mxu0 0
        %2120 = vmatprep.subr.bf16.mxu0 0
        %2121 = vmatpush1.bf16.msra.mxu0 0
        %2122 = vmatprep.subr.bf16.mxu0 0
        %2123 = vmatpush1.bf16.msra.mxu0 0
        %2124 = vmatprep.subr.bf16.mxu0 0
        %2125 = vmatpush1.bf16.msra.mxu0 0
        %2126 = vmatprep.subr.bf16.mxu0 0
        %2127 = vmatpush1.bf16.msra.mxu0 0
        %2128 = vmatprep.mubr.bf16.mxu0 0
        %2129 = vmatmul.mubr.bf16.gmra.mrb[0].mxu0 %v2091
        %v2130 = vpop.f32.mrb[0].mxu0
        %v2131 = vadd.f32 0.0, %v2130
        %v2132 = vpop.f32.mrb[0].mxu0
        %v2133 = vpop.f32.mrb[0].mxu0
        %v2134 = vpop.f32.mrb[0].mxu0
        %2135 = vdwg.mxu0
        %v2136 = vadd.f32 %v2083, %v2131
        %s2137 = scalar_lea.vmem [#allocation16], 12
        %v2138 = vld [vmem:[%s2137] sm:$0xf]
        %v2140 = vsel %vm1547, %v1992, 0
        %v2143 = vsel %vm1795, %v2138, 0
        %2145 = vmatprep.subr.bf16.mxu0 0
        %2146 = vmatpush1.bf16.msra.mxu0 %v2143
        %2147 = vmatprep.subr.bf16.mxu0 0
        %2148 = vmatpush1.bf16.msra.mxu0 0
        %2149 = vmatprep.subr.bf16.mxu0 0
        %2150 = vmatpush1.bf16.msra.mxu0 0
        %2151 = vmatprep.subr.bf16.mxu0 0
        %2152 = vmatpush1.bf16.msra.mxu0 0
        %2153 = vmatprep.subr.bf16.mxu0 0
        %2154 = vmatpush1.bf16.msra.mxu0 0
        %2155 = vmatprep.subr.bf16.mxu0 0
        %2156 = vmatpush1.bf16.msra.mxu0 0
        %2157 = vmatprep.subr.bf16.mxu0 0
        %2158 = vmatpush1.bf16.msra.mxu0 0
        %2159 = vmatprep.subr.bf16.mxu0 0
        %2160 = vmatpush1.bf16.msra.mxu0 0
        %2161 = vmatprep.subr.bf16.mxu0 0
        %2162 = vmatpush1.bf16.msra.mxu0 0
        %2163 = vmatprep.subr.bf16.mxu0 0
        %2164 = vmatpush1.bf16.msra.mxu0 0
        %2165 = vmatprep.subr.bf16.mxu0 0
        %2166 = vmatpush1.bf16.msra.mxu0 0
        %2167 = vmatprep.subr.bf16.mxu0 0
        %2168 = vmatpush1.bf16.msra.mxu0 0
        %2169 = vmatprep.subr.bf16.mxu0 0
        %2170 = vmatpush1.bf16.msra.mxu0 0
        %2171 = vmatprep.subr.bf16.mxu0 0
        %2172 = vmatpush1.bf16.msra.mxu0 0
        %2173 = vmatprep.subr.bf16.mxu0 0
        %2174 = vmatpush1.bf16.msra.mxu0 0
        %2175 = vmatprep.subr.bf16.mxu0 0
        %2176 = vmatpush1.bf16.msra.mxu0 0
        %2177 = vmatprep.mubr.bf16.mxu0 0
        %2178 = vmatmul.mubr.bf16.gmra.mrb[0].mxu0 %v2140
        %v2179 = vpop.f32.mrb[0].mxu0
        %v2180 = vadd.f32 0.0, %v2179
        %v2181 = vpop.f32.mrb[0].mxu0
        %v2182 = vpop.f32.mrb[0].mxu0
        %v2183 = vpop.f32.mrb[0].mxu0
        %2184 = vdwg.mxu0
        %v2185 = vadd.f32 %v2136, %v2180
        %v2186 = vld [vmem:[#allocation18] sm:$0x1]
        %v2188 = vlaneseq
        %v2189 = vshrl.u32 %v2188, 7
        %v2190 = vsub.s32 0, %v2189
        %v2191 = vrot.slane %v2186, %v2190
        %v2193 = vadd.f32 %v2185, %v2191
        %v2194 = vadd.f32 %v2193, %v1269
        %v2195 = vsel %vm1296, %v2194, 0.0
        %2196 = vadd.xlane.f32.xlu0 %v2195
        %v2197 = vpop.xlane.xlu0 %2196
        %v2198 = vrcp.pop 32.0
        %v2199 = vmul.f32 %v2197, %v2198
        %v2200 = vsub.f32 %v2194, %v2199
        %v2201 = vmul.f32 %v2200, %v2200
        %v2202 = vsel %vm1296, %v2201, 0.0
        %2203 = vadd.xlane.f32.xlu0 %v2202
        %v2204 = vpop.xlane.xlu0 %2203
        %v2205 = vmul.f32 %v2204, %v2198
        %v2206 = vadd.f32 %v2205, 1e-06
        %v2207 = vrsqrt.pop %v2206
        %v2208 = vmul.f32 %v2200, %v2207
        %v2210 = vlaneseq
        %v2211 = vshrl.u32 %v2210, 7
        %v2212 = vsub.s32 0, %v2211
        %v2213 = vrot.slane %v1271, %v2212
        %v2215 = vmul.f32 %v2208, %v2213
        %v2217 = vlaneseq
        %v2218 = vshrl.u32 %v2217, 7
        %v2219 = vsub.s32 0, %v2218
        %v2220 = vrot.slane %v1272, %v2219
        %v2222 = vadd.f32 %v2215, %v2220
        %v2223 = vpack.c.bf16 %v2222, %v2222
        %v2224 = vld [vmem:[#allocation19] sm:$0xf]
        %v2225 = vld [vmem:[#allocation19 + $0x4] sm:$0xf]
        %v2226 = vld [vmem:[#allocation19 + $0x8] sm:$0xf]
        %v2227 = vld [vmem:[#allocation19 + $0xc] sm:$0xf]
        %v2228 = vld [vmem:[#allocation21] sm:$0x1]
        %v2230 = vlaneseq
        %v2231 = vshrl.u32 %v2230, 7
        %v2232 = vsub.s32 0, %v2231
        %v2233 = vrot.slane %v2228, %v2232
        %v2239 = vunpack.c.l.b16 %v2224
        %v2240 = vunpack.c.l.b16 %v2225
        %v2241 = vunpack.c.l.b16 %v2226
        %v2242 = vunpack.c.l.b16 %v2227
        %v2243 = vpack.c.b16 %v2240, %v2239
        %v2244 = vpack.c.b16 %v2242, %v2241
        %v2248 = vsel %vm1296, %v2223, 0
        %2250 = vmatprep.subr.bf16.mxu0 0
        %2251 = vmatpush1.bf16.msra.mxu0 %v2243
        %2252 = vmatprep.subr.bf16.mxu0 0
        %2253 = vmatpush1.bf16.msra.mxu0 %v2244
        %2254 = vmatprep.subr.bf16.mxu0 0
        %2255 = vmatpush1.bf16.msra.mxu0 0
        %2256 = vmatprep.subr.bf16.mxu0 0
        %2257 = vmatpush1.bf16.msra.mxu0 0
        %2258 = vmatprep.subr.bf16.mxu0 0
        %2259 = vmatpush1.bf16.msra.mxu0 0
        %2260 = vmatprep.subr.bf16.mxu0 0
        %2261 = vmatpush1.bf16.msra.mxu0 0
        %2262 = vmatprep.subr.bf16.mxu0 0
        %2263 = vmatpush1.bf16.msra.mxu0 0
        %2264 = vmatprep.subr.bf16.mxu0 0
        %2265 = vmatpush1.bf16.msra.mxu0 0
        %2266 = vmatprep.subr.bf16.mxu0 0
        %2267 = vmatpush1.bf16.msra.mxu0 0
        %2268 = vmatprep.subr.bf16.mxu0 0
        %2269 = vmatpush1.bf16.msra.mxu0 0
        %2270 = vmatprep.subr.bf16.mxu0 0
        %2271 = vmatpush1.bf16.msra.mxu0 0
        %2272 = vmatprep.subr.bf16.mxu0 0
        %2273 = vmatpush1.bf16.msra.mxu0 0
        %2274 = vmatprep.subr.bf16.mxu0 0
        %2275 = vmatpush1.bf16.msra.mxu0 0
        %2276 = vmatprep.subr.bf16.mxu0 0
        %2277 = vmatpush1.bf16.msra.mxu0 0
        %2278 = vmatprep.subr.bf16.mxu0 0
        %2279 = vmatpush1.bf16.msra.mxu0 0
        %2280 = vmatprep.subr.bf16.mxu0 0
        %2281 = vmatpush1.bf16.msra.mxu0 0
        %2282 = vmatprep.mubr.bf16.mxu0 0
        %2283 = vmatmul.mubr.bf16.gmra.mrb[0].mxu0 %v2248
        %v2284 = vpop.f32.mrb[0].mxu0
        %v2285 = vadd.f32 %v2233, %v2284
        %v2286 = vpop.f32.mrb[0].mxu0
        %v2287 = vpop.f32.mrb[0].mxu0
        %v2288 = vpop.f32.mrb[0].mxu0
        %2289 = vdwg.mxu0
        %v2290 = vmax.f32 %v2285, 0.0
        %v2291 = vpack.c.bf16 %v2290, %v2290
        %v2292 = vld [vmem:[#allocation22] sm:$0xf]
        %v2293 = vld [vmem:[#allocation22 + $0x4] sm:$0xf]
        %v2294 = vld [vmem:[#allocation22 + $0x8] sm:$0xf]
        %v2295 = vld [vmem:[#allocation22 + $0xc] sm:$0xf]
        %v2296 = vld [vmem:[#allocation22 + $0x10] sm:$0xf]
        %v2297 = vld [vmem:[#allocation22 + $0x14] sm:$0xf]
        %v2298 = vld [vmem:[#allocation22 + $0x18] sm:$0xf]
        %v2299 = vld [vmem:[#allocation22 + $0x1c] sm:$0xf]
        %v2300 = vld [vmem:[#allocation24] sm:$0x1]
        %v2302 = vlaneseq
        %v2303 = vshrl.u32 %v2302, 7
        %v2304 = vsub.s32 0, %v2303
        %v2305 = vrot.slane %v2300, %v2304
        %v2315 = vunpack.c.l.b16 %v2292
        %v2316 = vunpack.c.l.b16 %v2293
        %v2317 = vunpack.c.l.b16 %v2294
        %v2318 = vunpack.c.l.b16 %v2295
        %v2319 = vunpack.c.l.b16 %v2296
        %v2320 = vunpack.c.l.b16 %v2297
        %v2321 = vunpack.c.l.b16 %v2298
        %v2322 = vunpack.c.l.b16 %v2299
        %v2323 = vpack.c.b16 %v2316, %v2315
        %v2324 = vpack.c.b16 %v2318, %v2317
        %v2325 = vpack.c.b16 %v2320, %v2319
        %v2326 = vpack.c.b16 %v2322, %v2321
        %vm2331 = vcmask 523264
        %v2333 = vsel %vm2331, %v2291, 0
        %2335 = vmatprep.subr.bf16.mxu0 0
        %2336 = vmatpush1.bf16.msra.mxu0 %v2323
        %2337 = vmatprep.subr.bf16.mxu0 0
        %2338 = vmatpush1.bf16.msra.mxu0 %v2324
        %2339 = vmatprep.subr.bf16.mxu0 0
        %2340 = vmatpush1.bf16.msra.mxu0 %v2325
        %2341 = vmatprep.subr.bf16.mxu0 0
        %2342 = vmatpush1.bf16.msra.mxu0 %v2326
        %2343 = vmatprep.subr.bf16.mxu0 0
        %2344 = vmatpush1.bf16.msra.mxu0 0
        %2345 = vmatprep.subr.bf16.mxu0 0
        %2346 = vmatpush1.bf16.msra.mxu0 0
        %2347 = vmatprep.subr.bf16.mxu0 0
        %2348 = vmatpush1.bf16.msra.mxu0 0
        %2349 = vmatprep.subr.bf16.mxu0 0
        %2350 = vmatpush1.bf16.msra.mxu0 0
        %2351 = vmatprep.subr.bf16.mxu0 0
        %2352 = vmatpush1.bf16.msra.mxu0 0
        %2353 = vmatprep.subr.bf16.mxu0 0
        %2354 = vmatpush1.bf16.msra.mxu0 0
        %2355 = vmatprep.subr.bf16.mxu0 0
        %2356 = vmatpush1.bf16.msra.mxu0 0
        %2357 = vmatprep.subr.bf16.mxu0 0
        %2358 = vmatpush1.bf16.msra.mxu0 0
        %2359 = vmatprep.subr.bf16.mxu0 0
        %2360 = vmatpush1.bf16.msra.mxu0 0
        %2361 = vmatprep.subr.bf16.mxu0 0
        %2362 = vmatpush1.bf16.msra.mxu0 0
        %2363 = vmatprep.subr.bf16.mxu0 0
        %2364 = vmatpush1.bf16.msra.mxu0 0
        %2365 = vmatprep.subr.bf16.mxu0 0
        %2366 = vmatpush1.bf16.msra.mxu0 0
        %2367 = vmatprep.mubr.bf16.mxu0 0
        %2368 = vmatmul.mubr.bf16.gmra.mrb[0].mxu0 %v2333
        %v2369 = vpop.f32.mrb[0].mxu0
        %v2370 = vadd.f32 %v2305, %v2369
        %v2371 = vpop.f32.mrb[0].mxu0
        %v2372 = vpop.f32.mrb[0].mxu0
        %v2373 = vpop.f32.mrb[0].mxu0
        %2374 = vdwg.mxu0
        %v2375 = vadd.f32 %v2370, %v2222
        %v2376 = vsel %vm1296, %v2375, 0.0
        %2377 = vadd.xlane.f32.xlu0 %v2376
        %v2378 = vpop.xlane.xlu0 %2377
        %v2379 = vmul.f32 %v2378, %v2198
        %v2380 = vsub.f32 %v2375, %v2379
        %v2381 = vmul.f32 %v2380, %v2380
        %v2382 = vsel %vm1296, %v2381, 0.0
        %2383 = vadd.xlane.f32.xlu0 %v2382
        %v2384 = vpop.xlane.xlu0 %2383
        %v2385 = vmul.f32 %v2384, %v2198
        %v2386 = vadd.f32 %v2385, 1e-06
        %v2387 = vrsqrt.pop %v2386
        %v2388 = vmul.f32 %v2380, %v2387
        %v2389 = vmul.f32 %v2388, %v2213
        %v2390 = vadd.f32 %v2389, %v2220
        %2391 = vst.msk [vmem:[%s716] sm:$0xff] %vm1296, %v2390
        %s2392 = sand.u32 %s381, 1
        %s2393 = scalar_lea.sflag [#allocation6], %s2392
        %s2394 = sand.u32 %s381, 1
        %s2395 = smul.addr %s2394, 8
        %s2396 = scalar_lea.vmem [#allocation28], %s2395
        // Predicated region
        $region145: #{tpu_custom_call.1} parent=79 // pred_check
          %p2397 = pneg %p391
        $region146: #{tpu_custom_call.1} parent=79 // pred_check_branch
          %2399 = sbr.rel (%p2397) target = $region148
        $region147: #{tpu_custom_call.1} parent=79 // pred_region
          %s2401 = ssub.s32 128, 128
          %2402 = vsyncadd %s2393, %s2401
          %s2403 = sadd.s32 %s44, %s43
          %s2404 = smul.addr %s2403, 128
          %s2405 = scalar_lea.hbm %s15, %s2404
          %s2407 = sshll.u32 %s2396, 4
          %s2408 = int_to_ptr.vmem [resolvable:$true] %s2407
          %2410 = dma.vmem_to_hbm [thread:$0]  %s2408, 128, %s2405, %s2393
        $region148: #{tpu_custom_call.1} parent=79 // pred_fallthru
          _
      $region80: #{tpu_custom_call.1} parent=5 // pred_fallthru
        _
      %p2411 = scmp.le.s32.totalorder 2, %s34
      // Predicated region
      $region149: #{tpu_custom_call.1} parent=5 // pred_check
        %p2412 = pneg %p2411
      $region150: #{tpu_custom_call.1} parent=5 // pred_check_branch
        %2414 = sbr.rel (%p2412) target = $region152
      $region151: #{tpu_custom_call.1} parent=5 // pred_region
        %s2415 = ssub.s32 %s34, 2
        // Predicated region
        $region153: #{tpu_custom_call.1} parent=151 // pred_check
          %p2416 = pneg %p397
        $region154: #{tpu_custom_call.1} parent=151 // pred_check_branch
          %2418 = sbr.rel (%p2416) target = $region156
        $region155: #{tpu_custom_call.1} parent=151 // pred_region
          %s2419 = sand.u32 %s382, 1
          %s2420 = scalar_lea.sflag [#allocation6], %s2419
          %s2421 = sand.u32 %s382, 1
          %s2422 = smul.addr %s2421, 8
          %s2423 = scalar_lea.vmem [#allocation28], %s2422
          %2424 = dma.done %s2420, 128
        $region156: #{tpu_custom_call.1} parent=151 // pred_fallthru
          _
      $region152: #{tpu_custom_call.1} parent=5 // pred_fallthru
        _
    $region6: #{tpu_custom_call.1} parent=1 // loop_footer
      %s38 = sadd.s32 1, %s34
    $region7: #{tpu_custom_call.1} parent=1 // loop_footer_branch
      %33 = sbr.rel target = $region3
    $region8: #{tpu_custom_call.1} parent=1 // loop_exit
      _
    %2425 = vsyncpa [#allocation5], 1
    %s2426 = scalar_lea.sflag [#allocation5], 1
    %2427 = vsyncpa %s2426, 1
    %2428 = vsyncpa [#allocation8], 1
    %2429 = vsyncpa [#allocation11], 1
    %2430 = vsyncpa [#allocation14], 1
    %2431 = vsyncpa [#allocation17], 1
    %2432 = vsyncpa [#allocation20], 1
    %2433 = vsyncpa [#allocation23], 1
    %2434 = vsyncpa [#allocation26], 1
    %2435 = vsyncpa [#allocation6], 1
    %s2436 = scalar_lea.sflag [#allocation6], 1
    %2437 = vsyncpa %s2436, 1

// kernel: tpu_custom_call.1
$region0: #{tpu_custom_call.1}
  #allocation0 [shape = 'u32[]', space=smem, size = 0x4, offset = 0x4, fixed_abs, tag = 'smem constant byte address 0x4 - core index']
  #allocation1 [shape = 'u32[144,128]{1,0:T(1,128)}', space=vmem, size = 0x12000, scoped, tag = 'internal scratch']
  #allocation2 [shape = 'bf16[4,8,8]{2,1,0:T(8,128)(2,1)}', space=vmem, size = 0x2000, scoped, tag = 'scratch operand']
  #allocation3 [shape = 'bf16[4,8,8]{2,1,0:T(8,128)(2,1)}', space=vmem, size = 0x2000, scoped, tag = 'scratch operand']
  %s0 = inlined_call_operand.hbm [shape: f32[2,8,32], index: 0, kind: input, shape index: {}]
  %s1 = inlined_call_operand.hbm [shape: bf16[4,32,8], index: 1, kind: input, shape index: {}]
  %s2 = inlined_call_operand.hbm [shape: f32[4,1,8], index: 2, kind: input, shape index: {}]
  %s3 = inlined_call_operand.hbm [shape: bf16[4,32,8], index: 3, kind: input, shape index: {}]
  %s4 = inlined_call_operand.hbm [shape: f32[4,1,8], index: 4, kind: input, shape index: {}]
  %s5 = inlined_call_operand.hbm [shape: bf16[4,32,8], index: 5, kind: input, shape index: {}]
  %s6 = inlined_call_operand.hbm [shape: f32[4,1,8], index: 6, kind: input, shape index: {}]
  %s7 = inlined_call_operand.hbm [shape: bf16[4,8,32], index: 7, kind: input, shape index: {}]
  %s8 = inlined_call_operand.hbm [shape: f32[1,32], index: 8, kind: input, shape index: {}]
  %s9 = inlined_call_operand.hbm [shape: bf16[1,32,64], index: 9, kind: input, shape index: {}]
  %s10 = inlined_call_operand.hbm [shape: f32[1,1,64], index: 10, kind: input, shape index: {}]
  %s11 = inlined_call_operand.hbm [shape: bf16[1,64,32], index: 11, kind: input, shape index: {}]
  %s12 = inlined_call_operand.hbm [shape: f32[1,32], index: 12, kind: input, shape index: {}]
  %s13 = inlined_call_operand.hbm [shape: f32[1,32], index: 13, kind: input, shape index: {}]
  %s14 = inlined_call_operand.hbm [shape: f32[1,32], index: 14, kind: input, shape index: {}]
  %s15 = inlined_call_operand.hbm [shape: f32[2,8,32], index: 15, kind: output, shape index: {}]
  %s16 = sld [smem:[#allocation0]]
  $region157: #{tpu_custom_call.1} parent=0
    _
  %s18 = ssub.s32 1, %s16
  %s19 = scalar_select 0, %s18, %s16
  $region1: #{tpu_custom_call.1} parent=0
    #allocation4 [shape = 'u8[8192]{0}', space=vmem, size = 0x2000, scoped, tag = 'input window, operand 0']
    #allocation5 [shape = 's32[2]{0}', space=sflag, size = 0x8, scoped, tag = 'scoped memory for tpu_custom_call.1']
    #allocation6 [shape = 's32[2]{0}', space=sflag, size = 0x8, scoped, tag = 'scoped memory for tpu_custom_call.1']
    #allocation7 [shape = 'u8[32768]{0}', space=vmem, size = 0x8000, scoped, tag = 'input window, operand 1, single buffered']
    #allocation8 [shape = 's32[1]{0}', space=sflag, size = 0x4, scoped, tag = 'scoped memory for tpu_custom_call.1']
    #allocation9 [shape = 'u8[2048]{0}', space=vmem, size = 0x800, scoped, tag = 'input window, operand 2, single buffered']
    #allocation10 [shape = 'u8[32768]{0}', space=vmem, size = 0x8000, scoped, tag = 'input window, operand 3, single buffered']
    #allocation11 [shape = 's32[1]{0}', space=sflag, size = 0x4, scoped, tag = 'scoped memory for tpu_custom_call.1']
    #allocation12 [shape = 'u8[2048]{0}', space=vmem, size = 0x800, scoped, tag = 'input window, operand 4, single buffered']
    #allocation13 [shape = 'u8[32768]{0}', space=vmem, size = 0x8000, scoped, tag = 'input window, operand 5, single buffered']
    #allocation14 [shape = 's32[1]{0}', space=sflag, size = 0x4, scoped, tag = 'scoped memory for tpu_custom_call.1']
    #allocation15 [shape = 'u8[2048]{0}', space=vmem, size = 0x800, scoped, tag = 'input window, operand 6, single buffered']
    #allocation16 [shape = 'u8[8192]{0}', space=vmem, size = 0x2000, scoped, tag = 'input window, operand 7, single buffered']
    #allocation17 [shape = 's32[1]{0}', space=sflag, size = 0x4, scoped, tag = 'scoped memory for tpu_custom_call.1']
    #allocation18 [shape = 'u8[512]{0}', space=vmem, size = 0x400, scoped, tag = 'input window, operand 8, single buffered']
    #allocation19 [shape = 'u8[8192]{0}', space=vmem, size = 0x2000, scoped, tag = 'input window, operand 9, single buffered']
    #allocation20 [shape = 's32[1]{0}', space=sflag, size = 0x4, scoped, tag = 'scoped memory for tpu_custom_call.1']
    #allocation21 [shape = 'u8[512]{0}', space=vmem, size = 0x400, scoped, tag = 'input window, operand 10, single buffered']
    #allocation22 [shape = 'u8[16384]{0}', space=vmem, size = 0x4000, scoped, tag = 'input window, operand 11, single buffered']
    #allocation23 [shape = 's32[1]{0}', space=sflag, size = 0x4, scoped, tag = 'scoped memory for tpu_custom_call.1']
    #allocation24 [shape = 'u8[512]{0}', space=vmem, size = 0x400, scoped, tag = 'input window, operand 12, single buffered']
    #allocation25 [shape = 'u8[512]{0}', space=vmem, size = 0x400, scoped, tag = 'input window, operand 13, single buffered']
    #allocation26 [shape = 's32[1]{0}', space=sflag, size = 0x4, scoped, tag = 'scoped memory for tpu_custom_call.1']
    #allocation27 [shape = 'u8[512]{0}', space=vmem, size = 0x400, scoped, tag = 'input window, operand 14, single buffered']
    #allocation28 [shape = 'u8[8192]{0}', space=vmem, size = 0x2000, scoped, tag = 'output window, operand 0']
    %20 = vsyncpa [#allocation5], 0
    %s21 = scalar_lea.sflag [#allocation5], 1
    %22 = vsyncpa %s21, 0
    %23 = vsyncpa [#allocation8], 0
    %24 = vsyncpa [#allocation11], 0
    %25 = vsyncpa [#allocation14], 0
    %26 = vsyncpa [#allocation17], 0
    %27 = vsyncpa [#allocation20], 0
    %28 = vsyncpa [#allocation23], 0
    %29 = vsyncpa [#allocation26], 0
    %30 = vsyncpa [#allocation6], 0
    %s31 = scalar_lea.sflag [#allocation6], 1
    %32 = vsyncpa %s31, 0
    loop: start=0, step=1, limit=4
    $region2: #{tpu_custom_call.1} parent=1 // loop_pre_header
      _
    $region3: #{tpu_custom_call.1} parent=1 // loop_header
      %s34 = sphi 0, %s38
      %p35 = scmp.ge.s32.totalorder %s34, 4
      %s41 = sphi 0, %s53
      %s42 = sphi 0, %s49
      %s43 = sphi 0, %s41
      %s44 = sphi 0, %s42
      %s45 = sphi 0, %s43
      %s46 = sphi 0, %s44
      %s56 = sphi 0, %s58
      %s59 = sphi 0, %s56
      %s60 = sphi 0, %s59
      %s76 = sphi 0, %s60
      %s80 = sphi 0, %s80
      %s82 = sphi 0, %s80
      %s83 = sphi 0, %s82
      %s97 = sphi 0, %s83
      %s101 = sphi 0, %s101
      %s103 = sphi 0, %s101
      %s104 = sphi 0, %s103
      %s118 = sphi 0, %s104
      %s122 = sphi 0, %s122
      %s124 = sphi 0, %s122
      %s125 = sphi 0, %s124
      %s139 = sphi 0, %s125
      %s143 = sphi 0, %s143
      %s145 = sphi 0, %s143
      %s146 = sphi 0, %s145
      %s160 = sphi 0, %s146
      %s164 = sphi 0, %s164
      %s166 = sphi 0, %s164
      %s167 = sphi 0, %s166
      %s181 = sphi 0, %s167
      %s185 = sphi 0, %s185
      %s187 = sphi 0, %s185
      %s188 = sphi 0, %s187
      %s202 = sphi 0, %s188
      %s206 = sphi 0, %s206
      %s208 = sphi 0, %s206
      %s209 = sphi 0, %s208
      %s223 = sphi 0, %s209
      %s227 = sphi 0, %s227
      %s229 = sphi 0, %s227
      %s230 = sphi 0, %s229
      %s244 = sphi 0, %s230
      %s248 = sphi 0, %s248
      %s250 = sphi 0, %s248
      %s251 = sphi 0, %s250
      %s265 = sphi 0, %s251
      %s269 = sphi 0, %s269
      %s271 = sphi 0, %s269
      %s272 = sphi 0, %s271
      %s286 = sphi 0, %s272
      %s290 = sphi 0, %s290
      %s292 = sphi 0, %s290
      %s293 = sphi 0, %s292
      %s307 = sphi 0, %s293
      %s311 = sphi 0, %s311
      %s313 = sphi 0, %s311
      %s314 = sphi 0, %s313
      %s328 = sphi 0, %s314
      %s332 = sphi 0, %s332
      %s334 = sphi 0, %s332
      %s335 = sphi 0, %s334
      %s349 = sphi 0, %s335
      %s353 = sphi 0, %s353
      %s355 = sphi 0, %s353
      %s356 = sphi 0, %s355
      %s370 = sphi 0, %s356
      %s378 = sphi 0, %s380
      %s381 = sphi 0, %s378
      %s382 = sphi 0, %s381
      %s398 = sphi 0, %s382
    $region4: #{tpu_custom_call.1} parent=1 // loop_header_branch
      %37 = sbr.rel (%p35) target = $region8
    $region5: #{tpu_custom_call.1} parent=1 // loop_body
      %s39 = ssub.s32 %s34, 1
      %s40 = ssub.s32 %s34, 2
      %s47 = sadd.s32 1, %s42
      %p48 = scmp.ge.s32.totalorder %s47, 1
      %s49 = scalar_select %p48, 0, %s47
      %s50 = sadd.s32 1, %s41
      %s51 = scalar_select %p48, %s50, %s41
      %p52 = scmp.ge.s32.totalorder %s51, 2
      %s53 = scalar_select %p52, 0, %s51
      %s54 = ssub.s32 %s41, %s53
      %p55 = scmp.eq.s32.totalorder %s54, 0
      %s57 = sadd.s32 %s56, 1
      %s58 = scalar_select %p55, %s56, %s57
      %p61 = pneg %p55
      %p62 = scmp.eq.s32.totalorder %s34, 1
      %p63 = por %p61, %p62
      %p64 = scmp.ne.s32.totalorder %s56, %s59
      %p65 = scmp.eq.s32.totalorder %s34, 0
      %p66 = por %p64, %p65
      %p67 = scmp.ne.s32.totalorder %s56, %s59
      %p68 = scmp.eq.s32.totalorder %s39, 1
      %p69 = por %p67, %p68
      %p70 = scmp.ne.s32.totalorder %s59, %s60
      %p71 = scmp.eq.s32.totalorder %s39, 0
      %p72 = por %p70, %p71
      %p73 = scmp.ne.s32.totalorder %s59, %s60
      %p74 = scmp.eq.s32.totalorder %s40, 1
      %p75 = por %p73, %p74
      %p77 = scmp.ne.s32.totalorder %s60, %s76
      %p78 = scmp.eq.s32.totalorder %s40, 0
      %p79 = por %p77, %p78
      %s81 = sadd.s32 %s80, 1
      %p84 = scmp.eq.s32.totalorder %s34, 1
      %p85 = scmp.ne.s32.totalorder %s80, %s82
      %p86 = scmp.eq.s32.totalorder %s34, 0
      %p87 = por %p85, %p86
      %p88 = scmp.ne.s32.totalorder %s80, %s82
      %p89 = scmp.eq.s32.totalorder %s39, 1
      %p90 = por %p88, %p89
      %p91 = scmp.ne.s32.totalorder %s82, %s83
      %p92 = scmp.eq.s32.totalorder %s39, 0
      %p93 = por %p91, %p92
      %p94 = scmp.ne.s32.totalorder %s82, %s83
      %p95 = scmp.eq.s32.totalorder %s40, 1
      %p96 = por %p94, %p95
      %p98 = scmp.ne.s32.totalorder %s83, %s97
      %p99 = scmp.eq.s32.totalorder %s40, 0
      %p100 = por %p98, %p99
      %s102 = sadd.s32 %s101, 1
      %p105 = scmp.eq.s32.totalorder %s34, 1
      %p106 = scmp.ne.s32.totalorder %s101, %s103
      %p107 = scmp.eq.s32.totalorder %s34, 0
      %p108 = por %p106, %p107
      %p109 = scmp.ne.s32.totalorder %s101, %s103
      %p110 = scmp.eq.s32.totalorder %s39, 1
      %p111 = por %p109, %p110
      %p112 = scmp.ne.s32.totalorder %s103, %s104
      %p113 = scmp.eq.s32.totalorder %s39, 0
      %p114 = por %p112, %p113
      %p115 = scmp.ne.s32.totalorder %s103, %s104
      %p116 = scmp.eq.s32.totalorder %s40, 1
      %p117 = por %p115, %p116
      %p119 = scmp.ne.s32.totalorder %s104, %s118
      %p120 = scmp.eq.s32.totalorder %s40, 0
      %p121 = por %p119, %p120
      %s123 = sadd.s32 %s122, 1
      %p126 = scmp.eq.s32.totalorder %s34, 1
      %p127 = scmp.ne.s32.totalorder %s122, %s124
      %p128 = scmp.eq.s32.totalorder %s34, 0
      %p129 = por %p127, %p128
      %p130 = scmp.ne.s32.totalorder %s122, %s124
      %p131 = scmp.eq.s32.totalorder %s39, 1
      %p132 = por %p130, %p131
      %p133 = scmp.ne.s32.totalorder %s124, %s125
      %p134 = scmp.eq.s32.totalorder %s39, 0
      %p135 = por %p133, %p134
      %p136 = scmp.ne.s32.totalorder %s124, %s125
      %p137 = scmp.eq.s32.totalorder %s40, 1
      %p138 = por %p136, %p137
      %p140 = scmp.ne.s32.totalorder %s125, %s139
      %p141 = scmp.eq.s32.totalorder %s40, 0
      %p142 = por %p140, %p141
      %s144 = sadd.s32 %s143, 1
      %p147 = scmp.eq.s32.totalorder %s34, 1
      %p148 = scmp.ne.s32.totalorder %s143, %s145
      %p149 = scmp.eq.s32.totalorder %s34, 0
      %p150 = por %p148, %p149
      %p151 = scmp.ne.s32.totalorder %s143, %s145
      %p152 = scmp.eq.s32.totalorder %s39, 1
      %p153 = por %p151, %p152
      %p154 = scmp.ne.s32.totalorder %s145, %s146
      %p155 = scmp.eq.s32.totalorder %s39, 0
      %p156 = por %p154, %p155
      %p157 = scmp.ne.s32.totalorder %s145, %s146
      %p158 = scmp.eq.s32.totalorder %s40, 1
      %p159 = por %p157, %p158
      %p161 = scmp.ne.s32.totalorder %s146, %s160
      %p162 = scmp.eq.s32.totalorder %s40, 0
      %p163 = por %p161, %p162
      %s165 = sadd.s32 %s164, 1
      %p168 = scmp.eq.s32.totalorder %s34, 1
      %p169 = scmp.ne.s32.totalorder %s164, %s166
      %p170 = scmp.eq.s32.totalorder %s34, 0
      %p171 = por %p169, %p170
      %p172 = scmp.ne.s32.totalorder %s164, %s166
      %p173 = scmp.eq.s32.totalorder %s39, 1
      %p174 = por %p172, %p173
      %p175 = scmp.ne.s32.totalorder %s166, %s167
      %p176 = scmp.eq.s32.totalorder %s39, 0
      %p177 = por %p175, %p176
      %p178 = scmp.ne.s32.totalorder %s166, %s167
      %p179 = scmp.eq.s32.totalorder %s40, 1
      %p180 = por %p178, %p179
      %p182 = scmp.ne.s32.totalorder %s167, %s181
      %p183 = scmp.eq.s32.totalorder %s40, 0
      %p184 = por %p182, %p183
      %s186 = sadd.s32 %s185, 1
      %p189 = scmp.eq.s32.totalorder %s34, 1
      %p190 = scmp.ne.s32.totalorder %s185, %s187
      %p191 = scmp.eq.s32.totalorder %s34, 0
      %p192 = por %p190, %p191
      %p193 = scmp.ne.s32.totalorder %s185, %s187
      %p194 = scmp.eq.s32.totalorder %s39, 1
      %p195 = por %p193, %p194
      %p196 = scmp.ne.s32.totalorder %s187, %s188
      %p197 = scmp.eq.s32.totalorder %s39, 0
      %p198 = por %p196, %p197
      %p199 = scmp.ne.s32.totalorder %s187, %s188
      %p200 = scmp.eq.s32.totalorder %s40, 1
      %p201 = por %p199, %p200
      %p203 = scmp.ne.s32.totalorder %s188, %s202
      %p204 = scmp.eq.s32.totalorder %s40, 0
      %p205 = por %p203, %p204
      %s207 = sadd.s32 %s206, 1
      %p210 = scmp.eq.s32.totalorder %s34, 1
      %p211 = scmp.ne.s32.totalorder %s206, %s208
      %p212 = scmp.eq.s32.totalorder %s34, 0
      %p213 = por %p211, %p212
      %p214 = scmp.ne.s32.totalorder %s206, %s208
      %p215 = scmp.eq.s32.totalorder %s39, 1
      %p216 = por %p214, %p215
      %p217 = scmp.ne.s32.totalorder %s208, %s209
      %p218 = scmp.eq.s32.totalorder %s39, 0
      %p219 = por %p217, %p218
      %p220 = scmp.ne.s32.totalorder %s208, %s209
      %p221 = scmp.eq.s32.totalorder %s40, 1
      %p222 = por %p220, %p221
      %p224 = scmp.ne.s32.totalorder %s209, %s223
      %p225 = scmp.eq.s32.totalorder %s40, 0
      %p226 = por %p224, %p225
      %s228 = sadd.s32 %s227, 1
      %p231 = scmp.eq.s32.totalorder %s34, 1
      %p232 = scmp.ne.s32.totalorder %s227, %s229
      %p233 = scmp.eq.s32.totalorder %s34, 0
      %p234 = por %p232, %p233
      %p235 = scmp.ne.s32.totalorder %s227, %s229
      %p236 = scmp.eq.s32.totalorder %s39, 1
      %p237 = por %p235, %p236
      %p238 = scmp.ne.s32.totalorder %s229, %s230
      %p239 = scmp.eq.s32.totalorder %s39, 0
      %p240 = por %p238, %p239
      %p241 = scmp.ne.s32.totalorder %s229, %s230
      %p242 = scmp.eq.s32.totalorder %s40, 1
      %p243 = por %p241, %p242
      %p245 = scmp.ne.s32.totalorder %s230, %s244
      %p246 = scmp.eq.s32.totalorder %s40, 0
      %p247 = por %p245, %p246
      %s249 = sadd.s32 %s248, 1
      %p252 = scmp.eq.s32.totalorder %s34, 1
      %p253 = scmp.ne.s32.totalorder %s248, %s250
      %p254 = scmp.eq.s32.totalorder %s34, 0
      %p255 = por %p253, %p254
      %p256 = scmp.ne.s32.totalorder %s248, %s250
      %p257 = scmp.eq.s32.totalorder %s39, 1
      %p258 = por %p256, %p257
      %p259 = scmp.ne.s32.totalorder %s250, %s251
      %p260 = scmp.eq.s32.totalorder %s39, 0
      %p261 = por %p259, %p260
      %p262 = scmp.ne.s32.totalorder %s250, %s251
      %p263 = scmp.eq.s32.totalorder %s40, 1
      %p264 = por %p262, %p263
      %p266 = scmp.ne.s32.totalorder %s251, %s265
      %p267 = scmp.eq.s32.totalorder %s40, 0
      %p268 = por %p266, %p267
      %s270 = sadd.s32 %s269, 1
      %p273 = scmp.eq.s32.totalorder %s34, 1
      %p274 = scmp.ne.s32.totalorder %s269, %s271
      %p275 = scmp.eq.s32.totalorder %s34, 0
      %p276 = por %p274, %p275
      %p277 = scmp.ne.s32.totalorder %s269, %s271
      %p278 = scmp.eq.s32.totalorder %s39, 1
      %p279 = por %p277, %p278
      %p280 = scmp.ne.s32.totalorder %s271, %s272
      %p281 = scmp.eq.s32.totalorder %s39, 0
      %p282 = por %p280, %p281
      %p283 = scmp.ne.s32.totalorder %s271, %s272
      %p284 = scmp.eq.s32.totalorder %s40, 1
      %p285 = por %p283, %p284
      %p287 = scmp.ne.s32.totalorder %s272, %s286
      %p288 = scmp.eq.s32.totalorder %s40, 0
      %p289 = por %p287, %p288
      %s291 = sadd.s32 %s290, 1
      %p294 = scmp.eq.s32.totalorder %s34, 1
      %p295 = scmp.ne.s32.totalorder %s290, %s292
      %p296 = scmp.eq.s32.totalorder %s34, 0
      %p297 = por %p295, %p296
      %p298 = scmp.ne.s32.totalorder %s290, %s292
      %p299 = scmp.eq.s32.totalorder %s39, 1
      %p300 = por %p298, %p299
      %p301 = scmp.ne.s32.totalorder %s292, %s293
      %p302 = scmp.eq.s32.totalorder %s39, 0
      %p303 = por %p301, %p302
      %p304 = scmp.ne.s32.totalorder %s292, %s293
      %p305 = scmp.eq.s32.totalorder %s40, 1
      %p306 = por %p304, %p305
      %p308 = scmp.ne.s32.totalorder %s293, %s307
      %p309 = scmp.eq.s32.totalorder %s40, 0
      %p310 = por %p308, %p309
      %s312 = sadd.s32 %s311, 1
      %p315 = scmp.eq.s32.totalorder %s34, 1
      %p316 = scmp.ne.s32.totalorder %s311, %s313
      %p317 = scmp.eq.s32.totalorder %s34, 0
      %p318 = por %p316, %p317
      %p319 = scmp.ne.s32.totalorder %s311, %s313
      %p320 = scmp.eq.s32.totalorder %s39, 1
      %p321 = por %p319, %p320
      %p322 = scmp.ne.s32.totalorder %s313, %s314
      %p323 = scmp.eq.s32.totalorder %s39, 0
      %p324 = por %p322, %p323
      %p325 = scmp.ne.s32.totalorder %s313, %s314
      %p326 = scmp.eq.s32.totalorder %s40, 1
      %p327 = por %p325, %p326
      %p329 = scmp.ne.s32.totalorder %s314, %s328
      %p330 = scmp.eq.s32.totalorder %s40, 0
      %p331 = por %p329, %p330
      %s333 = sadd.s32 %s332, 1
      %p336 = scmp.eq.s32.totalorder %s34, 1
      %p337 = scmp.ne.s32.totalorder %s332, %s334
      %p338 = scmp.eq.s32.totalorder %s34, 0
      %p339 = por %p337, %p338
      %p340 = scmp.ne.s32.totalorder %s332, %s334
      %p341 = scmp.eq.s32.totalorder %s39, 1
      %p342 = por %p340, %p341
      %p343 = scmp.ne.s32.totalorder %s334, %s335
      %p344 = scmp.eq.s32.totalorder %s39, 0
      %p345 = por %p343, %p344
      %p346 = scmp.ne.s32.totalorder %s334, %s335
      %p347 = scmp.eq.s32.totalorder %s40, 1
      %p348 = por %p346, %p347
      %p350 = scmp.ne.s32.totalorder %s335, %s349
      %p351 = scmp.eq.s32.totalorder %s40, 0
      %p352 = por %p350, %p351
      %s354 = sadd.s32 %s353, 1
      %p357 = scmp.eq.s32.totalorder %s34, 1
      %p358 = scmp.ne.s32.totalorder %s353, %s355
      %p359 = scmp.eq.s32.totalorder %s34, 0
      %p360 = por %p358, %p359
      %p361 = scmp.ne.s32.totalorder %s353, %s355
      %p362 = scmp.eq.s32.totalorder %s39, 1
      %p363 = por %p361, %p362
      %p364 = scmp.ne.s32.totalorder %s355, %s356
      %p365 = scmp.eq.s32.totalorder %s39, 0
      %p366 = por %p364, %p365
      %p367 = scmp.ne.s32.totalorder %s355, %s356
      %p368 = scmp.eq.s32.totalorder %s40, 1
      %p369 = por %p367, %p368
      %p371 = scmp.ne.s32.totalorder %s356, %s370
      %p372 = scmp.eq.s32.totalorder %s40, 0
      %p373 = por %p371, %p372
      %s374 = ssub.s32 %s41, %s53
      %s375 = ssub.s32 %s42, %s49
      %s376 = sor.u32 %s374, %s375
      %p377 = scmp.eq.s32.totalorder %s376, 0
      %s379 = sadd.s32 %s378, 1
      %s380 = scalar_select %p377, %s378, %s379
      %p383 = pneg %p377
      %p384 = scmp.eq.s32.totalorder %s34, 1
      %p385 = por %p383, %p384
      %p386 = scmp.ne.s32.totalorder %s378, %s381
      %p387 = scmp.eq.s32.totalorder %s34, 0
      %p388 = por %p386, %p387
      %p389 = scmp.ne.s32.totalorder %s378, %s381
      %p390 = scmp.eq.s32.totalorder %s39, 1
      %p391 = por %p389, %p390
      %p392 = scmp.ne.s32.totalorder %s381, %s382
      %p393 = scmp.eq.s32.totalorder %s39, 0
      %p394 = por %p392, %p393
      %p395 = scmp.ne.s32.totalorder %s381, %s382
      %p396 = scmp.eq.s32.totalorder %s40, 1
      %p397 = por %p395, %p396
      %p399 = scmp.ne.s32.totalorder %s382, %s398
      %p400 = scmp.eq.s32.totalorder %s40, 0
      %p401 = por %p399, %p400
      %p402 = scmp.le.s32.totalorder 1, %s34
      %p403 = scmp.lt.s32.totalorder %s34, 3
      %p404 = pnand %p402, %p403
      %p405 = pneg %p404
      // Predicated region
      $region9: #{tpu_custom_call.1} parent=5 // pred_check
        _
      $region10: #{tpu_custom_call.1} parent=5 // pred_check_branch
        %407 = sbr.rel (%p404) target = $region12
      $region11: #{tpu_custom_call.1} parent=5 // pred_region
        %s408 = ssub.s32 %s34, 1
        // Predicated region
        $region13: #{tpu_custom_call.1} parent=11 // pred_check
          %p409 = pneg %p93
        $region14: #{tpu_custom_call.1} parent=11 // pred_check_branch
          %411 = sbr.rel (%p409) target = $region16
        $region15: #{tpu_custom_call.1} parent=11 // pred_region
          %s413 = ssub.s32 1024, 1024
          %414 = vsyncadd [#allocation8], %s413
          %s415 = sshll.u32 [#allocation7], 4
          %s416 = int_to_ptr.vmem [resolvable:$true] %s415
          %421 = dma.hbm_to_vmem [thread:$0]  %s1, 1024, %s416, [#allocation8], 64, 64, 4
        $region16: #{tpu_custom_call.1} parent=11 // pred_fallthru
          _
        // Predicated region
        $region17: #{tpu_custom_call.1} parent=11 // pred_check
          %p422 = pneg %p114
        $region18: #{tpu_custom_call.1} parent=11 // pred_check_branch
          %424 = sbr.rel (%p422) target = $region20
        $region19: #{tpu_custom_call.1} parent=11 // pred_region
          %s426 = ssub.s32 64, 64
          %427 = vsyncadd [#allocation8], %s426
          %s428 = sshll.u32 [#allocation9], 4
          %s429 = int_to_ptr.vmem [resolvable:$true] %s428
          %434 = dma.hbm_to_vmem [thread:$0]  %s2, 64, %s429, [#allocation8], 16, 16, 1
        $region20: #{tpu_custom_call.1} parent=11 // pred_fallthru
          _
        // Predicated region
        $region21: #{tpu_custom_call.1} parent=11 // pred_check
          %p435 = pneg %p135
        $region22: #{tpu_custom_call.1} parent=11 // pred_check_branch
          %437 = sbr.rel (%p435) target = $region24
        $region23: #{tpu_custom_call.1} parent=11 // pred_region
          %s439 = ssub.s32 1024, 1024
          %440 = vsyncadd [#allocation11], %s439
          %s441 = sshll.u32 [#allocation10], 4
          %s442 = int_to_ptr.vmem [resolvable:$true] %s441
          %447 = dma.hbm_to_vmem [thread:$0]  %s3, 1024, %s442, [#allocation11], 64, 64, 4
        $region24: #{tpu_custom_call.1} parent=11 // pred_fallthru
          _
        // Predicated region
        $region25: #{tpu_custom_call.1} parent=11 // pred_check
          %p448 = pneg %p156
        $region26: #{tpu_custom_call.1} parent=11 // pred_check_branch
          %450 = sbr.rel (%p448) target = $region28
        $region27: #{tpu_custom_call.1} parent=11 // pred_region
          %s452 = ssub.s32 64, 64
          %453 = vsyncadd [#allocation11], %s452
          %s454 = sshll.u32 [#allocation12], 4
          %s455 = int_to_ptr.vmem [resolvable:$true] %s454
          %460 = dma.hbm_to_vmem [thread:$0]  %s4, 64, %s455, [#allocation11], 16, 16, 1
        $region28: #{tpu_custom_call.1} parent=11 // pred_fallthru
          _
        // Predicated region
        $region29: #{tpu_custom_call.1} parent=11 // pred_check
          %p461 = pneg %p177
        $region30: #{tpu_custom_call.1} parent=11 // pred_check_branch
          %463 = sbr.rel (%p461) target = $region32
        $region31: #{tpu_custom_call.1} parent=11 // pred_region
          %s465 = ssub.s32 1024, 1024
          %466 = vsyncadd [#allocation14], %s465
          %s467 = sshll.u32 [#allocation13], 4
          %s468 = int_to_ptr.vmem [resolvable:$true] %s467
          %473 = dma.hbm_to_vmem [thread:$0]  %s5, 1024, %s468, [#allocation14], 64, 64, 4
        $region32: #{tpu_custom_call.1} parent=11 // pred_fallthru
          _
        // Predicated region
        $region33: #{tpu_custom_call.1} parent=11 // pred_check
          %p474 = pneg %p198
        $region34: #{tpu_custom_call.1} parent=11 // pred_check_branch
          %476 = sbr.rel (%p474) target = $region36
        $region35: #{tpu_custom_call.1} parent=11 // pred_region
          %s478 = ssub.s32 64, 64
          %479 = vsyncadd [#allocation14], %s478
          %s480 = sshll.u32 [#allocation15], 4
          %s481 = int_to_ptr.vmem [resolvable:$true] %s480
          %486 = dma.hbm_to_vmem [thread:$0]  %s6, 64, %s481, [#allocation14], 16, 16, 1
        $region36: #{tpu_custom_call.1} parent=11 // pred_fallthru
          _
        // Predicated region
        $region37: #{tpu_custom_call.1} parent=11 // pred_check
          %p487 = pneg %p219
        $region38: #{tpu_custom_call.1} parent=11 // pred_check_branch
          %489 = sbr.rel (%p487) target = $region40
        $region39: #{tpu_custom_call.1} parent=11 // pred_region
          %s491 = ssub.s32 256, 256
          %492 = vsyncadd [#allocation17], %s491
          %s493 = sshll.u32 [#allocation16], 4
          %s494 = int_to_ptr.vmem [resolvable:$true] %s493
          %499 = dma.hbm_to_vmem [thread:$0]  %s7, 256, %s494, [#allocation17], 64, 64, 4
        $region40: #{tpu_custom_call.1} parent=11 // pred_fallthru
          _
        // Predicated region
        $region41: #{tpu_custom_call.1} parent=11 // pred_check
          %p500 = pneg %p240
        $region42: #{tpu_custom_call.1} parent=11 // pred_check_branch
          %502 = sbr.rel (%p500) target = $region44
        $region43: #{tpu_custom_call.1} parent=11 // pred_region
          %s504 = ssub.s32 16, 16
          %505 = vsyncadd [#allocation17], %s504
          %s507 = sshll.u32 [#allocation18], 4
          %s508 = int_to_ptr.vmem [resolvable:$true] %s507
          %510 = dma.hbm_to_vmem [thread:$0]  %s8, 16, %s508, [#allocation17]
        $region44: #{tpu_custom_call.1} parent=11 // pred_fallthru
          _
        // Predicated region
        $region45: #{tpu_custom_call.1} parent=11 // pred_check
          %p511 = pneg %p261
        $region46: #{tpu_custom_call.1} parent=11 // pred_check_branch
          %513 = sbr.rel (%p511) target = $region48
        $region47: #{tpu_custom_call.1} parent=11 // pred_region
          %s515 = ssub.s32 256, 256
          %516 = vsyncadd [#allocation20], %s515
          %s517 = sshll.u32 [#allocation19], 4
          %s518 = int_to_ptr.vmem [resolvable:$true] %s517
          %523 = dma.hbm_to_vmem [thread:$0]  %s9, 256, %s518, [#allocation20], 64, 64, 4
        $region48: #{tpu_custom_call.1} parent=11 // pred_fallthru
          _
        // Predicated region
        $region49: #{tpu_custom_call.1} parent=11 // pred_check
          %p524 = pneg %p282
        $region50: #{tpu_custom_call.1} parent=11 // pred_check_branch
          %526 = sbr.rel (%p524) target = $region52
        $region51: #{tpu_custom_call.1} parent=11 // pred_region
          %s528 = ssub.s32 16, 16
          %529 = vsyncadd [#allocation20], %s528
          %s531 = sshll.u32 [#allocation21], 4
          %s532 = int_to_ptr.vmem [resolvable:$true] %s531
          %534 = dma.hbm_to_vmem [thread:$0]  %s10, 16, %s532, [#allocation20]
        $region52: #{tpu_custom_call.1} parent=11 // pred_fallthru
          _
        // Predicated region
        $region53: #{tpu_custom_call.1} parent=11 // pred_check
          %p535 = pneg %p303
        $region54: #{tpu_custom_call.1} parent=11 // pred_check_branch
          %537 = sbr.rel (%p535) target = $region56
        $region55: #{tpu_custom_call.1} parent=11 // pred_region
          %s539 = ssub.s32 512, 512
          %540 = vsyncadd [#allocation23], %s539
          %s541 = sshll.u32 [#allocation22], 4
          %s542 = int_to_ptr.vmem [resolvable:$true] %s541
          %547 = dma.hbm_to_vmem [thread:$0]  %s11, 512, %s542, [#allocation23], 64, 64, 4
        $region56: #{tpu_custom_call.1} parent=11 // pred_fallthru
          _
        // Predicated region
        $region57: #{tpu_custom_call.1} parent=11 // pred_check
          %p548 = pneg %p324
        $region58: #{tpu_custom_call.1} parent=11 // pred_check_branch
          %550 = sbr.rel (%p548) target = $region60
        $region59: #{tpu_custom_call.1} parent=11 // pred_region
          %s552 = ssub.s32 16, 16
          %553 = vsyncadd [#allocation23], %s552
          %s555 = sshll.u32 [#allocation24], 4
          %s556 = int_to_ptr.vmem [resolvable:$true] %s555
          %558 = dma.hbm_to_vmem [thread:$0]  %s12, 16, %s556, [#allocation23]
        $region60: #{tpu_custom_call.1} parent=11 // pred_fallthru
          _
        // Predicated region
        $region61: #{tpu_custom_call.1} parent=11 // pred_check
          %p559 = pneg %p345
        $region62: #{tpu_custom_call.1} parent=11 // pred_check_branch
          %561 = sbr.rel (%p559) target = $region64
        $region63: #{tpu_custom_call.1} parent=11 // pred_region
          %s563 = ssub.s32 16, 16
          %564 = vsyncadd [#allocation26], %s563
          %s566 = sshll.u32 [#allocation25], 4
          %s567 = int_to_ptr.vmem [resolvable:$true] %s566
          %569 = dma.hbm_to_vmem [thread:$0]  %s13, 16, %s567, [#allocation26]
        $region64: #{tpu_custom_call.1} parent=11 // pred_fallthru
          _
        // Predicated region
        $region65: #{tpu_custom_call.1} parent=11 // pred_check
          %p570 = pneg %p366
        $region66: #{tpu_custom_call.1} parent=11 // pred_check_branch
          %572 = sbr.rel (%p570) target = $region68
        $region67: #{tpu_custom_call.1} parent=11 // pred_region
          %s574 = ssub.s32 16, 16
          %575 = vsyncadd [#allocation26], %s574
          %s577 = sshll.u32 [#allocation27], 4
          %s578 = int_to_ptr.vmem [resolvable:$true] %s577
          %580 = dma.hbm_to_vmem [thread:$0]  %s14, 16, %s578, [#allocation26]
        $region68: #{tpu_custom_call.1} parent=11 // pred_fallthru
          _
      $region12: #{tpu_custom_call.1} parent=5 // pred_fallthru
        _
      %p581 = scmp.lt.s32.totalorder %s34, 2
      // Predicated region
      $region69: #{tpu_custom_call.1} parent=5 // pred_check
        %p582 = pneg %p581
      $region70: #{tpu_custom_call.1} parent=5 // pred_check_branch
        %584 = sbr.rel (%p582) target = $region72
      $region71: #{tpu_custom_call.1} parent=5 // pred_region
        // Predicated region
        $region73: #{tpu_custom_call.1} parent=71 // pred_check
          %p585 = pneg %p66
        $region74: #{tpu_custom_call.1} parent=71 // pred_check_branch
          %587 = sbr.rel (%p585) target = $region76
        $region75: #{tpu_custom_call.1} parent=71 // pred_region
          %s588 = sand.u32 %s56, 1
          %s589 = scalar_lea.sflag [#allocation5], %s588
          %s590 = sand.u32 %s56, 1
          %s591 = smul.addr %s590, 8
          %s592 = scalar_lea.vmem [#allocation4], %s591
          %s594 = ssub.s32 128, 128
          %595 = vsyncadd %s589, %s594
          %s596 = smul.addr %s41, 128
          %s597 = scalar_lea.hbm %s0, %s596
          %s599 = sshll.u32 %s592, 4
          %s600 = int_to_ptr.vmem [resolvable:$true] %s599
          %602 = dma.hbm_to_vmem [thread:$0]  %s597, 128, %s600, %s589
        $region76: #{tpu_custom_call.1} parent=71 // pred_fallthru
          _
      $region72: #{tpu_custom_call.1} parent=5 // pred_fallthru
        _
      %p603 = scmp.le.s32.totalorder 1, %s34
      %p604 = scmp.lt.s32.totalorder %s34, 3
      %p605 = pnand %p603, %p604
      %p606 = pneg %p605
      // Predicated region
      $region77: #{tpu_custom_call.1} parent=5 // pred_check
        _
      $region78: #{tpu_custom_call.1} parent=5 // pred_check_branch
        %608 = sbr.rel (%p605) target = $region80
      $region79: #{tpu_custom_call.1} parent=5 // pred_region
        %s609 = ssub.s32 %s34, 1
        %s610 = sand.u32 %s59, 1
        %s611 = scalar_lea.sflag [#allocation5], %s610
        %s612 = sand.u32 %s59, 1
        %s613 = smul.addr %s612, 8
        %s614 = scalar_lea.vmem [#allocation4], %s613
        // Predicated region
        $region81: #{tpu_custom_call.1} parent=79 // pred_check
          %p615 = pneg %p72
        $region82: #{tpu_custom_call.1} parent=79 // pred_check_branch
          %617 = sbr.rel (%p615) target = $region84
        $region83: #{tpu_custom_call.1} parent=79 // pred_region
          %618 = dma.done %s611, 128
        $region84: #{tpu_custom_call.1} parent=79 // pred_fallthru
          _
        // Predicated region
        $region85: #{tpu_custom_call.1} parent=79 // pred_check
          %p619 = pneg %p93
        $region86: #{tpu_custom_call.1} parent=79 // pred_check_branch
          %621 = sbr.rel (%p619) target = $region88
        $region87: #{tpu_custom_call.1} parent=79 // pred_region
          %622 = dma.done [#allocation8], 1024
        $region88: #{tpu_custom_call.1} parent=79 // pred_fallthru
          _
        // Predicated region
        $region89: #{tpu_custom_call.1} parent=79 // pred_check
          %p623 = pneg %p114
        $region90: #{tpu_custom_call.1} parent=79 // pred_check_branch
          %625 = sbr.rel (%p623) target = $region92
        $region91: #{tpu_custom_call.1} parent=79 // pred_region
          %626 = dma.done [#allocation8], 64
        $region92: #{tpu_custom_call.1} parent=79 // pred_fallthru
          _
        // Predicated region
        $region93: #{tpu_custom_call.1} parent=79 // pred_check
          %p627 = pneg %p135
        $region94: #{tpu_custom_call.1} parent=79 // pred_check_branch
          %629 = sbr.rel (%p627) target = $region96
        $region95: #{tpu_custom_call.1} parent=79 // pred_region
          %630 = dma.done [#allocation11], 1024
        $region96: #{tpu_custom_call.1} parent=79 // pred_fallthru
          _
        // Predicated region
        $region97: #{tpu_custom_call.1} parent=79 // pred_check
          %p631 = pneg %p156
        $region98: #{tpu_custom_call.1} parent=79 // pred_check_branch
          %633 = sbr.rel (%p631) target = $region100
        $region99: #{tpu_custom_call.1} parent=79 // pred_region
          %634 = dma.done [#allocation11], 64
        $region100: #{tpu_custom_call.1} parent=79 // pred_fallthru
          _
        // Predicated region
        $region101: #{tpu_custom_call.1} parent=79 // pred_check
          %p635 = pneg %p177
        $region102: #{tpu_custom_call.1} parent=79 // pred_check_branch
          %637 = sbr.rel (%p635) target = $region104
        $region103: #{tpu_custom_call.1} parent=79 // pred_region
          %638 = dma.done [#allocation14], 1024
        $region104: #{tpu_custom_call.1} parent=79 // pred_fallthru
          _
        // Predicated region
        $region105: #{tpu_custom_call.1} parent=79 // pred_check
          %p639 = pneg %p198
        $region106: #{tpu_custom_call.1} parent=79 // pred_check_branch
          %641 = sbr.rel (%p639) target = $region108
        $region107: #{tpu_custom_call.1} parent=79 // pred_region
          %642 = dma.done [#allocation14], 64
        $region108: #{tpu_custom_call.1} parent=79 // pred_fallthru
          _
        // Predicated region
        $region109: #{tpu_custom_call.1} parent=79 // pred_check
          %p643 = pneg %p219
        $region110: #{tpu_custom_call.1} parent=79 // pred_check_branch
          %645 = sbr.rel (%p643) target = $region112
        $region111: #{tpu_custom_call.1} parent=79 // pred_region
          %646 = dma.done [#allocation17], 256
        $region112: #{tpu_custom_call.1} parent=79 // pred_fallthru
          _
        // Predicated region
        $region113: #{tpu_custom_call.1} parent=79 // pred_check
          %p647 = pneg %p240
        $region114: #{tpu_custom_call.1} parent=79 // pred_check_branch
          %649 = sbr.rel (%p647) target = $region116
        $region115: #{tpu_custom_call.1} parent=79 // pred_region
          %650 = dma.done [#allocation17], 16
        $region116: #{tpu_custom_call.1} parent=79 // pred_fallthru
          _
        // Predicated region
        $region117: #{tpu_custom_call.1} parent=79 // pred_check
          %p651 = pneg %p261
        $region118: #{tpu_custom_call.1} parent=79 // pred_check_branch
          %653 = sbr.rel (%p651) target = $region120
        $region119: #{tpu_custom_call.1} parent=79 // pred_region
          %654 = dma.done [#allocation20], 256
        $region120: #{tpu_custom_call.1} parent=79 // pred_fallthru
          _
        // Predicated region
        $region121: #{tpu_custom_call.1} parent=79 // pred_check
          %p655 = pneg %p282
        $region122: #{tpu_custom_call.1} parent=79 // pred_check_branch
          %657 = sbr.rel (%p655) target = $region124
        $region123: #{tpu_custom_call.1} parent=79 // pred_region
          %658 = dma.done [#allocation20], 16
        $region124: #{tpu_custom_call.1} parent=79 // pred_fallthru
          _
        // Predicated region
        $region125: #{tpu_custom_call.1} parent=79 // pred_check
          %p659 = pneg %p303
        $region126: #{tpu_custom_call.1} parent=79 // pred_check_branch
          %661 = sbr.rel (%p659) target = $region128
        $region127: #{tpu_custom_call.1} parent=79 // pred_region
          %662 = dma.done [#allocation23], 512
        $region128: #{tpu_custom_call.1} parent=79 // pred_fallthru
          _
        // Predicated region
        $region129: #{tpu_custom_call.1} parent=79 // pred_check
          %p663 = pneg %p324
        $region130: #{tpu_custom_call.1} parent=79 // pred_check_branch
          %665 = sbr.rel (%p663) target = $region132
        $region131: #{tpu_custom_call.1} parent=79 // pred_region
          %666 = dma.done [#allocation23], 16
        $region132: #{tpu_custom_call.1} parent=79 // pred_fallthru
          _
        // Predicated region
        $region133: #{tpu_custom_call.1} parent=79 // pred_check
          %p667 = pneg %p345
        $region134: #{tpu_custom_call.1} parent=79 // pred_check_branch
          %669 = sbr.rel (%p667) target = $region136
        $region135: #{tpu_custom_call.1} parent=79 // pred_region
          %670 = dma.done [#allocation26], 16
        $region136: #{tpu_custom_call.1} parent=79 // pred_fallthru
          _
        // Predicated region
        $region137: #{tpu_custom_call.1} parent=79 // pred_check
          %p671 = pneg %p366
        $region138: #{tpu_custom_call.1} parent=79 // pred_check_branch
          %673 = sbr.rel (%p671) target = $region140
        $region139: #{tpu_custom_call.1} parent=79 // pred_region
          %674 = dma.done [#allocation26], 16
        $region140: #{tpu_custom_call.1} parent=79 // pred_fallthru
          _
        %s675 = sand.u32 %s59, 1
        %s676 = scalar_lea.sflag [#allocation5], %s675
        %s677 = sand.u32 %s59, 1
        %s678 = smul.addr %s677, 8
        %s679 = scalar_lea.vmem [#allocation4], %s678
        %p680 = pneg %p72
        %p681 = pneg %p69
        %p682 = pneg %p93
        %p683 = pneg %p90
        %p684 = pneg %p114
        %p685 = pneg %p111
        %p686 = pneg %p135
        %p687 = pneg %p132
        %p688 = pneg %p156
        %p689 = pneg %p153
        %p690 = pneg %p177
        %p691 = pneg %p174
        %p692 = pneg %p198
        %p693 = pneg %p195
        %p694 = pneg %p219
        %p695 = pneg %p216
        %p696 = pneg %p240
        %p697 = pneg %p237
        %p698 = pneg %p261
        %p699 = pneg %p258
        %p700 = pneg %p282
        %p701 = pneg %p279
        %p702 = pneg %p303
        %p703 = pneg %p300
        %p704 = pneg %p324
        %p705 = pneg %p321
        %p706 = pneg %p345
        %p707 = pneg %p342
        %p708 = pneg %p366
        %p709 = pneg %p363
        %p710 = pneg %p394
        %p711 = pneg %p391
        %s712 = sand.u32 %s381, 1
        %s713 = scalar_lea.sflag [#allocation6], %s712
        %s714 = sand.u32 %s381, 1
        %s715 = smul.addr %s714, 8
        %s716 = scalar_lea.vmem [#allocation28], %s715
        %p718 = scmp.eq.s32.totalorder %s44, 0
        // Predicated region
        $region141: #{tpu_custom_call.1} parent=79 // pred_check
          %p719 = pneg %p718
        $region142: #{tpu_custom_call.1} parent=79 // pred_check_branch
          %721 = sbr.rel (%p719) target = $region144
        $region143: #{tpu_custom_call.1} parent=79 // pred_region
          %v722 = vld [vmem:[%s614] sm:$0xff]
          %v723 = vpack.c.bf16 %v722, %v722
          %v724 = vld [vmem:[#allocation10] sm:$0xf]
          %v725 = vld [vmem:[#allocation10 + $0x4] sm:$0xf]
          %v726 = vld [vmem:[#allocation10 + $0x8] sm:$0xf]
          %v727 = vld [vmem:[#allocation10 + $0xc] sm:$0xf]
          %v728 = vld [vmem:[#allocation12] sm:$0x1]
          %v730 = vlaneseq
          %v731 = vshrl.u32 %v730, 7
          %v732 = vsub.s32 0, %v731
          %v733 = vrot.slane %v728, %v732
          %v739 = vunpack.c.l.b16 %v724
          %v740 = vunpack.c.l.b16 %v725
          %v741 = vunpack.c.l.b16 %v726
          %v742 = vunpack.c.l.b16 %v727
          %v743 = vpack.c.b16 %v740, %v739
          %v744 = vpack.c.b16 %v742, %v741
          %vm747 = vcmask 261120
          %v749 = vsel %vm747, %v723, 0
          %751 = vmatprep.subr.bf16.mxu0 0
          %752 = vmatpush1.bf16.msra.mxu0 %v743
          %753 = vmatprep.subr.bf16.mxu0 0
          %754 = vmatpush1.bf16.msra.mxu0 %v744
          %755 = vmatprep.subr.bf16.mxu0 0
          %756 = vmatpush1.bf16.msra.mxu0 0
          %757 = vmatprep.subr.bf16.mxu0 0
          %758 = vmatpush1.bf16.msra.mxu0 0
          %759 = vmatprep.subr.bf16.mxu0 0
          %760 = vmatpush1.bf16.msra.mxu0 0
          %761 = vmatprep.subr.bf16.mxu0 0
          %762 = vmatpush1.bf16.msra.mxu0 0
          %763 = vmatprep.subr.bf16.mxu0 0
          %764 = vmatpush1.bf16.msra.mxu0 0
          %765 = vmatprep.subr.bf16.mxu0 0
          %766 = vmatpush1.bf16.msra.mxu0 0
          %767 = vmatprep.subr.bf16.mxu0 0
          %768 = vmatpush1.bf16.msra.mxu0 0
          %769 = vmatprep.subr.bf16.mxu0 0
          %770 = vmatpush1.bf16.msra.mxu0 0
          %771 = vmatprep.subr.bf16.mxu0 0
          %772 = vmatpush1.bf16.msra.mxu0 0
          %773 = vmatprep.subr.bf16.mxu0 0
          %774 = vmatpush1.bf16.msra.mxu0 0
          %775 = vmatprep.subr.bf16.mxu0 0
          %776 = vmatpush1.bf16.msra.mxu0 0
          %777 = vmatprep.subr.bf16.mxu0 0
          %778 = vmatpush1.bf16.msra.mxu0 0
          %779 = vmatprep.subr.bf16.mxu0 0
          %780 = vmatpush1.bf16.msra.mxu0 0
          %781 = vmatprep.subr.bf16.mxu0 0
          %782 = vmatpush1.bf16.msra.mxu0 0
          %783 = vmatprep.mubr.bf16.mxu0 0
          %784 = vmatmul.mubr.bf16.gmra.mrb[0].mxu0 %v749
          %v785 = vpop.f32.mrb[0].mxu0
          %v786 = vadd.f32 %v733, %v785
          %v787 = vpop.f32.mrb[0].mxu0
          %v788 = vpop.f32.mrb[0].mxu0
          %v789 = vpop.f32.mrb[0].mxu0
          %790 = vdwg.mxu0
          %v791 = vld [vmem:[#allocation13] sm:$0xf]
          %v792 = vld [vmem:[#allocation13 + $0x4] sm:$0xf]
          %v793 = vld [vmem:[#allocation13 + $0x8] sm:$0xf]
          %v794 = vld [vmem:[#allocation13 + $0xc] sm:$0xf]
          %v795 = vld [vmem:[#allocation15] sm:$0x1]
          %v797 = vlaneseq
          %v798 = vshrl.u32 %v797, 7
          %v799 = vsub.s32 0, %v798
          %v800 = vrot.slane %v795, %v799
          %v806 = vunpack.c.l.b16 %v791
          %v807 = vunpack.c.l.b16 %v792
          %v808 = vunpack.c.l.b16 %v793
          %v809 = vunpack.c.l.b16 %v794
          %v810 = vpack.c.b16 %v807, %v806
          %v811 = vpack.c.b16 %v809, %v808
          %814 = vmatprep.subr.bf16.mxu0 0
          %815 = vmatpush1.bf16.msra.mxu0 %v810
          %816 = vmatprep.subr.bf16.mxu0 0
          %817 = vmatpush1.bf16.msra.mxu0 %v811
          %818 = vmatprep.subr.bf16.mxu0 0
          %819 = vmatpush1.bf16.msra.mxu0 0
          %820 = vmatprep.subr.bf16.mxu0 0
          %821 = vmatpush1.bf16.msra.mxu0 0
          %822 = vmatprep.subr.bf16.mxu0 0
          %823 = vmatpush1.bf16.msra.mxu0 0
          %824 = vmatprep.subr.bf16.mxu0 0
          %825 = vmatpush1.bf16.msra.mxu0 0
          %826 = vmatprep.subr.bf16.mxu0 0
          %827 = vmatpush1.bf16.msra.mxu0 0
          %828 = vmatprep.subr.bf16.mxu0 0
          %829 = vmatpush1.bf16.msra.mxu0 0
          %830 = vmatprep.subr.bf16.mxu0 0
          %831 = vmatpush1.bf16.msra.mxu0 0
          %832 = vmatprep.subr.bf16.mxu0 0
          %833 = vmatpush1.bf16.msra.mxu0 0
          %834 = vmatprep.subr.bf16.mxu0 0
          %835 = vmatpush1.bf16.msra.mxu0 0
          %836 = vmatprep.subr.bf16.mxu0 0
          %837 = vmatpush1.bf16.msra.mxu0 0
          %838 = vmatprep.subr.bf16.mxu0 0
          %839 = vmatpush1.bf16.msra.mxu0 0
          %840 = vmatprep.subr.bf16.mxu0 0
          %841 = vmatpush1.bf16.msra.mxu0 0
          %842 = vmatprep.subr.bf16.mxu0 0
          %843 = vmatpush1.bf16.msra.mxu0 0
          %844 = vmatprep.subr.bf16.mxu0 0
          %845 = vmatpush1.bf16.msra.mxu0 0
          %846 = vmatprep.mubr.bf16.mxu0 0
          %847 = vmatmul.mubr.bf16.gmra.mrb[0].mxu0 %v749
          %v848 = vpop.f32.mrb[0].mxu0
          %v849 = vadd.f32 %v800, %v848
          %v850 = vpop.f32.mrb[0].mxu0
          %v851 = vpop.f32.mrb[0].mxu0
          %v852 = vpop.f32.mrb[0].mxu0
          %853 = vdwg.mxu0
          %v854 = vpack.c.bf16 %v786, %v786
          %vm855 = vcmask 60416
          %856 = vst.msk [vmem:[#allocation2] sm:$0xf] %vm855, %v854
          %v857 = vpack.c.bf16 %v849, %v849
          %858 = vst.msk [vmem:[#allocation3] sm:$0xf] %vm855, %v857
          %s859 = scalar_lea.vmem [#allocation10], 16
          %v860 = vld [vmem:[%s859] sm:$0xf]
          %v861 = vld [vmem:[%s859 + $0x4] sm:$0xf]
          %v862 = vld [vmem:[%s859 + $0x8] sm:$0xf]
          %v863 = vld [vmem:[%s859 + $0xc] sm:$0xf]
          %s864 = scalar_lea.vmem [#allocation12], 1
          %v865 = vld [vmem:[%s864] sm:$0x1]
          %v867 = vlaneseq
          %v868 = vshrl.u32 %v867, 7
          %v869 = vsub.s32 0, %v868
          %v870 = vrot.slane %v865, %v869
          %v876 = vunpack.c.l.b16 %v860
          %v877 = vunpack.c.l.b16 %v861
          %v878 = vunpack.c.l.b16 %v862
          %v879 = vunpack.c.l.b16 %v863
          %v880 = vpack.c.b16 %v877, %v876
          %v881 = vpack.c.b16 %v879, %v878
          %884 = vmatprep.subr.bf16.mxu0 0
          %885 = vmatpush1.bf16.msra.mxu0 %v880
          %886 = vmatprep.subr.bf16.mxu0 0
          %887 = vmatpush1.bf16.msra.mxu0 %v881
          %888 = vmatprep.subr.bf16.mxu0 0
          %889 = vmatpush1.bf16.msra.mxu0 0
          %890 = vmatprep.subr.bf16.mxu0 0
          %891 = vmatpush1.bf16.msra.mxu0 0
          %892 = vmatprep.subr.bf16.mxu0 0
          %893 = vmatpush1.bf16.msra.mxu0 0
          %894 = vmatprep.subr.bf16.mxu0 0
          %895 = vmatpush1.bf16.msra.mxu0 0
          %896 = vmatprep.subr.bf16.mxu0 0
          %897 = vmatpush1.bf16.msra.mxu0 0
          %898 = vmatprep.subr.bf16.mxu0 0
          %899 = vmatpush1.bf16.msra.mxu0 0
          %900 = vmatprep.subr.bf16.mxu0 0
          %901 = vmatpush1.bf16.msra.mxu0 0
          %902 = vmatprep.subr.bf16.mxu0 0
          %903 = vmatpush1.bf16.msra.mxu0 0
          %904 = vmatprep.subr.bf16.mxu0 0
          %905 = vmatpush1.bf16.msra.mxu0 0
          %906 = vmatprep.subr.bf16.mxu0 0
          %907 = vmatpush1.bf16.msra.mxu0 0
          %908 = vmatprep.subr.bf16.mxu0 0
          %909 = vmatpush1.bf16.msra.mxu0 0
          %910 = vmatprep.subr.bf16.mxu0 0
          %911 = vmatpush1.bf16.msra.mxu0 0
          %912 = vmatprep.subr.bf16.mxu0 0
          %913 = vmatpush1.bf16.msra.mxu0 0
          %914 = vmatprep.subr.bf16.mxu0 0
          %915 = vmatpush1.bf16.msra.mxu0 0
          %916 = vmatprep.mubr.bf16.mxu0 0
          %917 = vmatmul.mubr.bf16.gmra.mrb[0].mxu0 %v749
          %v918 = vpop.f32.mrb[0].mxu0
          %v919 = vadd.f32 %v870, %v918
          %v920 = vpop.f32.mrb[0].mxu0
          %v921 = vpop.f32.mrb[0].mxu0
          %v922 = vpop.f32.mrb[0].mxu0
          %923 = vdwg.mxu0
          %s924 = scalar_lea.vmem [#allocation13], 16
          %v925 = vld [vmem:[%s924] sm:$0xf]
          %v926 = vld [vmem:[%s924 + $0x4] sm:$0xf]
          %v927 = vld [vmem:[%s924 + $0x8] sm:$0xf]
          %v928 = vld [vmem:[%s924 + $0xc] sm:$0xf]
          %s929 = scalar_lea.vmem [#allocation15], 1
          %v930 = vld [vmem:[%s929] sm:$0x1]
          %v932 = vlaneseq
          %v933 = vshrl.u32 %v932, 7
          %v934 = vsub.s32 0, %v933
          %v935 = vrot.slane %v930, %v934
          %v941 = vunpack.c.l.b16 %v925
          %v942 = vunpack.c.l.b16 %v926
          %v943 = vunpack.c.l.b16 %v927
          %v944 = vunpack.c.l.b16 %v928
          %v945 = vpack.c.b16 %v942, %v941
          %v946 = vpack.c.b16 %v944, %v943
          %949 = vmatprep.subr.bf16.mxu0 0
          %950 = vmatpush1.bf16.msra.mxu0 %v945
          %951 = vmatprep.subr.bf16.mxu0 0
          %952 = vmatpush1.bf16.msra.mxu0 %v946
          %953 = vmatprep.subr.bf16.mxu0 0
          %954 = vmatpush1.bf16.msra.mxu0 0
          %955 = vmatprep.subr.bf16.mxu0 0
          %956 = vmatpush1.bf16.msra.mxu0 0
          %957 = vmatprep.subr.bf16.mxu0 0
          %958 = vmatpush1.bf16.msra.mxu0 0
          %959 = vmatprep.subr.bf16.mxu0 0
          %960 = vmatpush1.bf16.msra.mxu0 0
          %961 = vmatprep.subr.bf16.mxu0 0
          %962 = vmatpush1.bf16.msra.mxu0 0
          %963 = vmatprep.subr.bf16.mxu0 0
          %964 = vmatpush1.bf16.msra.mxu0 0
          %965 = vmatprep.subr.bf16.mxu0 0
          %966 = vmatpush1.bf16.msra.mxu0 0
          %967 = vmatprep.subr.bf16.mxu0 0
          %968 = vmatpush1.bf16.msra.mxu0 0
          %969 = vmatprep.subr.bf16.mxu0 0
          %970 = vmatpush1.bf16.msra.mxu0 0
          %971 = vmatprep.subr.bf16.mxu0 0
          %972 = vmatpush1.bf16.msra.mxu0 0
          %973 = vmatprep.subr.bf16.mxu0 0
          %974 = vmatpush1.bf16.msra.mxu0 0
          %975 = vmatprep.subr.bf16.mxu0 0
          %976 = vmatpush1.bf16.msra.mxu0 0
          %977 = vmatprep.subr.bf16.mxu0 0
          %978 = vmatpush1.bf16.msra.mxu0 0
          %979 = vmatprep.subr.bf16.mxu0 0
          %980 = vmatpush1.bf16.msra.mxu0 0
          %981 = vmatprep.mubr.bf16.mxu0 0
          %982 = vmatmul.mubr.bf16.gmra.mrb[0].mxu0 %v749
          %v983 = vpop.f32.mrb[0].mxu0
          %v984 = vadd.f32 %v935, %v983
          %v985 = vpop.f32.mrb[0].mxu0
          %v986 = vpop.f32.mrb[0].mxu0
          %v987 = vpop.f32.mrb[0].mxu0
          %988 = vdwg.mxu0
          %v989 = vpack.c.bf16 %v919, %v919
          %s990 = scalar_lea.vmem [#allocation2], 4
          %991 = vst.msk [vmem:[%s990] sm:$0xf] %vm855, %v989
          %v992 = vpack.c.bf16 %v984, %v984
          %s993 = scalar_lea.vmem [#allocation3], 4
          %994 = vst.msk [vmem:[%s993] sm:$0xf] %vm855, %v992
          %s995 = scalar_lea.vmem [#allocation10], 32
          %v996 = vld [vmem:[%s995] sm:$0xf]
          %v997 = vld [vmem:[%s995 + $0x4] sm:$0xf]
          %v998 = vld [vmem:[%s995 + $0x8] sm:$0xf]
          %v999 = vld [vmem:[%s995 + $0xc] sm:$0xf]
          %s1000 = scalar_lea.vmem [#allocation12], 2
          %v1001 = vld [vmem:[%s1000] sm:$0x1]
          %v1003 = vlaneseq
          %v1004 = vshrl.u32 %v1003, 7
          %v1005 = vsub.s32 0, %v1004
          %v1006 = vrot.slane %v1001, %v1005
          %v1012 = vunpack.c.l.b16 %v996
          %v1013 = vunpack.c.l.b16 %v997
          %v1014 = vunpack.c.l.b16 %v998
          %v1015 = vunpack.c.l.b16 %v999
          %v1016 = vpack.c.b16 %v1013, %v1012
          %v1017 = vpack.c.b16 %v1015, %v1014
          %1020 = vmatprep.subr.bf16.mxu0 0
          %1021 = vmatpush1.bf16.msra.mxu0 %v1016
          %1022 = vmatprep.subr.bf16.mxu0 0
          %1023 = vmatpush1.bf16.msra.mxu0 %v1017
          %1024 = vmatprep.subr.bf16.mxu0 0
          %1025 = vmatpush1.bf16.msra.mxu0 0
          %1026 = vmatprep.subr.bf16.mxu0 0
          %1027 = vmatpush1.bf16.msra.mxu0 0
          %1028 = vmatprep.subr.bf16.mxu0 0
          %1029 = vmatpush1.bf16.msra.mxu0 0
          %1030 = vmatprep.subr.bf16.mxu0 0
          %1031 = vmatpush1.bf16.msra.mxu0 0
          %1032 = vmatprep.subr.bf16.mxu0 0
          %1033 = vmatpush1.bf16.msra.mxu0 0
          %1034 = vmatprep.subr.bf16.mxu0 0
          %1035 = vmatpush1.bf16.msra.mxu0 0
          %1036 = vmatprep.subr.bf16.mxu0 0
          %1037 = vmatpush1.bf16.msra.mxu0 0
          %1038 = vmatprep.subr.bf16.mxu0 0
          %1039 = vmatpush1.bf16.msra.mxu0 0
          %1040 = vmatprep.subr.bf16.mxu0 0
          %1041 = vmatpush1.bf16.msra.mxu0 0
          %1042 = vmatprep.subr.bf16.mxu0 0
          %1043 = vmatpush1.bf16.msra.mxu0 0
          %1044 = vmatprep.subr.bf16.mxu0 0
          %1045 = vmatpush1.bf16.msra.mxu0 0
          %1046 = vmatprep.subr.bf16.mxu0 0
          %1047 = vmatpush1.bf16.msra.mxu0 0
          %1048 = vmatprep.subr.bf16.mxu0 0
          %1049 = vmatpush1.bf16.msra.mxu0 0
          %1050 = vmatprep.subr.bf16.mxu0 0
          %1051 = vmatpush1.bf16.msra.mxu0 0
          %1052 = vmatprep.mubr.bf16.mxu0 0
          %1053 = vmatmul.mubr.bf16.gmra.mrb[0].mxu0 %v749
          %v1054 = vpop.f32.mrb[0].mxu0
          %v1055 = vadd.f32 %v1006, %v1054
          %v1056 = vpop.f32.mrb[0].mxu0
          %v1057 = vpop.f32.mrb[0].mxu0
          %v1058 = vpop.f32.mrb[0].mxu0
          %1059 = vdwg.mxu0
          %s1060 = scalar_lea.vmem [#allocation13], 32
          %v1061 = vld [vmem:[%s1060] sm:$0xf]
          %v1062 = vld [vmem:[%s1060 + $0x4] sm:$0xf]
          %v1063 = vld [vmem:[%s1060 + $0x8] sm:$0xf]
          %v1064 = vld [vmem:[%s1060 + $0xc] sm:$0xf]
          %s1065 = scalar_lea.vmem [#allocation15], 2
          %v1066 = vld [vmem:[%s1065] sm:$0x1]
          %v1068 = vlaneseq
          %v1069 = vshrl.u32 %v1068, 7
          %v1070 = vsub.s32 0, %v1069
          %v1071 = vrot.slane %v1066, %v1070
          %v1077 = vunpack.c.l.b16 %v1061
          %v1078 = vunpack.c.l.b16 %v1062
          %v1079 = vunpack.c.l.b16 %v1063
          %v1080 = vunpack.c.l.b16 %v1064
          %v1081 = vpack.c.b16 %v1078, %v1077
          %v1082 = vpack.c.b16 %v1080, %v1079
          %1085 = vmatprep.subr.bf16.mxu0 0
          %1086 = vmatpush1.bf16.msra.mxu0 %v1081
          %1087 = vmatprep.subr.bf16.mxu0 0
          %1088 = vmatpush1.bf16.msra.mxu0 %v1082
          %1089 = vmatprep.subr.bf16.mxu0 0
          %1090 = vmatpush1.bf16.msra.mxu0 0
          %1091 = vmatprep.subr.bf16.mxu0 0
          %1092 = vmatpush1.bf16.msra.mxu0 0
          %1093 = vmatprep.subr.bf16.mxu0 0
          %1094 = vmatpush1.bf16.msra.mxu0 0
          %1095 = vmatprep.subr.bf16.mxu0 0
          %1096 = vmatpush1.bf16.msra.mxu0 0
          %1097 = vmatprep.subr.bf16.mxu0 0
          %1098 = vmatpush1.bf16.msra.mxu0 0
          %1099 = vmatprep.subr.bf16.mxu0 0
          %1100 = vmatpush1.bf16.msra.mxu0 0
          %1101 = vmatprep.subr.bf16.mxu0 0
          %1102 = vmatpush1.bf16.msra.mxu0 0
          %1103 = vmatprep.subr.bf16.mxu0 0
          %1104 = vmatpush1.bf16.msra.mxu0 0
          %1105 = vmatprep.subr.bf16.mxu0 0
          %1106 = vmatpush1.bf16.msra.mxu0 0
          %1107 = vmatprep.subr.bf16.mxu0 0
          %1108 = vmatpush1.bf16.msra.mxu0 0
          %1109 = vmatprep.subr.bf16.mxu0 0
          %1110 = vmatpush1.bf16.msra.mxu0 0
          %1111 = vmatprep.subr.bf16.mxu0 0
          %1112 = vmatpush1.bf16.msra.mxu0 0
          %1113 = vmatprep.subr.bf16.mxu0 0
          %1114 = vmatpush1.bf16.msra.mxu0 0
          %1115 = vmatprep.subr.bf16.mxu0 0
          %1116 = vmatpush1.bf16.msra.mxu0 0
          %1117 = vmatprep.mubr.bf16.mxu0 0
          %1118 = vmatmul.mubr.bf16.gmra.mrb[0].mxu0 %v749
          %v1119 = vpop.f32.mrb[0].mxu0
          %v1120 = vadd.f32 %v1071, %v1119
          %v1121 = vpop.f32.mrb[0].mxu0
          %v1122 = vpop.f32.mrb[0].mxu0
          %v1123 = vpop.f32.mrb[0].mxu0
          %1124 = vdwg.mxu0
          %v1125 = vpack.c.bf16 %v1055, %v1055
          %s1126 = scalar_lea.vmem [#allocation2], 8
          %1127 = vst.msk [vmem:[%s1126] sm:$0xf] %vm855, %v1125
          %v1128 = vpack.c.bf16 %v1120, %v1120
          %s1129 = scalar_lea.vmem [#allocation3], 8
          %1130 = vst.msk [vmem:[%s1129] sm:$0xf] %vm855, %v1128
          %s1131 = scalar_lea.vmem [#allocation10], 48
          %v1132 = vld [vmem:[%s1131] sm:$0xf]
          %v1133 = vld [vmem:[%s1131 + $0x4] sm:$0xf]
          %v1134 = vld [vmem:[%s1131 + $0x8] sm:$0xf]
          %v1135 = vld [vmem:[%s1131 + $0xc] sm:$0xf]
          %s1136 = scalar_lea.vmem [#allocation12], 3
          %v1137 = vld [vmem:[%s1136] sm:$0x1]
          %v1139 = vlaneseq
          %v1140 = vshrl.u32 %v1139, 7
          %v1141 = vsub.s32 0, %v1140
          %v1142 = vrot.slane %v1137, %v1141
          %v1148 = vunpack.c.l.b16 %v1132
          %v1149 = vunpack.c.l.b16 %v1133
          %v1150 = vunpack.c.l.b16 %v1134
          %v1151 = vunpack.c.l.b16 %v1135
          %v1152 = vpack.c.b16 %v1149, %v1148
          %v1153 = vpack.c.b16 %v1151, %v1150
          %1156 = vmatprep.subr.bf16.mxu0 0
          %1157 = vmatpush1.bf16.msra.mxu0 %v1152
          %1158 = vmatprep.subr.bf16.mxu0 0
          %1159 = vmatpush1.bf16.msra.mxu0 %v1153
          %1160 = vmatprep.subr.bf16.mxu0 0
          %1161 = vmatpush1.bf16.msra.mxu0 0
          %1162 = vmatprep.subr.bf16.mxu0 0
          %1163 = vmatpush1.bf16.msra.mxu0 0
          %1164 = vmatprep.subr.bf16.mxu0 0
          %1165 = vmatpush1.bf16.msra.mxu0 0
          %1166 = vmatprep.subr.bf16.mxu0 0
          %1167 = vmatpush1.bf16.msra.mxu0 0
          %1168 = vmatprep.subr.bf16.mxu0 0
          %1169 = vmatpush1.bf16.msra.mxu0 0
          %1170 = vmatprep.subr.bf16.mxu0 0
          %1171 = vmatpush1.bf16.msra.mxu0 0
          %1172 = vmatprep.subr.bf16.mxu0 0
          %1173 = vmatpush1.bf16.msra.mxu0 0
          %1174 = vmatprep.subr.bf16.mxu0 0
          %1175 = vmatpush1.bf16.msra.mxu0 0
          %1176 = vmatprep.subr.bf16.mxu0 0
          %1177 = vmatpush1.bf16.msra.mxu0 0
          %1178 = vmatprep.subr.bf16.mxu0 0
          %1179 = vmatpush1.bf16.msra.mxu0 0
          %1180 = vmatprep.subr.bf16.mxu0 0
          %1181 = vmatpush1.bf16.msra.mxu0 0
          %1182 = vmatprep.subr.bf16.mxu0 0
          %1183 = vmatpush1.bf16.msra.mxu0 0
          %1184 = vmatprep.subr.bf16.mxu0 0
          %1185 = vmatpush1.bf16.msra.mxu0 0
          %1186 = vmatprep.subr.bf16.mxu0 0
          %1187 = vmatpush1.bf16.msra.mxu0 0
          %1188 = vmatprep.mubr.bf16.mxu0 0
          %1189 = vmatmul.mubr.bf16.gmra.mrb[0].mxu0 %v749
          %v1190 = vpop.f32.mrb[0].mxu0
          %v1191 = vadd.f32 %v1142, %v1190
          %v1192 = vpop.f32.mrb[0].mxu0
          %v1193 = vpop.f32.mrb[0].mxu0
          %v1194 = vpop.f32.mrb[0].mxu0
          %1195 = vdwg.mxu0
          %s1196 = scalar_lea.vmem [#allocation13], 48
          %v1197 = vld [vmem:[%s1196] sm:$0xf]
          %v1198 = vld [vmem:[%s1196 + $0x4] sm:$0xf]
          %v1199 = vld [vmem:[%s1196 + $0x8] sm:$0xf]
          %v1200 = vld [vmem:[%s1196 + $0xc] sm:$0xf]
          %s1201 = scalar_lea.vmem [#allocation15], 3
          %v1202 = vld [vmem:[%s1201] sm:$0x1]
          %v1204 = vlaneseq
          %v1205 = vshrl.u32 %v1204, 7
          %v1206 = vsub.s32 0, %v1205
          %v1207 = vrot.slane %v1202, %v1206
          %v1213 = vunpack.c.l.b16 %v1197
          %v1214 = vunpack.c.l.b16 %v1198
          %v1215 = vunpack.c.l.b16 %v1199
          %v1216 = vunpack.c.l.b16 %v1200
          %v1217 = vpack.c.b16 %v1214, %v1213
          %v1218 = vpack.c.b16 %v1216, %v1215
          %1221 = vmatprep.subr.bf16.mxu0 0
          %1222 = vmatpush1.bf16.msra.mxu0 %v1217
          %1223 = vmatprep.subr.bf16.mxu0 0
          %1224 = vmatpush1.bf16.msra.mxu0 %v1218
          %1225 = vmatprep.subr.bf16.mxu0 0
          %1226 = vmatpush1.bf16.msra.mxu0 0
          %1227 = vmatprep.subr.bf16.mxu0 0
          %1228 = vmatpush1.bf16.msra.mxu0 0
          %1229 = vmatprep.subr.bf16.mxu0 0
          %1230 = vmatpush1.bf16.msra.mxu0 0
          %1231 = vmatprep.subr.bf16.mxu0 0
          %1232 = vmatpush1.bf16.msra.mxu0 0
          %1233 = vmatprep.subr.bf16.mxu0 0
          %1234 = vmatpush1.bf16.msra.mxu0 0
          %1235 = vmatprep.subr.bf16.mxu0 0
          %1236 = vmatpush1.bf16.msra.mxu0 0
          %1237 = vmatprep.subr.bf16.mxu0 0
          %1238 = vmatpush1.bf16.msra.mxu0 0
          %1239 = vmatprep.subr.bf16.mxu0 0
          %1240 = vmatpush1.bf16.msra.mxu0 0
          %1241 = vmatprep.subr.bf16.mxu0 0
          %1242 = vmatpush1.bf16.msra.mxu0 0
          %1243 = vmatprep.subr.bf16.mxu0 0
          %1244 = vmatpush1.bf16.msra.mxu0 0
          %1245 = vmatprep.subr.bf16.mxu0 0
          %1246 = vmatpush1.bf16.msra.mxu0 0
          %1247 = vmatprep.subr.bf16.mxu0 0
          %1248 = vmatpush1.bf16.msra.mxu0 0
          %1249 = vmatprep.subr.bf16.mxu0 0
          %1250 = vmatpush1.bf16.msra.mxu0 0
          %1251 = vmatprep.subr.bf16.mxu0 0
          %1252 = vmatpush1.bf16.msra.mxu0 0
          %1253 = vmatprep.mubr.bf16.mxu0 0
          %1254 = vmatmul.mubr.bf16.gmra.mrb[0].mxu0 %v749
          %v1255 = vpop.f32.mrb[0].mxu0
          %v1256 = vadd.f32 %v1207, %v1255
          %v1257 = vpop.f32.mrb[0].mxu0
          %v1258 = vpop.f32.mrb[0].mxu0
          %v1259 = vpop.f32.mrb[0].mxu0
          %1260 = vdwg.mxu0
          %v1261 = vpack.c.bf16 %v1191, %v1191
          %s1262 = scalar_lea.vmem [#allocation2], 12
          %1263 = vst.msk [vmem:[%s1262] sm:$0xf] %vm855, %v1261
          %v1264 = vpack.c.bf16 %v1256, %v1256
          %s1265 = scalar_lea.vmem [#allocation3], 12
          %1266 = vst.msk [vmem:[%s1265] sm:$0xf] %vm855, %v1264
        $region144: #{tpu_custom_call.1} parent=79 // pred_fallthru
          _
        %s1267 = smul.u32 %s44, 8
        %s1268 = scalar_lea.vmem %s614, %s1267 [#allocation4]
        %v1269 = vld [vmem:[%s1268] sm:$0xff]
        %v1270 = vpack.c.bf16 %v1269, %v1269
        %v1271 = vld [vmem:[#allocation25] sm:$0x1]
        %v1272 = vld [vmem:[#allocation27] sm:$0x1]
        %v1273 = vld [vmem:[#allocation7] sm:$0xf]
        %v1274 = vld [vmem:[#allocation7 + $0x4] sm:$0xf]
        %v1275 = vld [vmem:[#allocation7 + $0x8] sm:$0xf]
        %v1276 = vld [vmem:[#allocation7 + $0xc] sm:$0xf]
        %v1277 = vld [vmem:[#allocation9] sm:$0x1]
        %v1279 = vlaneseq
        %v1280 = vshrl.u32 %v1279, 7
        %v1281 = vsub.s32 0, %v1280
        %v1282 = vrot.slane %v1277, %v1281
        %v1288 = vunpack.c.l.b16 %v1273
        %v1289 = vunpack.c.l.b16 %v1274
        %v1290 = vunpack.c.l.b16 %v1275
        %v1291 = vunpack.c.l.b16 %v1276
        %v1292 = vpack.c.b16 %v1289, %v1288
        %v1293 = vpack.c.b16 %v1291, %v1290
        %vm1296 = vcmask 261120
        %v1298 = vsel %vm1296, %v1270, 0
        %1300 = vmatprep.subr.bf16.mxu0 0
        %1301 = vmatpush1.bf16.msra.mxu0 %v1292
        %1302 = vmatprep.subr.bf16.mxu0 0
        %1303 = vmatpush1.bf16.msra.mxu0 %v1293
        %1304 = vmatprep.subr.bf16.mxu0 0
        %1305 = vmatpush1.bf16.msra.mxu0 0
        %1306 = vmatprep.subr.bf16.mxu0 0
        %1307 = vmatpush1.bf16.msra.mxu0 0
        %1308 = vmatprep.subr.bf16.mxu0 0
        %1309 = vmatpush1.bf16.msra.mxu0 0
        %1310 = vmatprep.subr.bf16.mxu0 0
        %1311 = vmatpush1.bf16.msra.mxu0 0
        %1312 = vmatprep.subr.bf16.mxu0 0
        %1313 = vmatpush1.bf16.msra.mxu0 0
        %1314 = vmatprep.subr.bf16.mxu0 0
        %1315 = vmatpush1.bf16.msra.mxu0 0
        %1316 = vmatprep.subr.bf16.mxu0 0
        %1317 = vmatpush1.bf16.msra.mxu0 0
        %1318 = vmatprep.subr.bf16.mxu0 0
        %1319 = vmatpush1.bf16.msra.mxu0 0
        %1320 = vmatprep.subr.bf16.mxu0 0
        %1321 = vmatpush1.bf16.msra.mxu0 0
        %1322 = vmatprep.subr.bf16.mxu0 0
        %1323 = vmatpush1.bf16.msra.mxu0 0
        %1324 = vmatprep.subr.bf16.mxu0 0
        %1325 = vmatpush1.bf16.msra.mxu0 0
        %1326 = vmatprep.subr.bf16.mxu0 0
        %1327 = vmatpush1.bf16.msra.mxu0 0
        %1328 = vmatprep.subr.bf16.mxu0 0
        %1329 = vmatpush1.bf16.msra.mxu0 0
        %1330 = vmatprep.subr.bf16.mxu0 0
        %1331 = vmatpush1.bf16.msra.mxu0 0
        %1332 = vmatprep.mubr.bf16.mxu0 0
        %1333 = vmatmul.mubr.bf16.gmra.mrb[0].mxu0 %v1298
        %v1334 = vpop.f32.mrb[0].mxu0
        %v1335 = vadd.f32 %v1282, %v1334
        %v1336 = vpop.f32.mrb[0].mxu0
        %v1337 = vpop.f32.mrb[0].mxu0
        %v1338 = vpop.f32.mrb[0].mxu0
        %1339 = vdwg.mxu0
        %v1340 = vpack.c.bf16 %v1335, %v1335
        %s1341 = scalar_lea.vmem [#allocation7], 16
        %v1342 = vld [vmem:[%s1341] sm:$0xf]
        %v1343 = vld [vmem:[%s1341 + $0x4] sm:$0xf]
        %v1344 = vld [vmem:[%s1341 + $0x8] sm:$0xf]
        %v1345 = vld [vmem:[%s1341 + $0xc] sm:$0xf]
        %s1346 = scalar_lea.vmem [#allocation9], 1
        %v1347 = vld [vmem:[%s1346] sm:$0x1]
        %v1349 = vlaneseq
        %v1350 = vshrl.u32 %v1349, 7
        %v1351 = vsub.s32 0, %v1350
        %v1352 = vrot.slane %v1347, %v1351
        %v1358 = vunpack.c.l.b16 %v1342
        %v1359 = vunpack.c.l.b16 %v1343
        %v1360 = vunpack.c.l.b16 %v1344
        %v1361 = vunpack.c.l.b16 %v1345
        %v1362 = vpack.c.b16 %v1359, %v1358
        %v1363 = vpack.c.b16 %v1361, %v1360
        %1366 = vmatprep.subr.bf16.mxu0 0
        %1367 = vmatpush1.bf16.msra.mxu0 %v1362
        %1368 = vmatprep.subr.bf16.mxu0 0
        %1369 = vmatpush1.bf16.msra.mxu0 %v1363
        %1370 = vmatprep.subr.bf16.mxu0 0
        %1371 = vmatpush1.bf16.msra.mxu0 0
        %1372 = vmatprep.subr.bf16.mxu0 0
        %1373 = vmatpush1.bf16.msra.mxu0 0
        %1374 = vmatprep.subr.bf16.mxu0 0
        %1375 = vmatpush1.bf16.msra.mxu0 0
        %1376 = vmatprep.subr.bf16.mxu0 0
        %1377 = vmatpush1.bf16.msra.mxu0 0
        %1378 = vmatprep.subr.bf16.mxu0 0
        %1379 = vmatpush1.bf16.msra.mxu0 0
        %1380 = vmatprep.subr.bf16.mxu0 0
        %1381 = vmatpush1.bf16.msra.mxu0 0
        %1382 = vmatprep.subr.bf16.mxu0 0
        %1383 = vmatpush1.bf16.msra.mxu0 0
        %1384 = vmatprep.subr.bf16.mxu0 0
        %1385 = vmatpush1.bf16.msra.mxu0 0
        %1386 = vmatprep.subr.bf16.mxu0 0
        %1387 = vmatpush1.bf16.msra.mxu0 0
        %1388 = vmatprep.subr.bf16.mxu0 0
        %1389 = vmatpush1.bf16.msra.mxu0 0
        %1390 = vmatprep.subr.bf16.mxu0 0
        %1391 = vmatpush1.bf16.msra.mxu0 0
        %1392 = vmatprep.subr.bf16.mxu0 0
        %1393 = vmatpush1.bf16.msra.mxu0 0
        %1394 = vmatprep.subr.bf16.mxu0 0
        %1395 = vmatpush1.bf16.msra.mxu0 0
        %1396 = vmatprep.subr.bf16.mxu0 0
        %1397 = vmatpush1.bf16.msra.mxu0 0
        %1398 = vmatprep.mubr.bf16.mxu0 0
        %1399 = vmatmul.mubr.bf16.gmra.mrb[0].mxu0 %v1298
        %v1400 = vpop.f32.mrb[0].mxu0
        %v1401 = vadd.f32 %v1352, %v1400
        %v1402 = vpop.f32.mrb[0].mxu0
        %v1403 = vpop.f32.mrb[0].mxu0
        %v1404 = vpop.f32.mrb[0].mxu0
        %1405 = vdwg.mxu0
        %v1406 = vpack.c.bf16 %v1401, %v1401
        %s1407 = scalar_lea.vmem [#allocation7], 32
        %v1408 = vld [vmem:[%s1407] sm:$0xf]
        %v1409 = vld [vmem:[%s1407 + $0x4] sm:$0xf]
        %v1410 = vld [vmem:[%s1407 + $0x8] sm:$0xf]
        %v1411 = vld [vmem:[%s1407 + $0xc] sm:$0xf]
        %s1412 = scalar_lea.vmem [#allocation9], 2
        %v1413 = vld [vmem:[%s1412] sm:$0x1]
        %v1415 = vlaneseq
        %v1416 = vshrl.u32 %v1415, 7
        %v1417 = vsub.s32 0, %v1416
        %v1418 = vrot.slane %v1413, %v1417
        %v1424 = vunpack.c.l.b16 %v1408
        %v1425 = vunpack.c.l.b16 %v1409
        %v1426 = vunpack.c.l.b16 %v1410
        %v1427 = vunpack.c.l.b16 %v1411
        %v1428 = vpack.c.b16 %v1425, %v1424
        %v1429 = vpack.c.b16 %v1427, %v1426
        %1432 = vmatprep.subr.bf16.mxu0 0
        %1433 = vmatpush1.bf16.msra.mxu0 %v1428
        %1434 = vmatprep.subr.bf16.mxu0 0
        %1435 = vmatpush1.bf16.msra.mxu0 %v1429
        %1436 = vmatprep.subr.bf16.mxu0 0
        %1437 = vmatpush1.bf16.msra.mxu0 0
        %1438 = vmatprep.subr.bf16.mxu0 0
        %1439 = vmatpush1.bf16.msra.mxu0 0
        %1440 = vmatprep.subr.bf16.mxu0 0
        %1441 = vmatpush1.bf16.msra.mxu0 0
        %1442 = vmatprep.subr.bf16.mxu0 0
        %1443 = vmatpush1.bf16.msra.mxu0 0
        %1444 = vmatprep.subr.bf16.mxu0 0
        %1445 = vmatpush1.bf16.msra.mxu0 0
        %1446 = vmatprep.subr.bf16.mxu0 0
        %1447 = vmatpush1.bf16.msra.mxu0 0
        %1448 = vmatprep.subr.bf16.mxu0 0
        %1449 = vmatpush1.bf16.msra.mxu0 0
        %1450 = vmatprep.subr.bf16.mxu0 0
        %1451 = vmatpush1.bf16.msra.mxu0 0
        %1452 = vmatprep.subr.bf16.mxu0 0
        %1453 = vmatpush1.bf16.msra.mxu0 0
        %1454 = vmatprep.subr.bf16.mxu0 0
        %1455 = vmatpush1.bf16.msra.mxu0 0
        %1456 = vmatprep.subr.bf16.mxu0 0
        %1457 = vmatpush1.bf16.msra.mxu0 0
        %1458 = vmatprep.subr.bf16.mxu0 0
        %1459 = vmatpush1.bf16.msra.mxu0 0
        %1460 = vmatprep.subr.bf16.mxu0 0
        %1461 = vmatpush1.bf16.msra.mxu0 0
        %1462 = vmatprep.subr.bf16.mxu0 0
        %1463 = vmatpush1.bf16.msra.mxu0 0
        %1464 = vmatprep.mubr.bf16.mxu0 0
        %1465 = vmatmul.mubr.bf16.gmra.mrb[0].mxu0 %v1298
        %v1466 = vpop.f32.mrb[0].mxu0
        %v1467 = vadd.f32 %v1418, %v1466
        %v1468 = vpop.f32.mrb[0].mxu0
        %v1469 = vpop.f32.mrb[0].mxu0
        %v1470 = vpop.f32.mrb[0].mxu0
        %1471 = vdwg.mxu0
        %v1472 = vpack.c.bf16 %v1467, %v1467
        %s1473 = scalar_lea.vmem [#allocation7], 48
        %v1474 = vld [vmem:[%s1473] sm:$0xf]
        %v1475 = vld [vmem:[%s1473 + $0x4] sm:$0xf]
        %v1476 = vld [vmem:[%s1473 + $0x8] sm:$0xf]
        %v1477 = vld [vmem:[%s1473 + $0xc] sm:$0xf]
        %s1478 = scalar_lea.vmem [#allocation9], 3
        %v1479 = vld [vmem:[%s1478] sm:$0x1]
        %v1481 = vlaneseq
        %v1482 = vshrl.u32 %v1481, 7
        %v1483 = vsub.s32 0, %v1482
        %v1484 = vrot.slane %v1479, %v1483
        %v1490 = vunpack.c.l.b16 %v1474
        %v1491 = vunpack.c.l.b16 %v1475
        %v1492 = vunpack.c.l.b16 %v1476
        %v1493 = vunpack.c.l.b16 %v1477
        %v1494 = vpack.c.b16 %v1491, %v1490
        %v1495 = vpack.c.b16 %v1493, %v1492
        %1498 = vmatprep.subr.bf16.mxu0 0
        %1499 = vmatpush1.bf16.msra.mxu0 %v1494
        %1500 = vmatprep.subr.bf16.mxu0 0
        %1501 = vmatpush1.bf16.msra.mxu0 %v1495
        %1502 = vmatprep.subr.bf16.mxu0 0
        %1503 = vmatpush1.bf16.msra.mxu0 0
        %1504 = vmatprep.subr.bf16.mxu0 0
        %1505 = vmatpush1.bf16.msra.mxu0 0
        %1506 = vmatprep.subr.bf16.mxu0 0
        %1507 = vmatpush1.bf16.msra.mxu0 0
        %1508 = vmatprep.subr.bf16.mxu0 0
        %1509 = vmatpush1.bf16.msra.mxu0 0
        %1510 = vmatprep.subr.bf16.mxu0 0
        %1511 = vmatpush1.bf16.msra.mxu0 0
        %1512 = vmatprep.subr.bf16.mxu0 0
        %1513 = vmatpush1.bf16.msra.mxu0 0
        %1514 = vmatprep.subr.bf16.mxu0 0
        %1515 = vmatpush1.bf16.msra.mxu0 0
        %1516 = vmatprep.subr.bf16.mxu0 0
        %1517 = vmatpush1.bf16.msra.mxu0 0
        %1518 = vmatprep.subr.bf16.mxu0 0
        %1519 = vmatpush1.bf16.msra.mxu0 0
        %1520 = vmatprep.subr.bf16.mxu0 0
        %1521 = vmatpush1.bf16.msra.mxu0 0
        %1522 = vmatprep.subr.bf16.mxu0 0
        %1523 = vmatpush1.bf16.msra.mxu0 0
        %1524 = vmatprep.subr.bf16.mxu0 0
        %1525 = vmatpush1.bf16.msra.mxu0 0
        %1526 = vmatprep.subr.bf16.mxu0 0
        %1527 = vmatpush1.bf16.msra.mxu0 0
        %1528 = vmatprep.subr.bf16.mxu0 0
        %1529 = vmatpush1.bf16.msra.mxu0 0
        %1530 = vmatprep.mubr.bf16.mxu0 0
        %1531 = vmatmul.mubr.bf16.gmra.mrb[0].mxu0 %v1298
        %v1532 = vpop.f32.mrb[0].mxu0
        %v1533 = vadd.f32 %v1484, %v1532
        %v1534 = vpop.f32.mrb[0].mxu0
        %v1535 = vpop.f32.mrb[0].mxu0
        %v1536 = vpop.f32.mrb[0].mxu0
        %1537 = vdwg.mxu0
        %v1538 = vpack.c.bf16 %v1533, %v1533
        %v1539 = vld [vmem:[#allocation2] sm:$0xf]
        %v1540 = vld [vmem:[#allocation2 + $0x4] sm:$0xf]
        %v1541 = vld [vmem:[#allocation2 + $0x8] sm:$0xf]
        %v1542 = vld [vmem:[#allocation2 + $0xc] sm:$0xf]
        %v1543 = vld [vmem:[#allocation3] sm:$0xf]
        %v1544 = vld [vmem:[#allocation3 + $0x4] sm:$0xf]
        %v1545 = vld [vmem:[#allocation3 + $0x8] sm:$0xf]
        %v1546 = vld [vmem:[#allocation3 + $0xc] sm:$0xf]
        %vm1547 = vcmask 64512
        %v1549 = vsel %vm1547, %v1340, 0
        %v1552 = vsel %vm1547, %v1539, 0
        %1554 = vmatprep.subr.bf16.mxu0 0
        %1555 = vmatpush1.bf16.xpose.msra.mxu0 %v1552
        %1556 = vmatprep.subr.bf16.mxu0 0
        %1557 = vmatpush1.bf16.xpose.msra.mxu0 0
        %1558 = vmatprep.subr.bf16.mxu0 0
        %1559 = vmatpush1.bf16.xpose.msra.mxu0 0
        %1560 = vmatprep.subr.bf16.mxu0 0
        %1561 = vmatpush1.bf16.xpose.msra.mxu0 0
        %1562 = vmatprep.subr.bf16.mxu0 0
        %1563 = vmatpush1.bf16.xpose.msra.mxu0 0
        %1564 = vmatprep.subr.bf16.mxu0 0
        %1565 = vmatpush1.bf16.xpose.msra.mxu0 0
        %1566 = vmatprep.subr.bf16.mxu0 0
        %1567 = vmatpush1.bf16.xpose.msra.mxu0 0
        %1568 = vmatprep.subr.bf16.mxu0 0
        %1569 = vmatpush1.bf16.xpose.msra.mxu0 0
        %1570 = vmatprep.subr.bf16.mxu0 0
        %1571 = vmatpush1.bf16.xpose.msra.mxu0 0
        %1572 = vmatprep.subr.bf16.mxu0 0
        %1573 = vmatpush1.bf16.xpose.msra.mxu0 0
        %1574 = vmatprep.subr.bf16.mxu0 0
        %1575 = vmatpush1.bf16.xpose.msra.mxu0 0
        %1576 = vmatprep.subr.bf16.mxu0 0
        %1577 = vmatpush1.bf16.xpose.msra.mxu0 0
        %1578 = vmatprep.subr.bf16.mxu0 0
        %1579 = vmatpush1.bf16.xpose.msra.mxu0 0
        %1580 = vmatprep.subr.bf16.mxu0 0
        %1581 = vmatpush1.bf16.xpose.msra.mxu0 0
        %1582 = vmatprep.subr.bf16.mxu0 0
        %1583 = vmatpush1.bf16.xpose.msra.mxu0 0
        %1584 = vmatprep.subr.bf16.mxu0 0
        %1585 = vmatpush1.bf16.xpose.msra.mxu0 0
        %1586 = vmatprep.mubr.bf16.mxu0 0
        %1587 = vmatmul.mubr.bf16.gmra.mrb[0].mxu0 %v1549
        %v1588 = vpop.f32.mrb[0].mxu0
        %v1589 = vadd.f32 0.0, %v1588
        %v1590 = vpop.f32.mrb[0].mxu0
        %v1591 = vpop.f32.mrb[0].mxu0
        %v1592 = vpop.f32.mrb[0].mxu0
        %1593 = vdwg.mxu0
        %v1595 = vsel %vm1547, %v1406, 0
        %v1598 = vsel %vm1547, %v1540, 0
        %1600 = vmatprep.subr.bf16.mxu0 0
        %1601 = vmatpush1.bf16.xpose.msra.mxu0 %v1598
        %1602 = vmatprep.subr.bf16.mxu0 0
        %1603 = vmatpush1.bf16.xpose.msra.mxu0 0
        %1604 = vmatprep.subr.bf16.mxu0 0
        %1605 = vmatpush1.bf16.xpose.msra.mxu0 0
        %1606 = vmatprep.subr.bf16.mxu0 0
        %1607 = vmatpush1.bf16.xpose.msra.mxu0 0
        %1608 = vmatprep.subr.bf16.mxu0 0
        %1609 = vmatpush1.bf16.xpose.msra.mxu0 0
        %1610 = vmatprep.subr.bf16.mxu0 0
        %1611 = vmatpush1.bf16.xpose.msra.mxu0 0
        %1612 = vmatprep.subr.bf16.mxu0 0
        %1613 = vmatpush1.bf16.xpose.msra.mxu0 0
        %1614 = vmatprep.subr.bf16.mxu0 0
        %1615 = vmatpush1.bf16.xpose.msra.mxu0 0
        %1616 = vmatprep.subr.bf16.mxu0 0
        %1617 = vmatpush1.bf16.xpose.msra.mxu0 0
        %1618 = vmatprep.subr.bf16.mxu0 0
        %1619 = vmatpush1.bf16.xpose.msra.mxu0 0
        %1620 = vmatprep.subr.bf16.mxu0 0
        %1621 = vmatpush1.bf16.xpose.msra.mxu0 0
        %1622 = vmatprep.subr.bf16.mxu0 0
        %1623 = vmatpush1.bf16.xpose.msra.mxu0 0
        %1624 = vmatprep.subr.bf16.mxu0 0
        %1625 = vmatpush1.bf16.xpose.msra.mxu0 0
        %1626 = vmatprep.subr.bf16.mxu0 0
        %1627 = vmatpush1.bf16.xpose.msra.mxu0 0
        %1628 = vmatprep.subr.bf16.mxu0 0
        %1629 = vmatpush1.bf16.xpose.msra.mxu0 0
        %1630 = vmatprep.subr.bf16.mxu0 0
        %1631 = vmatpush1.bf16.xpose.msra.mxu0 0
        %1632 = vmatprep.mubr.bf16.mxu0 0
        %1633 = vmatmul.mubr.bf16.gmra.mrb[0].mxu0 %v1595
        %v1634 = vpop.f32.mrb[0].mxu0
        %v1635 = vadd.f32 0.0, %v1634
        %v1636 = vpop.f32.mrb[0].mxu0
        %v1637 = vpop.f32.mrb[0].mxu0
        %v1638 = vpop.f32.mrb[0].mxu0
        %1639 = vdwg.mxu0
        %v1641 = vsel %vm1547, %v1472, 0
        %v1644 = vsel %vm1547, %v1541, 0
        %1646 = vmatprep.subr.bf16.mxu0 0
        %1647 = vmatpush1.bf16.xpose.msra.mxu0 %v1644
        %1648 = vmatprep.subr.bf16.mxu0 0
        %1649 = vmatpush1.bf16.xpose.msra.mxu0 0
        %1650 = vmatprep.subr.bf16.mxu0 0
        %1651 = vmatpush1.bf16.xpose.msra.mxu0 0
        %1652 = vmatprep.subr.bf16.mxu0 0
        %1653 = vmatpush1.bf16.xpose.msra.mxu0 0
        %1654 = vmatprep.subr.bf16.mxu0 0
        %1655 = vmatpush1.bf16.xpose.msra.mxu0 0
        %1656 = vmatprep.subr.bf16.mxu0 0
        %1657 = vmatpush1.bf16.xpose.msra.mxu0 0
        %1658 = vmatprep.subr.bf16.mxu0 0
        %1659 = vmatpush1.bf16.xpose.msra.mxu0 0
        %1660 = vmatprep.subr.bf16.mxu0 0
        %1661 = vmatpush1.bf16.xpose.msra.mxu0 0
        %1662 = vmatprep.subr.bf16.mxu0 0
        %1663 = vmatpush1.bf16.xpose.msra.mxu0 0
        %1664 = vmatprep.subr.bf16.mxu0 0
        %1665 = vmatpush1.bf16.xpose.msra.mxu0 0
        %1666 = vmatprep.subr.bf16.mxu0 0
        %1667 = vmatpush1.bf16.xpose.msra.mxu0 0
        %1668 = vmatprep.subr.bf16.mxu0 0
        %1669 = vmatpush1.bf16.xpose.msra.mxu0 0
        %1670 = vmatprep.subr.bf16.mxu0 0
        %1671 = vmatpush1.bf16.xpose.msra.mxu0 0
        %1672 = vmatprep.subr.bf16.mxu0 0
        %1673 = vmatpush1.bf16.xpose.msra.mxu0 0
        %1674 = vmatprep.subr.bf16.mxu0 0
        %1675 = vmatpush1.bf16.xpose.msra.mxu0 0
        %1676 = vmatprep.subr.bf16.mxu0 0
        %1677 = vmatpush1.bf16.xpose.msra.mxu0 0
        %1678 = vmatprep.mubr.bf16.mxu0 0
        %1679 = vmatmul.mubr.bf16.gmra.mrb[0].mxu0 %v1641
        %v1680 = vpop.f32.mrb[0].mxu0
        %v1681 = vadd.f32 0.0, %v1680
        %v1682 = vpop.f32.mrb[0].mxu0
        %v1683 = vpop.f32.mrb[0].mxu0
        %v1684 = vpop.f32.mrb[0].mxu0
        %1685 = vdwg.mxu0
        %v1687 = vsel %vm1547, %v1538, 0
        %v1690 = vsel %vm1547, %v1542, 0
        %1692 = vmatprep.subr.bf16.mxu0 0
        %1693 = vmatpush1.bf16.xpose.msra.mxu0 %v1690
        %1694 = vmatprep.subr.bf16.mxu0 0
        %1695 = vmatpush1.bf16.xpose.msra.mxu0 0
        %1696 = vmatprep.subr.bf16.mxu0 0
        %1697 = vmatpush1.bf16.xpose.msra.mxu0 0
        %1698 = vmatprep.subr.bf16.mxu0 0
        %1699 = vmatpush1.bf16.xpose.msra.mxu0 0
        %1700 = vmatprep.subr.bf16.mxu0 0
        %1701 = vmatpush1.bf16.xpose.msra.mxu0 0
        %1702 = vmatprep.subr.bf16.mxu0 0
        %1703 = vmatpush1.bf16.xpose.msra.mxu0 0
        %1704 = vmatprep.subr.bf16.mxu0 0
        %1705 = vmatpush1.bf16.xpose.msra.mxu0 0
        %1706 = vmatprep.subr.bf16.mxu0 0
        %1707 = vmatpush1.bf16.xpose.msra.mxu0 0
        %1708 = vmatprep.subr.bf16.mxu0 0
        %1709 = vmatpush1.bf16.xpose.msra.mxu0 0
        %1710 = vmatprep.subr.bf16.mxu0 0
        %1711 = vmatpush1.bf16.xpose.msra.mxu0 0
        %1712 = vmatprep.subr.bf16.mxu0 0
        %1713 = vmatpush1.bf16.xpose.msra.mxu0 0
        %1714 = vmatprep.subr.bf16.mxu0 0
        %1715 = vmatpush1.bf16.xpose.msra.mxu0 0
        %1716 = vmatprep.subr.bf16.mxu0 0
        %1717 = vmatpush1.bf16.xpose.msra.mxu0 0
        %1718 = vmatprep.subr.bf16.mxu0 0
        %1719 = vmatpush1.bf16.xpose.msra.mxu0 0
        %1720 = vmatprep.subr.bf16.mxu0 0
        %1721 = vmatpush1.bf16.xpose.msra.mxu0 0
        %1722 = vmatprep.subr.bf16.mxu0 0
        %1723 = vmatpush1.bf16.xpose.msra.mxu0 0
        %1724 = vmatprep.mubr.bf16.mxu0 0
        %1725 = vmatmul.mubr.bf16.gmra.mrb[0].mxu0 %v1687
        %v1726 = vpop.f32.mrb[0].mxu0
        %v1727 = vadd.f32 0.0, %v1726
        %v1728 = vpop.f32.mrb[0].mxu0
        %v1729 = vpop.f32.mrb[0].mxu0
        %v1730 = vpop.f32.mrb[0].mxu0
        %1731 = vdwg.mxu0
        %v1732 = vsel %vm1547, %v1589, -inf
        %1733 = vmax.xlane.f32.xlu0 %v1732
        %v1734 = vpop.xlane.xlu0 %1733
        %v1735 = vsel %vm1547, %v1635, -inf
        %1736 = vmax.xlane.f32.xlu0 %v1735
        %v1737 = vpop.xlane.xlu0 %1736
        %v1738 = vsel %vm1547, %v1681, -inf
        %1739 = vmax.xlane.f32.xlu0 %v1738
        %v1740 = vpop.xlane.xlu0 %1739
        %v1741 = vsel %vm1547, %v1727, -inf
        %1742 = vmax.xlane.f32.xlu0 %v1741
        %v1743 = vpop.xlane.xlu0 %1742
        %v1744 = vsub.f32 -inf, %v1734
        %v1745 = vsub.f32 -inf, %v1737
        %v1746 = vsub.f32 -inf, %v1740
        %v1747 = vsub.f32 -inf, %v1743
        %v1748 = vmul.f32 %v1744, 1.442695
        %v1749 = vpow.pop %v1748
        %v1750 = vmul.f32 %v1745, 1.442695
        %v1751 = vpow.pop %v1750
        %v1752 = vmul.f32 %v1746, 1.442695
        %v1753 = vpow.pop %v1752
        %v1754 = vmul.f32 %v1747, 1.442695
        %v1755 = vpow.pop %v1754
        %v1756 = vsub.f32 %v1589, %v1734
        %v1757 = vsub.f32 %v1635, %v1737
        %v1758 = vsub.f32 %v1681, %v1740
        %v1759 = vsub.f32 %v1727, %v1743
        %v1760 = vmul.f32 %v1756, 1.442695
        %v1761 = vpow.pop %v1760
        %v1762 = vmul.f32 %v1757, 1.442695
        %v1763 = vpow.pop %v1762
        %v1764 = vmul.f32 %v1758, 1.442695
        %v1765 = vpow.pop %v1764
        %v1766 = vmul.f32 %v1759, 1.442695
        %v1767 = vpow.pop %v1766
        %v1768 = vmul.f32 %v1749, 0.0
        %v1769 = vmul.f32 %v1751, 0.0
        %v1770 = vmul.f32 %v1753, 0.0
        %v1771 = vmul.f32 %v1755, 0.0
        %v1772 = vsel %vm1547, %v1761, 0.0
        %1773 = vadd.xlane.f32.xlu0 %v1772
        %v1774 = vpop.xlane.xlu0 %1773
        %v1775 = vsel %vm1547, %v1763, 0.0
        %1776 = vadd.xlane.f32.xlu0 %v1775
        %v1777 = vpop.xlane.xlu0 %1776
        %v1778 = vsel %vm1547, %v1765, 0.0
        %1779 = vadd.xlane.f32.xlu0 %v1778
        %v1780 = vpop.xlane.xlu0 %1779
        %v1781 = vsel %vm1547, %v1767, 0.0
        %1782 = vadd.xlane.f32.xlu0 %v1781
        %v1783 = vpop.xlane.xlu0 %1782
        %v1784 = vadd.f32 %v1768, %v1774
        %v1785 = vadd.f32 %v1769, %v1777
        %v1786 = vadd.f32 %v1770, %v1780
        %v1787 = vadd.f32 %v1771, %v1783
        %v1788 = vpack.c.bf16 %v1761, %v1761
        %v1789 = vpack.c.bf16 %v1763, %v1763
        %v1790 = vpack.c.bf16 %v1765, %v1765
        %v1791 = vpack.c.bf16 %v1767, %v1767
        %v1793 = vsel %vm1547, %v1788, 0
        %vm1795 = vcmask 1043456
        %v1797 = vsel %vm1795, %v1543, 0
        %1799 = vmatprep.subr.bf16.mxu0 0
        %1800 = vmatpush1.bf16.msra.mxu0 %v1797
        %1801 = vmatprep.subr.bf16.mxu0 0
        %1802 = vmatpush1.bf16.msra.mxu0 0
        %1803 = vmatprep.subr.bf16.mxu0 0
        %1804 = vmatpush1.bf16.msra.mxu0 0
        %1805 = vmatprep.subr.bf16.mxu0 0
        %1806 = vmatpush1.bf16.msra.mxu0 0
        %1807 = vmatprep.subr.bf16.mxu0 0
        %1808 = vmatpush1.bf16.msra.mxu0 0
        %1809 = vmatprep.subr.bf16.mxu0 0
        %1810 = vmatpush1.bf16.msra.mxu0 0
        %1811 = vmatprep.subr.bf16.mxu0 0
        %1812 = vmatpush1.bf16.msra.mxu0 0
        %1813 = vmatprep.subr.bf16.mxu0 0
        %1814 = vmatpush1.bf16.msra.mxu0 0
        %1815 = vmatprep.subr.bf16.mxu0 0
        %1816 = vmatpush1.bf16.msra.mxu0 0
        %1817 = vmatprep.subr.bf16.mxu0 0
        %1818 = vmatpush1.bf16.msra.mxu0 0
        %1819 = vmatprep.subr.bf16.mxu0 0
        %1820 = vmatpush1.bf16.msra.mxu0 0
        %1821 = vmatprep.subr.bf16.mxu0 0
        %1822 = vmatpush1.bf16.msra.mxu0 0
        %1823 = vmatprep.subr.bf16.mxu0 0
        %1824 = vmatpush1.bf16.msra.mxu0 0
        %1825 = vmatprep.subr.bf16.mxu0 0
        %1826 = vmatpush1.bf16.msra.mxu0 0
        %1827 = vmatprep.subr.bf16.mxu0 0
        %1828 = vmatpush1.bf16.msra.mxu0 0
        %1829 = vmatprep.subr.bf16.mxu0 0
        %1830 = vmatpush1.bf16.msra.mxu0 0
        %1831 = vmatprep.mubr.bf16.mxu0 0
        %1832 = vmatmul.mubr.bf16.gmra.mrb[0].mxu0 %v1793
        %v1833 = vpop.f32.mrb[0].mxu0
        %v1834 = vadd.f32 0.0, %v1833
        %v1835 = vpop.f32.mrb[0].mxu0
        %v1836 = vpop.f32.mrb[0].mxu0
        %v1837 = vpop.f32.mrb[0].mxu0
        %1838 = vdwg.mxu0
        %v1840 = vsel %vm1547, %v1789, 0
        %v1843 = vsel %vm1795, %v1544, 0
        %1845 = vmatprep.subr.bf16.mxu0 0
        %1846 = vmatpush1.bf16.msra.mxu0 %v1843
        %1847 = vmatprep.subr.bf16.mxu0 0
        %1848 = vmatpush1.bf16.msra.mxu0 0
        %1849 = vmatprep.subr.bf16.mxu0 0
        %1850 = vmatpush1.bf16.msra.mxu0 0
        %1851 = vmatprep.subr.bf16.mxu0 0
        %1852 = vmatpush1.bf16.msra.mxu0 0
        %1853 = vmatprep.subr.bf16.mxu0 0
        %1854 = vmatpush1.bf16.msra.mxu0 0
        %1855 = vmatprep.subr.bf16.mxu0 0
        %1856 = vmatpush1.bf16.msra.mxu0 0
        %1857 = vmatprep.subr.bf16.mxu0 0
        %1858 = vmatpush1.bf16.msra.mxu0 0
        %1859 = vmatprep.subr.bf16.mxu0 0
        %1860 = vmatpush1.bf16.msra.mxu0 0
        %1861 = vmatprep.subr.bf16.mxu0 0
        %1862 = vmatpush1.bf16.msra.mxu0 0
        %1863 = vmatprep.subr.bf16.mxu0 0
        %1864 = vmatpush1.bf16.msra.mxu0 0
        %1865 = vmatprep.subr.bf16.mxu0 0
        %1866 = vmatpush1.bf16.msra.mxu0 0
        %1867 = vmatprep.subr.bf16.mxu0 0
        %1868 = vmatpush1.bf16.msra.mxu0 0
        %1869 = vmatprep.subr.bf16.mxu0 0
        %1870 = vmatpush1.bf16.msra.mxu0 0
        %1871 = vmatprep.subr.bf16.mxu0 0
        %1872 = vmatpush1.bf16.msra.mxu0 0
        %1873 = vmatprep.subr.bf16.mxu0 0
        %1874 = vmatpush1.bf16.msra.mxu0 0
        %1875 = vmatprep.subr.bf16.mxu0 0
        %1876 = vmatpush1.bf16.msra.mxu0 0
        %1877 = vmatprep.mubr.bf16.mxu0 0
        %1878 = vmatmul.mubr.bf16.gmra.mrb[0].mxu0 %v1840
        %v1879 = vpop.f32.mrb[0].mxu0
        %v1880 = vadd.f32 0.0, %v1879
        %v1881 = vpop.f32.mrb[0].mxu0
        %v1882 = vpop.f32.mrb[0].mxu0
        %v1883 = vpop.f32.mrb[0].mxu0
        %1884 = vdwg.mxu0
        %v1886 = vsel %vm1547, %v1790, 0
        %v1889 = vsel %vm1795, %v1545, 0
        %1891 = vmatprep.subr.bf16.mxu0 0
        %1892 = vmatpush1.bf16.msra.mxu0 %v1889
        %1893 = vmatprep.subr.bf16.mxu0 0
        %1894 = vmatpush1.bf16.msra.mxu0 0
        %1895 = vmatprep.subr.bf16.mxu0 0
        %1896 = vmatpush1.bf16.msra.mxu0 0
        %1897 = vmatprep.subr.bf16.mxu0 0
        %1898 = vmatpush1.bf16.msra.mxu0 0
        %1899 = vmatprep.subr.bf16.mxu0 0
        %1900 = vmatpush1.bf16.msra.mxu0 0
        %1901 = vmatprep.subr.bf16.mxu0 0
        %1902 = vmatpush1.bf16.msra.mxu0 0
        %1903 = vmatprep.subr.bf16.mxu0 0
        %1904 = vmatpush1.bf16.msra.mxu0 0
        %1905 = vmatprep.subr.bf16.mxu0 0
        %1906 = vmatpush1.bf16.msra.mxu0 0
        %1907 = vmatprep.subr.bf16.mxu0 0
        %1908 = vmatpush1.bf16.msra.mxu0 0
        %1909 = vmatprep.subr.bf16.mxu0 0
        %1910 = vmatpush1.bf16.msra.mxu0 0
        %1911 = vmatprep.subr.bf16.mxu0 0
        %1912 = vmatpush1.bf16.msra.mxu0 0
        %1913 = vmatprep.subr.bf16.mxu0 0
        %1914 = vmatpush1.bf16.msra.mxu0 0
        %1915 = vmatprep.subr.bf16.mxu0 0
        %1916 = vmatpush1.bf16.msra.mxu0 0
        %1917 = vmatprep.subr.bf16.mxu0 0
        %1918 = vmatpush1.bf16.msra.mxu0 0
        %1919 = vmatprep.subr.bf16.mxu0 0
        %1920 = vmatpush1.bf16.msra.mxu0 0
        %1921 = vmatprep.subr.bf16.mxu0 0
        %1922 = vmatpush1.bf16.msra.mxu0 0
        %1923 = vmatprep.mubr.bf16.mxu0 0
        %1924 = vmatmul.mubr.bf16.gmra.mrb[0].mxu0 %v1886
        %v1925 = vpop.f32.mrb[0].mxu0
        %v1926 = vadd.f32 0.0, %v1925
        %v1927 = vpop.f32.mrb[0].mxu0
        %v1928 = vpop.f32.mrb[0].mxu0
        %v1929 = vpop.f32.mrb[0].mxu0
        %1930 = vdwg.mxu0
        %v1932 = vsel %vm1547, %v1791, 0
        %v1935 = vsel %vm1795, %v1546, 0
        %1937 = vmatprep.subr.bf16.mxu0 0
        %1938 = vmatpush1.bf16.msra.mxu0 %v1935
        %1939 = vmatprep.subr.bf16.mxu0 0
        %1940 = vmatpush1.bf16.msra.mxu0 0
        %1941 = vmatprep.subr.bf16.mxu0 0
        %1942 = vmatpush1.bf16.msra.mxu0 0
        %1943 = vmatprep.subr.bf16.mxu0 0
        %1944 = vmatpush1.bf16.msra.mxu0 0
        %1945 = vmatprep.subr.bf16.mxu0 0
        %1946 = vmatpush1.bf16.msra.mxu0 0
        %1947 = vmatprep.subr.bf16.mxu0 0
        %1948 = vmatpush1.bf16.msra.mxu0 0
        %1949 = vmatprep.subr.bf16.mxu0 0
        %1950 = vmatpush1.bf16.msra.mxu0 0
        %1951 = vmatprep.subr.bf16.mxu0 0
        %1952 = vmatpush1.bf16.msra.mxu0 0
        %1953 = vmatprep.subr.bf16.mxu0 0
        %1954 = vmatpush1.bf16.msra.mxu0 0
        %1955 = vmatprep.subr.bf16.mxu0 0
        %1956 = vmatpush1.bf16.msra.mxu0 0
        %1957 = vmatprep.subr.bf16.mxu0 0
        %1958 = vmatpush1.bf16.msra.mxu0 0
        %1959 = vmatprep.subr.bf16.mxu0 0
        %1960 = vmatpush1.bf16.msra.mxu0 0
        %1961 = vmatprep.subr.bf16.mxu0 0
        %1962 = vmatpush1.bf16.msra.mxu0 0
        %1963 = vmatprep.subr.bf16.mxu0 0
        %1964 = vmatpush1.bf16.msra.mxu0 0
        %1965 = vmatprep.subr.bf16.mxu0 0
        %1966 = vmatpush1.bf16.msra.mxu0 0
        %1967 = vmatprep.subr.bf16.mxu0 0
        %1968 = vmatpush1.bf16.msra.mxu0 0
        %1969 = vmatprep.mubr.bf16.mxu0 0
        %1970 = vmatmul.mubr.bf16.gmra.mrb[0].mxu0 %v1932
        %v1971 = vpop.f32.mrb[0].mxu0
        %v1972 = vadd.f32 0.0, %v1971
        %v1973 = vpop.f32.mrb[0].mxu0
        %v1974 = vpop.f32.mrb[0].mxu0
        %v1975 = vpop.f32.mrb[0].mxu0
        %1976 = vdwg.mxu0
        %v1977 = vadd.f32 %v1768, %v1834
        %v1978 = vadd.f32 %v1769, %v1880
        %v1979 = vadd.f32 %v1770, %v1926
        %v1980 = vadd.f32 %v1771, %v1972
        %v1981 = vrcp.pop %v1784
        %v1982 = vrcp.pop %v1785
        %v1983 = vrcp.pop %v1786
        %v1984 = vrcp.pop %v1787
        %v1985 = vmul.f32 %v1977, %v1981
        %v1986 = vmul.f32 %v1978, %v1982
        %v1987 = vmul.f32 %v1979, %v1983
        %v1988 = vmul.f32 %v1980, %v1984
        %v1989 = vpack.c.bf16 %v1985, %v1985
        %v1990 = vpack.c.bf16 %v1986, %v1986
        %v1991 = vpack.c.bf16 %v1987, %v1987
        %v1992 = vpack.c.bf16 %v1988, %v1988
        %v1993 = vld [vmem:[#allocation16] sm:$0xf]
        %s1994 = scalar_lea.vmem [#allocation16], 4
        %v1995 = vld [vmem:[%s1994] sm:$0xf]
        %v1997 = vsel %vm1547, %v1990, 0
        %v2000 = vsel %vm1795, %v1995, 0
        %2002 = vmatprep.subr.bf16.mxu0 0
        %2003 = vmatpush1.bf16.msra.mxu0 %v2000
        %2004 = vmatprep.subr.bf16.mxu0 0
        %2005 = vmatpush1.bf16.msra.mxu0 0
        %2006 = vmatprep.subr.bf16.mxu0 0
        %2007 = vmatpush1.bf16.msra.mxu0 0
        %2008 = vmatprep.subr.bf16.mxu0 0
        %2009 = vmatpush1.bf16.msra.mxu0 0
        %2010 = vmatprep.subr.bf16.mxu0 0
        %2011 = vmatpush1.bf16.msra.mxu0 0
        %2012 = vmatprep.subr.bf16.mxu0 0
        %2013 = vmatpush1.bf16.msra.mxu0 0
        %2014 = vmatprep.subr.bf16.mxu0 0
        %2015 = vmatpush1.bf16.msra.mxu0 0
        %2016 = vmatprep.subr.bf16.mxu0 0
        %2017 = vmatpush1.bf16.msra.mxu0 0
        %2018 = vmatprep.subr.bf16.mxu0 0
        %2019 = vmatpush1.bf16.msra.mxu0 0
        %2020 = vmatprep.subr.bf16.mxu0 0
        %2021 = vmatpush1.bf16.msra.mxu0 0
        %2022 = vmatprep.subr.bf16.mxu0 0
        %2023 = vmatpush1.bf16.msra.mxu0 0
        %2024 = vmatprep.subr.bf16.mxu0 0
        %2025 = vmatpush1.bf16.msra.mxu0 0
        %2026 = vmatprep.subr.bf16.mxu0 0
        %2027 = vmatpush1.bf16.msra.mxu0 0
        %2028 = vmatprep.subr.bf16.mxu0 0
        %2029 = vmatpush1.bf16.msra.mxu0 0
        %2030 = vmatprep.subr.bf16.mxu0 0
        %2031 = vmatpush1.bf16.msra.mxu0 0
        %2032 = vmatprep.subr.bf16.mxu0 0
        %2033 = vmatpush1.bf16.msra.mxu0 0
        %2034 = vmatprep.mubr.bf16.mxu0 0
        %2035 = vmatmul.mubr.bf16.gmra.mrb[0].mxu0 %v1997
        %v2036 = vpop.f32.mrb[0].mxu0
        %v2037 = vadd.f32 0.0, %v2036
        %v2038 = vpop.f32.mrb[0].mxu0
        %v2039 = vpop.f32.mrb[0].mxu0
        %v2040 = vpop.f32.mrb[0].mxu0
        %2041 = vdwg.mxu0
        %v2043 = vsel %vm1547, %v1989, 0
        %v2046 = vsel %vm1795, %v1993, 0
        %2048 = vmatprep.subr.bf16.mxu0 0
        %2049 = vmatpush1.bf16.msra.mxu0 %v2046
        %2050 = vmatprep.subr.bf16.mxu0 0
        %2051 = vmatpush1.bf16.msra.mxu0 0
        %2052 = vmatprep.subr.bf16.mxu0 0
        %2053 = vmatpush1.bf16.msra.mxu0 0
        %2054 = vmatprep.subr.bf16.mxu0 0
        %2055 = vmatpush1.bf16.msra.mxu0 0
        %2056 = vmatprep.subr.bf16.mxu0 0
        %2057 = vmatpush1.bf16.msra.mxu0 0
        %2058 = vmatprep.subr.bf16.mxu0 0
        %2059 = vmatpush1.bf16.msra.mxu0 0
        %2060 = vmatprep.subr.bf16.mxu0 0
        %2061 = vmatpush1.bf16.msra.mxu0 0
        %2062 = vmatprep.subr.bf16.mxu0 0
        %2063 = vmatpush1.bf16.msra.mxu0 0
        %2064 = vmatprep.subr.bf16.mxu0 0
        %2065 = vmatpush1.bf16.msra.mxu0 0
        %2066 = vmatprep.subr.bf16.mxu0 0
        %2067 = vmatpush1.bf16.msra.mxu0 0
        %2068 = vmatprep.subr.bf16.mxu0 0
        %2069 = vmatpush1.bf16.msra.mxu0 0
        %2070 = vmatprep.subr.bf16.mxu0 0
        %2071 = vmatpush1.bf16.msra.mxu0 0
        %2072 = vmatprep.subr.bf16.mxu0 0
        %2073 = vmatpush1.bf16.msra.mxu0 0
        %2074 = vmatprep.subr.bf16.mxu0 0
        %2075 = vmatpush1.bf16.msra.mxu0 0
        %2076 = vmatprep.subr.bf16.mxu0 0
        %2077 = vmatpush1.bf16.msra.mxu0 0
        %2078 = vmatprep.subr.bf16.mxu0 0
        %2079 = vmatpush1.bf16.msra.mxu0 0
        %2080 = vmatprep.mubr.bf16.mxu0 0
        %2081 = vmatmul.mubr.bf16.gmra.mrb[0].mxu0 %v2043
        %v2082 = vpop.f32.mrb[0].mxu0
        %v2083 = vadd.f32 %v2037, %v2082
        %v2084 = vpop.f32.mrb[0].mxu0
        %v2085 = vpop.f32.mrb[0].mxu0
        %v2086 = vpop.f32.mrb[0].mxu0
        %2087 = vdwg.mxu0
        %s2088 = scalar_lea.vmem [#allocation16], 8
        %v2089 = vld [vmem:[%s2088] sm:$0xf]
        %v2091 = vsel %vm1547, %v1991, 0
        %v2094 = vsel %vm1795, %v2089, 0
        %2096 = vmatprep.subr.bf16.mxu0 0
        %2097 = vmatpush1.bf16.msra.mxu0 %v2094
        %2098 = vmatprep.subr.bf16.mxu0 0
        %2099 = vmatpush1.bf16.msra.mxu0 0
        %2100 = vmatprep.subr.bf16.mxu0 0
        %2101 = vmatpush1.bf16.msra.mxu0 0
        %2102 = vmatprep.subr.bf16.mxu0 0
        %2103 = vmatpush1.bf16.msra.mxu0 0
        %2104 = vmatprep.subr.bf16.mxu0 0
        %2105 = vmatpush1.bf16.msra.mxu0 0
        %2106 = vmatprep.subr.bf16.mxu0 0
        %2107 = vmatpush1.bf16.msra.mxu0 0
        %2108 = vmatprep.subr.bf16.mxu0 0
        %2109 = vmatpush1.bf16.msra.mxu0 0
        %2110 = vmatprep.subr.bf16.mxu0 0
        %2111 = vmatpush1.bf16.msra.mxu0 0
        %2112 = vmatprep.subr.bf16.mxu0 0
        %2113 = vmatpush1.bf16.msra.mxu0 0
        %2114 = vmatprep.subr.bf16.mxu0 0
        %2115 = vmatpush1.bf16.msra.mxu0 0
        %2116 = vmatprep.subr.bf16.mxu0 0
        %2117 = vmatpush1.bf16.msra.mxu0 0
        %2118 = vmatprep.subr.bf16.mxu0 0
        %2119 = vmatpush1.bf16.msra.mxu0 0
        %2120 = vmatprep.subr.bf16.mxu0 0
        %2121 = vmatpush1.bf16.msra.mxu0 0
        %2122 = vmatprep.subr.bf16.mxu0 0
        %2123 = vmatpush1.bf16.msra.mxu0 0
        %2124 = vmatprep.subr.bf16.mxu0 0
        %2125 = vmatpush1.bf16.msra.mxu0 0
        %2126 = vmatprep.subr.bf16.mxu0 0
        %2127 = vmatpush1.bf16.msra.mxu0 0
        %2128 = vmatprep.mubr.bf16.mxu0 0
        %2129 = vmatmul.mubr.bf16.gmra.mrb[0].mxu0 %v2091
        %v2130 = vpop.f32.mrb[0].mxu0
        %v2131 = vadd.f32 0.0, %v2130
        %v2132 = vpop.f32.mrb[0].mxu0
        %v2133 = vpop.f32.mrb[0].mxu0
        %v2134 = vpop.f32.mrb[0].mxu0
        %2135 = vdwg.mxu0
        %v2136 = vadd.f32 %v2083, %v2131
        %s2137 = scalar_lea.vmem [#allocation16], 12
        %v2138 = vld [vmem:[%s2137] sm:$0xf]
        %v2140 = vsel %vm1547, %v1992, 0
        %v2143 = vsel %vm1795, %v2138, 0
        %2145 = vmatprep.subr.bf16.mxu0 0
        %2146 = vmatpush1.bf16.msra.mxu0 %v2143
        %2147 = vmatprep.subr.bf16.mxu0 0
        %2148 = vmatpush1.bf16.msra.mxu0 0
        %2149 = vmatprep.subr.bf16.mxu0 0
        %2150 = vmatpush1.bf16.msra.mxu0 0
        %2151 = vmatprep.subr.bf16.mxu0 0
        %2152 = vmatpush1.bf16.msra.mxu0 0
        %2153 = vmatprep.subr.bf16.mxu0 0
        %2154 = vmatpush1.bf16.msra.mxu0 0
        %2155 = vmatprep.subr.bf16.mxu0 0
        %2156 = vmatpush1.bf16.msra.mxu0 0
        %2157 = vmatprep.subr.bf16.mxu0 0
        %2158 = vmatpush1.bf16.msra.mxu0 0
        %2159 = vmatprep.subr.bf16.mxu0 0
        %2160 = vmatpush1.bf16.msra.mxu0 0
        %2161 = vmatprep.subr.bf16.mxu0 0
        %2162 = vmatpush1.bf16.msra.mxu0 0
        %2163 = vmatprep.subr.bf16.mxu0 0
        %2164 = vmatpush1.bf16.msra.mxu0 0
        %2165 = vmatprep.subr.bf16.mxu0 0
        %2166 = vmatpush1.bf16.msra.mxu0 0
        %2167 = vmatprep.subr.bf16.mxu0 0
        %2168 = vmatpush1.bf16.msra.mxu0 0
        %2169 = vmatprep.subr.bf16.mxu0 0
        %2170 = vmatpush1.bf16.msra.mxu0 0
        %2171 = vmatprep.subr.bf16.mxu0 0
        %2172 = vmatpush1.bf16.msra.mxu0 0
        %2173 = vmatprep.subr.bf16.mxu0 0
        %2174 = vmatpush1.bf16.msra.mxu0 0
        %2175 = vmatprep.subr.bf16.mxu0 0
        %2176 = vmatpush1.bf16.msra.mxu0 0
        %2177 = vmatprep.mubr.bf16.mxu0 0
        %2178 = vmatmul.mubr.bf16.gmra.mrb[0].mxu0 %v2140
        %v2179 = vpop.f32.mrb[0].mxu0
        %v2180 = vadd.f32 0.0, %v2179
        %v2181 = vpop.f32.mrb[0].mxu0
        %v2182 = vpop.f32.mrb[0].mxu0
        %v2183 = vpop.f32.mrb[0].mxu0
        %2184 = vdwg.mxu0
        %v2185 = vadd.f32 %v2136, %v2180
        %v2186 = vld [vmem:[#allocation18] sm:$0x1]
        %v2188 = vlaneseq
        %v2189 = vshrl.u32 %v2188, 7
        %v2190 = vsub.s32 0, %v2189
        %v2191 = vrot.slane %v2186, %v2190
        %v2193 = vadd.f32 %v2185, %v2191
        %v2194 = vadd.f32 %v2193, %v1269
        %v2195 = vsel %vm1296, %v2194, 0.0
        %2196 = vadd.xlane.f32.xlu0 %v2195
        %v2197 = vpop.xlane.xlu0 %2196
        %v2198 = vrcp.pop 32.0
        %v2199 = vmul.f32 %v2197, %v2198
        %v2200 = vsub.f32 %v2194, %v2199
        %v2201 = vmul.f32 %v2200, %v2200
        %v2202 = vsel %vm1296, %v2201, 0.0
        %2203 = vadd.xlane.f32.xlu0 %v2202
        %v2204 = vpop.xlane.xlu0 %2203
        %v2205 = vmul.f32 %v2204, %v2198
        %v2206 = vadd.f32 %v2205, 1e-06
        %v2207 = vrsqrt.pop %v2206
        %v2208 = vmul.f32 %v2200, %v2207
        %v2210 = vlaneseq
        %v2211 = vshrl.u32 %v2210, 7
        %v2212 = vsub.s32 0, %v2211
        %v2213 = vrot.slane %v1271, %v2212
        %v2215 = vmul.f32 %v2208, %v2213
        %v2217 = vlaneseq
        %v2218 = vshrl.u32 %v2217, 7
        %v2219 = vsub.s32 0, %v2218
        %v2220 = vrot.slane %v1272, %v2219
        %v2222 = vadd.f32 %v2215, %v2220
        %v2223 = vpack.c.bf16 %v2222, %v2222
        %v2224 = vld [vmem:[#allocation19] sm:$0xf]
        %v2225 = vld [vmem:[#allocation19 + $0x4] sm:$0xf]
        %v2226 = vld [vmem:[#allocation19 + $0x8] sm:$0xf]
        %v2227 = vld [vmem:[#allocation19 + $0xc] sm:$0xf]
        %v2228 = vld [vmem:[#allocation21] sm:$0x1]
        %v2230 = vlaneseq
        %v2231 = vshrl.u32 %v2230, 7
        %v2232 = vsub.s32 0, %v2231
        %v2233 = vrot.slane %v2228, %v2232
        %v2239 = vunpack.c.l.b16 %v2224
        %v2240 = vunpack.c.l.b16 %v2225
        %v2241 = vunpack.c.l.b16 %v2226
        %v2242 = vunpack.c.l.b16 %v2227
        %v2243 = vpack.c.b16 %v2240, %v2239
        %v2244 = vpack.c.b16 %v2242, %v2241
        %v2248 = vsel %vm1296, %v2223, 0
        %2250 = vmatprep.subr.bf16.mxu0 0
        %2251 = vmatpush1.bf16.msra.mxu0 %v2243
        %2252 = vmatprep.subr.bf16.mxu0 0
        %2253 = vmatpush1.bf16.msra.mxu0 %v2244
        %2254 = vmatprep.subr.bf16.mxu0 0
        %2255 = vmatpush1.bf16.msra.mxu0 0
        %2256 = vmatprep.subr.bf16.mxu0 0
        %2257 = vmatpush1.bf16.msra.mxu0 0
        %2258 = vmatprep.subr.bf16.mxu0 0
        %2259 = vmatpush1.bf16.msra.mxu0 0
        %2260 = vmatprep.subr.bf16.mxu0 0
        %2261 = vmatpush1.bf16.msra.mxu0 0
        %2262 = vmatprep.subr.bf16.mxu0 0
        %2263 = vmatpush1.bf16.msra.mxu0 0
        %2264 = vmatprep.subr.bf16.mxu0 0
        %2265 = vmatpush1.bf16.msra.mxu0 0
        %2266 = vmatprep.subr.bf16.mxu0 0
        %2267 = vmatpush1.bf16.msra.mxu0 0
        %2268 = vmatprep.subr.bf16.mxu0 0
        %2269 = vmatpush1.bf16.msra.mxu0 0
        %2270 = vmatprep.subr.bf16.mxu0 0
        %2271 = vmatpush1.bf16.msra.mxu0 0
        %2272 = vmatprep.subr.bf16.mxu0 0
        %2273 = vmatpush1.bf16.msra.mxu0 0
        %2274 = vmatprep.subr.bf16.mxu0 0
        %2275 = vmatpush1.bf16.msra.mxu0 0
        %2276 = vmatprep.subr.bf16.mxu0 0
        %2277 = vmatpush1.bf16.msra.mxu0 0
        %2278 = vmatprep.subr.bf16.mxu0 0
        %2279 = vmatpush1.bf16.msra.mxu0 0
        %2280 = vmatprep.subr.bf16.mxu0 0
        %2281 = vmatpush1.bf16.msra.mxu0 0
        %2282 = vmatprep.mubr.bf16.mxu0 0
        %2283 = vmatmul.mubr.bf16.gmra.mrb[0].mxu0 %v2248
        %v2284 = vpop.f32.mrb[0].mxu0
        %v2285 = vadd.f32 %v2233, %v2284
        %v2286 = vpop.f32.mrb[0].mxu0
        %v2287 = vpop.f32.mrb[0].mxu0
        %v2288 = vpop.f32.mrb[0].mxu0
        %2289 = vdwg.mxu0
        %v2290 = vmax.f32 %v2285, 0.0
        %v2291 = vpack.c.bf16 %v2290, %v2290
        %v2292 = vld [vmem:[#allocation22] sm:$0xf]
        %v2293 = vld [vmem:[#allocation22 + $0x4] sm:$0xf]
        %v2294 = vld [vmem:[#allocation22 + $0x8] sm:$0xf]
        %v2295 = vld [vmem:[#allocation22 + $0xc] sm:$0xf]
        %v2296 = vld [vmem:[#allocation22 + $0x10] sm:$0xf]
        %v2297 = vld [vmem:[#allocation22 + $0x14] sm:$0xf]
        %v2298 = vld [vmem:[#allocation22 + $0x18] sm:$0xf]
        %v2299 = vld [vmem:[#allocation22 + $0x1c] sm:$0xf]
        %v2300 = vld [vmem:[#allocation24] sm:$0x1]
        %v2302 = vlaneseq
        %v2303 = vshrl.u32 %v2302, 7
        %v2304 = vsub.s32 0, %v2303
        %v2305 = vrot.slane %v2300, %v2304
        %v2315 = vunpack.c.l.b16 %v2292
        %v2316 = vunpack.c.l.b16 %v2293
        %v2317 = vunpack.c.l.b16 %v2294
        %v2318 = vunpack.c.l.b16 %v2295
        %v2319 = vunpack.c.l.b16 %v2296
        %v2320 = vunpack.c.l.b16 %v2297
        %v2321 = vunpack.c.l.b16 %v2298
        %v2322 = vunpack.c.l.b16 %v2299
        %v2323 = vpack.c.b16 %v2316, %v2315
        %v2324 = vpack.c.b16 %v2318, %v2317
        %v2325 = vpack.c.b16 %v2320, %v2319
        %v2326 = vpack.c.b16 %v2322, %v2321
        %vm2331 = vcmask 523264
        %v2333 = vsel %vm2331, %v2291, 0
        %2335 = vmatprep.subr.bf16.mxu0 0
        %2336 = vmatpush1.bf16.msra.mxu0 %v2323
        %2337 = vmatprep.subr.bf16.mxu0 0
        %2338 = vmatpush1.bf16.msra.mxu0 %v2324
        %2339 = vmatprep.subr.bf16.mxu0 0
        %2340 = vmatpush1.bf16.msra.mxu0 %v2325
        %2341 = vmatprep.subr.bf16.mxu0 0
        %2342 = vmatpush1.bf16.msra.mxu0 %v2326
        %2343 = vmatprep.subr.bf16.mxu0 0
        %2344 = vmatpush1.bf16.msra.mxu0 0
        %2345 = vmatprep.subr.bf16.mxu0 0
        %2346 = vmatpush1.bf16.msra.mxu0 0
        %2347 = vmatprep.subr.bf16.mxu0 0
        %2348 = vmatpush1.bf16.msra.mxu0 0
        %2349 = vmatprep.subr.bf16.mxu0 0
        %2350 = vmatpush1.bf16.msra.mxu0 0
        %2351 = vmatprep.subr.bf16.mxu0 0
        %2352 = vmatpush1.bf16.msra.mxu0 0
        %2353 = vmatprep.subr.bf16.mxu0 0
        %2354 = vmatpush1.bf16.msra.mxu0 0
        %2355 = vmatprep.subr.bf16.mxu0 0
        %2356 = vmatpush1.bf16.msra.mxu0 0
        %2357 = vmatprep.subr.bf16.mxu0 0
        %2358 = vmatpush1.bf16.msra.mxu0 0
        %2359 = vmatprep.subr.bf16.mxu0 0
        %2360 = vmatpush1.bf16.msra.mxu0 0
        %2361 = vmatprep.subr.bf16.mxu0 0
        %2362 = vmatpush1.bf16.msra.mxu0 0
        %2363 = vmatprep.subr.bf16.mxu0 0
        %2364 = vmatpush1.bf16.msra.mxu0 0
        %2365 = vmatprep.subr.bf16.mxu0 0
        %2366 = vmatpush1.bf16.msra.mxu0 0
        %2367 = vmatprep.mubr.bf16.mxu0 0
        %2368 = vmatmul.mubr.bf16.gmra.mrb[0].mxu0 %v2333
        %v2369 = vpop.f32.mrb[0].mxu0
        %v2370 = vadd.f32 %v2305, %v2369
        %v2371 = vpop.f32.mrb[0].mxu0
        %v2372 = vpop.f32.mrb[0].mxu0
        %v2373 = vpop.f32.mrb[0].mxu0
        %2374 = vdwg.mxu0
        %v2375 = vadd.f32 %v2370, %v2222
        %v2376 = vsel %vm1296, %v2375, 0.0
        %2377 = vadd.xlane.f32.xlu0 %v2376
        %v2378 = vpop.xlane.xlu0 %2377
        %v2379 = vmul.f32 %v2378, %v2198
        %v2380 = vsub.f32 %v2375, %v2379
        %v2381 = vmul.f32 %v2380, %v2380
        %v2382 = vsel %vm1296, %v2381, 0.0
        %2383 = vadd.xlane.f32.xlu0 %v2382
        %v2384 = vpop.xlane.xlu0 %2383
        %v2385 = vmul.f32 %v2384, %v2198
        %v2386 = vadd.f32 %v2385, 1e-06
        %v2387 = vrsqrt.pop %v2386
        %v2388 = vmul.f32 %v2380, %v2387
        %v2389 = vmul.f32 %v2388, %v2213
        %v2390 = vadd.f32 %v2389, %v2220
        %2391 = vst.msk [vmem:[%s716] sm:$0xff] %vm1296, %v2390
        %s2392 = sand.u32 %s381, 1
        %s2393 = scalar_lea.sflag [#allocation6], %s2392
        %s2394 = sand.u32 %s381, 1
        %s2395 = smul.addr %s2394, 8
        %s2396 = scalar_lea.vmem [#allocation28], %s2395
        // Predicated region
        $region145: #{tpu_custom_call.1} parent=79 // pred_check
          %p2397 = pneg %p391
        $region146: #{tpu_custom_call.1} parent=79 // pred_check_branch
          %2399 = sbr.rel (%p2397) target = $region148
        $region147: #{tpu_custom_call.1} parent=79 // pred_region
          %s2401 = ssub.s32 128, 128
          %2402 = vsyncadd %s2393, %s2401
          %s2403 = sadd.s32 %s44, %s43
          %s2404 = smul.addr %s2403, 128
          %s2405 = scalar_lea.hbm %s15, %s2404
          %s2407 = sshll.u32 %s2396, 4
          %s2408 = int_to_ptr.vmem [resolvable:$true] %s2407
          %2410 = dma.vmem_to_hbm [thread:$0]  %s2408, 128, %s2405, %s2393
        $region148: #{tpu_custom_call.1} parent=79 // pred_fallthru
          _
      $region80: #{tpu_custom_call.1} parent=5 // pred_fallthru
        _
      %p2411 = scmp.le.s32.totalorder 2, %s34
      // Predicated region
      $region149: #{tpu_custom_call.1} parent=5 // pred_check
        %p2412 = pneg %p2411
      $region150: #{tpu_custom_call.1} parent=5 // pred_check_branch
        %2414 = sbr.rel (%p2412) target = $region152
      $region151: #{tpu_custom_call.1} parent=5 // pred_region
        %s2415 = ssub.s32 %s34, 2
        // Predicated region
        $region153: #{tpu_custom_call.1} parent=151 // pred_check
          %p2416 = pneg %p397
        $region154: #{tpu_custom_call.1} parent=151 // pred_check_branch
          %2418 = sbr.rel (%p2416) target = $region156
        $region155: #{tpu_custom_call.1} parent=151 // pred_region
          %s2419 = sand.u32 %s382, 1
          %s2420 = scalar_lea.sflag [#allocation6], %s2419
          %s2421 = sand.u32 %s382, 1
          %s2422 = smul.addr %s2421, 8
          %s2423 = scalar_lea.vmem [#allocation28], %s2422
          %2424 = dma.done %s2420, 128
        $region156: #{tpu_custom_call.1} parent=151 // pred_fallthru
          _
      $region152: #{tpu_custom_call.1} parent=5 // pred_fallthru
        _
    $region6: #{tpu_custom_call.1} parent=1 // loop_footer
      %s38 = sadd.s32 1, %s34
    $region7: #{tpu_custom_call.1} parent=1 // loop_footer_branch
      %33 = sbr.rel target = $region3
    $region8: #{tpu_custom_call.1} parent=1 // loop_exit
      _
    %2425 = vsyncpa [#allocation5], 1
    %s2426 = scalar_lea.sflag [#allocation5], 1
    %2427 = vsyncpa %s2426, 1
    %2428 = vsyncpa [#allocation8], 1
    %2429 = vsyncpa [#allocation11], 1
    %2430 = vsyncpa [#allocation14], 1
    %2431 = vsyncpa [#allocation17], 1
    %2432 = vsyncpa [#allocation20], 1
    %2433 = vsyncpa [#allocation23], 1
    %2434 = vsyncpa [#allocation26], 1
    %2435 = vsyncpa [#allocation6], 1
    %s2436 = scalar_lea.sflag [#allocation6], 1
    %2437 = vsyncpa %s2436, 1

</llo_original>
